<compile_context>
chip_gen: v7x
topology: tpu7x:2x2x1
jax: 0.10.0
libtpu: 0.0.40
codegen_flags: <defaults>
</compile_context>

<pallas_src>
import jax
import jax.numpy as jnp
import numpy as np
from jax.experimental import pallas as pl
from jax.experimental.pallas import tpu as pltpu

BN_EPS = 1e-5
KSIZE = 5


def _ceil_to(x, m):
    return (x + m - 1) // m * m


# --------------------------------------------------------------------------
# Fused Pallas kernel
# --------------------------------------------------------------------------
def _build_fused_kernel(cfg):
    K = cfg["K"]            # conv kernel size (5)
    C = cfg["C"]            # hidden channels (32)
    H = cfg["H"]            # input height == rows per width-position group
    NR1 = cfg["NR1"]        # conv1 row space (dj-phase-major)
    HALF = cfg["R2"]        # conv2 row space == NR1 // 2
    Z1R = cfg["Z1R"]        # padded conv1 scratch rows
    SCR2 = cfg["SCR2"]      # padded pooled-conv1 scratch rows
    PB = cfg["PB"]          # padded rows per conv2 pool phase
    BPAD = cfg["BPAD"]      # padded batch rows for the head
    NF_P = cfg["NF_P"]      # fc1 output lanes
    NC_P = cfg["NC_P"]      # logits lanes
    R_T2, R_F1B, R_F2B = cfg["R_T2"], cfg["R_F1B"], cfg["R_F2B"]
    bf16 = jnp.bfloat16

    def kernel(xw_ref, w1_ref, w2_ref, f1w_ref, f2w_ref, c_ref,
               out_ref, z1_ref, p1_ref, slab_ref):
        # ---- conv1: K height-tap matmuls on the width-unfolded input.
        # BN scale is folded into w1; the BN/bias shift rides on the constant-1
        # column (tap-0 weight row), so no separate scale/shift operands.
        acc1 = jnp.dot(xw_ref[0:NR1, :].astype(bf16), w1_ref[0],
                       preferred_element_type=jnp.float32)
        for kh in range(1, K):
            acc1 = acc1 + jnp.dot(xw_ref[kh:kh + NR1, :].astype(bf16),
                                  w1_ref[kh], preferred_element_type=jnp.float32)
        z1_ref[0:NR1, :] = jnp.maximum(acc1, 0.0)                       # ReLU
        z1_ref[NR1:Z1R, :] = jnp.zeros((Z1R - NR1, C), jnp.float32)     # finite tail

        # ---- conv1 2x2 max pool, contiguous slices only:
        #   height phase: max with the +1-row shifted copy (valid at even rows)
        #   width phase : max of the two dj-phase-major halves
        cand = jnp.maximum(z1_ref[0:NR1, :], z1_ref[1:NR1 + 1, :])      # (NR1, C)
        m = jnp.maximum(cand[0:HALF, :], cand[HALF:NR1, :])             # (HALF, C)
        p1_ref[0:HALF, :] = m
        p1_ref[HALF:SCR2, :] = jnp.zeros((SCR2 - HALF, C), jnp.float32)

        # ---- conv2 as ONE K-packed matmul: stage the 25 shifted-row slices
        # into a (HALF, 25*C) bf16 slab, contract in a single MXU pass.
        for kh in range(K):
            for kw in range(K):
                t = kh * K + kw
                s = kw * H + 2 * kh        # pooled grid lives at row-stride 2
                slab_ref[:, t * C:(t + 1) * C] = p1_ref[s:s + HALF, :].astype(bf16)
        t2 = c_ref[R_T2:R_T2 + 1, 0:C]
        z2 = jnp.maximum(
            jnp.dot(slab_ref[...], w2_ref[...],
                    preferred_element_type=jnp.float32) + t2, 0.0)      # (HALF, C)

        # ---- conv2 2x2 max pool: exact 0/1 phase selection (also masks the
        # edge/batch-crossing garbage rows of the shifted-tap trick), then
        # AdaptiveAvgPool2d(1) as an exact averaging matmul.
        sel2 = c_ref[0:4 * PB, 0:HALF]
        ph = jnp.dot(sel2, z2, preferred_element_type=jnp.float32)      # (4*PB, C)
        pooled2 = jnp.maximum(
            jnp.maximum(ph[0:PB], ph[PB:2 * PB]),
            jnp.maximum(ph[2 * PB:3 * PB], ph[3 * PB:4 * PB]))          # (PB, C)
        avgm = c_ref[4 * PB:4 * PB + BPAD, 0:PB]
        feats = jnp.dot(avgm, pooled2, preferred_element_type=jnp.float32)

        # ---- classifier head: Linear -> ReLU -> Linear (bf16 MXU operands)
        f1b = c_ref[R_F1B:R_F1B + 1, 0:NF_P]
        f2b = c_ref[R_F2B:R_F2B + 1, 0:NC_P]
        h = jnp.maximum(
            jnp.dot(feats.astype(bf16), f1w_ref[...],
                    preferred_element_type=jnp.float32) + f1b, 0.0)
        out_ref[...] = (jnp.dot(h.astype(bf16), f2w_ref[...],
                                preferred_element_type=jnp.float32) + f2b)

    return kernel


# --------------------------------------------------------------------------
# One-time parameter preparation (BN folding, weight repack, packed constants)
# --------------------------------------------------------------------------
def prepare_params(p, input_hw, batch):
    H, W = input_hw
    B = batch
    K = KSIZE
    cin = p["conv1_w"].shape[1]
    C = p["conv1_w"].shape[0]
    nfeat = p["fc1_w"].shape[0]
    ncls = p["fc2_w"].shape[0]

    assert H % 2 == 0, "even input height assumed"
    OH1, OW1 = H - K + 1, W - K + 1
    PH1, PW1 = OH1 // 2, OW1 // 2
    OH2, OW2 = PH1 - K + 1, PW1 - K + 1
    PH2, PW2 = OH2 // 2, OW2 // 2
    assert PH2 >= 1 and PW2 >= 1, "input too small for two conv+pool blocks"

    R2 = B * PW1 * H                      # conv2 row space: (b, q, i), i fastest
    NR1 = 2 * R2                          # conv1 row space: dj phase-major on top
    assert R2 % 8 == 0, "row space must be sublane aligned"
    XW_ROWS = _ceil_to(NR1 + K, 8)        # zero tail so shifted tap reads stay in-bounds
    Z1R = _ceil_to(NR1 + 1, 8)
    SCR2 = _ceil_to(R2 + (K - 1) * H + 2 * (K - 1), 8)

    n2 = B * PH2 * PW2
    PB = max(8, _ceil_to(n2, 8))
    BPAD = max(8, _ceil_to(B, 8))
    TAPW = K * cin + 1                    # per-tap width incl. constant-1 bias column
    NF_P = _ceil_to(nfeat, 128)
    NC_P = _ceil_to(ncls, 128)
    CW = max(128, _ceil_to(R2, 128), NF_P, NC_P)
    R_T2 = 4 * PB + BPAD
    R_F1B = R_T2 + 1
    R_F2B = R_T2 + 2
    CROWS = _ceil_to(R_F2B + 1, 8)

    f32, bf16 = jnp.float32, jnp.bfloat16

    # BN folded: scale into the conv weights, shift kept as a vector.
    s1 = p["bn1_gamma"] / jnp.sqrt(p["bn1_var"] + BN_EPS)
    t1 = (p["conv1_b"] - p["bn1_mean"]) * s1 + p["bn1_beta"]
    s2 = p["bn2_gamma"] / jnp.sqrt(p["bn2_var"] + BN_EPS)
    t2 = (p["conv2_b"] - p["bn2_mean"]) * s2 + p["bn2_beta"]

    # conv1: per-height-tap (kh) blocks of shape (K*cin + 1, C); the extra row
    # (hit by the constant-1 column of xw) carries t1 on tap 0 only.
    w1t = (jnp.transpose(p["conv1_w"], (2, 3, 1, 0)).astype(f32) * s1)
    w1t = w1t.reshape(K, K * cin, C)
    bias_row = jnp.zeros((K, 1, C), f32).at[0, 0, :].set(t1)
    w1p = jnp.concatenate([w1t, bias_row], axis=1).astype(bf16)     # (K, TAPW, C)

    # conv2: K-packed (25*C, C) with tap-major rows, BN scale folded.
    w2t = (jnp.transpose(p["conv2_w"], (2, 3, 1, 0)).astype(f32) * s2)
    w2p = w2t.reshape(K * K * C, C).astype(bf16)

    # head weights: PyTorch (out, in) -> (in, out), zero-padded to lane multiples.
    f1w = jnp.pad(p["fc1_w"].T.astype(f32), ((0, 0), (0, NF_P - nfeat))).astype(bf16)
    f2w = jnp.pad(p["fc2_w"].T.astype(f32),
                  ((0, NF_P - nfeat), (0, NC_P - ncls))).astype(bf16)

    # Exact 0/1 selection: conv2 row space -> 4 pool phases (padded rows).
    sel2 = np.zeros((4 * PB, R2), np.float32)
    for di in range(2):
        for dj in range(2):
            for b in range(B):
                for p2 in range(PH2):
                    for q2 in range(PW2):
                        orow = (di * 2 + dj) * PB + b * PH2 * PW2 + p2 * PW2 + q2
                        irow = b * PW1 * H + (2 * q2 + dj) * H + 2 * (2 * p2 + di)
                        sel2[orow, irow] = 1.0
    avg = np.zeros((BPAD, PB), np.float32)
    for b in range(B):
        for j in range(PH2 * PW2):
            avg[b, b * PH2 * PW2 + j] = 1.0 / (PH2 * PW2)

    # All small constants packed into ONE f32 operand (fewer exposed DMAs).
    consts = jnp.zeros((CROWS, CW), f32)
    consts = consts.at[0:4 * PB, 0:R2].set(jnp.asarray(sel2))
    consts = consts.at[4 * PB:4 * PB + BPAD, 0:PB].set(jnp.asarray(avg))
    consts = consts.at[R_T2, 0:C].set(t2.astype(f32))
    consts = consts.at[R_F1B, 0:nfeat].set(p["fc1_b"].astype(f32))
    consts = consts.at[R_F2B, 0:ncls].set(p["fc2_b"].astype(f32))

    cfg = dict(B=B, H=H, W=W, K=K, cin=cin, C=C, OH1=OH1, OW1=OW1,
               PH1=PH1, PW1=PW1, PH2=PH2, PW2=PW2,
               NR1=NR1, R2=R2, XW_ROWS=XW_ROWS, Z1R=Z1R, SCR2=SCR2,
               TAPW=TAPW, PB=PB, BPAD=BPAD, NF_P=NF_P, NC_P=NC_P, CW=CW,
               R_T2=R_T2, R_F1B=R_F1B, R_F2B=R_F2B, ncls=ncls, nfeat=nfeat)
    ops = dict(w1p=w1p, w2p=w2p, f1w=f1w, f2w=f2w, consts=consts)
    return cfg, ops


# --------------------------------------------------------------------------
# Per-call glue: width-direction unfold only (tiny), everything else in-kernel
# --------------------------------------------------------------------------
def _conv1_width_patches(x_nchw, cfg):
    """NCHW -> width-unfolded rows, dj-phase-major, + constant-1 bias column.

    Row index = dj*(B*PW1*H) + b*(PW1*H) + q*H + i; columns = (kw, cin) flat.
    ~25 KiB for the default shapes (vs 147 KiB for a full im2col).
    """
    K, PW1, H = cfg["K"], cfg["PW1"], cfg["H"]
    x = jnp.transpose(x_nchw, (0, 2, 3, 1)).astype(jnp.float32)       # NHWC
    B, _, W, Cin = x.shape
    cols = [x[:, :, kw:kw + 2 * PW1, :] for kw in range(K)]           # (B,H,2PW1,Cin)
    xs = jnp.stack(cols, axis=3)                                      # (B,H,2PW1,K,Cin)
    xs = xs.reshape(B, H, PW1, 2, K * Cin)                            # j0 = 2q + dj
    xs = jnp.transpose(xs, (3, 0, 2, 1, 4))                           # (dj,B,PW1,H,KCin)
    xw = xs.reshape(cfg["NR1"], K * Cin)
    xw = jnp.concatenate([xw, jnp.ones((cfg["NR1"], 1), jnp.float32)], axis=1)
    return jnp.pad(xw, ((0, cfg["XW_ROWS"] - cfg["NR1"]), (0, 0)))


def convnet_unc_forward(x_nchw, cfg, ops):
    """Returns the padded (BPAD, NC_P) logits tile; slice [:B,:ncls] at the consumer."""
    xw = _conv1_width_patches(x_nchw, cfg)
    kernel = _build_fused_kernel(cfg)

    def full(shape):
        return pl.BlockSpec(shape, lambda i, n=len(shape): (0,) * n)

    in_arrays = (xw, ops["w1p"], ops["w2p"], ops["f1w"], ops["f2w"], ops["consts"])

    flops = 2 * (cfg["K"] * cfg["NR1"] * cfg["TAPW"] * cfg["C"]
                 + cfg["R2"] * cfg["K"] * cfg["K"] * cfg["C"] * cfg["C"]
                 + 4 * cfg["PB"] * cfg["R2"] * cfg["C"]
                 + cfg["BPAD"] * cfg["PB"] * cfg["C"]
                 + cfg["BPAD"] * cfg["C"] * cfg["NF_P"]
                 + cfg["BPAD"] * cfg["NF_P"] * cfg["NC_P"])
    bytes_accessed = (sum(int(np.prod(a.shape)) * a.dtype.itemsize for a in in_arrays)
                      + cfg["BPAD"] * cfg["NC_P"] * 4)

    return pl.pallas_call(
        kernel,
        out_shape=jax.ShapeDtypeStruct((cfg["BPAD"], cfg["NC_P"]), jnp.float32),
        grid=(1,),
        in_specs=[full(a.shape) for a in in_arrays],
        out_specs=full((cfg["BPAD"], cfg["NC_P"])),
        scratch_shapes=[
            pltpu.VMEM((cfg["Z1R"], cfg["C"]), jnp.float32),                    # conv1 out
            pltpu.VMEM((cfg["SCR2"], cfg["C"]), jnp.float32),                   # pooled1
            pltpu.VMEM((cfg["R2"], cfg["K"] * cfg["K"] * cfg["C"]), jnp.bfloat16),  # conv2 slab
        ],
        compiler_params=pltpu.CompilerParams(dimension_semantics=("arbitrary",)),
        cost_estimate=pl.CostEstimate(flops=int(flops), transcendentals=0,
                                      bytes_accessed=int(bytes_accessed)),
    )(*in_arrays)


# --------------------------------------------------------------------------
# Deterministic parameter init (shapes from ConvNetUNC.__init__, small dims)
# --------------------------------------------------------------------------
def init_params(key, c_in=3, hidden=32, n_feat=200, n_cls=10, k=5):
    ks = jax.random.split(key, 16)
    nrm = lambda kk, shp, s: s * jax.random.normal(kk, shp, jnp.float32)
    return {
        "conv1_w": nrm(ks[0], (hidden, c_in, k, k), 0.1),
        "conv1_b": nrm(ks[1], (hidden,), 0.05),
        "bn1_gamma": 1.0 + nrm(ks[2], (hidden,), 0.1),
        "bn1_beta": nrm(ks[3], (hidden,), 0.05),
        "bn1_mean": nrm(ks[4], (hidden,), 0.1),
        "bn1_var": 0.9 + 0.2 * jax.random.uniform(ks[5], (hidden,), jnp.float32),
        "conv2_w": nrm(ks[6], (hidden, hidden, k, k), 0.05),
        "conv2_b": nrm(ks[7], (hidden,), 0.05),
        "bn2_gamma": 1.0 + nrm(ks[8], (hidden,), 0.1),
        "bn2_beta": nrm(ks[9], (hidden,), 0.05),
        "bn2_mean": nrm(ks[10], (hidden,), 0.1),
        "bn2_var": 0.9 + 0.2 * jax.random.uniform(ks[11], (hidden,), jnp.float32),
        "fc1_w": nrm(ks[12], (n_feat, hidden), 0.1),
        "fc1_b": nrm(ks[13], (n_feat,), 0.05),
        "fc2_w": nrm(ks[14], (n_cls, n_feat), 0.1),
        "fc2_b": nrm(ks[15], (n_cls,), 0.05),
    }


# --------------------------------------------------------------------------
# Pure-JAX reference (lax.conv based) to validate the Pallas path
# --------------------------------------------------------------------------
def reference_forward(x_nchw, p):
    x = jnp.transpose(x_nchw, (0, 2, 3, 1))

    def block(x, w, b, g, beta, mean, var):
        w_hwio = jnp.transpose(w, (2, 3, 1, 0))
        z = jax.lax.conv_general_dilated(
            x, w_hwio, (1, 1), "VALID",
            dimension_numbers=("NHWC", "HWIO", "NHWC"))
        z = z + b[None, None, None, :]
        z = (z - mean) * (g / jnp.sqrt(var + BN_EPS)) + beta
        z = jnp.maximum(z, 0.0)
        B, H, W, C = z.shape
        z = z[:, :(H // 2) * 2, :(W // 2) * 2, :]
        return z.reshape(B, H // 2, 2, W // 2, 2, C).max(axis=(2, 4))

    out = block(x, p["conv1_w"], p["conv1_b"],
                p["bn1_gamma"], p["bn1_beta"], p["bn1_mean"], p["bn1_var"])
    out = block(out, p["conv2_w"], p["conv2_b"],
                p["bn2_gamma"], p["bn2_beta"], p["bn2_mean"], p["bn2_var"])
    pooled = out.mean(axis=(1, 2))
    h = jnp.maximum(pooled @ p["fc1_w"].T + p["fc1_b"], 0.0)
    return h @ p["fc2_w"].T + p["fc2_b"]


# --------------------------------------------------------------------------
if __name__ == "__main__":
    key = jax.random.PRNGKey(0)
    k_x, k_p = jax.random.split(key)

    # small shapes consistent with the module: batch=2, channels=3, 16x16 input,
    # hidden_dim=32, 200 head features, 10 classes
    B, C_IN, H, W = 2, 3, 16, 16
    HIDDEN, N_FEAT, N_CLS = 32, 200, 10

    x_nchw = jax.random.normal(k_x, (B, C_IN, H, W), jnp.float32)   # PyTorch layout
    params = init_params(k_p, c_in=C_IN, hidden=HIDDEN, n_feat=N_FEAT, n_cls=N_CLS)

    cfg, ops = prepare_params(params, (H, W), B)                    # one-time prep
    fwd = jax.jit(lambda x, o: convnet_unc_forward(x, cfg, o))

    logits_pad = jax.block_until_ready(fwd(x_nchw, ops))
    assert logits_pad.shape == (cfg["BPAD"], cfg["NC_P"]), logits_pad.shape
    # slice off the padding at the consumer, outside the hot path
    logits = np.asarray(logits_pad)[:B, :N_CLS]

    ref = jax.block_until_ready(reference_forward(x_nchw, params))
    # bf16 MXU operands with f32 accumulation; tolerance matches that choice.
    np.testing.assert_allclose(logits, np.asarray(ref), rtol=2e-2, atol=2e-2)

    print("KERNEL_OK")
</pallas_src>

<mosaic_0001>
module attributes {stable_mosaic.version = 11 : i64} {
  func.func @kernel(%arg0: i32, %arg1: memref<392x16xf32, #tpu.memory_space<vmem>>, %arg2: memref<5x16x32xbf16, #tpu.memory_space<vmem>>, %arg3: memref<800x32xbf16, #tpu.memory_space<vmem>>, %arg4: memref<32x256xbf16, #tpu.memory_space<vmem>>, %arg5: memref<256x128xbf16, #tpu.memory_space<vmem>>, %arg6: memref<48x256xf32, #tpu.memory_space<vmem>>, %arg7: memref<8x128xf32, #tpu.memory_space<vmem>>, %arg8: memref<392x32xf32, #tpu.memory_space<vmem>>, %arg9: memref<264x32xf32, #tpu.memory_space<vmem>>, %arg10: memref<192x800xbf16, #tpu.memory_space<vmem>>) attributes {dimension_semantics = [#tpu.dimension_semantics<arbitrary>], iteration_bounds = array<i64: 1>, scalar_prefetch = 0 : i64, scratch_operands = 3 : i64, tpu.core_type = #tpu.core_type<tc>, window_params = [{pipeline_mode = #tpu.pipeline_mode<synchronous>, transform_indices = @transform_0, window_bounds = array<i64: 392, 16>}, {pipeline_mode = #tpu.pipeline_mode<synchronous>, transform_indices = @transform_1, window_bounds = array<i64: 5, 16, 32>}, {pipeline_mode = #tpu.pipeline_mode<synchronous>, transform_indices = @transform_2, window_bounds = array<i64: 800, 32>}, {pipeline_mode = #tpu.pipeline_mode<synchronous>, transform_indices = @transform_3, window_bounds = array<i64: 32, 256>}, {pipeline_mode = #tpu.pipeline_mode<synchronous>, transform_indices = @transform_4, window_bounds = array<i64: 256, 128>}, {pipeline_mode = #tpu.pipeline_mode<synchronous>, transform_indices = @transform_5, window_bounds = array<i64: 48, 256>}, {pipeline_mode = #tpu.pipeline_mode<synchronous>, transform_indices = @transform_6, window_bounds = array<i64: 8, 128>}]} {
    %c0 = arith.constant 0 : index
    %c0_0 = arith.constant 0 : index
    %0 = vector.load %arg1[%c0, %c0_0] : memref<392x16xf32, #tpu.memory_space<vmem>>, vector<384x16xf32>
    %1 = arith.truncf %0 : vector<384x16xf32> to vector<384x16xbf16>
    %c0_1 = arith.constant 0 : index
    %c0_2 = arith.constant 0 : index
    %c0_3 = arith.constant 0 : index
    %2 = vector.load %arg2[%c0_1, %c0_2, %c0_3] : memref<5x16x32xbf16, #tpu.memory_space<vmem>>, vector<1x16x32xbf16>
    %3 = vector.shape_cast %2 : vector<1x16x32xbf16> to vector<16x32xbf16>
    %cst = arith.constant dense<0.000000e+00> : vector<384x32xf32>
    %4 = tpu.matmul %1, %3, %cst {dimension_numbers = #tpu.dot_dimension_numbers<[1], [0], [0], [1], [0, 0, 1, 1], [], []>} : vector<384x16xbf16>, vector<16x32xbf16>, vector<384x32xf32> -> vector<384x32xf32>
    %c1 = arith.constant 1 : index
    %c0_4 = arith.constant 0 : index
    %5 = vector.load %arg1[%c1, %c0_4] : memref<392x16xf32, #tpu.memory_space<vmem>>, vector<384x16xf32>
    %6 = arith.truncf %5 : vector<384x16xf32> to vector<384x16xbf16>
    %c1_5 = arith.constant 1 : index
    %c0_6 = arith.constant 0 : index
    %c0_7 = arith.constant 0 : index
    %7 = vector.load %arg2[%c1_5, %c0_6, %c0_7] : memref<5x16x32xbf16, #tpu.memory_space<vmem>>, vector<1x16x32xbf16>
    %8 = vector.shape_cast %7 : vector<1x16x32xbf16> to vector<16x32xbf16>
    %cst_8 = arith.constant dense<0.000000e+00> : vector<384x32xf32>
    %9 = tpu.matmul %6, %8, %cst_8 {dimension_numbers = #tpu.dot_dimension_numbers<[1], [0], [0], [1], [0, 0, 1, 1], [], []>} : vector<384x16xbf16>, vector<16x32xbf16>, vector<384x32xf32> -> vector<384x32xf32>
    %10 = arith.addf %4, %9 : vector<384x32xf32>
    %c2 = arith.constant 2 : index
    %c0_9 = arith.constant 0 : index
    %11 = vector.load %arg1[%c2, %c0_9] : memref<392x16xf32, #tpu.memory_space<vmem>>, vector<384x16xf32>
    %12 = arith.truncf %11 : vector<384x16xf32> to vector<384x16xbf16>
    %c2_10 = arith.constant 2 : index
    %c0_11 = arith.constant 0 : index
    %c0_12 = arith.constant 0 : index
    %13 = vector.load %arg2[%c2_10, %c0_11, %c0_12] : memref<5x16x32xbf16, #tpu.memory_space<vmem>>, vector<1x16x32xbf16>
    %14 = vector.shape_cast %13 : vector<1x16x32xbf16> to vector<16x32xbf16>
    %cst_13 = arith.constant dense<0.000000e+00> : vector<384x32xf32>
    %15 = tpu.matmul %12, %14, %cst_13 {dimension_numbers = #tpu.dot_dimension_numbers<[1], [0], [0], [1], [0, 0, 1, 1], [], []>} : vector<384x16xbf16>, vector<16x32xbf16>, vector<384x32xf32> -> vector<384x32xf32>
    %16 = arith.addf %10, %15 : vector<384x32xf32>
    %c3 = arith.constant 3 : index
    %c0_14 = arith.constant 0 : index
    %17 = vector.load %arg1[%c3, %c0_14] : memref<392x16xf32, #tpu.memory_space<vmem>>, vector<384x16xf32>
    %18 = arith.truncf %17 : vector<384x16xf32> to vector<384x16xbf16>
    %c3_15 = arith.constant 3 : index
    %c0_16 = arith.constant 0 : index
    %c0_17 = arith.constant 0 : index
    %19 = vector.load %arg2[%c3_15, %c0_16, %c0_17] : memref<5x16x32xbf16, #tpu.memory_space<vmem>>, vector<1x16x32xbf16>
    %20 = vector.shape_cast %19 : vector<1x16x32xbf16> to vector<16x32xbf16>
    %cst_18 = arith.constant dense<0.000000e+00> : vector<384x32xf32>
    %21 = tpu.matmul %18, %20, %cst_18 {dimension_numbers = #tpu.dot_dimension_numbers<[1], [0], [0], [1], [0, 0, 1, 1], [], []>} : vector<384x16xbf16>, vector<16x32xbf16>, vector<384x32xf32> -> vector<384x32xf32>
    %22 = arith.addf %16, %21 : vector<384x32xf32>
    %c4 = arith.constant 4 : index
    %c0_19 = arith.constant 0 : index
    %23 = vector.load %arg1[%c4, %c0_19] : memref<392x16xf32, #tpu.memory_space<vmem>>, vector<384x16xf32>
    %24 = arith.truncf %23 : vector<384x16xf32> to vector<384x16xbf16>
    %c4_20 = arith.constant 4 : index
    %c0_21 = arith.constant 0 : index
    %c0_22 = arith.constant 0 : index
    %25 = vector.load %arg2[%c4_20, %c0_21, %c0_22] : memref<5x16x32xbf16, #tpu.memory_space<vmem>>, vector<1x16x32xbf16>
    %26 = vector.shape_cast %25 : vector<1x16x32xbf16> to vector<16x32xbf16>
    %cst_23 = arith.constant dense<0.000000e+00> : vector<384x32xf32>
    %27 = tpu.matmul %24, %26, %cst_23 {dimension_numbers = #tpu.dot_dimension_numbers<[1], [0], [0], [1], [0, 0, 1, 1], [], []>} : vector<384x16xbf16>, vector<16x32xbf16>, vector<384x32xf32> -> vector<384x32xf32>
    %28 = arith.addf %22, %27 : vector<384x32xf32>
    %cst_24 = arith.constant 0.000000e+00 : f32
    %29 = vector.broadcast %cst_24 : f32 to vector<384x32xf32>
    %30 = arith.maximumf %28, %29 : vector<384x32xf32>
    %c0_25 = arith.constant 0 : index
    %c0_26 = arith.constant 0 : index
    %31 = vector.load %arg8[%c0_25, %c0_26] : memref<392x32xf32, #tpu.memory_space<vmem>>, vector<384x32xf32>
    tpu.vector_store %arg8[%c0_25, %c0_26], %30 {strides = array<i32>} : memref<392x32xf32, #tpu.memory_space<vmem>>, vector<384x32xf32>,
    %cst_27 = arith.constant 0.000000e+00 : f32
    %32 = vector.broadcast %cst_27 : f32 to vector<8x32xf32>
    %c384 = arith.constant 384 : index
    %c0_28 = arith.constant 0 : index
    %33 = vector.load %arg8[%c384, %c0_28] : memref<392x32xf32, #tpu.memory_space<vmem>>, vector<8x32xf32>
    tpu.vector_store %arg8[%c384, %c0_28], %32 {strides = array<i32>} : memref<392x32xf32, #tpu.memory_space<vmem>>, vector<8x32xf32>,
    %c0_29 = arith.constant 0 : index
    %c0_30 = arith.constant 0 : index
    %34 = vector.load %arg8[%c0_29, %c0_30] : memref<392x32xf32, #tpu.memory_space<vmem>>, vector<384x32xf32>
    %c1_31 = arith.constant 1 : index
    %c0_32 = arith.constant 0 : index
    %35 = vector.load %arg8[%c1_31, %c0_32] : memref<392x32xf32, #tpu.memory_space<vmem>>, vector<384x32xf32>
    %36 = arith.maximumf %34, %35 : vector<384x32xf32>
    %37 = vector.extract_strided_slice %36 {offsets = [0, 0], sizes = [192, 32], strides = [1, 1]} : vector<384x32xf32> to vector<192x32xf32>
    %38 = vector.extract_strided_slice %36 {offsets = [192, 0], sizes = [192, 32], strides = [1, 1]} : vector<384x32xf32> to vector<192x32xf32>
    %39 = arith.maximumf %37, %38 : vector<192x32xf32>
    %c0_33 = arith.constant 0 : index
    %c0_34 = arith.constant 0 : index
    %40 = vector.load %arg9[%c0_33, %c0_34] : memref<264x32xf32, #tpu.memory_space<vmem>>, vector<192x32xf32>
    tpu.vector_store %arg9[%c0_33, %c0_34], %39 {strides = array<i32>} : memref<264x32xf32, #tpu.memory_space<vmem>>, vector<192x32xf32>,
    %cst_35 = arith.constant 0.000000e+00 : f32
    %41 = vector.broadcast %cst_35 : f32 to vector<72x32xf32>
    %c192 = arith.constant 192 : index
    %c0_36 = arith.constant 0 : index
    %42 = vector.load %arg9[%c192, %c0_36] : memref<264x32xf32, #tpu.memory_space<vmem>>, vector<72x32xf32>
    tpu.vector_store %arg9[%c192, %c0_36], %41 {strides = array<i32>} : memref<264x32xf32, #tpu.memory_space<vmem>>, vector<72x32xf32>,
    %c0_37 = arith.constant 0 : index
    %c0_38 = arith.constant 0 : index
    %43 = vector.load %arg9[%c0_37, %c0_38] : memref<264x32xf32, #tpu.memory_space<vmem>>, vector<192x32xf32>
    %44 = arith.truncf %43 : vector<192x32xf32> to vector<192x32xbf16>
    %c0_39 = arith.constant 0 : index
    %c0_40 = arith.constant 0 : index
    %45 = vector.load %arg10[%c0_39, %c0_40] : memref<192x800xbf16, #tpu.memory_space<vmem>>, vector<192x32xbf16>
    tpu.vector_store %arg10[%c0_39, %c0_40], %44 {strides = array<i32>} : memref<192x800xbf16, #tpu.memory_space<vmem>>, vector<192x32xbf16>,
    %c16 = arith.constant 16 : index
    %c0_41 = arith.constant 0 : index
    %46 = vector.load %arg9[%c16, %c0_41] : memref<264x32xf32, #tpu.memory_space<vmem>>, vector<192x32xf32>
    %47 = arith.truncf %46 : vector<192x32xf32> to vector<192x32xbf16>
    %c0_42 = arith.constant 0 : index
    %c32 = arith.constant 32 : index
    %48 = vector.load %arg10[%c0_42, %c32] : memref<192x800xbf16, #tpu.memory_space<vmem>>, vector<192x32xbf16>
    tpu.vector_store %arg10[%c0_42, %c32], %47 {strides = array<i32>} : memref<192x800xbf16, #tpu.memory_space<vmem>>, vector<192x32xbf16>,
    %c32_43 = arith.constant 32 : index
    %c0_44 = arith.constant 0 : index
    %49 = vector.load %arg9[%c32_43, %c0_44] : memref<264x32xf32, #tpu.memory_space<vmem>>, vector<192x32xf32>
    %50 = arith.truncf %49 : vector<192x32xf32> to vector<192x32xbf16>
    %c0_45 = arith.constant 0 : index
    %c64 = arith.constant 64 : index
    %51 = vector.load %arg10[%c0_45, %c64] : memref<192x800xbf16, #tpu.memory_space<vmem>>, vector<192x32xbf16>
    tpu.vector_store %arg10[%c0_45, %c64], %50 {strides = array<i32>} : memref<192x800xbf16, #tpu.memory_space<vmem>>, vector<192x32xbf16>,
    %c48 = arith.constant 48 : index
    %c0_46 = arith.constant 0 : index
    %52 = vector.load %arg9[%c48, %c0_46] : memref<264x32xf32, #tpu.memory_space<vmem>>, vector<192x32xf32>
    %53 = arith.truncf %52 : vector<192x32xf32> to vector<192x32xbf16>
    %c0_47 = arith.constant 0 : index
    %c96 = arith.constant 96 : index
    %54 = vector.load %arg10[%c0_47, %c96] : memref<192x800xbf16, #tpu.memory_space<vmem>>, vector<192x32xbf16>
    tpu.vector_store %arg10[%c0_47, %c96], %53 {strides = array<i32>} : memref<192x800xbf16, #tpu.memory_space<vmem>>, vector<192x32xbf16>,
    %c64_48 = arith.constant 64 : index
    %c0_49 = arith.constant 0 : index
    %55 = vector.load %arg9[%c64_48, %c0_49] : memref<264x32xf32, #tpu.memory_space<vmem>>, vector<192x32xf32>
    %56 = arith.truncf %55 : vector<192x32xf32> to vector<192x32xbf16>
    %c0_50 = arith.constant 0 : index
    %c128 = arith.constant 128 : index
    %57 = vector.load %arg10[%c0_50, %c128] : memref<192x800xbf16, #tpu.memory_space<vmem>>, vector<192x32xbf16>
    tpu.vector_store %arg10[%c0_50, %c128], %56 {strides = array<i32>} : memref<192x800xbf16, #tpu.memory_space<vmem>>, vector<192x32xbf16>,
    %c2_51 = arith.constant 2 : index
    %c0_52 = arith.constant 0 : index
    %58 = vector.load %arg9[%c2_51, %c0_52] : memref<264x32xf32, #tpu.memory_space<vmem>>, vector<192x32xf32>
    %59 = arith.truncf %58 : vector<192x32xf32> to vector<192x32xbf16>
    %c0_53 = arith.constant 0 : index
    %c160 = arith.constant 160 : index
    %60 = vector.load %arg10[%c0_53, %c160] : memref<192x800xbf16, #tpu.memory_space<vmem>>, vector<192x32xbf16>
    tpu.vector_store %arg10[%c0_53, %c160], %59 {strides = array<i32>} : memref<192x800xbf16, #tpu.memory_space<vmem>>, vector<192x32xbf16>,
    %c18 = arith.constant 18 : index
    %c0_54 = arith.constant 0 : index
    %61 = vector.load %arg9[%c18, %c0_54] : memref<264x32xf32, #tpu.memory_space<vmem>>, vector<192x32xf32>
    %62 = arith.truncf %61 : vector<192x32xf32> to vector<192x32xbf16>
    %c0_55 = arith.constant 0 : index
    %c192_56 = arith.constant 192 : index
    %63 = vector.load %arg10[%c0_55, %c192_56] : memref<192x800xbf16, #tpu.memory_space<vmem>>, vector<192x32xbf16>
    tpu.vector_store %arg10[%c0_55, %c192_56], %62 {strides = array<i32>} : memref<192x800xbf16, #tpu.memory_space<vmem>>, vector<192x32xbf16>,
    %c34 = arith.constant 34 : index
    %c0_57 = arith.constant 0 : index
    %64 = vector.load %arg9[%c34, %c0_57] : memref<264x32xf32, #tpu.memory_space<vmem>>, vector<192x32xf32>
    %65 = arith.truncf %64 : vector<192x32xf32> to vector<192x32xbf16>
    %c0_58 = arith.constant 0 : index
    %c224 = arith.constant 224 : index
    %66 = vector.load %arg10[%c0_58, %c224] : memref<192x800xbf16, #tpu.memory_space<vmem>>, vector<192x32xbf16>
    tpu.vector_store %arg10[%c0_58, %c224], %65 {strides = array<i32>} : memref<192x800xbf16, #tpu.memory_space<vmem>>, vector<192x32xbf16>,
    %c50 = arith.constant 50 : index
    %c0_59 = arith.constant 0 : index
    %67 = vector.load %arg9[%c50, %c0_59] : memref<264x32xf32, #tpu.memory_space<vmem>>, vector<192x32xf32>
    %68 = arith.truncf %67 : vector<192x32xf32> to vector<192x32xbf16>
    %c0_60 = arith.constant 0 : index
    %c256 = arith.constant 256 : index
    %69 = vector.load %arg10[%c0_60, %c256] : memref<192x800xbf16, #tpu.memory_space<vmem>>, vector<192x32xbf16>
    tpu.vector_store %arg10[%c0_60, %c256], %68 {strides = array<i32>} : memref<192x800xbf16, #tpu.memory_space<vmem>>, vector<192x32xbf16>,
    %c66 = arith.constant 66 : index
    %c0_61 = arith.constant 0 : index
    %70 = vector.load %arg9[%c66, %c0_61] : memref<264x32xf32, #tpu.memory_space<vmem>>, vector<192x32xf32>
    %71 = arith.truncf %70 : vector<192x32xf32> to vector<192x32xbf16>
    %c0_62 = arith.constant 0 : index
    %c288 = arith.constant 288 : index
    %72 = vector.load %arg10[%c0_62, %c288] : memref<192x800xbf16, #tpu.memory_space<vmem>>, vector<192x32xbf16>
    tpu.vector_store %arg10[%c0_62, %c288], %71 {strides = array<i32>} : memref<192x800xbf16, #tpu.memory_space<vmem>>, vector<192x32xbf16>,
    %c4_63 = arith.constant 4 : index
    %c0_64 = arith.constant 0 : index
    %73 = vector.load %arg9[%c4_63, %c0_64] : memref<264x32xf32, #tpu.memory_space<vmem>>, vector<192x32xf32>
    %74 = arith.truncf %73 : vector<192x32xf32> to vector<192x32xbf16>
    %c0_65 = arith.constant 0 : index
    %c320 = arith.constant 320 : index
    %75 = vector.load %arg10[%c0_65, %c320] : memref<192x800xbf16, #tpu.memory_space<vmem>>, vector<192x32xbf16>
    tpu.vector_store %arg10[%c0_65, %c320], %74 {strides = array<i32>} : memref<192x800xbf16, #tpu.memory_space<vmem>>, vector<192x32xbf16>,
    %c20 = arith.constant 20 : index
    %c0_66 = arith.constant 0 : index
    %76 = vector.load %arg9[%c20, %c0_66] : memref<264x32xf32, #tpu.memory_space<vmem>>, vector<192x32xf32>
    %77 = arith.truncf %76 : vector<192x32xf32> to vector<192x32xbf16>
    %c0_67 = arith.constant 0 : index
    %c352 = arith.constant 352 : index
    %78 = vector.load %arg10[%c0_67, %c352] : memref<192x800xbf16, #tpu.memory_space<vmem>>, vector<192x32xbf16>
    tpu.vector_store %arg10[%c0_67, %c352], %77 {strides = array<i32>} : memref<192x800xbf16, #tpu.memory_space<vmem>>, vector<192x32xbf16>,
    %c36 = arith.constant 36 : index
    %c0_68 = arith.constant 0 : index
    %79 = vector.load %arg9[%c36, %c0_68] : memref<264x32xf32, #tpu.memory_space<vmem>>, vector<192x32xf32>
    %80 = arith.truncf %79 : vector<192x32xf32> to vector<192x32xbf16>
    %c0_69 = arith.constant 0 : index
    %c384_70 = arith.constant 384 : index
    %81 = vector.load %arg10[%c0_69, %c384_70] : memref<192x800xbf16, #tpu.memory_space<vmem>>, vector<192x32xbf16>
    tpu.vector_store %arg10[%c0_69, %c384_70], %80 {strides = array<i32>} : memref<192x800xbf16, #tpu.memory_space<vmem>>, vector<192x32xbf16>,
    %c52 = arith.constant 52 : index
    %c0_71 = arith.constant 0 : index
    %82 = vector.load %arg9[%c52, %c0_71] : memref<264x32xf32, #tpu.memory_space<vmem>>, vector<192x32xf32>
    %83 = arith.truncf %82 : vector<192x32xf32> to vector<192x32xbf16>
    %c0_72 = arith.constant 0 : index
    %c416 = arith.constant 416 : index
    %84 = vector.load %arg10[%c0_72, %c416] : memref<192x800xbf16, #tpu.memory_space<vmem>>, vector<192x32xbf16>
    tpu.vector_store %arg10[%c0_72, %c416], %83 {strides = array<i32>} : memref<192x800xbf16, #tpu.memory_space<vmem>>, vector<192x32xbf16>,
    %c68 = arith.constant 68 : index
    %c0_73 = arith.constant 0 : index
    %85 = vector.load %arg9[%c68, %c0_73] : memref<264x32xf32, #tpu.memory_space<vmem>>, vector<192x32xf32>
    %86 = arith.truncf %85 : vector<192x32xf32> to vector<192x32xbf16>
    %c0_74 = arith.constant 0 : index
    %c448 = arith.constant 448 : index
    %87 = vector.load %arg10[%c0_74, %c448] : memref<192x800xbf16, #tpu.memory_space<vmem>>, vector<192x32xbf16>
    tpu.vector_store %arg10[%c0_74, %c448], %86 {strides = array<i32>} : memref<192x800xbf16, #tpu.memory_space<vmem>>, vector<192x32xbf16>,
    %c6 = arith.constant 6 : index
    %c0_75 = arith.constant 0 : index
    %88 = vector.load %arg9[%c6, %c0_75] : memref<264x32xf32, #tpu.memory_space<vmem>>, vector<192x32xf32>
    %89 = arith.truncf %88 : vector<192x32xf32> to vector<192x32xbf16>
    %c0_76 = arith.constant 0 : index
    %c480 = arith.constant 480 : index
    %90 = vector.load %arg10[%c0_76, %c480] : memref<192x800xbf16, #tpu.memory_space<vmem>>, vector<192x32xbf16>
    tpu.vector_store %arg10[%c0_76, %c480], %89 {strides = array<i32>} : memref<192x800xbf16, #tpu.memory_space<vmem>>, vector<192x32xbf16>,
    %c22 = arith.constant 22 : index
    %c0_77 = arith.constant 0 : index
    %91 = vector.load %arg9[%c22, %c0_77] : memref<264x32xf32, #tpu.memory_space<vmem>>, vector<192x32xf32>
    %92 = arith.truncf %91 : vector<192x32xf32> to vector<192x32xbf16>
    %c0_78 = arith.constant 0 : index
    %c512 = arith.constant 512 : index
    %93 = vector.load %arg10[%c0_78, %c512] : memref<192x800xbf16, #tpu.memory_space<vmem>>, vector<192x32xbf16>
    tpu.vector_store %arg10[%c0_78, %c512], %92 {strides = array<i32>} : memref<192x800xbf16, #tpu.memory_space<vmem>>, vector<192x32xbf16>,
    %c38 = arith.constant 38 : index
    %c0_79 = arith.constant 0 : index
    %94 = vector.load %arg9[%c38, %c0_79] : memref<264x32xf32, #tpu.memory_space<vmem>>, vector<192x32xf32>
    %95 = arith.truncf %94 : vector<192x32xf32> to vector<192x32xbf16>
    %c0_80 = arith.constant 0 : index
    %c544 = arith.constant 544 : index
    %96 = vector.load %arg10[%c0_80, %c544] : memref<192x800xbf16, #tpu.memory_space<vmem>>, vector<192x32xbf16>
    tpu.vector_store %arg10[%c0_80, %c544], %95 {strides = array<i32>} : memref<192x800xbf16, #tpu.memory_space<vmem>>, vector<192x32xbf16>,
    %c54 = arith.constant 54 : index
    %c0_81 = arith.constant 0 : index
    %97 = vector.load %arg9[%c54, %c0_81] : memref<264x32xf32, #tpu.memory_space<vmem>>, vector<192x32xf32>
    %98 = arith.truncf %97 : vector<192x32xf32> to vector<192x32xbf16>
    %c0_82 = arith.constant 0 : index
    %c576 = arith.constant 576 : index
    %99 = vector.load %arg10[%c0_82, %c576] : memref<192x800xbf16, #tpu.memory_space<vmem>>, vector<192x32xbf16>
    tpu.vector_store %arg10[%c0_82, %c576], %98 {strides = array<i32>} : memref<192x800xbf16, #tpu.memory_space<vmem>>, vector<192x32xbf16>,
    %c70 = arith.constant 70 : index
    %c0_83 = arith.constant 0 : index
    %100 = vector.load %arg9[%c70, %c0_83] : memref<264x32xf32, #tpu.memory_space<vmem>>, vector<192x32xf32>
    %101 = arith.truncf %100 : vector<192x32xf32> to vector<192x32xbf16>
    %c0_84 = arith.constant 0 : index
    %c608 = arith.constant 608 : index
    %102 = vector.load %arg10[%c0_84, %c608] : memref<192x800xbf16, #tpu.memory_space<vmem>>, vector<192x32xbf16>
    tpu.vector_store %arg10[%c0_84, %c608], %101 {strides = array<i32>} : memref<192x800xbf16, #tpu.memory_space<vmem>>, vector<192x32xbf16>,
    %c8 = arith.constant 8 : index
    %c0_85 = arith.constant 0 : index
    %103 = vector.load %arg9[%c8, %c0_85] : memref<264x32xf32, #tpu.memory_space<vmem>>, vector<192x32xf32>
    %104 = arith.truncf %103 : vector<192x32xf32> to vector<192x32xbf16>
    %c0_86 = arith.constant 0 : index
    %c640 = arith.constant 640 : index
    %105 = vector.load %arg10[%c0_86, %c640] : memref<192x800xbf16, #tpu.memory_space<vmem>>, vector<192x32xbf16>
    tpu.vector_store %arg10[%c0_86, %c640], %104 {strides = array<i32>} : memref<192x800xbf16, #tpu.memory_space<vmem>>, vector<192x32xbf16>,
    %c24 = arith.constant 24 : index
    %c0_87 = arith.constant 0 : index
    %106 = vector.load %arg9[%c24, %c0_87] : memref<264x32xf32, #tpu.memory_space<vmem>>, vector<192x32xf32>
    %107 = arith.truncf %106 : vector<192x32xf32> to vector<192x32xbf16>
    %c0_88 = arith.constant 0 : index
    %c672 = arith.constant 672 : index
    %108 = vector.load %arg10[%c0_88, %c672] : memref<192x800xbf16, #tpu.memory_space<vmem>>, vector<192x32xbf16>
    tpu.vector_store %arg10[%c0_88, %c672], %107 {strides = array<i32>} : memref<192x800xbf16, #tpu.memory_space<vmem>>, vector<192x32xbf16>,
    %c40 = arith.constant 40 : index
    %c0_89 = arith.constant 0 : index
    %109 = vector.load %arg9[%c40, %c0_89] : memref<264x32xf32, #tpu.memory_space<vmem>>, vector<192x32xf32>
    %110 = arith.truncf %109 : vector<192x32xf32> to vector<192x32xbf16>
    %c0_90 = arith.constant 0 : index
    %c704 = arith.constant 704 : index
    %111 = vector.load %arg10[%c0_90, %c704] : memref<192x800xbf16, #tpu.memory_space<vmem>>, vector<192x32xbf16>
    tpu.vector_store %arg10[%c0_90, %c704], %110 {strides = array<i32>} : memref<192x800xbf16, #tpu.memory_space<vmem>>, vector<192x32xbf16>,
    %c56 = arith.constant 56 : index
    %c0_91 = arith.constant 0 : index
    %112 = vector.load %arg9[%c56, %c0_91] : memref<264x32xf32, #tpu.memory_space<vmem>>, vector<192x32xf32>
    %113 = arith.truncf %112 : vector<192x32xf32> to vector<192x32xbf16>
    %c0_92 = arith.constant 0 : index
    %c736 = arith.constant 736 : index
    %114 = vector.load %arg10[%c0_92, %c736] : memref<192x800xbf16, #tpu.memory_space<vmem>>, vector<192x32xbf16>
    tpu.vector_store %arg10[%c0_92, %c736], %113 {strides = array<i32>} : memref<192x800xbf16, #tpu.memory_space<vmem>>, vector<192x32xbf16>,
    %c72 = arith.constant 72 : index
    %c0_93 = arith.constant 0 : index
    %115 = vector.load %arg9[%c72, %c0_93] : memref<264x32xf32, #tpu.memory_space<vmem>>, vector<192x32xf32>
    %116 = arith.truncf %115 : vector<192x32xf32> to vector<192x32xbf16>
    %c0_94 = arith.constant 0 : index
    %c768 = arith.constant 768 : index
    %117 = vector.load %arg10[%c0_94, %c768] : memref<192x800xbf16, #tpu.memory_space<vmem>>, vector<192x32xbf16>
    tpu.vector_store %arg10[%c0_94, %c768], %116 {strides = array<i32>} : memref<192x800xbf16, #tpu.memory_space<vmem>>, vector<192x32xbf16>,
    %c40_95 = arith.constant 40 : index
    %c0_96 = arith.constant 0 : index
    %118 = vector.load %arg6[%c40_95, %c0_96] : memref<48x256xf32, #tpu.memory_space<vmem>>, vector<1x32xf32>
    %c0_97 = arith.constant 0 : index
    %c0_98 = arith.constant 0 : index
    %119 = vector.load %arg10[%c0_97, %c0_98] : memref<192x800xbf16, #tpu.memory_space<vmem>>, vector<192x800xbf16>
    %c0_99 = arith.constant 0 : index
    %c0_100 = arith.constant 0 : index
    %120 = vector.load %arg3[%c0_99, %c0_100] : memref<800x32xbf16, #tpu.memory_space<vmem>>, vector<800x32xbf16>
    %cst_101 = arith.constant dense<0.000000e+00> : vector<192x32xf32>
    %121 = tpu.matmul %119, %120, %cst_101 {dimension_numbers = #tpu.dot_dimension_numbers<[1], [0], [0], [1], [0, 0, 1, 1], [], []>} : vector<192x800xbf16>, vector<800x32xbf16>, vector<192x32xf32> -> vector<192x32xf32>
    %122 = vector.broadcast %118 : vector<1x32xf32> to vector<192x32xf32>
    %123 = arith.addf %121, %122 : vector<192x32xf32>
    %cst_102 = arith.constant 0.000000e+00 : f32
    %124 = vector.broadcast %cst_102 : f32 to vector<192x32xf32>
    %125 = arith.maximumf %123, %124 : vector<192x32xf32>
    %c0_103 = arith.constant 0 : index
    %c0_104 = arith.constant 0 : index
    %126 = vector.load %arg6[%c0_103, %c0_104] : memref<48x256xf32, #tpu.memory_space<vmem>>, vector<32x192xf32>
    %cst_105 = arith.constant dense<0.000000e+00> : vector<32x32xf32>
    %127 = tpu.matmul %126, %125, %cst_105 {dimension_numbers = #tpu.dot_dimension_numbers<[1], [0], [0], [1], [0, 0, 1, 1], [], []>} : vector<32x192xf32>, vector<192x32xf32>, vector<32x32xf32> -> vector<32x32xf32>
    %128 = vector.extract_strided_slice %127 {offsets = [0, 0], sizes = [8, 32], strides = [1, 1]} : vector<32x32xf32> to vector<8x32xf32>
    %129 = vector.extract_strided_slice %127 {offsets = [8, 0], sizes = [8, 32], strides = [1, 1]} : vector<32x32xf32> to vector<8x32xf32>
    %130 = arith.maximumf %128, %129 : vector<8x32xf32>
    %131 = vector.extract_strided_slice %127 {offsets = [16, 0], sizes = [8, 32], strides = [1, 1]} : vector<32x32xf32> to vector<8x32xf32>
    %132 = vector.extract_strided_slice %127 {offsets = [24, 0], sizes = [8, 32], strides = [1, 1]} : vector<32x32xf32> to vector<8x32xf32>
    %133 = arith.maximumf %131, %132 : vector<8x32xf32>
    %134 = arith.maximumf %130, %133 : vector<8x32xf32>
    %c32_106 = arith.constant 32 : index
    %c0_107 = arith.constant 0 : index
    %135 = vector.load %arg6[%c32_106, %c0_107] : memref<48x256xf32, #tpu.memory_space<vmem>>, vector<8x8xf32>
    %cst_108 = arith.constant dense<0.000000e+00> : vector<8x32xf32>
    %136 = tpu.matmul %135, %134, %cst_108 {dimension_numbers = #tpu.dot_dimension_numbers<[1], [0], [0], [1], [0, 0, 1, 1], [], []>} : vector<8x8xf32>, vector<8x32xf32>, vector<8x32xf32> -> vector<8x32xf32>
    %c41 = arith.constant 41 : index
    %c0_109 = arith.constant 0 : index
    %137 = vector.load %arg6[%c41, %c0_109] : memref<48x256xf32, #tpu.memory_space<vmem>>, vector<1x256xf32>
    %c42 = arith.constant 42 : index
    %c0_110 = arith.constant 0 : index
    %138 = vector.load %arg6[%c42, %c0_110] : memref<48x256xf32, #tpu.memory_space<vmem>>, vector<1x128xf32>
    %139 = arith.truncf %136 : vector<8x32xf32> to vector<8x32xbf16>
    %c0_111 = arith.constant 0 : index
    %c0_112 = arith.constant 0 : index
    %140 = vector.load %arg4[%c0_111, %c0_112] : memref<32x256xbf16, #tpu.memory_space<vmem>>, vector<32x256xbf16>
    %cst_113 = arith.constant dense<0.000000e+00> : vector<8x256xf32>
    %141 = tpu.matmul %139, %140, %cst_113 {dimension_numbers = #tpu.dot_dimension_numbers<[1], [0], [0], [1], [0, 0, 1, 1], [], []>} : vector<8x32xbf16>, vector<32x256xbf16>, vector<8x256xf32> -> vector<8x256xf32>
    %142 = vector.broadcast %137 : vector<1x256xf32> to vector<8x256xf32>
    %143 = arith.addf %141, %142 : vector<8x256xf32>
    %cst_114 = arith.constant 0.000000e+00 : f32
    %144 = vector.broadcast %cst_114 : f32 to vector<8x256xf32>
    %145 = arith.maximumf %143, %144 : vector<8x256xf32>
    %146 = arith.truncf %145 : vector<8x256xf32> to vector<8x256xbf16>
    %c0_115 = arith.constant 0 : index
    %c0_116 = arith.constant 0 : index
    %147 = vector.load %arg5[%c0_115, %c0_116] : memref<256x128xbf16, #tpu.memory_space<vmem>>, vector<256x128xbf16>
    %cst_117 = arith.constant dense<0.000000e+00> : vector<8x128xf32>
    %148 = tpu.matmul %146, %147, %cst_117 {dimension_numbers = #tpu.dot_dimension_numbers<[1], [0], [0], [1], [0, 0, 1, 1], [], []>} : vector<8x256xbf16>, vector<256x128xbf16>, vector<8x128xf32> -> vector<8x128xf32>
    %149 = vector.broadcast %138 : vector<1x128xf32> to vector<8x128xf32>
    %150 = arith.addf %148, %149 : vector<8x128xf32>
    %c0_118 = arith.constant 0 : index
    %c0_119 = arith.constant 0 : index
    %151 = vector.load %arg7[%c0_118, %c0_119] : memref<8x128xf32, #tpu.memory_space<vmem>>, vector<8x128xf32>
    tpu.vector_store %arg7[%c0_118, %c0_119], %150 {strides = array<i32>} : memref<8x128xf32, #tpu.memory_space<vmem>>, vector<8x128xf32>,
    return
  }
  func.func @transform_0(%arg0: i32) -> (i32, i32) {
    %c0_i32 = arith.constant 0 : i32
    %c0_i32_0 = arith.constant 0 : i32
    %c0_i32_1 = arith.constant 0 : i32
    return %c0_i32, %c0_i32_0 : i32, i32
  }
  func.func @transform_1(%arg0: i32) -> (i32, i32, i32) {
    %c0_i32 = arith.constant 0 : i32
    %c0_i32_0 = arith.constant 0 : i32
    %c0_i32_1 = arith.constant 0 : i32
    %c0_i32_2 = arith.constant 0 : i32
    return %c0_i32, %c0_i32_0, %c0_i32_1 : i32, i32, i32
  }
  func.func @transform_2(%arg0: i32) -> (i32, i32) {
    %c0_i32 = arith.constant 0 : i32
    %c0_i32_0 = arith.constant 0 : i32
    %c0_i32_1 = arith.constant 0 : i32
    return %c0_i32, %c0_i32_0 : i32, i32
  }
  func.func @transform_3(%arg0: i32) -> (i32, i32) {
    %c0_i32 = arith.constant 0 : i32
    %c0_i32_0 = arith.constant 0 : i32
    %c0_i32_1 = arith.constant 0 : i32
    return %c0_i32, %c0_i32_0 : i32, i32
  }
  func.func @transform_4(%arg0: i32) -> (i32, i32) {
    %c0_i32 = arith.constant 0 : i32
    %c0_i32_0 = arith.constant 0 : i32
    %c0_i32_1 = arith.constant 0 : i32
    return %c0_i32, %c0_i32_0 : i32, i32
  }
  func.func @transform_5(%arg0: i32) -> (i32, i32) {
    %c0_i32 = arith.constant 0 : i32
    %c0_i32_0 = arith.constant 0 : i32
    %c0_i32_1 = arith.constant 0 : i32
    return %c0_i32, %c0_i32_0 : i32, i32
  }
  func.func @transform_6(%arg0: i32) -> (i32, i32) {
    %c0_i32 = arith.constant 0 : i32
    %c0_i32_0 = arith.constant 0 : i32
    %c0_i32_1 = arith.constant 0 : i32
    return %c0_i32, %c0_i32_0 : i32, i32
  }
}

</mosaic_0001>

<llo_original>
// kernel: _lambda_.1
$region0: #{_lambda_.1}
  #allocation0 [shape = 'u32[]', space=smem, size = 0x4, offset = 0x4, fixed_abs, tag = 'smem constant byte address 0x4 - core index']
  #allocation1 [shape = 'u32[144,128]{1,0:T(1,128)}', space=vmem, size = 0x12000, scoped, tag = 'internal scratch']
  #allocation2 [shape = 'f32[392,32]{1,0:T(8,128)}', space=vmem, size = 0x31000, scoped, tag = 'scratch operand']
  #allocation3 [shape = 'f32[264,32]{1,0:T(8,128)}', space=vmem, size = 0x21000, scoped, tag = 'scratch operand']
  #allocation4 [shape = 'bf16[192,800]{1,0:T(16,128)(2,1)}', space=vmem, size = 0x54000, scoped, tag = 'scratch operand']
  %s0 = inlined_call_operand.vmem [shape: f32[392,16], index: 0, kind: input, shape index: {}]
  %s1 = inlined_call_operand.vmem [shape: bf16[5,16,32], index: 1, kind: input, shape index: {}]
  %s2 = inlined_call_operand.vmem [shape: bf16[800,32], index: 2, kind: input, shape index: {}]
  %s3 = inlined_call_operand.vmem [shape: bf16[32,256], index: 3, kind: input, shape index: {}]
  %s4 = inlined_call_operand.vmem [shape: bf16[256,128], index: 4, kind: input, shape index: {}]
  %s5 = inlined_call_operand.vmem [shape: f32[48,256], index: 5, kind: input, shape index: {}]
  %s6 = inlined_call_operand.hbm [shape: f32[8,128], index: 6, kind: output, shape index: {}]
  %s7 = sld [smem:[#allocation0]]
  $region34: #{_lambda_.1} parent=0
    _
  %s9 = ssub.s32 1, %s7
  %s10 = scalar_select 0, %s9, %s7
  $region1: #{_lambda_.1} parent=0
    #allocation5 [shape = 'u8[4096]{0}', space=vmem, size = 0x1000, scoped, tag = 'output window, operand 0, single buffered']
    #allocation6 [shape = 's32[1]{0}', space=sflag, size = 0x4, scoped, tag = 'scoped memory for _lambda_.1']
    %11 = vsyncpa [#allocation6], 0
    // Predicated region
    $region2: #{_lambda_.1} parent=1 // pred_check
      _
    $region3: #{_lambda_.1} parent=1 // pred_check_branch
      %13 = sbr.rel (0) target = $region5
    $region4: #{_lambda_.1} parent=1 // pred_region
      _
    $region5: #{_lambda_.1} parent=1 // pred_fallthru
      _
    // Predicated region
    $region6: #{_lambda_.1} parent=1 // pred_check
      _
    $region7: #{_lambda_.1} parent=1 // pred_check_branch
      %15 = sbr.rel (0) target = $region9
    $region8: #{_lambda_.1} parent=1 // pred_region
      _
    $region9: #{_lambda_.1} parent=1 // pred_fallthru
      _
    // Predicated region
    $region10: #{_lambda_.1} parent=1 // pred_check
      _
    $region11: #{_lambda_.1} parent=1 // pred_check_branch
      %17 = sbr.rel (0) target = $region13
    $region12: #{_lambda_.1} parent=1 // pred_region
      _
    $region13: #{_lambda_.1} parent=1 // pred_fallthru
      _
    // Predicated region
    $region14: #{_lambda_.1} parent=1 // pred_check
      _
    $region15: #{_lambda_.1} parent=1 // pred_check_branch
      %19 = sbr.rel (0) target = $region17
    $region16: #{_lambda_.1} parent=1 // pred_region
      _
    $region17: #{_lambda_.1} parent=1 // pred_fallthru
      _
    // Predicated region
    $region18: #{_lambda_.1} parent=1 // pred_check
      _
    $region19: #{_lambda_.1} parent=1 // pred_check_branch
      %21 = sbr.rel (0) target = $region21
    $region20: #{_lambda_.1} parent=1 // pred_region
      _
    $region21: #{_lambda_.1} parent=1 // pred_fallthru
      _
    // Predicated region
    $region22: #{_lambda_.1} parent=1 // pred_check
      _
    $region23: #{_lambda_.1} parent=1 // pred_check_branch
      %23 = sbr.rel (0) target = $region25
    $region24: #{_lambda_.1} parent=1 // pred_region
      _
    $region25: #{_lambda_.1} parent=1 // pred_fallthru
      _
    %v25 = vld [vmem:[%s0] sm:$0xff]
    %v26 = vld [vmem:[%s0 + $0x8] sm:$0xff]
    %v27 = vld [vmem:[%s0 + $0x10] sm:$0xff]
    %v28 = vld [vmem:[%s0 + $0x18] sm:$0xff]
    %v29 = vld [vmem:[%s0 + $0x20] sm:$0xff]
    %v30 = vld [vmem:[%s0 + $0x28] sm:$0xff]
    %v31 = vld [vmem:[%s0 + $0x30] sm:$0xff]
    %v32 = vld [vmem:[%s0 + $0x38] sm:$0xff]
    %v33 = vld [vmem:[%s0 + $0x40] sm:$0xff]
    %v34 = vld [vmem:[%s0 + $0x48] sm:$0xff]
    %v35 = vld [vmem:[%s0 + $0x50] sm:$0xff]
    %v36 = vld [vmem:[%s0 + $0x58] sm:$0xff]
    %v37 = vld [vmem:[%s0 + $0x60] sm:$0xff]
    %v38 = vld [vmem:[%s0 + $0x68] sm:$0xff]
    %v39 = vld [vmem:[%s0 + $0x70] sm:$0xff]
    %v40 = vld [vmem:[%s0 + $0x78] sm:$0xff]
    %v41 = vld [vmem:[%s0 + $0x80] sm:$0xff]
    %v42 = vld [vmem:[%s0 + $0x88] sm:$0xff]
    %v43 = vld [vmem:[%s0 + $0x90] sm:$0xff]
    %v44 = vld [vmem:[%s0 + $0x98] sm:$0xff]
    %v45 = vld [vmem:[%s0 + $0xa0] sm:$0xff]
    %v46 = vld [vmem:[%s0 + $0xa8] sm:$0xff]
    %v47 = vld [vmem:[%s0 + $0xb0] sm:$0xff]
    %v48 = vld [vmem:[%s0 + $0xb8] sm:$0xff]
    %v49 = vld [vmem:[%s0 + $0xc0] sm:$0xff]
    %v50 = vld [vmem:[%s0 + $0xc8] sm:$0xff]
    %v51 = vld [vmem:[%s0 + $0xd0] sm:$0xff]
    %v52 = vld [vmem:[%s0 + $0xd8] sm:$0xff]
    %v53 = vld [vmem:[%s0 + $0xe0] sm:$0xff]
    %v54 = vld [vmem:[%s0 + $0xe8] sm:$0xff]
    %v55 = vld [vmem:[%s0 + $0xf0] sm:$0xff]
    %v56 = vld [vmem:[%s0 + $0xf8] sm:$0xff]
    %v57 = vld [vmem:[%s0 + $0x100] sm:$0xff]
    %v58 = vld [vmem:[%s0 + $0x108] sm:$0xff]
    %v59 = vld [vmem:[%s0 + $0x110] sm:$0xff]
    %v60 = vld [vmem:[%s0 + $0x118] sm:$0xff]
    %v61 = vld [vmem:[%s0 + $0x120] sm:$0xff]
    %v62 = vld [vmem:[%s0 + $0x128] sm:$0xff]
    %v63 = vld [vmem:[%s0 + $0x130] sm:$0xff]
    %v64 = vld [vmem:[%s0 + $0x138] sm:$0xff]
    %v65 = vld [vmem:[%s0 + $0x140] sm:$0xff]
    %v66 = vld [vmem:[%s0 + $0x148] sm:$0xff]
    %v67 = vld [vmem:[%s0 + $0x150] sm:$0xff]
    %v68 = vld [vmem:[%s0 + $0x158] sm:$0xff]
    %v69 = vld [vmem:[%s0 + $0x160] sm:$0xff]
    %v70 = vld [vmem:[%s0 + $0x168] sm:$0xff]
    %v71 = vld [vmem:[%s0 + $0x170] sm:$0xff]
    %v72 = vld [vmem:[%s0 + $0x178] sm:$0xff]
    %v73 = vpack.c.bf16 %v26, %v25
    %v74 = vpack.c.bf16 %v28, %v27
    %v75 = vpack.c.bf16 %v30, %v29
    %v76 = vpack.c.bf16 %v32, %v31
    %v77 = vpack.c.bf16 %v34, %v33
    %v78 = vpack.c.bf16 %v36, %v35
    %v79 = vpack.c.bf16 %v38, %v37
    %v80 = vpack.c.bf16 %v40, %v39
    %v81 = vpack.c.bf16 %v42, %v41
    %v82 = vpack.c.bf16 %v44, %v43
    %v83 = vpack.c.bf16 %v46, %v45
    %v84 = vpack.c.bf16 %v48, %v47
    %v85 = vpack.c.bf16 %v50, %v49
    %v86 = vpack.c.bf16 %v52, %v51
    %v87 = vpack.c.bf16 %v54, %v53
    %v88 = vpack.c.bf16 %v56, %v55
    %v89 = vpack.c.bf16 %v58, %v57
    %v90 = vpack.c.bf16 %v60, %v59
    %v91 = vpack.c.bf16 %v62, %v61
    %v92 = vpack.c.bf16 %v64, %v63
    %v93 = vpack.c.bf16 %v66, %v65
    %v94 = vpack.c.bf16 %v68, %v67
    %v95 = vpack.c.bf16 %v70, %v69
    %v96 = vpack.c.bf16 %v72, %v71
    %v97 = vld [vmem:[%s1] sm:$0xf]
    %v98 = vld [vmem:[%s1 + $0x4] sm:$0xf]
    %v99 = vld [vmem:[%s0 + $0x1] sm:$0xff]
    %v100 = vld [vmem:[%s0 + $0x9] sm:$0xff]
    %v101 = vld [vmem:[%s0 + $0x11] sm:$0xff]
    %v102 = vld [vmem:[%s0 + $0x19] sm:$0xff]
    %v103 = vld [vmem:[%s0 + $0x21] sm:$0xff]
    %v104 = vld [vmem:[%s0 + $0x29] sm:$0xff]
    %v105 = vld [vmem:[%s0 + $0x31] sm:$0xff]
    %v106 = vld [vmem:[%s0 + $0x39] sm:$0xff]
    %v107 = vld [vmem:[%s0 + $0x41] sm:$0xff]
    %v108 = vld [vmem:[%s0 + $0x49] sm:$0xff]
    %v109 = vld [vmem:[%s0 + $0x51] sm:$0xff]
    %v110 = vld [vmem:[%s0 + $0x59] sm:$0xff]
    %v111 = vld [vmem:[%s0 + $0x61] sm:$0xff]
    %v112 = vld [vmem:[%s0 + $0x69] sm:$0xff]
    %v113 = vld [vmem:[%s0 + $0x71] sm:$0xff]
    %v114 = vld [vmem:[%s0 + $0x79] sm:$0xff]
    %v115 = vld [vmem:[%s0 + $0x81] sm:$0xff]
    %v116 = vld [vmem:[%s0 + $0x89] sm:$0xff]
    %v117 = vld [vmem:[%s0 + $0x91] sm:$0xff]
    %v118 = vld [vmem:[%s0 + $0x99] sm:$0xff]
    %v119 = vld [vmem:[%s0 + $0xa1] sm:$0xff]
    %v120 = vld [vmem:[%s0 + $0xa9] sm:$0xff]
    %v121 = vld [vmem:[%s0 + $0xb1] sm:$0xff]
    %v122 = vld [vmem:[%s0 + $0xb9] sm:$0xff]
    %v123 = vld [vmem:[%s0 + $0xc1] sm:$0xff]
    %v124 = vld [vmem:[%s0 + $0xc9] sm:$0xff]
    %v125 = vld [vmem:[%s0 + $0xd1] sm:$0xff]
    %v126 = vld [vmem:[%s0 + $0xd9] sm:$0xff]
    %v127 = vld [vmem:[%s0 + $0xe1] sm:$0xff]
    %v128 = vld [vmem:[%s0 + $0xe9] sm:$0xff]
    %v129 = vld [vmem:[%s0 + $0xf1] sm:$0xff]
    %v130 = vld [vmem:[%s0 + $0xf9] sm:$0xff]
    %v131 = vld [vmem:[%s0 + $0x101] sm:$0xff]
    %v132 = vld [vmem:[%s0 + $0x109] sm:$0xff]
    %v133 = vld [vmem:[%s0 + $0x111] sm:$0xff]
    %v134 = vld [vmem:[%s0 + $0x119] sm:$0xff]
    %v135 = vld [vmem:[%s0 + $0x121] sm:$0xff]
    %v136 = vld [vmem:[%s0 + $0x129] sm:$0xff]
    %v137 = vld [vmem:[%s0 + $0x131] sm:$0xff]
    %v138 = vld [vmem:[%s0 + $0x139] sm:$0xff]
    %v139 = vld [vmem:[%s0 + $0x141] sm:$0xff]
    %v140 = vld [vmem:[%s0 + $0x149] sm:$0xff]
    %v141 = vld [vmem:[%s0 + $0x151] sm:$0xff]
    %v142 = vld [vmem:[%s0 + $0x159] sm:$0xff]
    %v143 = vld [vmem:[%s0 + $0x161] sm:$0xff]
    %v144 = vld [vmem:[%s0 + $0x169] sm:$0xff]
    %v145 = vld [vmem:[%s0 + $0x171] sm:$0xff]
    %v146 = vld [vmem:[%s0 + $0x179] sm:$0xff]
    %v147 = vpack.c.bf16 %v100, %v99
    %v148 = vpack.c.bf16 %v102, %v101
    %v149 = vpack.c.bf16 %v104, %v103
    %v150 = vpack.c.bf16 %v106, %v105
    %v151 = vpack.c.bf16 %v108, %v107
    %v152 = vpack.c.bf16 %v110, %v109
    %v153 = vpack.c.bf16 %v112, %v111
    %v154 = vpack.c.bf16 %v114, %v113
    %v155 = vpack.c.bf16 %v116, %v115
    %v156 = vpack.c.bf16 %v118, %v117
    %v157 = vpack.c.bf16 %v120, %v119
    %v158 = vpack.c.bf16 %v122, %v121
    %v159 = vpack.c.bf16 %v124, %v123
    %v160 = vpack.c.bf16 %v126, %v125
    %v161 = vpack.c.bf16 %v128, %v127
    %v162 = vpack.c.bf16 %v130, %v129
    %v163 = vpack.c.bf16 %v132, %v131
    %v164 = vpack.c.bf16 %v134, %v133
    %v165 = vpack.c.bf16 %v136, %v135
    %v166 = vpack.c.bf16 %v138, %v137
    %v167 = vpack.c.bf16 %v140, %v139
    %v168 = vpack.c.bf16 %v142, %v141
    %v169 = vpack.c.bf16 %v144, %v143
    %v170 = vpack.c.bf16 %v146, %v145
    %s171 = scalar_lea.vmem %s1, 8
    %v172 = vld [vmem:[%s171] sm:$0xf]
    %v173 = vld [vmem:[%s171 + $0x4] sm:$0xf]
    %v176 = vunpack.c.l.b16 %v172
    %v177 = vunpack.c.l.b16 %v173
    %v178 = vpack.c.b16 %v177, %v176
    %vm180 = vcmask 130048
    %v182 = vsel %vm180, %v147, 0
    %v185 = vsel %vm180, %v148, 0
    %v188 = vsel %vm180, %v149, 0
    %v191 = vsel %vm180, %v150, 0
    %v194 = vsel %vm180, %v151, 0
    %v197 = vsel %vm180, %v152, 0
    %v200 = vsel %vm180, %v153, 0
    %v203 = vsel %vm180, %v154, 0
    %v206 = vsel %vm180, %v155, 0
    %v209 = vsel %vm180, %v156, 0
    %v212 = vsel %vm180, %v157, 0
    %v215 = vsel %vm180, %v158, 0
    %v218 = vsel %vm180, %v159, 0
    %v221 = vsel %vm180, %v160, 0
    %v224 = vsel %vm180, %v161, 0
    %v227 = vsel %vm180, %v162, 0
    %v230 = vsel %vm180, %v163, 0
    %v233 = vsel %vm180, %v164, 0
    %v236 = vsel %vm180, %v165, 0
    %v239 = vsel %vm180, %v166, 0
    %v242 = vsel %vm180, %v167, 0
    %v245 = vsel %vm180, %v168, 0
    %v248 = vsel %vm180, %v169, 0
    %v251 = vsel %vm180, %v170, 0
    %253 = vmatprep.subr.bf16.mxu0 0
    %254 = vmatpush1.bf16.msra.mxu0 %v178
    %255 = vmatprep.subr.bf16.mxu0 0
    %256 = vmatpush1.bf16.msra.mxu0 0
    %257 = vmatprep.subr.bf16.mxu0 0
    %258 = vmatpush1.bf16.msra.mxu0 0
    %259 = vmatprep.subr.bf16.mxu0 0
    %260 = vmatpush1.bf16.msra.mxu0 0
    %261 = vmatprep.subr.bf16.mxu0 0
    %262 = vmatpush1.bf16.msra.mxu0 0
    %263 = vmatprep.subr.bf16.mxu0 0
    %264 = vmatpush1.bf16.msra.mxu0 0
    %265 = vmatprep.subr.bf16.mxu0 0
    %266 = vmatpush1.bf16.msra.mxu0 0
    %267 = vmatprep.subr.bf16.mxu0 0
    %268 = vmatpush1.bf16.msra.mxu0 0
    %269 = vmatprep.subr.bf16.mxu0 0
    %270 = vmatpush1.bf16.msra.mxu0 0
    %271 = vmatprep.subr.bf16.mxu0 0
    %272 = vmatpush1.bf16.msra.mxu0 0
    %273 = vmatprep.subr.bf16.mxu0 0
    %274 = vmatpush1.bf16.msra.mxu0 0
    %275 = vmatprep.subr.bf16.mxu0 0
    %276 = vmatpush1.bf16.msra.mxu0 0
    %277 = vmatprep.subr.bf16.mxu0 0
    %278 = vmatpush1.bf16.msra.mxu0 0
    %279 = vmatprep.subr.bf16.mxu0 0
    %280 = vmatpush1.bf16.msra.mxu0 0
    %281 = vmatprep.subr.bf16.mxu0 0
    %282 = vmatpush1.bf16.msra.mxu0 0
    %283 = vmatprep.subr.bf16.mxu0 0
    %284 = vmatpush1.bf16.msra.mxu0 0
    %285 = vmatprep.mubr.bf16.mxu0 0
    %286 = vmatmul.mubr.bf16.gmra.mrb[0].mxu0 %v182
    %v287 = vpop.f32.mrb[0].mxu0
    %v288 = vadd.f32 0.0, %v287
    %v289 = vpop.f32.mrb[0].mxu0
    %v290 = vpop.f32.mrb[0].mxu0
    %v291 = vadd.f32 0.0, %v290
    %v292 = vpop.f32.mrb[0].mxu0
    %293 = vmatprep.mubr.bf16.mxu0 0
    %294 = vmatmul.mubr.bf16.gmra.mrb[0].mxu0 %v185
    %v295 = vpop.f32.mrb[0].mxu0
    %v296 = vadd.f32 0.0, %v295
    %v297 = vpop.f32.mrb[0].mxu0
    %v298 = vpop.f32.mrb[0].mxu0
    %v299 = vadd.f32 0.0, %v298
    %v300 = vpop.f32.mrb[0].mxu0
    %301 = vmatprep.mubr.bf16.mxu0 0
    %302 = vmatmul.mubr.bf16.gmra.mrb[0].mxu0 %v188
    %v303 = vpop.f32.mrb[0].mxu0
    %v304 = vadd.f32 0.0, %v303
    %v305 = vpop.f32.mrb[0].mxu0
    %v306 = vpop.f32.mrb[0].mxu0
    %v307 = vadd.f32 0.0, %v306
    %v308 = vpop.f32.mrb[0].mxu0
    %309 = vmatprep.mubr.bf16.mxu0 0
    %310 = vmatmul.mubr.bf16.gmra.mrb[0].mxu0 %v191
    %v311 = vpop.f32.mrb[0].mxu0
    %v312 = vadd.f32 0.0, %v311
    %v313 = vpop.f32.mrb[0].mxu0
    %v314 = vpop.f32.mrb[0].mxu0
    %v315 = vadd.f32 0.0, %v314
    %v316 = vpop.f32.mrb[0].mxu0
    %317 = vmatprep.mubr.bf16.mxu0 0
    %318 = vmatmul.mubr.bf16.gmra.mrb[0].mxu0 %v194
    %v319 = vpop.f32.mrb[0].mxu0
    %v320 = vadd.f32 0.0, %v319
    %v321 = vpop.f32.mrb[0].mxu0
    %v322 = vpop.f32.mrb[0].mxu0
    %v323 = vadd.f32 0.0, %v322
    %v324 = vpop.f32.mrb[0].mxu0
    %325 = vmatprep.mubr.bf16.mxu0 0
    %326 = vmatmul.mubr.bf16.gmra.mrb[0].mxu0 %v197
    %v327 = vpop.f32.mrb[0].mxu0
    %v328 = vadd.f32 0.0, %v327
    %v329 = vpop.f32.mrb[0].mxu0
    %v330 = vpop.f32.mrb[0].mxu0
    %v331 = vadd.f32 0.0, %v330
    %v332 = vpop.f32.mrb[0].mxu0
    %333 = vmatprep.mubr.bf16.mxu0 0
    %334 = vmatmul.mubr.bf16.gmra.mrb[0].mxu0 %v200
    %v335 = vpop.f32.mrb[0].mxu0
    %v336 = vadd.f32 0.0, %v335
    %v337 = vpop.f32.mrb[0].mxu0
    %v338 = vpop.f32.mrb[0].mxu0
    %v339 = vadd.f32 0.0, %v338
    %v340 = vpop.f32.mrb[0].mxu0
    %341 = vmatprep.mubr.bf16.mxu0 0
    %342 = vmatmul.mubr.bf16.gmra.mrb[0].mxu0 %v203
    %v343 = vpop.f32.mrb[0].mxu0
    %v344 = vadd.f32 0.0, %v343
    %v345 = vpop.f32.mrb[0].mxu0
    %v346 = vpop.f32.mrb[0].mxu0
    %v347 = vadd.f32 0.0, %v346
    %v348 = vpop.f32.mrb[0].mxu0
    %349 = vmatprep.mubr.bf16.mxu0 0
    %350 = vmatmul.mubr.bf16.gmra.mrb[0].mxu0 %v206
    %v351 = vpop.f32.mrb[0].mxu0
    %v352 = vadd.f32 0.0, %v351
    %v353 = vpop.f32.mrb[0].mxu0
    %v354 = vpop.f32.mrb[0].mxu0
    %v355 = vadd.f32 0.0, %v354
    %v356 = vpop.f32.mrb[0].mxu0
    %357 = vmatprep.mubr.bf16.mxu0 0
    %358 = vmatmul.mubr.bf16.gmra.mrb[0].mxu0 %v209
    %v359 = vpop.f32.mrb[0].mxu0
    %v360 = vadd.f32 0.0, %v359
    %v361 = vpop.f32.mrb[0].mxu0
    %v362 = vpop.f32.mrb[0].mxu0
    %v363 = vadd.f32 0.0, %v362
    %v364 = vpop.f32.mrb[0].mxu0
    %365 = vmatprep.mubr.bf16.mxu0 0
    %366 = vmatmul.mubr.bf16.gmra.mrb[0].mxu0 %v212
    %v367 = vpop.f32.mrb[0].mxu0
    %v368 = vadd.f32 0.0, %v367
    %v369 = vpop.f32.mrb[0].mxu0
    %v370 = vpop.f32.mrb[0].mxu0
    %v371 = vadd.f32 0.0, %v370
    %v372 = vpop.f32.mrb[0].mxu0
    %373 = vmatprep.mubr.bf16.mxu0 0
    %374 = vmatmul.mubr.bf16.gmra.mrb[0].mxu0 %v215
    %v375 = vpop.f32.mrb[0].mxu0
    %v376 = vadd.f32 0.0, %v375
    %v377 = vpop.f32.mrb[0].mxu0
    %v378 = vpop.f32.mrb[0].mxu0
    %v379 = vadd.f32 0.0, %v378
    %v380 = vpop.f32.mrb[0].mxu0
    %381 = vmatprep.mubr.bf16.mxu0 0
    %382 = vmatmul.mubr.bf16.gmra.mrb[0].mxu0 %v218
    %v383 = vpop.f32.mrb[0].mxu0
    %v384 = vadd.f32 0.0, %v383
    %v385 = vpop.f32.mrb[0].mxu0
    %v386 = vpop.f32.mrb[0].mxu0
    %v387 = vadd.f32 0.0, %v386
    %v388 = vpop.f32.mrb[0].mxu0
    %389 = vmatprep.mubr.bf16.mxu0 0
    %390 = vmatmul.mubr.bf16.gmra.mrb[0].mxu0 %v221
    %v391 = vpop.f32.mrb[0].mxu0
    %v392 = vadd.f32 0.0, %v391
    %v393 = vpop.f32.mrb[0].mxu0
    %v394 = vpop.f32.mrb[0].mxu0
    %v395 = vadd.f32 0.0, %v394
    %v396 = vpop.f32.mrb[0].mxu0
    %397 = vmatprep.mubr.bf16.mxu0 0
    %398 = vmatmul.mubr.bf16.gmra.mrb[0].mxu0 %v224
    %v399 = vpop.f32.mrb[0].mxu0
    %v400 = vadd.f32 0.0, %v399
    %v401 = vpop.f32.mrb[0].mxu0
    %v402 = vpop.f32.mrb[0].mxu0
    %v403 = vadd.f32 0.0, %v402
    %v404 = vpop.f32.mrb[0].mxu0
    %405 = vmatprep.mubr.bf16.mxu0 0
    %406 = vmatmul.mubr.bf16.gmra.mrb[0].mxu0 %v227
    %v407 = vpop.f32.mrb[0].mxu0
    %v408 = vadd.f32 0.0, %v407
    %v409 = vpop.f32.mrb[0].mxu0
    %v410 = vpop.f32.mrb[0].mxu0
    %v411 = vadd.f32 0.0, %v410
    %v412 = vpop.f32.mrb[0].mxu0
    %413 = vmatprep.mubr.bf16.mxu0 0
    %414 = vmatmul.mubr.bf16.gmra.mrb[0].mxu0 %v230
    %v415 = vpop.f32.mrb[0].mxu0
    %v416 = vadd.f32 0.0, %v415
    %v417 = vpop.f32.mrb[0].mxu0
    %v418 = vpop.f32.mrb[0].mxu0
    %v419 = vadd.f32 0.0, %v418
    %v420 = vpop.f32.mrb[0].mxu0
    %421 = vmatprep.mubr.bf16.mxu0 0
    %422 = vmatmul.mubr.bf16.gmra.mrb[0].mxu0 %v233
    %v423 = vpop.f32.mrb[0].mxu0
    %v424 = vadd.f32 0.0, %v423
    %v425 = vpop.f32.mrb[0].mxu0
    %v426 = vpop.f32.mrb[0].mxu0
    %v427 = vadd.f32 0.0, %v426
    %v428 = vpop.f32.mrb[0].mxu0
    %429 = vmatprep.mubr.bf16.mxu0 0
    %430 = vmatmul.mubr.bf16.gmra.mrb[0].mxu0 %v236
    %v431 = vpop.f32.mrb[0].mxu0
    %v432 = vadd.f32 0.0, %v431
    %v433 = vpop.f32.mrb[0].mxu0
    %v434 = vpop.f32.mrb[0].mxu0
    %v435 = vadd.f32 0.0, %v434
    %v436 = vpop.f32.mrb[0].mxu0
    %437 = vmatprep.mubr.bf16.mxu0 0
    %438 = vmatmul.mubr.bf16.gmra.mrb[0].mxu0 %v239
    %v439 = vpop.f32.mrb[0].mxu0
    %v440 = vadd.f32 0.0, %v439
    %v441 = vpop.f32.mrb[0].mxu0
    %v442 = vpop.f32.mrb[0].mxu0
    %v443 = vadd.f32 0.0, %v442
    %v444 = vpop.f32.mrb[0].mxu0
    %445 = vmatprep.mubr.bf16.mxu0 0
    %446 = vmatmul.mubr.bf16.gmra.mrb[0].mxu0 %v242
    %v447 = vpop.f32.mrb[0].mxu0
    %v448 = vadd.f32 0.0, %v447
    %v449 = vpop.f32.mrb[0].mxu0
    %v450 = vpop.f32.mrb[0].mxu0
    %v451 = vadd.f32 0.0, %v450
    %v452 = vpop.f32.mrb[0].mxu0
    %453 = vmatprep.mubr.bf16.mxu0 0
    %454 = vmatmul.mubr.bf16.gmra.mrb[0].mxu0 %v245
    %v455 = vpop.f32.mrb[0].mxu0
    %v456 = vadd.f32 0.0, %v455
    %v457 = vpop.f32.mrb[0].mxu0
    %v458 = vpop.f32.mrb[0].mxu0
    %v459 = vadd.f32 0.0, %v458
    %v460 = vpop.f32.mrb[0].mxu0
    %461 = vmatprep.mubr.bf16.mxu0 0
    %462 = vmatmul.mubr.bf16.gmra.mrb[0].mxu0 %v248
    %v463 = vpop.f32.mrb[0].mxu0
    %v464 = vadd.f32 0.0, %v463
    %v465 = vpop.f32.mrb[0].mxu0
    %v466 = vpop.f32.mrb[0].mxu0
    %v467 = vadd.f32 0.0, %v466
    %v468 = vpop.f32.mrb[0].mxu0
    %469 = vmatprep.mubr.bf16.mxu0 0
    %470 = vmatmul.mubr.bf16.gmra.mrb[0].mxu0 %v251
    %v471 = vpop.f32.mrb[0].mxu0
    %v472 = vadd.f32 0.0, %v471
    %v473 = vpop.f32.mrb[0].mxu0
    %v474 = vpop.f32.mrb[0].mxu0
    %v475 = vadd.f32 0.0, %v474
    %v476 = vpop.f32.mrb[0].mxu0
    %477 = vdwg.mxu0
    %v480 = vunpack.c.l.b16 %v97
    %v481 = vunpack.c.l.b16 %v98
    %v482 = vpack.c.b16 %v481, %v480
    %v485 = vsel %vm180, %v73, 0
    %v488 = vsel %vm180, %v74, 0
    %v491 = vsel %vm180, %v75, 0
    %v494 = vsel %vm180, %v76, 0
    %v497 = vsel %vm180, %v77, 0
    %v500 = vsel %vm180, %v78, 0
    %v503 = vsel %vm180, %v79, 0
    %v506 = vsel %vm180, %v80, 0
    %v509 = vsel %vm180, %v81, 0
    %v512 = vsel %vm180, %v82, 0
    %v515 = vsel %vm180, %v83, 0
    %v518 = vsel %vm180, %v84, 0
    %v521 = vsel %vm180, %v85, 0
    %v524 = vsel %vm180, %v86, 0
    %v527 = vsel %vm180, %v87, 0
    %v530 = vsel %vm180, %v88, 0
    %v533 = vsel %vm180, %v89, 0
    %v536 = vsel %vm180, %v90, 0
    %v539 = vsel %vm180, %v91, 0
    %v542 = vsel %vm180, %v92, 0
    %v545 = vsel %vm180, %v93, 0
    %v548 = vsel %vm180, %v94, 0
    %v551 = vsel %vm180, %v95, 0
    %v554 = vsel %vm180, %v96, 0
    %556 = vmatprep.subr.bf16.mxu0 0
    %557 = vmatpush1.bf16.msra.mxu0 %v482
    %558 = vmatprep.subr.bf16.mxu0 0
    %559 = vmatpush1.bf16.msra.mxu0 0
    %560 = vmatprep.subr.bf16.mxu0 0
    %561 = vmatpush1.bf16.msra.mxu0 0
    %562 = vmatprep.subr.bf16.mxu0 0
    %563 = vmatpush1.bf16.msra.mxu0 0
    %564 = vmatprep.subr.bf16.mxu0 0
    %565 = vmatpush1.bf16.msra.mxu0 0
    %566 = vmatprep.subr.bf16.mxu0 0
    %567 = vmatpush1.bf16.msra.mxu0 0
    %568 = vmatprep.subr.bf16.mxu0 0
    %569 = vmatpush1.bf16.msra.mxu0 0
    %570 = vmatprep.subr.bf16.mxu0 0
    %571 = vmatpush1.bf16.msra.mxu0 0
    %572 = vmatprep.subr.bf16.mxu0 0
    %573 = vmatpush1.bf16.msra.mxu0 0
    %574 = vmatprep.subr.bf16.mxu0 0
    %575 = vmatpush1.bf16.msra.mxu0 0
    %576 = vmatprep.subr.bf16.mxu0 0
    %577 = vmatpush1.bf16.msra.mxu0 0
    %578 = vmatprep.subr.bf16.mxu0 0
    %579 = vmatpush1.bf16.msra.mxu0 0
    %580 = vmatprep.subr.bf16.mxu0 0
    %581 = vmatpush1.bf16.msra.mxu0 0
    %582 = vmatprep.subr.bf16.mxu0 0
    %583 = vmatpush1.bf16.msra.mxu0 0
    %584 = vmatprep.subr.bf16.mxu0 0
    %585 = vmatpush1.bf16.msra.mxu0 0
    %586 = vmatprep.subr.bf16.mxu0 0
    %587 = vmatpush1.bf16.msra.mxu0 0
    %588 = vmatprep.mubr.bf16.mxu0 0
    %589 = vmatmul.mubr.bf16.gmra.mrb[0].mxu0 %v485
    %v590 = vpop.f32.mrb[0].mxu0
    %v591 = vadd.f32 %v288, %v590
    %v592 = vpop.f32.mrb[0].mxu0
    %v593 = vpop.f32.mrb[0].mxu0
    %v594 = vadd.f32 %v291, %v593
    %v595 = vpop.f32.mrb[0].mxu0
    %596 = vmatprep.mubr.bf16.mxu0 0
    %597 = vmatmul.mubr.bf16.gmra.mrb[0].mxu0 %v488
    %v598 = vpop.f32.mrb[0].mxu0
    %v599 = vadd.f32 %v296, %v598
    %v600 = vpop.f32.mrb[0].mxu0
    %v601 = vpop.f32.mrb[0].mxu0
    %v602 = vadd.f32 %v299, %v601
    %v603 = vpop.f32.mrb[0].mxu0
    %604 = vmatprep.mubr.bf16.mxu0 0
    %605 = vmatmul.mubr.bf16.gmra.mrb[0].mxu0 %v491
    %v606 = vpop.f32.mrb[0].mxu0
    %v607 = vadd.f32 %v304, %v606
    %v608 = vpop.f32.mrb[0].mxu0
    %v609 = vpop.f32.mrb[0].mxu0
    %v610 = vadd.f32 %v307, %v609
    %v611 = vpop.f32.mrb[0].mxu0
    %612 = vmatprep.mubr.bf16.mxu0 0
    %613 = vmatmul.mubr.bf16.gmra.mrb[0].mxu0 %v494
    %v614 = vpop.f32.mrb[0].mxu0
    %v615 = vadd.f32 %v312, %v614
    %v616 = vpop.f32.mrb[0].mxu0
    %v617 = vpop.f32.mrb[0].mxu0
    %v618 = vadd.f32 %v315, %v617
    %v619 = vpop.f32.mrb[0].mxu0
    %620 = vmatprep.mubr.bf16.mxu0 0
    %621 = vmatmul.mubr.bf16.gmra.mrb[0].mxu0 %v497
    %v622 = vpop.f32.mrb[0].mxu0
    %v623 = vadd.f32 %v320, %v622
    %v624 = vpop.f32.mrb[0].mxu0
    %v625 = vpop.f32.mrb[0].mxu0
    %v626 = vadd.f32 %v323, %v625
    %v627 = vpop.f32.mrb[0].mxu0
    %628 = vmatprep.mubr.bf16.mxu0 0
    %629 = vmatmul.mubr.bf16.gmra.mrb[0].mxu0 %v500
    %v630 = vpop.f32.mrb[0].mxu0
    %v631 = vadd.f32 %v328, %v630
    %v632 = vpop.f32.mrb[0].mxu0
    %v633 = vpop.f32.mrb[0].mxu0
    %v634 = vadd.f32 %v331, %v633
    %v635 = vpop.f32.mrb[0].mxu0
    %636 = vmatprep.mubr.bf16.mxu0 0
    %637 = vmatmul.mubr.bf16.gmra.mrb[0].mxu0 %v503
    %v638 = vpop.f32.mrb[0].mxu0
    %v639 = vadd.f32 %v336, %v638
    %v640 = vpop.f32.mrb[0].mxu0
    %v641 = vpop.f32.mrb[0].mxu0
    %v642 = vadd.f32 %v339, %v641
    %v643 = vpop.f32.mrb[0].mxu0
    %644 = vmatprep.mubr.bf16.mxu0 0
    %645 = vmatmul.mubr.bf16.gmra.mrb[0].mxu0 %v506
    %v646 = vpop.f32.mrb[0].mxu0
    %v647 = vadd.f32 %v344, %v646
    %v648 = vpop.f32.mrb[0].mxu0
    %v649 = vpop.f32.mrb[0].mxu0
    %v650 = vadd.f32 %v347, %v649
    %v651 = vpop.f32.mrb[0].mxu0
    %652 = vmatprep.mubr.bf16.mxu0 0
    %653 = vmatmul.mubr.bf16.gmra.mrb[0].mxu0 %v509
    %v654 = vpop.f32.mrb[0].mxu0
    %v655 = vadd.f32 %v352, %v654
    %v656 = vpop.f32.mrb[0].mxu0
    %v657 = vpop.f32.mrb[0].mxu0
    %v658 = vadd.f32 %v355, %v657
    %v659 = vpop.f32.mrb[0].mxu0
    %660 = vmatprep.mubr.bf16.mxu0 0
    %661 = vmatmul.mubr.bf16.gmra.mrb[0].mxu0 %v512
    %v662 = vpop.f32.mrb[0].mxu0
    %v663 = vadd.f32 %v360, %v662
    %v664 = vpop.f32.mrb[0].mxu0
    %v665 = vpop.f32.mrb[0].mxu0
    %v666 = vadd.f32 %v363, %v665
    %v667 = vpop.f32.mrb[0].mxu0
    %668 = vmatprep.mubr.bf16.mxu0 0
    %669 = vmatmul.mubr.bf16.gmra.mrb[0].mxu0 %v515
    %v670 = vpop.f32.mrb[0].mxu0
    %v671 = vadd.f32 %v368, %v670
    %v672 = vpop.f32.mrb[0].mxu0
    %v673 = vpop.f32.mrb[0].mxu0
    %v674 = vadd.f32 %v371, %v673
    %v675 = vpop.f32.mrb[0].mxu0
    %676 = vmatprep.mubr.bf16.mxu0 0
    %677 = vmatmul.mubr.bf16.gmra.mrb[0].mxu0 %v518
    %v678 = vpop.f32.mrb[0].mxu0
    %v679 = vadd.f32 %v376, %v678
    %v680 = vpop.f32.mrb[0].mxu0
    %v681 = vpop.f32.mrb[0].mxu0
    %v682 = vadd.f32 %v379, %v681
    %v683 = vpop.f32.mrb[0].mxu0
    %684 = vmatprep.mubr.bf16.mxu0 0
    %685 = vmatmul.mubr.bf16.gmra.mrb[0].mxu0 %v521
    %v686 = vpop.f32.mrb[0].mxu0
    %v687 = vadd.f32 %v384, %v686
    %v688 = vpop.f32.mrb[0].mxu0
    %v689 = vpop.f32.mrb[0].mxu0
    %v690 = vadd.f32 %v387, %v689
    %v691 = vpop.f32.mrb[0].mxu0
    %692 = vmatprep.mubr.bf16.mxu0 0
    %693 = vmatmul.mubr.bf16.gmra.mrb[0].mxu0 %v524
    %v694 = vpop.f32.mrb[0].mxu0
    %v695 = vadd.f32 %v392, %v694
    %v696 = vpop.f32.mrb[0].mxu0
    %v697 = vpop.f32.mrb[0].mxu0
    %v698 = vadd.f32 %v395, %v697
    %v699 = vpop.f32.mrb[0].mxu0
    %700 = vmatprep.mubr.bf16.mxu0 0
    %701 = vmatmul.mubr.bf16.gmra.mrb[0].mxu0 %v527
    %v702 = vpop.f32.mrb[0].mxu0
    %v703 = vadd.f32 %v400, %v702
    %v704 = vpop.f32.mrb[0].mxu0
    %v705 = vpop.f32.mrb[0].mxu0
    %v706 = vadd.f32 %v403, %v705
    %v707 = vpop.f32.mrb[0].mxu0
    %708 = vmatprep.mubr.bf16.mxu0 0
    %709 = vmatmul.mubr.bf16.gmra.mrb[0].mxu0 %v530
    %v710 = vpop.f32.mrb[0].mxu0
    %v711 = vadd.f32 %v408, %v710
    %v712 = vpop.f32.mrb[0].mxu0
    %v713 = vpop.f32.mrb[0].mxu0
    %v714 = vadd.f32 %v411, %v713
    %v715 = vpop.f32.mrb[0].mxu0
    %716 = vmatprep.mubr.bf16.mxu0 0
    %717 = vmatmul.mubr.bf16.gmra.mrb[0].mxu0 %v533
    %v718 = vpop.f32.mrb[0].mxu0
    %v719 = vadd.f32 %v416, %v718
    %v720 = vpop.f32.mrb[0].mxu0
    %v721 = vpop.f32.mrb[0].mxu0
    %v722 = vadd.f32 %v419, %v721
    %v723 = vpop.f32.mrb[0].mxu0
    %724 = vmatprep.mubr.bf16.mxu0 0
    %725 = vmatmul.mubr.bf16.gmra.mrb[0].mxu0 %v536
    %v726 = vpop.f32.mrb[0].mxu0
    %v727 = vadd.f32 %v424, %v726
    %v728 = vpop.f32.mrb[0].mxu0
    %v729 = vpop.f32.mrb[0].mxu0
    %v730 = vadd.f32 %v427, %v729
    %v731 = vpop.f32.mrb[0].mxu0
    %732 = vmatprep.mubr.bf16.mxu0 0
    %733 = vmatmul.mubr.bf16.gmra.mrb[0].mxu0 %v539
    %v734 = vpop.f32.mrb[0].mxu0
    %v735 = vadd.f32 %v432, %v734
    %v736 = vpop.f32.mrb[0].mxu0
    %v737 = vpop.f32.mrb[0].mxu0
    %v738 = vadd.f32 %v435, %v737
    %v739 = vpop.f32.mrb[0].mxu0
    %740 = vmatprep.mubr.bf16.mxu0 0
    %741 = vmatmul.mubr.bf16.gmra.mrb[0].mxu0 %v542
    %v742 = vpop.f32.mrb[0].mxu0
    %v743 = vadd.f32 %v440, %v742
    %v744 = vpop.f32.mrb[0].mxu0
    %v745 = vpop.f32.mrb[0].mxu0
    %v746 = vadd.f32 %v443, %v745
    %v747 = vpop.f32.mrb[0].mxu0
    %748 = vmatprep.mubr.bf16.mxu0 0
    %749 = vmatmul.mubr.bf16.gmra.mrb[0].mxu0 %v545
    %v750 = vpop.f32.mrb[0].mxu0
    %v751 = vadd.f32 %v448, %v750
    %v752 = vpop.f32.mrb[0].mxu0
    %v753 = vpop.f32.mrb[0].mxu0
    %v754 = vadd.f32 %v451, %v753
    %v755 = vpop.f32.mrb[0].mxu0
    %756 = vmatprep.mubr.bf16.mxu0 0
    %757 = vmatmul.mubr.bf16.gmra.mrb[0].mxu0 %v548
    %v758 = vpop.f32.mrb[0].mxu0
    %v759 = vadd.f32 %v456, %v758
    %v760 = vpop.f32.mrb[0].mxu0
    %v761 = vpop.f32.mrb[0].mxu0
    %v762 = vadd.f32 %v459, %v761
    %v763 = vpop.f32.mrb[0].mxu0
    %764 = vmatprep.mubr.bf16.mxu0 0
    %765 = vmatmul.mubr.bf16.gmra.mrb[0].mxu0 %v551
    %v766 = vpop.f32.mrb[0].mxu0
    %v767 = vadd.f32 %v464, %v766
    %v768 = vpop.f32.mrb[0].mxu0
    %v769 = vpop.f32.mrb[0].mxu0
    %v770 = vadd.f32 %v467, %v769
    %v771 = vpop.f32.mrb[0].mxu0
    %772 = vmatprep.mubr.bf16.mxu0 0
    %773 = vmatmul.mubr.bf16.gmra.mrb[0].mxu0 %v554
    %v774 = vpop.f32.mrb[0].mxu0
    %v775 = vadd.f32 %v472, %v774
    %v776 = vpop.f32.mrb[0].mxu0
    %v777 = vpop.f32.mrb[0].mxu0
    %v778 = vadd.f32 %v475, %v777
    %v779 = vpop.f32.mrb[0].mxu0
    %780 = vdwg.mxu0
    %v781 = vld [vmem:[%s0 + $0x2] sm:$0xff]
    %v782 = vld [vmem:[%s0 + $0xa] sm:$0xff]
    %v783 = vld [vmem:[%s0 + $0x12] sm:$0xff]
    %v784 = vld [vmem:[%s0 + $0x1a] sm:$0xff]
    %v785 = vld [vmem:[%s0 + $0x22] sm:$0xff]
    %v786 = vld [vmem:[%s0 + $0x2a] sm:$0xff]
    %v787 = vld [vmem:[%s0 + $0x32] sm:$0xff]
    %v788 = vld [vmem:[%s0 + $0x3a] sm:$0xff]
    %v789 = vld [vmem:[%s0 + $0x42] sm:$0xff]
    %v790 = vld [vmem:[%s0 + $0x4a] sm:$0xff]
    %v791 = vld [vmem:[%s0 + $0x52] sm:$0xff]
    %v792 = vld [vmem:[%s0 + $0x5a] sm:$0xff]
    %v793 = vld [vmem:[%s0 + $0x62] sm:$0xff]
    %v794 = vld [vmem:[%s0 + $0x6a] sm:$0xff]
    %v795 = vld [vmem:[%s0 + $0x72] sm:$0xff]
    %v796 = vld [vmem:[%s0 + $0x7a] sm:$0xff]
    %v797 = vld [vmem:[%s0 + $0x82] sm:$0xff]
    %v798 = vld [vmem:[%s0 + $0x8a] sm:$0xff]
    %v799 = vld [vmem:[%s0 + $0x92] sm:$0xff]
    %v800 = vld [vmem:[%s0 + $0x9a] sm:$0xff]
    %v801 = vld [vmem:[%s0 + $0xa2] sm:$0xff]
    %v802 = vld [vmem:[%s0 + $0xaa] sm:$0xff]
    %v803 = vld [vmem:[%s0 + $0xb2] sm:$0xff]
    %v804 = vld [vmem:[%s0 + $0xba] sm:$0xff]
    %v805 = vld [vmem:[%s0 + $0xc2] sm:$0xff]
    %v806 = vld [vmem:[%s0 + $0xca] sm:$0xff]
    %v807 = vld [vmem:[%s0 + $0xd2] sm:$0xff]
    %v808 = vld [vmem:[%s0 + $0xda] sm:$0xff]
    %v809 = vld [vmem:[%s0 + $0xe2] sm:$0xff]
    %v810 = vld [vmem:[%s0 + $0xea] sm:$0xff]
    %v811 = vld [vmem:[%s0 + $0xf2] sm:$0xff]
    %v812 = vld [vmem:[%s0 + $0xfa] sm:$0xff]
    %v813 = vld [vmem:[%s0 + $0x102] sm:$0xff]
    %v814 = vld [vmem:[%s0 + $0x10a] sm:$0xff]
    %v815 = vld [vmem:[%s0 + $0x112] sm:$0xff]
    %v816 = vld [vmem:[%s0 + $0x11a] sm:$0xff]
    %v817 = vld [vmem:[%s0 + $0x122] sm:$0xff]
    %v818 = vld [vmem:[%s0 + $0x12a] sm:$0xff]
    %v819 = vld [vmem:[%s0 + $0x132] sm:$0xff]
    %v820 = vld [vmem:[%s0 + $0x13a] sm:$0xff]
    %v821 = vld [vmem:[%s0 + $0x142] sm:$0xff]
    %v822 = vld [vmem:[%s0 + $0x14a] sm:$0xff]
    %v823 = vld [vmem:[%s0 + $0x152] sm:$0xff]
    %v824 = vld [vmem:[%s0 + $0x15a] sm:$0xff]
    %v825 = vld [vmem:[%s0 + $0x162] sm:$0xff]
    %v826 = vld [vmem:[%s0 + $0x16a] sm:$0xff]
    %v827 = vld [vmem:[%s0 + $0x172] sm:$0xff]
    %v828 = vld [vmem:[%s0 + $0x17a] sm:$0xff]
    %v829 = vpack.c.bf16 %v782, %v781
    %v830 = vpack.c.bf16 %v784, %v783
    %v831 = vpack.c.bf16 %v786, %v785
    %v832 = vpack.c.bf16 %v788, %v787
    %v833 = vpack.c.bf16 %v790, %v789
    %v834 = vpack.c.bf16 %v792, %v791
    %v835 = vpack.c.bf16 %v794, %v793
    %v836 = vpack.c.bf16 %v796, %v795
    %v837 = vpack.c.bf16 %v798, %v797
    %v838 = vpack.c.bf16 %v800, %v799
    %v839 = vpack.c.bf16 %v802, %v801
    %v840 = vpack.c.bf16 %v804, %v803
    %v841 = vpack.c.bf16 %v806, %v805
    %v842 = vpack.c.bf16 %v808, %v807
    %v843 = vpack.c.bf16 %v810, %v809
    %v844 = vpack.c.bf16 %v812, %v811
    %v845 = vpack.c.bf16 %v814, %v813
    %v846 = vpack.c.bf16 %v816, %v815
    %v847 = vpack.c.bf16 %v818, %v817
    %v848 = vpack.c.bf16 %v820, %v819
    %v849 = vpack.c.bf16 %v822, %v821
    %v850 = vpack.c.bf16 %v824, %v823
    %v851 = vpack.c.bf16 %v826, %v825
    %v852 = vpack.c.bf16 %v828, %v827
    %s853 = scalar_lea.vmem %s1, 16
    %v854 = vld [vmem:[%s853] sm:$0xf]
    %v855 = vld [vmem:[%s853 + $0x4] sm:$0xf]
    %v858 = vunpack.c.l.b16 %v854
    %v859 = vunpack.c.l.b16 %v855
    %v860 = vpack.c.b16 %v859, %v858
    %v863 = vsel %vm180, %v829, 0
    %v866 = vsel %vm180, %v830, 0
    %v869 = vsel %vm180, %v831, 0
    %v872 = vsel %vm180, %v832, 0
    %v875 = vsel %vm180, %v833, 0
    %v878 = vsel %vm180, %v834, 0
    %v881 = vsel %vm180, %v835, 0
    %v884 = vsel %vm180, %v836, 0
    %v887 = vsel %vm180, %v837, 0
    %v890 = vsel %vm180, %v838, 0
    %v893 = vsel %vm180, %v839, 0
    %v896 = vsel %vm180, %v840, 0
    %v899 = vsel %vm180, %v841, 0
    %v902 = vsel %vm180, %v842, 0
    %v905 = vsel %vm180, %v843, 0
    %v908 = vsel %vm180, %v844, 0
    %v911 = vsel %vm180, %v845, 0
    %v914 = vsel %vm180, %v846, 0
    %v917 = vsel %vm180, %v847, 0
    %v920 = vsel %vm180, %v848, 0
    %v923 = vsel %vm180, %v849, 0
    %v926 = vsel %vm180, %v850, 0
    %v929 = vsel %vm180, %v851, 0
    %v932 = vsel %vm180, %v852, 0
    %934 = vmatprep.subr.bf16.mxu0 0
    %935 = vmatpush1.bf16.msra.mxu0 %v860
    %936 = vmatprep.subr.bf16.mxu0 0
    %937 = vmatpush1.bf16.msra.mxu0 0
    %938 = vmatprep.subr.bf16.mxu0 0
    %939 = vmatpush1.bf16.msra.mxu0 0
    %940 = vmatprep.subr.bf16.mxu0 0
    %941 = vmatpush1.bf16.msra.mxu0 0
    %942 = vmatprep.subr.bf16.mxu0 0
    %943 = vmatpush1.bf16.msra.mxu0 0
    %944 = vmatprep.subr.bf16.mxu0 0
    %945 = vmatpush1.bf16.msra.mxu0 0
    %946 = vmatprep.subr.bf16.mxu0 0
    %947 = vmatpush1.bf16.msra.mxu0 0
    %948 = vmatprep.subr.bf16.mxu0 0
    %949 = vmatpush1.bf16.msra.mxu0 0
    %950 = vmatprep.subr.bf16.mxu0 0
    %951 = vmatpush1.bf16.msra.mxu0 0
    %952 = vmatprep.subr.bf16.mxu0 0
    %953 = vmatpush1.bf16.msra.mxu0 0
    %954 = vmatprep.subr.bf16.mxu0 0
    %955 = vmatpush1.bf16.msra.mxu0 0
    %956 = vmatprep.subr.bf16.mxu0 0
    %957 = vmatpush1.bf16.msra.mxu0 0
    %958 = vmatprep.subr.bf16.mxu0 0
    %959 = vmatpush1.bf16.msra.mxu0 0
    %960 = vmatprep.subr.bf16.mxu0 0
    %961 = vmatpush1.bf16.msra.mxu0 0
    %962 = vmatprep.subr.bf16.mxu0 0
    %963 = vmatpush1.bf16.msra.mxu0 0
    %964 = vmatprep.subr.bf16.mxu0 0
    %965 = vmatpush1.bf16.msra.mxu0 0
    %966 = vmatprep.mubr.bf16.mxu0 0
    %967 = vmatmul.mubr.bf16.gmra.mrb[0].mxu0 %v863
    %v968 = vpop.f32.mrb[0].mxu0
    %v969 = vadd.f32 0.0, %v968
    %v970 = vpop.f32.mrb[0].mxu0
    %v971 = vpop.f32.mrb[0].mxu0
    %v972 = vadd.f32 0.0, %v971
    %v973 = vpop.f32.mrb[0].mxu0
    %974 = vmatprep.mubr.bf16.mxu0 0
    %975 = vmatmul.mubr.bf16.gmra.mrb[0].mxu0 %v866
    %v976 = vpop.f32.mrb[0].mxu0
    %v977 = vadd.f32 0.0, %v976
    %v978 = vpop.f32.mrb[0].mxu0
    %v979 = vpop.f32.mrb[0].mxu0
    %v980 = vadd.f32 0.0, %v979
    %v981 = vpop.f32.mrb[0].mxu0
    %982 = vmatprep.mubr.bf16.mxu0 0
    %983 = vmatmul.mubr.bf16.gmra.mrb[0].mxu0 %v869
    %v984 = vpop.f32.mrb[0].mxu0
    %v985 = vadd.f32 0.0, %v984
    %v986 = vpop.f32.mrb[0].mxu0
    %v987 = vpop.f32.mrb[0].mxu0
    %v988 = vadd.f32 0.0, %v987
    %v989 = vpop.f32.mrb[0].mxu0
    %990 = vmatprep.mubr.bf16.mxu0 0
    %991 = vmatmul.mubr.bf16.gmra.mrb[0].mxu0 %v872
    %v992 = vpop.f32.mrb[0].mxu0
    %v993 = vadd.f32 0.0, %v992
    %v994 = vpop.f32.mrb[0].mxu0
    %v995 = vpop.f32.mrb[0].mxu0
    %v996 = vadd.f32 0.0, %v995
    %v997 = vpop.f32.mrb[0].mxu0
    %998 = vmatprep.mubr.bf16.mxu0 0
    %999 = vmatmul.mubr.bf16.gmra.mrb[0].mxu0 %v875
    %v1000 = vpop.f32.mrb[0].mxu0
    %v1001 = vadd.f32 0.0, %v1000
    %v1002 = vpop.f32.mrb[0].mxu0
    %v1003 = vpop.f32.mrb[0].mxu0
    %v1004 = vadd.f32 0.0, %v1003
    %v1005 = vpop.f32.mrb[0].mxu0
    %1006 = vmatprep.mubr.bf16.mxu0 0
    %1007 = vmatmul.mubr.bf16.gmra.mrb[0].mxu0 %v878
    %v1008 = vpop.f32.mrb[0].mxu0
    %v1009 = vadd.f32 0.0, %v1008
    %v1010 = vpop.f32.mrb[0].mxu0
    %v1011 = vpop.f32.mrb[0].mxu0
    %v1012 = vadd.f32 0.0, %v1011
    %v1013 = vpop.f32.mrb[0].mxu0
    %1014 = vmatprep.mubr.bf16.mxu0 0
    %1015 = vmatmul.mubr.bf16.gmra.mrb[0].mxu0 %v881
    %v1016 = vpop.f32.mrb[0].mxu0
    %v1017 = vadd.f32 0.0, %v1016
    %v1018 = vpop.f32.mrb[0].mxu0
    %v1019 = vpop.f32.mrb[0].mxu0
    %v1020 = vadd.f32 0.0, %v1019
    %v1021 = vpop.f32.mrb[0].mxu0
    %1022 = vmatprep.mubr.bf16.mxu0 0
    %1023 = vmatmul.mubr.bf16.gmra.mrb[0].mxu0 %v884
    %v1024 = vpop.f32.mrb[0].mxu0
    %v1025 = vadd.f32 0.0, %v1024
    %v1026 = vpop.f32.mrb[0].mxu0
    %v1027 = vpop.f32.mrb[0].mxu0
    %v1028 = vadd.f32 0.0, %v1027
    %v1029 = vpop.f32.mrb[0].mxu0
    %1030 = vmatprep.mubr.bf16.mxu0 0
    %1031 = vmatmul.mubr.bf16.gmra.mrb[0].mxu0 %v887
    %v1032 = vpop.f32.mrb[0].mxu0
    %v1033 = vadd.f32 0.0, %v1032
    %v1034 = vpop.f32.mrb[0].mxu0
    %v1035 = vpop.f32.mrb[0].mxu0
    %v1036 = vadd.f32 0.0, %v1035
    %v1037 = vpop.f32.mrb[0].mxu0
    %1038 = vmatprep.mubr.bf16.mxu0 0
    %1039 = vmatmul.mubr.bf16.gmra.mrb[0].mxu0 %v890
    %v1040 = vpop.f32.mrb[0].mxu0
    %v1041 = vadd.f32 0.0, %v1040
    %v1042 = vpop.f32.mrb[0].mxu0
    %v1043 = vpop.f32.mrb[0].mxu0
    %v1044 = vadd.f32 0.0, %v1043
    %v1045 = vpop.f32.mrb[0].mxu0
    %1046 = vmatprep.mubr.bf16.mxu0 0
    %1047 = vmatmul.mubr.bf16.gmra.mrb[0].mxu0 %v893
    %v1048 = vpop.f32.mrb[0].mxu0
    %v1049 = vadd.f32 0.0, %v1048
    %v1050 = vpop.f32.mrb[0].mxu0
    %v1051 = vpop.f32.mrb[0].mxu0
    %v1052 = vadd.f32 0.0, %v1051
    %v1053 = vpop.f32.mrb[0].mxu0
    %1054 = vmatprep.mubr.bf16.mxu0 0
    %1055 = vmatmul.mubr.bf16.gmra.mrb[0].mxu0 %v896
    %v1056 = vpop.f32.mrb[0].mxu0
    %v1057 = vadd.f32 0.0, %v1056
    %v1058 = vpop.f32.mrb[0].mxu0
    %v1059 = vpop.f32.mrb[0].mxu0
    %v1060 = vadd.f32 0.0, %v1059
    %v1061 = vpop.f32.mrb[0].mxu0
    %1062 = vmatprep.mubr.bf16.mxu0 0
    %1063 = vmatmul.mubr.bf16.gmra.mrb[0].mxu0 %v899
    %v1064 = vpop.f32.mrb[0].mxu0
    %v1065 = vadd.f32 0.0, %v1064
    %v1066 = vpop.f32.mrb[0].mxu0
    %v1067 = vpop.f32.mrb[0].mxu0
    %v1068 = vadd.f32 0.0, %v1067
    %v1069 = vpop.f32.mrb[0].mxu0
    %1070 = vmatprep.mubr.bf16.mxu0 0
    %1071 = vmatmul.mubr.bf16.gmra.mrb[0].mxu0 %v902
    %v1072 = vpop.f32.mrb[0].mxu0
    %v1073 = vadd.f32 0.0, %v1072
    %v1074 = vpop.f32.mrb[0].mxu0
    %v1075 = vpop.f32.mrb[0].mxu0
    %v1076 = vadd.f32 0.0, %v1075
    %v1077 = vpop.f32.mrb[0].mxu0
    %1078 = vmatprep.mubr.bf16.mxu0 0
    %1079 = vmatmul.mubr.bf16.gmra.mrb[0].mxu0 %v905
    %v1080 = vpop.f32.mrb[0].mxu0
    %v1081 = vadd.f32 0.0, %v1080
    %v1082 = vpop.f32.mrb[0].mxu0
    %v1083 = vpop.f32.mrb[0].mxu0
    %v1084 = vadd.f32 0.0, %v1083
    %v1085 = vpop.f32.mrb[0].mxu0
    %1086 = vmatprep.mubr.bf16.mxu0 0
    %1087 = vmatmul.mubr.bf16.gmra.mrb[0].mxu0 %v908
    %v1088 = vpop.f32.mrb[0].mxu0
    %v1089 = vadd.f32 0.0, %v1088
    %v1090 = vpop.f32.mrb[0].mxu0
    %v1091 = vpop.f32.mrb[0].mxu0
    %v1092 = vadd.f32 0.0, %v1091
    %v1093 = vpop.f32.mrb[0].mxu0
    %1094 = vmatprep.mubr.bf16.mxu0 0
    %1095 = vmatmul.mubr.bf16.gmra.mrb[0].mxu0 %v911
    %v1096 = vpop.f32.mrb[0].mxu0
    %v1097 = vadd.f32 0.0, %v1096
    %v1098 = vpop.f32.mrb[0].mxu0
    %v1099 = vpop.f32.mrb[0].mxu0
    %v1100 = vadd.f32 0.0, %v1099
    %v1101 = vpop.f32.mrb[0].mxu0
    %1102 = vmatprep.mubr.bf16.mxu0 0
    %1103 = vmatmul.mubr.bf16.gmra.mrb[0].mxu0 %v914
    %v1104 = vpop.f32.mrb[0].mxu0
    %v1105 = vadd.f32 0.0, %v1104
    %v1106 = vpop.f32.mrb[0].mxu0
    %v1107 = vpop.f32.mrb[0].mxu0
    %v1108 = vadd.f32 0.0, %v1107
    %v1109 = vpop.f32.mrb[0].mxu0
    %1110 = vmatprep.mubr.bf16.mxu0 0
    %1111 = vmatmul.mubr.bf16.gmra.mrb[0].mxu0 %v917
    %v1112 = vpop.f32.mrb[0].mxu0
    %v1113 = vadd.f32 0.0, %v1112
    %v1114 = vpop.f32.mrb[0].mxu0
    %v1115 = vpop.f32.mrb[0].mxu0
    %v1116 = vadd.f32 0.0, %v1115
    %v1117 = vpop.f32.mrb[0].mxu0
    %1118 = vmatprep.mubr.bf16.mxu0 0
    %1119 = vmatmul.mubr.bf16.gmra.mrb[0].mxu0 %v920
    %v1120 = vpop.f32.mrb[0].mxu0
    %v1121 = vadd.f32 0.0, %v1120
    %v1122 = vpop.f32.mrb[0].mxu0
    %v1123 = vpop.f32.mrb[0].mxu0
    %v1124 = vadd.f32 0.0, %v1123
    %v1125 = vpop.f32.mrb[0].mxu0
    %1126 = vmatprep.mubr.bf16.mxu0 0
    %1127 = vmatmul.mubr.bf16.gmra.mrb[0].mxu0 %v923
    %v1128 = vpop.f32.mrb[0].mxu0
    %v1129 = vadd.f32 0.0, %v1128
    %v1130 = vpop.f32.mrb[0].mxu0
    %v1131 = vpop.f32.mrb[0].mxu0
    %v1132 = vadd.f32 0.0, %v1131
    %v1133 = vpop.f32.mrb[0].mxu0
    %1134 = vmatprep.mubr.bf16.mxu0 0
    %1135 = vmatmul.mubr.bf16.gmra.mrb[0].mxu0 %v926
    %v1136 = vpop.f32.mrb[0].mxu0
    %v1137 = vadd.f32 0.0, %v1136
    %v1138 = vpop.f32.mrb[0].mxu0
    %v1139 = vpop.f32.mrb[0].mxu0
    %v1140 = vadd.f32 0.0, %v1139
    %v1141 = vpop.f32.mrb[0].mxu0
    %1142 = vmatprep.mubr.bf16.mxu0 0
    %1143 = vmatmul.mubr.bf16.gmra.mrb[0].mxu0 %v929
    %v1144 = vpop.f32.mrb[0].mxu0
    %v1145 = vadd.f32 0.0, %v1144
    %v1146 = vpop.f32.mrb[0].mxu0
    %v1147 = vpop.f32.mrb[0].mxu0
    %v1148 = vadd.f32 0.0, %v1147
    %v1149 = vpop.f32.mrb[0].mxu0
    %1150 = vmatprep.mubr.bf16.mxu0 0
    %1151 = vmatmul.mubr.bf16.gmra.mrb[0].mxu0 %v932
    %v1152 = vpop.f32.mrb[0].mxu0
    %v1153 = vadd.f32 0.0, %v1152
    %v1154 = vpop.f32.mrb[0].mxu0
    %v1155 = vpop.f32.mrb[0].mxu0
    %v1156 = vadd.f32 0.0, %v1155
    %v1157 = vpop.f32.mrb[0].mxu0
    %1158 = vdwg.mxu0
    %v1159 = vadd.f32 %v591, %v969
    %v1160 = vadd.f32 %v594, %v972
    %v1161 = vadd.f32 %v599, %v977
    %v1162 = vadd.f32 %v602, %v980
    %v1163 = vadd.f32 %v607, %v985
    %v1164 = vadd.f32 %v610, %v988
    %v1165 = vadd.f32 %v615, %v993
    %v1166 = vadd.f32 %v618, %v996
    %v1167 = vadd.f32 %v623, %v1001
    %v1168 = vadd.f32 %v626, %v1004
    %v1169 = vadd.f32 %v631, %v1009
    %v1170 = vadd.f32 %v634, %v1012
    %v1171 = vadd.f32 %v639, %v1017
    %v1172 = vadd.f32 %v642, %v1020
    %v1173 = vadd.f32 %v647, %v1025
    %v1174 = vadd.f32 %v650, %v1028
    %v1175 = vadd.f32 %v655, %v1033
    %v1176 = vadd.f32 %v658, %v1036
    %v1177 = vadd.f32 %v663, %v1041
    %v1178 = vadd.f32 %v666, %v1044
    %v1179 = vadd.f32 %v671, %v1049
    %v1180 = vadd.f32 %v674, %v1052
    %v1181 = vadd.f32 %v679, %v1057
    %v1182 = vadd.f32 %v682, %v1060
    %v1183 = vadd.f32 %v687, %v1065
    %v1184 = vadd.f32 %v690, %v1068
    %v1185 = vadd.f32 %v695, %v1073
    %v1186 = vadd.f32 %v698, %v1076
    %v1187 = vadd.f32 %v703, %v1081
    %v1188 = vadd.f32 %v706, %v1084
    %v1189 = vadd.f32 %v711, %v1089
    %v1190 = vadd.f32 %v714, %v1092
    %v1191 = vadd.f32 %v719, %v1097
    %v1192 = vadd.f32 %v722, %v1100
    %v1193 = vadd.f32 %v727, %v1105
    %v1194 = vadd.f32 %v730, %v1108
    %v1195 = vadd.f32 %v735, %v1113
    %v1196 = vadd.f32 %v738, %v1116
    %v1197 = vadd.f32 %v743, %v1121
    %v1198 = vadd.f32 %v746, %v1124
    %v1199 = vadd.f32 %v751, %v1129
    %v1200 = vadd.f32 %v754, %v1132
    %v1201 = vadd.f32 %v759, %v1137
    %v1202 = vadd.f32 %v762, %v1140
    %v1203 = vadd.f32 %v767, %v1145
    %v1204 = vadd.f32 %v770, %v1148
    %v1205 = vadd.f32 %v775, %v1153
    %v1206 = vadd.f32 %v778, %v1156
    %v1207 = vld [vmem:[%s0 + $0x3] sm:$0xff]
    %v1208 = vld [vmem:[%s0 + $0xb] sm:$0xff]
    %v1209 = vld [vmem:[%s0 + $0x13] sm:$0xff]
    %v1210 = vld [vmem:[%s0 + $0x1b] sm:$0xff]
    %v1211 = vld [vmem:[%s0 + $0x23] sm:$0xff]
    %v1212 = vld [vmem:[%s0 + $0x2b] sm:$0xff]
    %v1213 = vld [vmem:[%s0 + $0x33] sm:$0xff]
    %v1214 = vld [vmem:[%s0 + $0x3b] sm:$0xff]
    %v1215 = vld [vmem:[%s0 + $0x43] sm:$0xff]
    %v1216 = vld [vmem:[%s0 + $0x4b] sm:$0xff]
    %v1217 = vld [vmem:[%s0 + $0x53] sm:$0xff]
    %v1218 = vld [vmem:[%s0 + $0x5b] sm:$0xff]
    %v1219 = vld [vmem:[%s0 + $0x63] sm:$0xff]
    %v1220 = vld [vmem:[%s0 + $0x6b] sm:$0xff]
    %v1221 = vld [vmem:[%s0 + $0x73] sm:$0xff]
    %v1222 = vld [vmem:[%s0 + $0x7b] sm:$0xff]
    %v1223 = vld [vmem:[%s0 + $0x83] sm:$0xff]
    %v1224 = vld [vmem:[%s0 + $0x8b] sm:$0xff]
    %v1225 = vld [vmem:[%s0 + $0x93] sm:$0xff]
    %v1226 = vld [vmem:[%s0 + $0x9b] sm:$0xff]
    %v1227 = vld [vmem:[%s0 + $0xa3] sm:$0xff]
    %v1228 = vld [vmem:[%s0 + $0xab] sm:$0xff]
    %v1229 = vld [vmem:[%s0 + $0xb3] sm:$0xff]
    %v1230 = vld [vmem:[%s0 + $0xbb] sm:$0xff]
    %v1231 = vld [vmem:[%s0 + $0xc3] sm:$0xff]
    %v1232 = vld [vmem:[%s0 + $0xcb] sm:$0xff]
    %v1233 = vld [vmem:[%s0 + $0xd3] sm:$0xff]
    %v1234 = vld [vmem:[%s0 + $0xdb] sm:$0xff]
    %v1235 = vld [vmem:[%s0 + $0xe3] sm:$0xff]
    %v1236 = vld [vmem:[%s0 + $0xeb] sm:$0xff]
    %v1237 = vld [vmem:[%s0 + $0xf3] sm:$0xff]
    %v1238 = vld [vmem:[%s0 + $0xfb] sm:$0xff]
    %v1239 = vld [vmem:[%s0 + $0x103] sm:$0xff]
    %v1240 = vld [vmem:[%s0 + $0x10b] sm:$0xff]
    %v1241 = vld [vmem:[%s0 + $0x113] sm:$0xff]
    %v1242 = vld [vmem:[%s0 + $0x11b] sm:$0xff]
    %v1243 = vld [vmem:[%s0 + $0x123] sm:$0xff]
    %v1244 = vld [vmem:[%s0 + $0x12b] sm:$0xff]
    %v1245 = vld [vmem:[%s0 + $0x133] sm:$0xff]
    %v1246 = vld [vmem:[%s0 + $0x13b] sm:$0xff]
    %v1247 = vld [vmem:[%s0 + $0x143] sm:$0xff]
    %v1248 = vld [vmem:[%s0 + $0x14b] sm:$0xff]
    %v1249 = vld [vmem:[%s0 + $0x153] sm:$0xff]
    %v1250 = vld [vmem:[%s0 + $0x15b] sm:$0xff]
    %v1251 = vld [vmem:[%s0 + $0x163] sm:$0xff]
    %v1252 = vld [vmem:[%s0 + $0x16b] sm:$0xff]
    %v1253 = vld [vmem:[%s0 + $0x173] sm:$0xff]
    %v1254 = vld [vmem:[%s0 + $0x17b] sm:$0xff]
    %v1255 = vpack.c.bf16 %v1208, %v1207
    %v1256 = vpack.c.bf16 %v1210, %v1209
    %v1257 = vpack.c.bf16 %v1212, %v1211
    %v1258 = vpack.c.bf16 %v1214, %v1213
    %v1259 = vpack.c.bf16 %v1216, %v1215
    %v1260 = vpack.c.bf16 %v1218, %v1217
    %v1261 = vpack.c.bf16 %v1220, %v1219
    %v1262 = vpack.c.bf16 %v1222, %v1221
    %v1263 = vpack.c.bf16 %v1224, %v1223
    %v1264 = vpack.c.bf16 %v1226, %v1225
    %v1265 = vpack.c.bf16 %v1228, %v1227
    %v1266 = vpack.c.bf16 %v1230, %v1229
    %v1267 = vpack.c.bf16 %v1232, %v1231
    %v1268 = vpack.c.bf16 %v1234, %v1233
    %v1269 = vpack.c.bf16 %v1236, %v1235
    %v1270 = vpack.c.bf16 %v1238, %v1237
    %v1271 = vpack.c.bf16 %v1240, %v1239
    %v1272 = vpack.c.bf16 %v1242, %v1241
    %v1273 = vpack.c.bf16 %v1244, %v1243
    %v1274 = vpack.c.bf16 %v1246, %v1245
    %v1275 = vpack.c.bf16 %v1248, %v1247
    %v1276 = vpack.c.bf16 %v1250, %v1249
    %v1277 = vpack.c.bf16 %v1252, %v1251
    %v1278 = vpack.c.bf16 %v1254, %v1253
    %s1279 = scalar_lea.vmem %s1, 24
    %v1280 = vld [vmem:[%s1279] sm:$0xf]
    %v1281 = vld [vmem:[%s1279 + $0x4] sm:$0xf]
    %v1284 = vunpack.c.l.b16 %v1280
    %v1285 = vunpack.c.l.b16 %v1281
    %v1286 = vpack.c.b16 %v1285, %v1284
    %v1289 = vsel %vm180, %v1255, 0
    %v1292 = vsel %vm180, %v1256, 0
    %v1295 = vsel %vm180, %v1257, 0
    %v1298 = vsel %vm180, %v1258, 0
    %v1301 = vsel %vm180, %v1259, 0
    %v1304 = vsel %vm180, %v1260, 0
    %v1307 = vsel %vm180, %v1261, 0
    %v1310 = vsel %vm180, %v1262, 0
    %v1313 = vsel %vm180, %v1263, 0
    %v1316 = vsel %vm180, %v1264, 0
    %v1319 = vsel %vm180, %v1265, 0
    %v1322 = vsel %vm180, %v1266, 0
    %v1325 = vsel %vm180, %v1267, 0
    %v1328 = vsel %vm180, %v1268, 0
    %v1331 = vsel %vm180, %v1269, 0
    %v1334 = vsel %vm180, %v1270, 0
    %v1337 = vsel %vm180, %v1271, 0
    %v1340 = vsel %vm180, %v1272, 0
    %v1343 = vsel %vm180, %v1273, 0
    %v1346 = vsel %vm180, %v1274, 0
    %v1349 = vsel %vm180, %v1275, 0
    %v1352 = vsel %vm180, %v1276, 0
    %v1355 = vsel %vm180, %v1277, 0
    %v1358 = vsel %vm180, %v1278, 0
    %1360 = vmatprep.subr.bf16.mxu0 0
    %1361 = vmatpush1.bf16.msra.mxu0 %v1286
    %1362 = vmatprep.subr.bf16.mxu0 0
    %1363 = vmatpush1.bf16.msra.mxu0 0
    %1364 = vmatprep.subr.bf16.mxu0 0
    %1365 = vmatpush1.bf16.msra.mxu0 0
    %1366 = vmatprep.subr.bf16.mxu0 0
    %1367 = vmatpush1.bf16.msra.mxu0 0
    %1368 = vmatprep.subr.bf16.mxu0 0
    %1369 = vmatpush1.bf16.msra.mxu0 0
    %1370 = vmatprep.subr.bf16.mxu0 0
    %1371 = vmatpush1.bf16.msra.mxu0 0
    %1372 = vmatprep.subr.bf16.mxu0 0
    %1373 = vmatpush1.bf16.msra.mxu0 0
    %1374 = vmatprep.subr.bf16.mxu0 0
    %1375 = vmatpush1.bf16.msra.mxu0 0
    %1376 = vmatprep.subr.bf16.mxu0 0
    %1377 = vmatpush1.bf16.msra.mxu0 0
    %1378 = vmatprep.subr.bf16.mxu0 0
    %1379 = vmatpush1.bf16.msra.mxu0 0
    %1380 = vmatprep.subr.bf16.mxu0 0
    %1381 = vmatpush1.bf16.msra.mxu0 0
    %1382 = vmatprep.subr.bf16.mxu0 0
    %1383 = vmatpush1.bf16.msra.mxu0 0
    %1384 = vmatprep.subr.bf16.mxu0 0
    %1385 = vmatpush1.bf16.msra.mxu0 0
    %1386 = vmatprep.subr.bf16.mxu0 0
    %1387 = vmatpush1.bf16.msra.mxu0 0
    %1388 = vmatprep.subr.bf16.mxu0 0
    %1389 = vmatpush1.bf16.msra.mxu0 0
    %1390 = vmatprep.subr.bf16.mxu0 0
    %1391 = vmatpush1.bf16.msra.mxu0 0
    %1392 = vmatprep.mubr.bf16.mxu0 0
    %1393 = vmatmul.mubr.bf16.gmra.mrb[0].mxu0 %v1289
    %v1394 = vpop.f32.mrb[0].mxu0
    %v1395 = vadd.f32 0.0, %v1394
    %v1396 = vpop.f32.mrb[0].mxu0
    %v1397 = vpop.f32.mrb[0].mxu0
    %v1398 = vadd.f32 0.0, %v1397
    %v1399 = vpop.f32.mrb[0].mxu0
    %1400 = vmatprep.mubr.bf16.mxu0 0
    %1401 = vmatmul.mubr.bf16.gmra.mrb[0].mxu0 %v1292
    %v1402 = vpop.f32.mrb[0].mxu0
    %v1403 = vadd.f32 0.0, %v1402
    %v1404 = vpop.f32.mrb[0].mxu0
    %v1405 = vpop.f32.mrb[0].mxu0
    %v1406 = vadd.f32 0.0, %v1405
    %v1407 = vpop.f32.mrb[0].mxu0
    %1408 = vmatprep.mubr.bf16.mxu0 0
    %1409 = vmatmul.mubr.bf16.gmra.mrb[0].mxu0 %v1295
    %v1410 = vpop.f32.mrb[0].mxu0
    %v1411 = vadd.f32 0.0, %v1410
    %v1412 = vpop.f32.mrb[0].mxu0
    %v1413 = vpop.f32.mrb[0].mxu0
    %v1414 = vadd.f32 0.0, %v1413
    %v1415 = vpop.f32.mrb[0].mxu0
    %1416 = vmatprep.mubr.bf16.mxu0 0
    %1417 = vmatmul.mubr.bf16.gmra.mrb[0].mxu0 %v1298
    %v1418 = vpop.f32.mrb[0].mxu0
    %v1419 = vadd.f32 0.0, %v1418
    %v1420 = vpop.f32.mrb[0].mxu0
    %v1421 = vpop.f32.mrb[0].mxu0
    %v1422 = vadd.f32 0.0, %v1421
    %v1423 = vpop.f32.mrb[0].mxu0
    %1424 = vmatprep.mubr.bf16.mxu0 0
    %1425 = vmatmul.mubr.bf16.gmra.mrb[0].mxu0 %v1301
    %v1426 = vpop.f32.mrb[0].mxu0
    %v1427 = vadd.f32 0.0, %v1426
    %v1428 = vpop.f32.mrb[0].mxu0
    %v1429 = vpop.f32.mrb[0].mxu0
    %v1430 = vadd.f32 0.0, %v1429
    %v1431 = vpop.f32.mrb[0].mxu0
    %1432 = vmatprep.mubr.bf16.mxu0 0
    %1433 = vmatmul.mubr.bf16.gmra.mrb[0].mxu0 %v1304
    %v1434 = vpop.f32.mrb[0].mxu0
    %v1435 = vadd.f32 0.0, %v1434
    %v1436 = vpop.f32.mrb[0].mxu0
    %v1437 = vpop.f32.mrb[0].mxu0
    %v1438 = vadd.f32 0.0, %v1437
    %v1439 = vpop.f32.mrb[0].mxu0
    %1440 = vmatprep.mubr.bf16.mxu0 0
    %1441 = vmatmul.mubr.bf16.gmra.mrb[0].mxu0 %v1307
    %v1442 = vpop.f32.mrb[0].mxu0
    %v1443 = vadd.f32 0.0, %v1442
    %v1444 = vpop.f32.mrb[0].mxu0
    %v1445 = vpop.f32.mrb[0].mxu0
    %v1446 = vadd.f32 0.0, %v1445
    %v1447 = vpop.f32.mrb[0].mxu0
    %1448 = vmatprep.mubr.bf16.mxu0 0
    %1449 = vmatmul.mubr.bf16.gmra.mrb[0].mxu0 %v1310
    %v1450 = vpop.f32.mrb[0].mxu0
    %v1451 = vadd.f32 0.0, %v1450
    %v1452 = vpop.f32.mrb[0].mxu0
    %v1453 = vpop.f32.mrb[0].mxu0
    %v1454 = vadd.f32 0.0, %v1453
    %v1455 = vpop.f32.mrb[0].mxu0
    %1456 = vmatprep.mubr.bf16.mxu0 0
    %1457 = vmatmul.mubr.bf16.gmra.mrb[0].mxu0 %v1313
    %v1458 = vpop.f32.mrb[0].mxu0
    %v1459 = vadd.f32 0.0, %v1458
    %v1460 = vpop.f32.mrb[0].mxu0
    %v1461 = vpop.f32.mrb[0].mxu0
    %v1462 = vadd.f32 0.0, %v1461
    %v1463 = vpop.f32.mrb[0].mxu0
    %1464 = vmatprep.mubr.bf16.mxu0 0
    %1465 = vmatmul.mubr.bf16.gmra.mrb[0].mxu0 %v1316
    %v1466 = vpop.f32.mrb[0].mxu0
    %v1467 = vadd.f32 0.0, %v1466
    %v1468 = vpop.f32.mrb[0].mxu0
    %v1469 = vpop.f32.mrb[0].mxu0
    %v1470 = vadd.f32 0.0, %v1469
    %v1471 = vpop.f32.mrb[0].mxu0
    %1472 = vmatprep.mubr.bf16.mxu0 0
    %1473 = vmatmul.mubr.bf16.gmra.mrb[0].mxu0 %v1319
    %v1474 = vpop.f32.mrb[0].mxu0
    %v1475 = vadd.f32 0.0, %v1474
    %v1476 = vpop.f32.mrb[0].mxu0
    %v1477 = vpop.f32.mrb[0].mxu0
    %v1478 = vadd.f32 0.0, %v1477
    %v1479 = vpop.f32.mrb[0].mxu0
    %1480 = vmatprep.mubr.bf16.mxu0 0
    %1481 = vmatmul.mubr.bf16.gmra.mrb[0].mxu0 %v1322
    %v1482 = vpop.f32.mrb[0].mxu0
    %v1483 = vadd.f32 0.0, %v1482
    %v1484 = vpop.f32.mrb[0].mxu0
    %v1485 = vpop.f32.mrb[0].mxu0
    %v1486 = vadd.f32 0.0, %v1485
    %v1487 = vpop.f32.mrb[0].mxu0
    %1488 = vmatprep.mubr.bf16.mxu0 0
    %1489 = vmatmul.mubr.bf16.gmra.mrb[0].mxu0 %v1325
    %v1490 = vpop.f32.mrb[0].mxu0
    %v1491 = vadd.f32 0.0, %v1490
    %v1492 = vpop.f32.mrb[0].mxu0
    %v1493 = vpop.f32.mrb[0].mxu0
    %v1494 = vadd.f32 0.0, %v1493
    %v1495 = vpop.f32.mrb[0].mxu0
    %1496 = vmatprep.mubr.bf16.mxu0 0
    %1497 = vmatmul.mubr.bf16.gmra.mrb[0].mxu0 %v1328
    %v1498 = vpop.f32.mrb[0].mxu0
    %v1499 = vadd.f32 0.0, %v1498
    %v1500 = vpop.f32.mrb[0].mxu0
    %v1501 = vpop.f32.mrb[0].mxu0
    %v1502 = vadd.f32 0.0, %v1501
    %v1503 = vpop.f32.mrb[0].mxu0
    %1504 = vmatprep.mubr.bf16.mxu0 0
    %1505 = vmatmul.mubr.bf16.gmra.mrb[0].mxu0 %v1331
    %v1506 = vpop.f32.mrb[0].mxu0
    %v1507 = vadd.f32 0.0, %v1506
    %v1508 = vpop.f32.mrb[0].mxu0
    %v1509 = vpop.f32.mrb[0].mxu0
    %v1510 = vadd.f32 0.0, %v1509
    %v1511 = vpop.f32.mrb[0].mxu0
    %1512 = vmatprep.mubr.bf16.mxu0 0
    %1513 = vmatmul.mubr.bf16.gmra.mrb[0].mxu0 %v1334
    %v1514 = vpop.f32.mrb[0].mxu0
    %v1515 = vadd.f32 0.0, %v1514
    %v1516 = vpop.f32.mrb[0].mxu0
    %v1517 = vpop.f32.mrb[0].mxu0
    %v1518 = vadd.f32 0.0, %v1517
    %v1519 = vpop.f32.mrb[0].mxu0
    %1520 = vmatprep.mubr.bf16.mxu0 0
    %1521 = vmatmul.mubr.bf16.gmra.mrb[0].mxu0 %v1337
    %v1522 = vpop.f32.mrb[0].mxu0
    %v1523 = vadd.f32 0.0, %v1522
    %v1524 = vpop.f32.mrb[0].mxu0
    %v1525 = vpop.f32.mrb[0].mxu0
    %v1526 = vadd.f32 0.0, %v1525
    %v1527 = vpop.f32.mrb[0].mxu0
    %1528 = vmatprep.mubr.bf16.mxu0 0
    %1529 = vmatmul.mubr.bf16.gmra.mrb[0].mxu0 %v1340
    %v1530 = vpop.f32.mrb[0].mxu0
    %v1531 = vadd.f32 0.0, %v1530
    %v1532 = vpop.f32.mrb[0].mxu0
    %v1533 = vpop.f32.mrb[0].mxu0
    %v1534 = vadd.f32 0.0, %v1533
    %v1535 = vpop.f32.mrb[0].mxu0
    %1536 = vmatprep.mubr.bf16.mxu0 0
    %1537 = vmatmul.mubr.bf16.gmra.mrb[0].mxu0 %v1343
    %v1538 = vpop.f32.mrb[0].mxu0
    %v1539 = vadd.f32 0.0, %v1538
    %v1540 = vpop.f32.mrb[0].mxu0
    %v1541 = vpop.f32.mrb[0].mxu0
    %v1542 = vadd.f32 0.0, %v1541
    %v1543 = vpop.f32.mrb[0].mxu0
    %1544 = vmatprep.mubr.bf16.mxu0 0
    %1545 = vmatmul.mubr.bf16.gmra.mrb[0].mxu0 %v1346
    %v1546 = vpop.f32.mrb[0].mxu0
    %v1547 = vadd.f32 0.0, %v1546
    %v1548 = vpop.f32.mrb[0].mxu0
    %v1549 = vpop.f32.mrb[0].mxu0
    %v1550 = vadd.f32 0.0, %v1549
    %v1551 = vpop.f32.mrb[0].mxu0
    %1552 = vmatprep.mubr.bf16.mxu0 0
    %1553 = vmatmul.mubr.bf16.gmra.mrb[0].mxu0 %v1349
    %v1554 = vpop.f32.mrb[0].mxu0
    %v1555 = vadd.f32 0.0, %v1554
    %v1556 = vpop.f32.mrb[0].mxu0
    %v1557 = vpop.f32.mrb[0].mxu0
    %v1558 = vadd.f32 0.0, %v1557
    %v1559 = vpop.f32.mrb[0].mxu0
    %1560 = vmatprep.mubr.bf16.mxu0 0
    %1561 = vmatmul.mubr.bf16.gmra.mrb[0].mxu0 %v1352
    %v1562 = vpop.f32.mrb[0].mxu0
    %v1563 = vadd.f32 0.0, %v1562
    %v1564 = vpop.f32.mrb[0].mxu0
    %v1565 = vpop.f32.mrb[0].mxu0
    %v1566 = vadd.f32 0.0, %v1565
    %v1567 = vpop.f32.mrb[0].mxu0
    %1568 = vmatprep.mubr.bf16.mxu0 0
    %1569 = vmatmul.mubr.bf16.gmra.mrb[0].mxu0 %v1355
    %v1570 = vpop.f32.mrb[0].mxu0
    %v1571 = vadd.f32 0.0, %v1570
    %v1572 = vpop.f32.mrb[0].mxu0
    %v1573 = vpop.f32.mrb[0].mxu0
    %v1574 = vadd.f32 0.0, %v1573
    %v1575 = vpop.f32.mrb[0].mxu0
    %1576 = vmatprep.mubr.bf16.mxu0 0
    %1577 = vmatmul.mubr.bf16.gmra.mrb[0].mxu0 %v1358
    %v1578 = vpop.f32.mrb[0].mxu0
    %v1579 = vadd.f32 0.0, %v1578
    %v1580 = vpop.f32.mrb[0].mxu0
    %v1581 = vpop.f32.mrb[0].mxu0
    %v1582 = vadd.f32 0.0, %v1581
    %v1583 = vpop.f32.mrb[0].mxu0
    %1584 = vdwg.mxu0
    %v1585 = vadd.f32 %v1159, %v1395
    %v1586 = vadd.f32 %v1160, %v1398
    %v1587 = vadd.f32 %v1161, %v1403
    %v1588 = vadd.f32 %v1162, %v1406
    %v1589 = vadd.f32 %v1163, %v1411
    %v1590 = vadd.f32 %v1164, %v1414
    %v1591 = vadd.f32 %v1165, %v1419
    %v1592 = vadd.f32 %v1166, %v1422
    %v1593 = vadd.f32 %v1167, %v1427
    %v1594 = vadd.f32 %v1168, %v1430
    %v1595 = vadd.f32 %v1169, %v1435
    %v1596 = vadd.f32 %v1170, %v1438
    %v1597 = vadd.f32 %v1171, %v1443
    %v1598 = vadd.f32 %v1172, %v1446
    %v1599 = vadd.f32 %v1173, %v1451
    %v1600 = vadd.f32 %v1174, %v1454
    %v1601 = vadd.f32 %v1175, %v1459
    %v1602 = vadd.f32 %v1176, %v1462
    %v1603 = vadd.f32 %v1177, %v1467
    %v1604 = vadd.f32 %v1178, %v1470
    %v1605 = vadd.f32 %v1179, %v1475
    %v1606 = vadd.f32 %v1180, %v1478
    %v1607 = vadd.f32 %v1181, %v1483
    %v1608 = vadd.f32 %v1182, %v1486
    %v1609 = vadd.f32 %v1183, %v1491
    %v1610 = vadd.f32 %v1184, %v1494
    %v1611 = vadd.f32 %v1185, %v1499
    %v1612 = vadd.f32 %v1186, %v1502
    %v1613 = vadd.f32 %v1187, %v1507
    %v1614 = vadd.f32 %v1188, %v1510
    %v1615 = vadd.f32 %v1189, %v1515
    %v1616 = vadd.f32 %v1190, %v1518
    %v1617 = vadd.f32 %v1191, %v1523
    %v1618 = vadd.f32 %v1192, %v1526
    %v1619 = vadd.f32 %v1193, %v1531
    %v1620 = vadd.f32 %v1194, %v1534
    %v1621 = vadd.f32 %v1195, %v1539
    %v1622 = vadd.f32 %v1196, %v1542
    %v1623 = vadd.f32 %v1197, %v1547
    %v1624 = vadd.f32 %v1198, %v1550
    %v1625 = vadd.f32 %v1199, %v1555
    %v1626 = vadd.f32 %v1200, %v1558
    %v1627 = vadd.f32 %v1201, %v1563
    %v1628 = vadd.f32 %v1202, %v1566
    %v1629 = vadd.f32 %v1203, %v1571
    %v1630 = vadd.f32 %v1204, %v1574
    %v1631 = vadd.f32 %v1205, %v1579
    %v1632 = vadd.f32 %v1206, %v1582
    %v1633 = vld [vmem:[%s0 + $0x4] sm:$0xff]
    %v1634 = vld [vmem:[%s0 + $0xc] sm:$0xff]
    %v1635 = vld [vmem:[%s0 + $0x14] sm:$0xff]
    %v1636 = vld [vmem:[%s0 + $0x1c] sm:$0xff]
    %v1637 = vld [vmem:[%s0 + $0x24] sm:$0xff]
    %v1638 = vld [vmem:[%s0 + $0x2c] sm:$0xff]
    %v1639 = vld [vmem:[%s0 + $0x34] sm:$0xff]
    %v1640 = vld [vmem:[%s0 + $0x3c] sm:$0xff]
    %v1641 = vld [vmem:[%s0 + $0x44] sm:$0xff]
    %v1642 = vld [vmem:[%s0 + $0x4c] sm:$0xff]
    %v1643 = vld [vmem:[%s0 + $0x54] sm:$0xff]
    %v1644 = vld [vmem:[%s0 + $0x5c] sm:$0xff]
    %v1645 = vld [vmem:[%s0 + $0x64] sm:$0xff]
    %v1646 = vld [vmem:[%s0 + $0x6c] sm:$0xff]
    %v1647 = vld [vmem:[%s0 + $0x74] sm:$0xff]
    %v1648 = vld [vmem:[%s0 + $0x7c] sm:$0xff]
    %v1649 = vld [vmem:[%s0 + $0x84] sm:$0xff]
    %v1650 = vld [vmem:[%s0 + $0x8c] sm:$0xff]
    %v1651 = vld [vmem:[%s0 + $0x94] sm:$0xff]
    %v1652 = vld [vmem:[%s0 + $0x9c] sm:$0xff]
    %v1653 = vld [vmem:[%s0 + $0xa4] sm:$0xff]
    %v1654 = vld [vmem:[%s0 + $0xac] sm:$0xff]
    %v1655 = vld [vmem:[%s0 + $0xb4] sm:$0xff]
    %v1656 = vld [vmem:[%s0 + $0xbc] sm:$0xff]
    %v1657 = vld [vmem:[%s0 + $0xc4] sm:$0xff]
    %v1658 = vld [vmem:[%s0 + $0xcc] sm:$0xff]
    %v1659 = vld [vmem:[%s0 + $0xd4] sm:$0xff]
    %v1660 = vld [vmem:[%s0 + $0xdc] sm:$0xff]
    %v1661 = vld [vmem:[%s0 + $0xe4] sm:$0xff]
    %v1662 = vld [vmem:[%s0 + $0xec] sm:$0xff]
    %v1663 = vld [vmem:[%s0 + $0xf4] sm:$0xff]
    %v1664 = vld [vmem:[%s0 + $0xfc] sm:$0xff]
    %v1665 = vld [vmem:[%s0 + $0x104] sm:$0xff]
    %v1666 = vld [vmem:[%s0 + $0x10c] sm:$0xff]
    %v1667 = vld [vmem:[%s0 + $0x114] sm:$0xff]
    %v1668 = vld [vmem:[%s0 + $0x11c] sm:$0xff]
    %v1669 = vld [vmem:[%s0 + $0x124] sm:$0xff]
    %v1670 = vld [vmem:[%s0 + $0x12c] sm:$0xff]
    %v1671 = vld [vmem:[%s0 + $0x134] sm:$0xff]
    %v1672 = vld [vmem:[%s0 + $0x13c] sm:$0xff]
    %v1673 = vld [vmem:[%s0 + $0x144] sm:$0xff]
    %v1674 = vld [vmem:[%s0 + $0x14c] sm:$0xff]
    %v1675 = vld [vmem:[%s0 + $0x154] sm:$0xff]
    %v1676 = vld [vmem:[%s0 + $0x15c] sm:$0xff]
    %v1677 = vld [vmem:[%s0 + $0x164] sm:$0xff]
    %v1678 = vld [vmem:[%s0 + $0x16c] sm:$0xff]
    %v1679 = vld [vmem:[%s0 + $0x174] sm:$0xff]
    %v1680 = vld [vmem:[%s0 + $0x17c] sm:$0xff]
    %v1681 = vpack.c.bf16 %v1634, %v1633
    %v1682 = vpack.c.bf16 %v1636, %v1635
    %v1683 = vpack.c.bf16 %v1638, %v1637
    %v1684 = vpack.c.bf16 %v1640, %v1639
    %v1685 = vpack.c.bf16 %v1642, %v1641
    %v1686 = vpack.c.bf16 %v1644, %v1643
    %v1687 = vpack.c.bf16 %v1646, %v1645
    %v1688 = vpack.c.bf16 %v1648, %v1647
    %v1689 = vpack.c.bf16 %v1650, %v1649
    %v1690 = vpack.c.bf16 %v1652, %v1651
    %v1691 = vpack.c.bf16 %v1654, %v1653
    %v1692 = vpack.c.bf16 %v1656, %v1655
    %v1693 = vpack.c.bf16 %v1658, %v1657
    %v1694 = vpack.c.bf16 %v1660, %v1659
    %v1695 = vpack.c.bf16 %v1662, %v1661
    %v1696 = vpack.c.bf16 %v1664, %v1663
    %v1697 = vpack.c.bf16 %v1666, %v1665
    %v1698 = vpack.c.bf16 %v1668, %v1667
    %v1699 = vpack.c.bf16 %v1670, %v1669
    %v1700 = vpack.c.bf16 %v1672, %v1671
    %v1701 = vpack.c.bf16 %v1674, %v1673
    %v1702 = vpack.c.bf16 %v1676, %v1675
    %v1703 = vpack.c.bf16 %v1678, %v1677
    %v1704 = vpack.c.bf16 %v1680, %v1679
    %s1705 = scalar_lea.vmem %s1, 32
    %v1706 = vld [vmem:[%s1705] sm:$0xf]
    %v1707 = vld [vmem:[%s1705 + $0x4] sm:$0xf]
    %v1710 = vunpack.c.l.b16 %v1706
    %v1711 = vunpack.c.l.b16 %v1707
    %v1712 = vpack.c.b16 %v1711, %v1710
    %v1715 = vsel %vm180, %v1681, 0
    %v1718 = vsel %vm180, %v1682, 0
    %v1721 = vsel %vm180, %v1683, 0
    %v1724 = vsel %vm180, %v1684, 0
    %v1727 = vsel %vm180, %v1685, 0
    %v1730 = vsel %vm180, %v1686, 0
    %v1733 = vsel %vm180, %v1687, 0
    %v1736 = vsel %vm180, %v1688, 0
    %v1739 = vsel %vm180, %v1689, 0
    %v1742 = vsel %vm180, %v1690, 0
    %v1745 = vsel %vm180, %v1691, 0
    %v1748 = vsel %vm180, %v1692, 0
    %v1751 = vsel %vm180, %v1693, 0
    %v1754 = vsel %vm180, %v1694, 0
    %v1757 = vsel %vm180, %v1695, 0
    %v1760 = vsel %vm180, %v1696, 0
    %v1763 = vsel %vm180, %v1697, 0
    %v1766 = vsel %vm180, %v1698, 0
    %v1769 = vsel %vm180, %v1699, 0
    %v1772 = vsel %vm180, %v1700, 0
    %v1775 = vsel %vm180, %v1701, 0
    %v1778 = vsel %vm180, %v1702, 0
    %v1781 = vsel %vm180, %v1703, 0
    %v1784 = vsel %vm180, %v1704, 0
    %1786 = vmatprep.subr.bf16.mxu0 0
    %1787 = vmatpush1.bf16.msra.mxu0 %v1712
    %1788 = vmatprep.subr.bf16.mxu0 0
    %1789 = vmatpush1.bf16.msra.mxu0 0
    %1790 = vmatprep.subr.bf16.mxu0 0
    %1791 = vmatpush1.bf16.msra.mxu0 0
    %1792 = vmatprep.subr.bf16.mxu0 0
    %1793 = vmatpush1.bf16.msra.mxu0 0
    %1794 = vmatprep.subr.bf16.mxu0 0
    %1795 = vmatpush1.bf16.msra.mxu0 0
    %1796 = vmatprep.subr.bf16.mxu0 0
    %1797 = vmatpush1.bf16.msra.mxu0 0
    %1798 = vmatprep.subr.bf16.mxu0 0
    %1799 = vmatpush1.bf16.msra.mxu0 0
    %1800 = vmatprep.subr.bf16.mxu0 0
    %1801 = vmatpush1.bf16.msra.mxu0 0
    %1802 = vmatprep.subr.bf16.mxu0 0
    %1803 = vmatpush1.bf16.msra.mxu0 0
    %1804 = vmatprep.subr.bf16.mxu0 0
    %1805 = vmatpush1.bf16.msra.mxu0 0
    %1806 = vmatprep.subr.bf16.mxu0 0
    %1807 = vmatpush1.bf16.msra.mxu0 0
    %1808 = vmatprep.subr.bf16.mxu0 0
    %1809 = vmatpush1.bf16.msra.mxu0 0
    %1810 = vmatprep.subr.bf16.mxu0 0
    %1811 = vmatpush1.bf16.msra.mxu0 0
    %1812 = vmatprep.subr.bf16.mxu0 0
    %1813 = vmatpush1.bf16.msra.mxu0 0
    %1814 = vmatprep.subr.bf16.mxu0 0
    %1815 = vmatpush1.bf16.msra.mxu0 0
    %1816 = vmatprep.subr.bf16.mxu0 0
    %1817 = vmatpush1.bf16.msra.mxu0 0
    %1818 = vmatprep.mubr.bf16.mxu0 0
    %1819 = vmatmul.mubr.bf16.gmra.mrb[0].mxu0 %v1715
    %v1820 = vpop.f32.mrb[0].mxu0
    %v1821 = vadd.f32 0.0, %v1820
    %v1822 = vpop.f32.mrb[0].mxu0
    %v1823 = vpop.f32.mrb[0].mxu0
    %v1824 = vadd.f32 0.0, %v1823
    %v1825 = vpop.f32.mrb[0].mxu0
    %1826 = vmatprep.mubr.bf16.mxu0 0
    %1827 = vmatmul.mubr.bf16.gmra.mrb[0].mxu0 %v1718
    %v1828 = vpop.f32.mrb[0].mxu0
    %v1829 = vadd.f32 0.0, %v1828
    %v1830 = vpop.f32.mrb[0].mxu0
    %v1831 = vpop.f32.mrb[0].mxu0
    %v1832 = vadd.f32 0.0, %v1831
    %v1833 = vpop.f32.mrb[0].mxu0
    %1834 = vmatprep.mubr.bf16.mxu0 0
    %1835 = vmatmul.mubr.bf16.gmra.mrb[0].mxu0 %v1721
    %v1836 = vpop.f32.mrb[0].mxu0
    %v1837 = vadd.f32 0.0, %v1836
    %v1838 = vpop.f32.mrb[0].mxu0
    %v1839 = vpop.f32.mrb[0].mxu0
    %v1840 = vadd.f32 0.0, %v1839
    %v1841 = vpop.f32.mrb[0].mxu0
    %1842 = vmatprep.mubr.bf16.mxu0 0
    %1843 = vmatmul.mubr.bf16.gmra.mrb[0].mxu0 %v1724
    %v1844 = vpop.f32.mrb[0].mxu0
    %v1845 = vadd.f32 0.0, %v1844
    %v1846 = vpop.f32.mrb[0].mxu0
    %v1847 = vpop.f32.mrb[0].mxu0
    %v1848 = vadd.f32 0.0, %v1847
    %v1849 = vpop.f32.mrb[0].mxu0
    %1850 = vmatprep.mubr.bf16.mxu0 0
    %1851 = vmatmul.mubr.bf16.gmra.mrb[0].mxu0 %v1727
    %v1852 = vpop.f32.mrb[0].mxu0
    %v1853 = vadd.f32 0.0, %v1852
    %v1854 = vpop.f32.mrb[0].mxu0
    %v1855 = vpop.f32.mrb[0].mxu0
    %v1856 = vadd.f32 0.0, %v1855
    %v1857 = vpop.f32.mrb[0].mxu0
    %1858 = vmatprep.mubr.bf16.mxu0 0
    %1859 = vmatmul.mubr.bf16.gmra.mrb[0].mxu0 %v1730
    %v1860 = vpop.f32.mrb[0].mxu0
    %v1861 = vadd.f32 0.0, %v1860
    %v1862 = vpop.f32.mrb[0].mxu0
    %v1863 = vpop.f32.mrb[0].mxu0
    %v1864 = vadd.f32 0.0, %v1863
    %v1865 = vpop.f32.mrb[0].mxu0
    %1866 = vmatprep.mubr.bf16.mxu0 0
    %1867 = vmatmul.mubr.bf16.gmra.mrb[0].mxu0 %v1733
    %v1868 = vpop.f32.mrb[0].mxu0
    %v1869 = vadd.f32 0.0, %v1868
    %v1870 = vpop.f32.mrb[0].mxu0
    %v1871 = vpop.f32.mrb[0].mxu0
    %v1872 = vadd.f32 0.0, %v1871
    %v1873 = vpop.f32.mrb[0].mxu0
    %1874 = vmatprep.mubr.bf16.mxu0 0
    %1875 = vmatmul.mubr.bf16.gmra.mrb[0].mxu0 %v1736
    %v1876 = vpop.f32.mrb[0].mxu0
    %v1877 = vadd.f32 0.0, %v1876
    %v1878 = vpop.f32.mrb[0].mxu0
    %v1879 = vpop.f32.mrb[0].mxu0
    %v1880 = vadd.f32 0.0, %v1879
    %v1881 = vpop.f32.mrb[0].mxu0
    %1882 = vmatprep.mubr.bf16.mxu0 0
    %1883 = vmatmul.mubr.bf16.gmra.mrb[0].mxu0 %v1739
    %v1884 = vpop.f32.mrb[0].mxu0
    %v1885 = vadd.f32 0.0, %v1884
    %v1886 = vpop.f32.mrb[0].mxu0
    %v1887 = vpop.f32.mrb[0].mxu0
    %v1888 = vadd.f32 0.0, %v1887
    %v1889 = vpop.f32.mrb[0].mxu0
    %1890 = vmatprep.mubr.bf16.mxu0 0
    %1891 = vmatmul.mubr.bf16.gmra.mrb[0].mxu0 %v1742
    %v1892 = vpop.f32.mrb[0].mxu0
    %v1893 = vadd.f32 0.0, %v1892
    %v1894 = vpop.f32.mrb[0].mxu0
    %v1895 = vpop.f32.mrb[0].mxu0
    %v1896 = vadd.f32 0.0, %v1895
    %v1897 = vpop.f32.mrb[0].mxu0
    %1898 = vmatprep.mubr.bf16.mxu0 0
    %1899 = vmatmul.mubr.bf16.gmra.mrb[0].mxu0 %v1745
    %v1900 = vpop.f32.mrb[0].mxu0
    %v1901 = vadd.f32 0.0, %v1900
    %v1902 = vpop.f32.mrb[0].mxu0
    %v1903 = vpop.f32.mrb[0].mxu0
    %v1904 = vadd.f32 0.0, %v1903
    %v1905 = vpop.f32.mrb[0].mxu0
    %1906 = vmatprep.mubr.bf16.mxu0 0
    %1907 = vmatmul.mubr.bf16.gmra.mrb[0].mxu0 %v1748
    %v1908 = vpop.f32.mrb[0].mxu0
    %v1909 = vadd.f32 0.0, %v1908
    %v1910 = vpop.f32.mrb[0].mxu0
    %v1911 = vpop.f32.mrb[0].mxu0
    %v1912 = vadd.f32 0.0, %v1911
    %v1913 = vpop.f32.mrb[0].mxu0
    %1914 = vmatprep.mubr.bf16.mxu0 0
    %1915 = vmatmul.mubr.bf16.gmra.mrb[0].mxu0 %v1751
    %v1916 = vpop.f32.mrb[0].mxu0
    %v1917 = vadd.f32 0.0, %v1916
    %v1918 = vpop.f32.mrb[0].mxu0
    %v1919 = vpop.f32.mrb[0].mxu0
    %v1920 = vadd.f32 0.0, %v1919
    %v1921 = vpop.f32.mrb[0].mxu0
    %1922 = vmatprep.mubr.bf16.mxu0 0
    %1923 = vmatmul.mubr.bf16.gmra.mrb[0].mxu0 %v1754
    %v1924 = vpop.f32.mrb[0].mxu0
    %v1925 = vadd.f32 0.0, %v1924
    %v1926 = vpop.f32.mrb[0].mxu0
    %v1927 = vpop.f32.mrb[0].mxu0
    %v1928 = vadd.f32 0.0, %v1927
    %v1929 = vpop.f32.mrb[0].mxu0
    %1930 = vmatprep.mubr.bf16.mxu0 0
    %1931 = vmatmul.mubr.bf16.gmra.mrb[0].mxu0 %v1757
    %v1932 = vpop.f32.mrb[0].mxu0
    %v1933 = vadd.f32 0.0, %v1932
    %v1934 = vpop.f32.mrb[0].mxu0
    %v1935 = vpop.f32.mrb[0].mxu0
    %v1936 = vadd.f32 0.0, %v1935
    %v1937 = vpop.f32.mrb[0].mxu0
    %1938 = vmatprep.mubr.bf16.mxu0 0
    %1939 = vmatmul.mubr.bf16.gmra.mrb[0].mxu0 %v1760
    %v1940 = vpop.f32.mrb[0].mxu0
    %v1941 = vadd.f32 0.0, %v1940
    %v1942 = vpop.f32.mrb[0].mxu0
    %v1943 = vpop.f32.mrb[0].mxu0
    %v1944 = vadd.f32 0.0, %v1943
    %v1945 = vpop.f32.mrb[0].mxu0
    %1946 = vmatprep.mubr.bf16.mxu0 0
    %1947 = vmatmul.mubr.bf16.gmra.mrb[0].mxu0 %v1763
    %v1948 = vpop.f32.mrb[0].mxu0
    %v1949 = vadd.f32 0.0, %v1948
    %v1950 = vpop.f32.mrb[0].mxu0
    %v1951 = vpop.f32.mrb[0].mxu0
    %v1952 = vadd.f32 0.0, %v1951
    %v1953 = vpop.f32.mrb[0].mxu0
    %1954 = vmatprep.mubr.bf16.mxu0 0
    %1955 = vmatmul.mubr.bf16.gmra.mrb[0].mxu0 %v1766
    %v1956 = vpop.f32.mrb[0].mxu0
    %v1957 = vadd.f32 0.0, %v1956
    %v1958 = vpop.f32.mrb[0].mxu0
    %v1959 = vpop.f32.mrb[0].mxu0
    %v1960 = vadd.f32 0.0, %v1959
    %v1961 = vpop.f32.mrb[0].mxu0
    %1962 = vmatprep.mubr.bf16.mxu0 0
    %1963 = vmatmul.mubr.bf16.gmra.mrb[0].mxu0 %v1769
    %v1964 = vpop.f32.mrb[0].mxu0
    %v1965 = vadd.f32 0.0, %v1964
    %v1966 = vpop.f32.mrb[0].mxu0
    %v1967 = vpop.f32.mrb[0].mxu0
    %v1968 = vadd.f32 0.0, %v1967
    %v1969 = vpop.f32.mrb[0].mxu0
    %1970 = vmatprep.mubr.bf16.mxu0 0
    %1971 = vmatmul.mubr.bf16.gmra.mrb[0].mxu0 %v1772
    %v1972 = vpop.f32.mrb[0].mxu0
    %v1973 = vadd.f32 0.0, %v1972
    %v1974 = vpop.f32.mrb[0].mxu0
    %v1975 = vpop.f32.mrb[0].mxu0
    %v1976 = vadd.f32 0.0, %v1975
    %v1977 = vpop.f32.mrb[0].mxu0
    %1978 = vmatprep.mubr.bf16.mxu0 0
    %1979 = vmatmul.mubr.bf16.gmra.mrb[0].mxu0 %v1775
    %v1980 = vpop.f32.mrb[0].mxu0
    %v1981 = vadd.f32 0.0, %v1980
    %v1982 = vpop.f32.mrb[0].mxu0
    %v1983 = vpop.f32.mrb[0].mxu0
    %v1984 = vadd.f32 0.0, %v1983
    %v1985 = vpop.f32.mrb[0].mxu0
    %1986 = vmatprep.mubr.bf16.mxu0 0
    %1987 = vmatmul.mubr.bf16.gmra.mrb[0].mxu0 %v1778
    %v1988 = vpop.f32.mrb[0].mxu0
    %v1989 = vadd.f32 0.0, %v1988
    %v1990 = vpop.f32.mrb[0].mxu0
    %v1991 = vpop.f32.mrb[0].mxu0
    %v1992 = vadd.f32 0.0, %v1991
    %v1993 = vpop.f32.mrb[0].mxu0
    %1994 = vmatprep.mubr.bf16.mxu0 0
    %1995 = vmatmul.mubr.bf16.gmra.mrb[0].mxu0 %v1781
    %v1996 = vpop.f32.mrb[0].mxu0
    %v1997 = vadd.f32 0.0, %v1996
    %v1998 = vpop.f32.mrb[0].mxu0
    %v1999 = vpop.f32.mrb[0].mxu0
    %v2000 = vadd.f32 0.0, %v1999
    %v2001 = vpop.f32.mrb[0].mxu0
    %2002 = vmatprep.mubr.bf16.mxu0 0
    %2003 = vmatmul.mubr.bf16.gmra.mrb[0].mxu0 %v1784
    %v2004 = vpop.f32.mrb[0].mxu0
    %v2005 = vadd.f32 0.0, %v2004
    %v2006 = vpop.f32.mrb[0].mxu0
    %v2007 = vpop.f32.mrb[0].mxu0
    %v2008 = vadd.f32 0.0, %v2007
    %v2009 = vpop.f32.mrb[0].mxu0
    %2010 = vdwg.mxu0
    %v2011 = vadd.f32 %v1585, %v1821
    %v2012 = vadd.f32 %v1586, %v1824
    %v2013 = vadd.f32 %v1587, %v1829
    %v2014 = vadd.f32 %v1588, %v1832
    %v2015 = vadd.f32 %v1589, %v1837
    %v2016 = vadd.f32 %v1590, %v1840
    %v2017 = vadd.f32 %v1591, %v1845
    %v2018 = vadd.f32 %v1592, %v1848
    %v2019 = vadd.f32 %v1593, %v1853
    %v2020 = vadd.f32 %v1594, %v1856
    %v2021 = vadd.f32 %v1595, %v1861
    %v2022 = vadd.f32 %v1596, %v1864
    %v2023 = vadd.f32 %v1597, %v1869
    %v2024 = vadd.f32 %v1598, %v1872
    %v2025 = vadd.f32 %v1599, %v1877
    %v2026 = vadd.f32 %v1600, %v1880
    %v2027 = vadd.f32 %v1601, %v1885
    %v2028 = vadd.f32 %v1602, %v1888
    %v2029 = vadd.f32 %v1603, %v1893
    %v2030 = vadd.f32 %v1604, %v1896
    %v2031 = vadd.f32 %v1605, %v1901
    %v2032 = vadd.f32 %v1606, %v1904
    %v2033 = vadd.f32 %v1607, %v1909
    %v2034 = vadd.f32 %v1608, %v1912
    %v2035 = vadd.f32 %v1609, %v1917
    %v2036 = vadd.f32 %v1610, %v1920
    %v2037 = vadd.f32 %v1611, %v1925
    %v2038 = vadd.f32 %v1612, %v1928
    %v2039 = vadd.f32 %v1613, %v1933
    %v2040 = vadd.f32 %v1614, %v1936
    %v2041 = vadd.f32 %v1615, %v1941
    %v2042 = vadd.f32 %v1616, %v1944
    %v2043 = vadd.f32 %v1617, %v1949
    %v2044 = vadd.f32 %v1618, %v1952
    %v2045 = vadd.f32 %v1619, %v1957
    %v2046 = vadd.f32 %v1620, %v1960
    %v2047 = vadd.f32 %v1621, %v1965
    %v2048 = vadd.f32 %v1622, %v1968
    %v2049 = vadd.f32 %v1623, %v1973
    %v2050 = vadd.f32 %v1624, %v1976
    %v2051 = vadd.f32 %v1625, %v1981
    %v2052 = vadd.f32 %v1626, %v1984
    %v2053 = vadd.f32 %v1627, %v1989
    %v2054 = vadd.f32 %v1628, %v1992
    %v2055 = vadd.f32 %v1629, %v1997
    %v2056 = vadd.f32 %v1630, %v2000
    %v2057 = vadd.f32 %v1631, %v2005
    %v2058 = vadd.f32 %v1632, %v2008
    %v2059 = vmax.f32 %v2011, 0.0
    %v2060 = vmax.f32 %v2012, 0.0
    %v2061 = vmax.f32 %v2013, 0.0
    %v2062 = vmax.f32 %v2014, 0.0
    %v2063 = vmax.f32 %v2015, 0.0
    %v2064 = vmax.f32 %v2016, 0.0
    %v2065 = vmax.f32 %v2017, 0.0
    %v2066 = vmax.f32 %v2018, 0.0
    %v2067 = vmax.f32 %v2019, 0.0
    %v2068 = vmax.f32 %v2020, 0.0
    %v2069 = vmax.f32 %v2021, 0.0
    %v2070 = vmax.f32 %v2022, 0.0
    %v2071 = vmax.f32 %v2023, 0.0
    %v2072 = vmax.f32 %v2024, 0.0
    %v2073 = vmax.f32 %v2025, 0.0
    %v2074 = vmax.f32 %v2026, 0.0
    %v2075 = vmax.f32 %v2027, 0.0
    %v2076 = vmax.f32 %v2028, 0.0
    %v2077 = vmax.f32 %v2029, 0.0
    %v2078 = vmax.f32 %v2030, 0.0
    %v2079 = vmax.f32 %v2031, 0.0
    %v2080 = vmax.f32 %v2032, 0.0
    %v2081 = vmax.f32 %v2033, 0.0
    %v2082 = vmax.f32 %v2034, 0.0
    %v2083 = vmax.f32 %v2035, 0.0
    %v2084 = vmax.f32 %v2036, 0.0
    %v2085 = vmax.f32 %v2037, 0.0
    %v2086 = vmax.f32 %v2038, 0.0
    %v2087 = vmax.f32 %v2039, 0.0
    %v2088 = vmax.f32 %v2040, 0.0
    %v2089 = vmax.f32 %v2041, 0.0
    %v2090 = vmax.f32 %v2042, 0.0
    %v2091 = vmax.f32 %v2043, 0.0
    %v2092 = vmax.f32 %v2044, 0.0
    %v2093 = vmax.f32 %v2045, 0.0
    %v2094 = vmax.f32 %v2046, 0.0
    %v2095 = vmax.f32 %v2047, 0.0
    %v2096 = vmax.f32 %v2048, 0.0
    %v2097 = vmax.f32 %v2049, 0.0
    %v2098 = vmax.f32 %v2050, 0.0
    %v2099 = vmax.f32 %v2051, 0.0
    %v2100 = vmax.f32 %v2052, 0.0
    %v2101 = vmax.f32 %v2053, 0.0
    %v2102 = vmax.f32 %v2054, 0.0
    %v2103 = vmax.f32 %v2055, 0.0
    %v2104 = vmax.f32 %v2056, 0.0
    %v2105 = vmax.f32 %v2057, 0.0
    %v2106 = vmax.f32 %v2058, 0.0
    %vm2107 = vcmask 261120
    %2108 = vst.msk [vmem:[#allocation2] sm:$0xff] %vm2107, %v2059
    %2109 = vst.msk [vmem:[#allocation2 + $0x8] sm:$0xff] %vm2107, %v2060
    %2110 = vst.msk [vmem:[#allocation2 + $0x10] sm:$0xff] %vm2107, %v2061
    %2111 = vst.msk [vmem:[#allocation2 + $0x18] sm:$0xff] %vm2107, %v2062
    %2112 = vst.msk [vmem:[#allocation2 + $0x20] sm:$0xff] %vm2107, %v2063
    %2113 = vst.msk [vmem:[#allocation2 + $0x28] sm:$0xff] %vm2107, %v2064
    %2114 = vst.msk [vmem:[#allocation2 + $0x30] sm:$0xff] %vm2107, %v2065
    %2115 = vst.msk [vmem:[#allocation2 + $0x38] sm:$0xff] %vm2107, %v2066
    %2116 = vst.msk [vmem:[#allocation2 + $0x40] sm:$0xff] %vm2107, %v2067
    %2117 = vst.msk [vmem:[#allocation2 + $0x48] sm:$0xff] %vm2107, %v2068
    %2118 = vst.msk [vmem:[#allocation2 + $0x50] sm:$0xff] %vm2107, %v2069
    %2119 = vst.msk [vmem:[#allocation2 + $0x58] sm:$0xff] %vm2107, %v2070
    %2120 = vst.msk [vmem:[#allocation2 + $0x60] sm:$0xff] %vm2107, %v2071
    %2121 = vst.msk [vmem:[#allocation2 + $0x68] sm:$0xff] %vm2107, %v2072
    %2122 = vst.msk [vmem:[#allocation2 + $0x70] sm:$0xff] %vm2107, %v2073
    %2123 = vst.msk [vmem:[#allocation2 + $0x78] sm:$0xff] %vm2107, %v2074
    %2124 = vst.msk [vmem:[#allocation2 + $0x80] sm:$0xff] %vm2107, %v2075
    %2125 = vst.msk [vmem:[#allocation2 + $0x88] sm:$0xff] %vm2107, %v2076
    %2126 = vst.msk [vmem:[#allocation2 + $0x90] sm:$0xff] %vm2107, %v2077
    %2127 = vst.msk [vmem:[#allocation2 + $0x98] sm:$0xff] %vm2107, %v2078
    %2128 = vst.msk [vmem:[#allocation2 + $0xa0] sm:$0xff] %vm2107, %v2079
    %2129 = vst.msk [vmem:[#allocation2 + $0xa8] sm:$0xff] %vm2107, %v2080
    %2130 = vst.msk [vmem:[#allocation2 + $0xb0] sm:$0xff] %vm2107, %v2081
    %2131 = vst.msk [vmem:[#allocation2 + $0xb8] sm:$0xff] %vm2107, %v2082
    %2132 = vst.msk [vmem:[#allocation2 + $0xc0] sm:$0xff] %vm2107, %v2083
    %2133 = vst.msk [vmem:[#allocation2 + $0xc8] sm:$0xff] %vm2107, %v2084
    %2134 = vst.msk [vmem:[#allocation2 + $0xd0] sm:$0xff] %vm2107, %v2085
    %2135 = vst.msk [vmem:[#allocation2 + $0xd8] sm:$0xff] %vm2107, %v2086
    %2136 = vst.msk [vmem:[#allocation2 + $0xe0] sm:$0xff] %vm2107, %v2087
    %2137 = vst.msk [vmem:[#allocation2 + $0xe8] sm:$0xff] %vm2107, %v2088
    %2138 = vst.msk [vmem:[#allocation2 + $0xf0] sm:$0xff] %vm2107, %v2089
    %2139 = vst.msk [vmem:[#allocation2 + $0xf8] sm:$0xff] %vm2107, %v2090
    %2140 = vst.msk [vmem:[#allocation2 + $0x100] sm:$0xff] %vm2107, %v2091
    %2141 = vst.msk [vmem:[#allocation2 + $0x108] sm:$0xff] %vm2107, %v2092
    %2142 = vst.msk [vmem:[#allocation2 + $0x110] sm:$0xff] %vm2107, %v2093
    %2143 = vst.msk [vmem:[#allocation2 + $0x118] sm:$0xff] %vm2107, %v2094
    %2144 = vst.msk [vmem:[#allocation2 + $0x120] sm:$0xff] %vm2107, %v2095
    %2145 = vst.msk [vmem:[#allocation2 + $0x128] sm:$0xff] %vm2107, %v2096
    %2146 = vst.msk [vmem:[#allocation2 + $0x130] sm:$0xff] %vm2107, %v2097
    %2147 = vst.msk [vmem:[#allocation2 + $0x138] sm:$0xff] %vm2107, %v2098
    %2148 = vst.msk [vmem:[#allocation2 + $0x140] sm:$0xff] %vm2107, %v2099
    %2149 = vst.msk [vmem:[#allocation2 + $0x148] sm:$0xff] %vm2107, %v2100
    %2150 = vst.msk [vmem:[#allocation2 + $0x150] sm:$0xff] %vm2107, %v2101
    %2151 = vst.msk [vmem:[#allocation2 + $0x158] sm:$0xff] %vm2107, %v2102
    %2152 = vst.msk [vmem:[#allocation2 + $0x160] sm:$0xff] %vm2107, %v2103
    %2153 = vst.msk [vmem:[#allocation2 + $0x168] sm:$0xff] %vm2107, %v2104
    %2154 = vst.msk [vmem:[#allocation2 + $0x170] sm:$0xff] %vm2107, %v2105
    %2155 = vst.msk [vmem:[#allocation2 + $0x178] sm:$0xff] %vm2107, %v2106
    %2156 = vst.msk [vmem:[#allocation2 + $0x180] sm:$0xff] %vm2107, 0.0
    %v2157 = vld [vmem:[#allocation2] sm:$0xff]
    %v2158 = vld [vmem:[#allocation2 + $0x8] sm:$0xff]
    %v2159 = vld [vmem:[#allocation2 + $0x10] sm:$0xff]
    %v2160 = vld [vmem:[#allocation2 + $0x18] sm:$0xff]
    %v2161 = vld [vmem:[#allocation2 + $0x20] sm:$0xff]
    %v2162 = vld [vmem:[#allocation2 + $0x28] sm:$0xff]
    %v2163 = vld [vmem:[#allocation2 + $0x30] sm:$0xff]
    %v2164 = vld [vmem:[#allocation2 + $0x38] sm:$0xff]
    %v2165 = vld [vmem:[#allocation2 + $0x40] sm:$0xff]
    %v2166 = vld [vmem:[#allocation2 + $0x48] sm:$0xff]
    %v2167 = vld [vmem:[#allocation2 + $0x50] sm:$0xff]
    %v2168 = vld [vmem:[#allocation2 + $0x58] sm:$0xff]
    %v2169 = vld [vmem:[#allocation2 + $0x60] sm:$0xff]
    %v2170 = vld [vmem:[#allocation2 + $0x68] sm:$0xff]
    %v2171 = vld [vmem:[#allocation2 + $0x70] sm:$0xff]
    %v2172 = vld [vmem:[#allocation2 + $0x78] sm:$0xff]
    %v2173 = vld [vmem:[#allocation2 + $0x80] sm:$0xff]
    %v2174 = vld [vmem:[#allocation2 + $0x88] sm:$0xff]
    %v2175 = vld [vmem:[#allocation2 + $0x90] sm:$0xff]
    %v2176 = vld [vmem:[#allocation2 + $0x98] sm:$0xff]
    %v2177 = vld [vmem:[#allocation2 + $0xa0] sm:$0xff]
    %v2178 = vld [vmem:[#allocation2 + $0xa8] sm:$0xff]
    %v2179 = vld [vmem:[#allocation2 + $0xb0] sm:$0xff]
    %v2180 = vld [vmem:[#allocation2 + $0xb8] sm:$0xff]
    %v2181 = vld [vmem:[#allocation2 + $0xc0] sm:$0xff]
    %v2182 = vld [vmem:[#allocation2 + $0xc8] sm:$0xff]
    %v2183 = vld [vmem:[#allocation2 + $0xd0] sm:$0xff]
    %v2184 = vld [vmem:[#allocation2 + $0xd8] sm:$0xff]
    %v2185 = vld [vmem:[#allocation2 + $0xe0] sm:$0xff]
    %v2186 = vld [vmem:[#allocation2 + $0xe8] sm:$0xff]
    %v2187 = vld [vmem:[#allocation2 + $0xf0] sm:$0xff]
    %v2188 = vld [vmem:[#allocation2 + $0xf8] sm:$0xff]
    %v2189 = vld [vmem:[#allocation2 + $0x100] sm:$0xff]
    %v2190 = vld [vmem:[#allocation2 + $0x108] sm:$0xff]
    %v2191 = vld [vmem:[#allocation2 + $0x110] sm:$0xff]
    %v2192 = vld [vmem:[#allocation2 + $0x118] sm:$0xff]
    %v2193 = vld [vmem:[#allocation2 + $0x120] sm:$0xff]
    %v2194 = vld [vmem:[#allocation2 + $0x128] sm:$0xff]
    %v2195 = vld [vmem:[#allocation2 + $0x130] sm:$0xff]
    %v2196 = vld [vmem:[#allocation2 + $0x138] sm:$0xff]
    %v2197 = vld [vmem:[#allocation2 + $0x140] sm:$0xff]
    %v2198 = vld [vmem:[#allocation2 + $0x148] sm:$0xff]
    %v2199 = vld [vmem:[#allocation2 + $0x150] sm:$0xff]
    %v2200 = vld [vmem:[#allocation2 + $0x158] sm:$0xff]
    %v2201 = vld [vmem:[#allocation2 + $0x160] sm:$0xff]
    %v2202 = vld [vmem:[#allocation2 + $0x168] sm:$0xff]
    %v2203 = vld [vmem:[#allocation2 + $0x170] sm:$0xff]
    %v2204 = vld [vmem:[#allocation2 + $0x178] sm:$0xff]
    %v2205 = vld [vmem:[#allocation2 + $0x1] sm:$0xff]
    %v2206 = vld [vmem:[#allocation2 + $0x9] sm:$0xff]
    %v2207 = vld [vmem:[#allocation2 + $0x11] sm:$0xff]
    %v2208 = vld [vmem:[#allocation2 + $0x19] sm:$0xff]
    %v2209 = vld [vmem:[#allocation2 + $0x21] sm:$0xff]
    %v2210 = vld [vmem:[#allocation2 + $0x29] sm:$0xff]
    %v2211 = vld [vmem:[#allocation2 + $0x31] sm:$0xff]
    %v2212 = vld [vmem:[#allocation2 + $0x39] sm:$0xff]
    %v2213 = vld [vmem:[#allocation2 + $0x41] sm:$0xff]
    %v2214 = vld [vmem:[#allocation2 + $0x49] sm:$0xff]
    %v2215 = vld [vmem:[#allocation2 + $0x51] sm:$0xff]
    %v2216 = vld [vmem:[#allocation2 + $0x59] sm:$0xff]
    %v2217 = vld [vmem:[#allocation2 + $0x61] sm:$0xff]
    %v2218 = vld [vmem:[#allocation2 + $0x69] sm:$0xff]
    %v2219 = vld [vmem:[#allocation2 + $0x71] sm:$0xff]
    %v2220 = vld [vmem:[#allocation2 + $0x79] sm:$0xff]
    %v2221 = vld [vmem:[#allocation2 + $0x81] sm:$0xff]
    %v2222 = vld [vmem:[#allocation2 + $0x89] sm:$0xff]
    %v2223 = vld [vmem:[#allocation2 + $0x91] sm:$0xff]
    %v2224 = vld [vmem:[#allocation2 + $0x99] sm:$0xff]
    %v2225 = vld [vmem:[#allocation2 + $0xa1] sm:$0xff]
    %v2226 = vld [vmem:[#allocation2 + $0xa9] sm:$0xff]
    %v2227 = vld [vmem:[#allocation2 + $0xb1] sm:$0xff]
    %v2228 = vld [vmem:[#allocation2 + $0xb9] sm:$0xff]
    %v2229 = vld [vmem:[#allocation2 + $0xc1] sm:$0xff]
    %v2230 = vld [vmem:[#allocation2 + $0xc9] sm:$0xff]
    %v2231 = vld [vmem:[#allocation2 + $0xd1] sm:$0xff]
    %v2232 = vld [vmem:[#allocation2 + $0xd9] sm:$0xff]
    %v2233 = vld [vmem:[#allocation2 + $0xe1] sm:$0xff]
    %v2234 = vld [vmem:[#allocation2 + $0xe9] sm:$0xff]
    %v2235 = vld [vmem:[#allocation2 + $0xf1] sm:$0xff]
    %v2236 = vld [vmem:[#allocation2 + $0xf9] sm:$0xff]
    %v2237 = vld [vmem:[#allocation2 + $0x101] sm:$0xff]
    %v2238 = vld [vmem:[#allocation2 + $0x109] sm:$0xff]
    %v2239 = vld [vmem:[#allocation2 + $0x111] sm:$0xff]
    %v2240 = vld [vmem:[#allocation2 + $0x119] sm:$0xff]
    %v2241 = vld [vmem:[#allocation2 + $0x121] sm:$0xff]
    %v2242 = vld [vmem:[#allocation2 + $0x129] sm:$0xff]
    %v2243 = vld [vmem:[#allocation2 + $0x131] sm:$0xff]
    %v2244 = vld [vmem:[#allocation2 + $0x139] sm:$0xff]
    %v2245 = vld [vmem:[#allocation2 + $0x141] sm:$0xff]
    %v2246 = vld [vmem:[#allocation2 + $0x149] sm:$0xff]
    %v2247 = vld [vmem:[#allocation2 + $0x151] sm:$0xff]
    %v2248 = vld [vmem:[#allocation2 + $0x159] sm:$0xff]
    %v2249 = vld [vmem:[#allocation2 + $0x161] sm:$0xff]
    %v2250 = vld [vmem:[#allocation2 + $0x169] sm:$0xff]
    %v2251 = vld [vmem:[#allocation2 + $0x171] sm:$0xff]
    %v2252 = vld [vmem:[#allocation2 + $0x179] sm:$0xff]
    %v2253 = vmax.f32 %v2157, %v2205
    %v2254 = vmax.f32 %v2158, %v2206
    %v2255 = vmax.f32 %v2159, %v2207
    %v2256 = vmax.f32 %v2160, %v2208
    %v2257 = vmax.f32 %v2161, %v2209
    %v2258 = vmax.f32 %v2162, %v2210
    %v2259 = vmax.f32 %v2163, %v2211
    %v2260 = vmax.f32 %v2164, %v2212
    %v2261 = vmax.f32 %v2165, %v2213
    %v2262 = vmax.f32 %v2166, %v2214
    %v2263 = vmax.f32 %v2167, %v2215
    %v2264 = vmax.f32 %v2168, %v2216
    %v2265 = vmax.f32 %v2169, %v2217
    %v2266 = vmax.f32 %v2170, %v2218
    %v2267 = vmax.f32 %v2171, %v2219
    %v2268 = vmax.f32 %v2172, %v2220
    %v2269 = vmax.f32 %v2173, %v2221
    %v2270 = vmax.f32 %v2174, %v2222
    %v2271 = vmax.f32 %v2175, %v2223
    %v2272 = vmax.f32 %v2176, %v2224
    %v2273 = vmax.f32 %v2177, %v2225
    %v2274 = vmax.f32 %v2178, %v2226
    %v2275 = vmax.f32 %v2179, %v2227
    %v2276 = vmax.f32 %v2180, %v2228
    %v2277 = vmax.f32 %v2181, %v2229
    %v2278 = vmax.f32 %v2182, %v2230
    %v2279 = vmax.f32 %v2183, %v2231
    %v2280 = vmax.f32 %v2184, %v2232
    %v2281 = vmax.f32 %v2185, %v2233
    %v2282 = vmax.f32 %v2186, %v2234
    %v2283 = vmax.f32 %v2187, %v2235
    %v2284 = vmax.f32 %v2188, %v2236
    %v2285 = vmax.f32 %v2189, %v2237
    %v2286 = vmax.f32 %v2190, %v2238
    %v2287 = vmax.f32 %v2191, %v2239
    %v2288 = vmax.f32 %v2192, %v2240
    %v2289 = vmax.f32 %v2193, %v2241
    %v2290 = vmax.f32 %v2194, %v2242
    %v2291 = vmax.f32 %v2195, %v2243
    %v2292 = vmax.f32 %v2196, %v2244
    %v2293 = vmax.f32 %v2197, %v2245
    %v2294 = vmax.f32 %v2198, %v2246
    %v2295 = vmax.f32 %v2199, %v2247
    %v2296 = vmax.f32 %v2200, %v2248
    %v2297 = vmax.f32 %v2201, %v2249
    %v2298 = vmax.f32 %v2202, %v2250
    %v2299 = vmax.f32 %v2203, %v2251
    %v2300 = vmax.f32 %v2204, %v2252
    %v2301 = vmax.f32 %v2253, %v2277
    %v2302 = vmax.f32 %v2254, %v2278
    %v2303 = vmax.f32 %v2255, %v2279
    %v2304 = vmax.f32 %v2256, %v2280
    %v2305 = vmax.f32 %v2257, %v2281
    %v2306 = vmax.f32 %v2258, %v2282
    %v2307 = vmax.f32 %v2259, %v2283
    %v2308 = vmax.f32 %v2260, %v2284
    %v2309 = vmax.f32 %v2261, %v2285
    %v2310 = vmax.f32 %v2262, %v2286
    %v2311 = vmax.f32 %v2263, %v2287
    %v2312 = vmax.f32 %v2264, %v2288
    %v2313 = vmax.f32 %v2265, %v2289
    %v2314 = vmax.f32 %v2266, %v2290
    %v2315 = vmax.f32 %v2267, %v2291
    %v2316 = vmax.f32 %v2268, %v2292
    %v2317 = vmax.f32 %v2269, %v2293
    %v2318 = vmax.f32 %v2270, %v2294
    %v2319 = vmax.f32 %v2271, %v2295
    %v2320 = vmax.f32 %v2272, %v2296
    %v2321 = vmax.f32 %v2273, %v2297
    %v2322 = vmax.f32 %v2274, %v2298
    %v2323 = vmax.f32 %v2275, %v2299
    %v2324 = vmax.f32 %v2276, %v2300
    %2325 = vst.msk [vmem:[#allocation3] sm:$0xff] %vm2107, %v2301
    %2326 = vst.msk [vmem:[#allocation3 + $0x8] sm:$0xff] %vm2107, %v2302
    %2327 = vst.msk [vmem:[#allocation3 + $0x10] sm:$0xff] %vm2107, %v2303
    %2328 = vst.msk [vmem:[#allocation3 + $0x18] sm:$0xff] %vm2107, %v2304
    %2329 = vst.msk [vmem:[#allocation3 + $0x20] sm:$0xff] %vm2107, %v2305
    %2330 = vst.msk [vmem:[#allocation3 + $0x28] sm:$0xff] %vm2107, %v2306
    %2331 = vst.msk [vmem:[#allocation3 + $0x30] sm:$0xff] %vm2107, %v2307
    %2332 = vst.msk [vmem:[#allocation3 + $0x38] sm:$0xff] %vm2107, %v2308
    %2333 = vst.msk [vmem:[#allocation3 + $0x40] sm:$0xff] %vm2107, %v2309
    %2334 = vst.msk [vmem:[#allocation3 + $0x48] sm:$0xff] %vm2107, %v2310
    %2335 = vst.msk [vmem:[#allocation3 + $0x50] sm:$0xff] %vm2107, %v2311
    %2336 = vst.msk [vmem:[#allocation3 + $0x58] sm:$0xff] %vm2107, %v2312
    %2337 = vst.msk [vmem:[#allocation3 + $0x60] sm:$0xff] %vm2107, %v2313
    %2338 = vst.msk [vmem:[#allocation3 + $0x68] sm:$0xff] %vm2107, %v2314
    %2339 = vst.msk [vmem:[#allocation3 + $0x70] sm:$0xff] %vm2107, %v2315
    %2340 = vst.msk [vmem:[#allocation3 + $0x78] sm:$0xff] %vm2107, %v2316
    %2341 = vst.msk [vmem:[#allocation3 + $0x80] sm:$0xff] %vm2107, %v2317
    %2342 = vst.msk [vmem:[#allocation3 + $0x88] sm:$0xff] %vm2107, %v2318
    %2343 = vst.msk [vmem:[#allocation3 + $0x90] sm:$0xff] %vm2107, %v2319
    %2344 = vst.msk [vmem:[#allocation3 + $0x98] sm:$0xff] %vm2107, %v2320
    %2345 = vst.msk [vmem:[#allocation3 + $0xa0] sm:$0xff] %vm2107, %v2321
    %2346 = vst.msk [vmem:[#allocation3 + $0xa8] sm:$0xff] %vm2107, %v2322
    %2347 = vst.msk [vmem:[#allocation3 + $0xb0] sm:$0xff] %vm2107, %v2323
    %2348 = vst.msk [vmem:[#allocation3 + $0xb8] sm:$0xff] %vm2107, %v2324
    %2349 = vst.msk [vmem:[#allocation3 + $0xc0] sm:$0xff] %vm2107, 0.0
    %2350 = vst.msk [vmem:[#allocation3 + $0xc8] sm:$0xff] %vm2107, 0.0
    %2351 = vst.msk [vmem:[#allocation3 + $0xd0] sm:$0xff] %vm2107, 0.0
    %2352 = vst.msk [vmem:[#allocation3 + $0xd8] sm:$0xff] %vm2107, 0.0
    %2353 = vst.msk [vmem:[#allocation3 + $0xe0] sm:$0xff] %vm2107, 0.0
    %2354 = vst.msk [vmem:[#allocation3 + $0xe8] sm:$0xff] %vm2107, 0.0
    %2355 = vst.msk [vmem:[#allocation3 + $0xf0] sm:$0xff] %vm2107, 0.0
    %2356 = vst.msk [vmem:[#allocation3 + $0xf8] sm:$0xff] %vm2107, 0.0
    %2357 = vst.msk [vmem:[#allocation3 + $0x100] sm:$0xff] %vm2107, 0.0
    %v2358 = vld [vmem:[#allocation3] sm:$0xff]
    %v2359 = vld [vmem:[#allocation3 + $0x8] sm:$0xff]
    %v2360 = vld [vmem:[#allocation3 + $0x10] sm:$0xff]
    %v2361 = vld [vmem:[#allocation3 + $0x18] sm:$0xff]
    %v2362 = vld [vmem:[#allocation3 + $0x20] sm:$0xff]
    %v2363 = vld [vmem:[#allocation3 + $0x28] sm:$0xff]
    %v2364 = vld [vmem:[#allocation3 + $0x30] sm:$0xff]
    %v2365 = vld [vmem:[#allocation3 + $0x38] sm:$0xff]
    %v2366 = vld [vmem:[#allocation3 + $0x40] sm:$0xff]
    %v2367 = vld [vmem:[#allocation3 + $0x48] sm:$0xff]
    %v2368 = vld [vmem:[#allocation3 + $0x50] sm:$0xff]
    %v2369 = vld [vmem:[#allocation3 + $0x58] sm:$0xff]
    %v2370 = vld [vmem:[#allocation3 + $0x60] sm:$0xff]
    %v2371 = vld [vmem:[#allocation3 + $0x68] sm:$0xff]
    %v2372 = vld [vmem:[#allocation3 + $0x70] sm:$0xff]
    %v2373 = vld [vmem:[#allocation3 + $0x78] sm:$0xff]
    %v2374 = vld [vmem:[#allocation3 + $0x80] sm:$0xff]
    %v2375 = vld [vmem:[#allocation3 + $0x88] sm:$0xff]
    %v2376 = vld [vmem:[#allocation3 + $0x90] sm:$0xff]
    %v2377 = vld [vmem:[#allocation3 + $0x98] sm:$0xff]
    %v2378 = vld [vmem:[#allocation3 + $0xa0] sm:$0xff]
    %v2379 = vld [vmem:[#allocation3 + $0xa8] sm:$0xff]
    %v2380 = vld [vmem:[#allocation3 + $0xb0] sm:$0xff]
    %v2381 = vld [vmem:[#allocation3 + $0xb8] sm:$0xff]
    %v2382 = vpack.c.bf16 %v2359, %v2358
    %v2383 = vpack.c.bf16 %v2361, %v2360
    %v2384 = vpack.c.bf16 %v2363, %v2362
    %v2385 = vpack.c.bf16 %v2365, %v2364
    %v2386 = vpack.c.bf16 %v2367, %v2366
    %v2387 = vpack.c.bf16 %v2369, %v2368
    %v2388 = vpack.c.bf16 %v2371, %v2370
    %v2389 = vpack.c.bf16 %v2373, %v2372
    %v2390 = vpack.c.bf16 %v2375, %v2374
    %v2391 = vpack.c.bf16 %v2377, %v2376
    %v2392 = vpack.c.bf16 %v2379, %v2378
    %v2393 = vpack.c.bf16 %v2381, %v2380
    %2394 = vst.msk [vmem:[#allocation4] sm:$0xff] %vm2107, %v2382
    %2395 = vst.msk [vmem:[#allocation4 + $0x38] sm:$0xff] %vm2107, %v2383
    %2396 = vst.msk [vmem:[#allocation4 + $0x70] sm:$0xff] %vm2107, %v2384
    %2397 = vst.msk [vmem:[#allocation4 + $0xa8] sm:$0xff] %vm2107, %v2385
    %2398 = vst.msk [vmem:[#allocation4 + $0xe0] sm:$0xff] %vm2107, %v2386
    %2399 = vst.msk [vmem:[#allocation4 + $0x118] sm:$0xff] %vm2107, %v2387
    %2400 = vst.msk [vmem:[#allocation4 + $0x150] sm:$0xff] %vm2107, %v2388
    %2401 = vst.msk [vmem:[#allocation4 + $0x188] sm:$0xff] %vm2107, %v2389
    %2402 = vst.msk [vmem:[#allocation4 + $0x1c0] sm:$0xff] %vm2107, %v2390
    %2403 = vst.msk [vmem:[#allocation4 + $0x1f8] sm:$0xff] %vm2107, %v2391
    %2404 = vst.msk [vmem:[#allocation4 + $0x230] sm:$0xff] %vm2107, %v2392
    %2405 = vst.msk [vmem:[#allocation4 + $0x268] sm:$0xff] %vm2107, %v2393
    %v2406 = vld [vmem:[#allocation3 + $0x10] sm:$0xff]
    %v2407 = vld [vmem:[#allocation3 + $0x18] sm:$0xff]
    %v2408 = vld [vmem:[#allocation3 + $0x20] sm:$0xff]
    %v2409 = vld [vmem:[#allocation3 + $0x28] sm:$0xff]
    %v2410 = vld [vmem:[#allocation3 + $0x30] sm:$0xff]
    %v2411 = vld [vmem:[#allocation3 + $0x38] sm:$0xff]
    %v2412 = vld [vmem:[#allocation3 + $0x40] sm:$0xff]
    %v2413 = vld [vmem:[#allocation3 + $0x48] sm:$0xff]
    %v2414 = vld [vmem:[#allocation3 + $0x50] sm:$0xff]
    %v2415 = vld [vmem:[#allocation3 + $0x58] sm:$0xff]
    %v2416 = vld [vmem:[#allocation3 + $0x60] sm:$0xff]
    %v2417 = vld [vmem:[#allocation3 + $0x68] sm:$0xff]
    %v2418 = vld [vmem:[#allocation3 + $0x70] sm:$0xff]
    %v2419 = vld [vmem:[#allocation3 + $0x78] sm:$0xff]
    %v2420 = vld [vmem:[#allocation3 + $0x80] sm:$0xff]
    %v2421 = vld [vmem:[#allocation3 + $0x88] sm:$0xff]
    %v2422 = vld [vmem:[#allocation3 + $0x90] sm:$0xff]
    %v2423 = vld [vmem:[#allocation3 + $0x98] sm:$0xff]
    %v2424 = vld [vmem:[#allocation3 + $0xa0] sm:$0xff]
    %v2425 = vld [vmem:[#allocation3 + $0xa8] sm:$0xff]
    %v2426 = vld [vmem:[#allocation3 + $0xb0] sm:$0xff]
    %v2427 = vld [vmem:[#allocation3 + $0xb8] sm:$0xff]
    %v2428 = vld [vmem:[#allocation3 + $0xc0] sm:$0xff]
    %v2429 = vld [vmem:[#allocation3 + $0xc8] sm:$0xff]
    %v2430 = vpack.c.bf16 %v2407, %v2406
    %v2431 = vpack.c.bf16 %v2409, %v2408
    %v2432 = vpack.c.bf16 %v2411, %v2410
    %v2433 = vpack.c.bf16 %v2413, %v2412
    %v2434 = vpack.c.bf16 %v2415, %v2414
    %v2435 = vpack.c.bf16 %v2417, %v2416
    %v2436 = vpack.c.bf16 %v2419, %v2418
    %v2437 = vpack.c.bf16 %v2421, %v2420
    %v2438 = vpack.c.bf16 %v2423, %v2422
    %v2439 = vpack.c.bf16 %v2425, %v2424
    %v2440 = vpack.c.bf16 %v2427, %v2426
    %v2441 = vpack.c.bf16 %v2429, %v2428
    %2454 = vrot.lane.b32.xlu0 %v2430, 32
    %v2455 = vpop.permute.xlu0 %2454
    %2456 = vrot.lane.b32.xlu0 %v2431, 32
    %v2457 = vpop.permute.xlu0 %2456
    %2458 = vrot.lane.b32.xlu0 %v2432, 32
    %v2459 = vpop.permute.xlu0 %2458
    %2460 = vrot.lane.b32.xlu0 %v2433, 32
    %v2461 = vpop.permute.xlu0 %2460
    %2462 = vrot.lane.b32.xlu0 %v2434, 32
    %v2463 = vpop.permute.xlu0 %2462
    %2464 = vrot.lane.b32.xlu0 %v2435, 32
    %v2465 = vpop.permute.xlu0 %2464
    %2466 = vrot.lane.b32.xlu0 %v2436, 32
    %v2467 = vpop.permute.xlu0 %2466
    %2468 = vrot.lane.b32.xlu0 %v2437, 32
    %v2469 = vpop.permute.xlu0 %2468
    %2470 = vrot.lane.b32.xlu0 %v2438, 32
    %v2471 = vpop.permute.xlu0 %2470
    %2472 = vrot.lane.b32.xlu0 %v2439, 32
    %v2473 = vpop.permute.xlu0 %2472
    %2474 = vrot.lane.b32.xlu0 %v2440, 32
    %v2475 = vpop.permute.xlu0 %2474
    %2476 = vrot.lane.b32.xlu0 %v2441, 32
    %v2477 = vpop.permute.xlu0 %2476
    %vm2490 = vcmask 523520
    %2491 = vst.msk [vmem:[#allocation4] sm:$0xff] %vm2490, %v2455
    %2492 = vst.msk [vmem:[#allocation4 + $0x38] sm:$0xff] %vm2490, %v2457
    %2493 = vst.msk [vmem:[#allocation4 + $0x70] sm:$0xff] %vm2490, %v2459
    %2494 = vst.msk [vmem:[#allocation4 + $0xa8] sm:$0xff] %vm2490, %v2461
    %2495 = vst.msk [vmem:[#allocation4 + $0xe0] sm:$0xff] %vm2490, %v2463
    %2496 = vst.msk [vmem:[#allocation4 + $0x118] sm:$0xff] %vm2490, %v2465
    %2497 = vst.msk [vmem:[#allocation4 + $0x150] sm:$0xff] %vm2490, %v2467
    %2498 = vst.msk [vmem:[#allocation4 + $0x188] sm:$0xff] %vm2490, %v2469
    %2499 = vst.msk [vmem:[#allocation4 + $0x1c0] sm:$0xff] %vm2490, %v2471
    %2500 = vst.msk [vmem:[#allocation4 + $0x1f8] sm:$0xff] %vm2490, %v2473
    %2501 = vst.msk [vmem:[#allocation4 + $0x230] sm:$0xff] %vm2490, %v2475
    %2502 = vst.msk [vmem:[#allocation4 + $0x268] sm:$0xff] %vm2490, %v2477
    %v2503 = vld [vmem:[#allocation3 + $0x20] sm:$0xff]
    %v2504 = vld [vmem:[#allocation3 + $0x28] sm:$0xff]
    %v2505 = vld [vmem:[#allocation3 + $0x30] sm:$0xff]
    %v2506 = vld [vmem:[#allocation3 + $0x38] sm:$0xff]
    %v2507 = vld [vmem:[#allocation3 + $0x40] sm:$0xff]
    %v2508 = vld [vmem:[#allocation3 + $0x48] sm:$0xff]
    %v2509 = vld [vmem:[#allocation3 + $0x50] sm:$0xff]
    %v2510 = vld [vmem:[#allocation3 + $0x58] sm:$0xff]
    %v2511 = vld [vmem:[#allocation3 + $0x60] sm:$0xff]
    %v2512 = vld [vmem:[#allocation3 + $0x68] sm:$0xff]
    %v2513 = vld [vmem:[#allocation3 + $0x70] sm:$0xff]
    %v2514 = vld [vmem:[#allocation3 + $0x78] sm:$0xff]
    %v2515 = vld [vmem:[#allocation3 + $0x80] sm:$0xff]
    %v2516 = vld [vmem:[#allocation3 + $0x88] sm:$0xff]
    %v2517 = vld [vmem:[#allocation3 + $0x90] sm:$0xff]
    %v2518 = vld [vmem:[#allocation3 + $0x98] sm:$0xff]
    %v2519 = vld [vmem:[#allocation3 + $0xa0] sm:$0xff]
    %v2520 = vld [vmem:[#allocation3 + $0xa8] sm:$0xff]
    %v2521 = vld [vmem:[#allocation3 + $0xb0] sm:$0xff]
    %v2522 = vld [vmem:[#allocation3 + $0xb8] sm:$0xff]
    %v2523 = vld [vmem:[#allocation3 + $0xc0] sm:$0xff]
    %v2524 = vld [vmem:[#allocation3 + $0xc8] sm:$0xff]
    %v2525 = vld [vmem:[#allocation3 + $0xd0] sm:$0xff]
    %v2526 = vld [vmem:[#allocation3 + $0xd8] sm:$0xff]
    %v2527 = vpack.c.bf16 %v2504, %v2503
    %v2528 = vpack.c.bf16 %v2506, %v2505
    %v2529 = vpack.c.bf16 %v2508, %v2507
    %v2530 = vpack.c.bf16 %v2510, %v2509
    %v2531 = vpack.c.bf16 %v2512, %v2511
    %v2532 = vpack.c.bf16 %v2514, %v2513
    %v2533 = vpack.c.bf16 %v2516, %v2515
    %v2534 = vpack.c.bf16 %v2518, %v2517
    %v2535 = vpack.c.bf16 %v2520, %v2519
    %v2536 = vpack.c.bf16 %v2522, %v2521
    %v2537 = vpack.c.bf16 %v2524, %v2523
    %v2538 = vpack.c.bf16 %v2526, %v2525
    %2551 = vrot.lane.b32.xlu0 %v2527, 64
    %v2552 = vpop.permute.xlu0 %2551
    %2553 = vrot.lane.b32.xlu0 %v2528, 64
    %v2554 = vpop.permute.xlu0 %2553
    %2555 = vrot.lane.b32.xlu0 %v2529, 64
    %v2556 = vpop.permute.xlu0 %2555
    %2557 = vrot.lane.b32.xlu0 %v2530, 64
    %v2558 = vpop.permute.xlu0 %2557
    %2559 = vrot.lane.b32.xlu0 %v2531, 64
    %v2560 = vpop.permute.xlu0 %2559
    %2561 = vrot.lane.b32.xlu0 %v2532, 64
    %v2562 = vpop.permute.xlu0 %2561
    %2563 = vrot.lane.b32.xlu0 %v2533, 64
    %v2564 = vpop.permute.xlu0 %2563
    %2565 = vrot.lane.b32.xlu0 %v2534, 64
    %v2566 = vpop.permute.xlu0 %2565
    %2567 = vrot.lane.b32.xlu0 %v2535, 64
    %v2568 = vpop.permute.xlu0 %2567
    %2569 = vrot.lane.b32.xlu0 %v2536, 64
    %v2570 = vpop.permute.xlu0 %2569
    %2571 = vrot.lane.b32.xlu0 %v2537, 64
    %v2572 = vpop.permute.xlu0 %2571
    %2573 = vrot.lane.b32.xlu0 %v2538, 64
    %v2574 = vpop.permute.xlu0 %2573
    %vm2587 = vcmask 785920
    %2588 = vst.msk [vmem:[#allocation4] sm:$0xff] %vm2587, %v2552
    %2589 = vst.msk [vmem:[#allocation4 + $0x38] sm:$0xff] %vm2587, %v2554
    %2590 = vst.msk [vmem:[#allocation4 + $0x70] sm:$0xff] %vm2587, %v2556
    %2591 = vst.msk [vmem:[#allocation4 + $0xa8] sm:$0xff] %vm2587, %v2558
    %2592 = vst.msk [vmem:[#allocation4 + $0xe0] sm:$0xff] %vm2587, %v2560
    %2593 = vst.msk [vmem:[#allocation4 + $0x118] sm:$0xff] %vm2587, %v2562
    %2594 = vst.msk [vmem:[#allocation4 + $0x150] sm:$0xff] %vm2587, %v2564
    %2595 = vst.msk [vmem:[#allocation4 + $0x188] sm:$0xff] %vm2587, %v2566
    %2596 = vst.msk [vmem:[#allocation4 + $0x1c0] sm:$0xff] %vm2587, %v2568
    %2597 = vst.msk [vmem:[#allocation4 + $0x1f8] sm:$0xff] %vm2587, %v2570
    %2598 = vst.msk [vmem:[#allocation4 + $0x230] sm:$0xff] %vm2587, %v2572
    %2599 = vst.msk [vmem:[#allocation4 + $0x268] sm:$0xff] %vm2587, %v2574
    %v2600 = vld [vmem:[#allocation3 + $0x30] sm:$0xff]
    %v2601 = vld [vmem:[#allocation3 + $0x38] sm:$0xff]
    %v2602 = vld [vmem:[#allocation3 + $0x40] sm:$0xff]
    %v2603 = vld [vmem:[#allocation3 + $0x48] sm:$0xff]
    %v2604 = vld [vmem:[#allocation3 + $0x50] sm:$0xff]
    %v2605 = vld [vmem:[#allocation3 + $0x58] sm:$0xff]
    %v2606 = vld [vmem:[#allocation3 + $0x60] sm:$0xff]
    %v2607 = vld [vmem:[#allocation3 + $0x68] sm:$0xff]
    %v2608 = vld [vmem:[#allocation3 + $0x70] sm:$0xff]
    %v2609 = vld [vmem:[#allocation3 + $0x78] sm:$0xff]
    %v2610 = vld [vmem:[#allocation3 + $0x80] sm:$0xff]
    %v2611 = vld [vmem:[#allocation3 + $0x88] sm:$0xff]
    %v2612 = vld [vmem:[#allocation3 + $0x90] sm:$0xff]
    %v2613 = vld [vmem:[#allocation3 + $0x98] sm:$0xff]
    %v2614 = vld [vmem:[#allocation3 + $0xa0] sm:$0xff]
    %v2615 = vld [vmem:[#allocation3 + $0xa8] sm:$0xff]
    %v2616 = vld [vmem:[#allocation3 + $0xb0] sm:$0xff]
    %v2617 = vld [vmem:[#allocation3 + $0xb8] sm:$0xff]
    %v2618 = vld [vmem:[#allocation3 + $0xc0] sm:$0xff]
    %v2619 = vld [vmem:[#allocation3 + $0xc8] sm:$0xff]
    %v2620 = vld [vmem:[#allocation3 + $0xd0] sm:$0xff]
    %v2621 = vld [vmem:[#allocation3 + $0xd8] sm:$0xff]
    %v2622 = vld [vmem:[#allocation3 + $0xe0] sm:$0xff]
    %v2623 = vld [vmem:[#allocation3 + $0xe8] sm:$0xff]
    %v2624 = vpack.c.bf16 %v2601, %v2600
    %v2625 = vpack.c.bf16 %v2603, %v2602
    %v2626 = vpack.c.bf16 %v2605, %v2604
    %v2627 = vpack.c.bf16 %v2607, %v2606
    %v2628 = vpack.c.bf16 %v2609, %v2608
    %v2629 = vpack.c.bf16 %v2611, %v2610
    %v2630 = vpack.c.bf16 %v2613, %v2612
    %v2631 = vpack.c.bf16 %v2615, %v2614
    %v2632 = vpack.c.bf16 %v2617, %v2616
    %v2633 = vpack.c.bf16 %v2619, %v2618
    %v2634 = vpack.c.bf16 %v2621, %v2620
    %v2635 = vpack.c.bf16 %v2623, %v2622
    %2648 = vrot.lane.b32.xlu0 %v2624, 96
    %v2649 = vpop.permute.xlu0 %2648
    %2650 = vrot.lane.b32.xlu0 %v2625, 96
    %v2651 = vpop.permute.xlu0 %2650
    %2652 = vrot.lane.b32.xlu0 %v2626, 96
    %v2653 = vpop.permute.xlu0 %2652
    %2654 = vrot.lane.b32.xlu0 %v2627, 96
    %v2655 = vpop.permute.xlu0 %2654
    %2656 = vrot.lane.b32.xlu0 %v2628, 96
    %v2657 = vpop.permute.xlu0 %2656
    %2658 = vrot.lane.b32.xlu0 %v2629, 96
    %v2659 = vpop.permute.xlu0 %2658
    %2660 = vrot.lane.b32.xlu0 %v2630, 96
    %v2661 = vpop.permute.xlu0 %2660
    %2662 = vrot.lane.b32.xlu0 %v2631, 96
    %v2663 = vpop.permute.xlu0 %2662
    %2664 = vrot.lane.b32.xlu0 %v2632, 96
    %v2665 = vpop.permute.xlu0 %2664
    %2666 = vrot.lane.b32.xlu0 %v2633, 96
    %v2667 = vpop.permute.xlu0 %2666
    %2668 = vrot.lane.b32.xlu0 %v2634, 96
    %v2669 = vpop.permute.xlu0 %2668
    %2670 = vrot.lane.b32.xlu0 %v2635, 96
    %v2671 = vpop.permute.xlu0 %2670
    %vm2684 = vcmask 1048320
    %2685 = vst.msk [vmem:[#allocation4] sm:$0xff] %vm2684, %v2649
    %2686 = vst.msk [vmem:[#allocation4 + $0x38] sm:$0xff] %vm2684, %v2651
    %2687 = vst.msk [vmem:[#allocation4 + $0x70] sm:$0xff] %vm2684, %v2653
    %2688 = vst.msk [vmem:[#allocation4 + $0xa8] sm:$0xff] %vm2684, %v2655
    %2689 = vst.msk [vmem:[#allocation4 + $0xe0] sm:$0xff] %vm2684, %v2657
    %2690 = vst.msk [vmem:[#allocation4 + $0x118] sm:$0xff] %vm2684, %v2659
    %2691 = vst.msk [vmem:[#allocation4 + $0x150] sm:$0xff] %vm2684, %v2661
    %2692 = vst.msk [vmem:[#allocation4 + $0x188] sm:$0xff] %vm2684, %v2663
    %2693 = vst.msk [vmem:[#allocation4 + $0x1c0] sm:$0xff] %vm2684, %v2665
    %2694 = vst.msk [vmem:[#allocation4 + $0x1f8] sm:$0xff] %vm2684, %v2667
    %2695 = vst.msk [vmem:[#allocation4 + $0x230] sm:$0xff] %vm2684, %v2669
    %2696 = vst.msk [vmem:[#allocation4 + $0x268] sm:$0xff] %vm2684, %v2671
    %v2697 = vld [vmem:[#allocation3 + $0x40] sm:$0xff]
    %v2698 = vld [vmem:[#allocation3 + $0x48] sm:$0xff]
    %v2699 = vld [vmem:[#allocation3 + $0x50] sm:$0xff]
    %v2700 = vld [vmem:[#allocation3 + $0x58] sm:$0xff]
    %v2701 = vld [vmem:[#allocation3 + $0x60] sm:$0xff]
    %v2702 = vld [vmem:[#allocation3 + $0x68] sm:$0xff]
    %v2703 = vld [vmem:[#allocation3 + $0x70] sm:$0xff]
    %v2704 = vld [vmem:[#allocation3 + $0x78] sm:$0xff]
    %v2705 = vld [vmem:[#allocation3 + $0x80] sm:$0xff]
    %v2706 = vld [vmem:[#allocation3 + $0x88] sm:$0xff]
    %v2707 = vld [vmem:[#allocation3 + $0x90] sm:$0xff]
    %v2708 = vld [vmem:[#allocation3 + $0x98] sm:$0xff]
    %v2709 = vld [vmem:[#allocation3 + $0xa0] sm:$0xff]
    %v2710 = vld [vmem:[#allocation3 + $0xa8] sm:$0xff]
    %v2711 = vld [vmem:[#allocation3 + $0xb0] sm:$0xff]
    %v2712 = vld [vmem:[#allocation3 + $0xb8] sm:$0xff]
    %v2713 = vld [vmem:[#allocation3 + $0xc0] sm:$0xff]
    %v2714 = vld [vmem:[#allocation3 + $0xc8] sm:$0xff]
    %v2715 = vld [vmem:[#allocation3 + $0xd0] sm:$0xff]
    %v2716 = vld [vmem:[#allocation3 + $0xd8] sm:$0xff]
    %v2717 = vld [vmem:[#allocation3 + $0xe0] sm:$0xff]
    %v2718 = vld [vmem:[#allocation3 + $0xe8] sm:$0xff]
    %v2719 = vld [vmem:[#allocation3 + $0xf0] sm:$0xff]
    %v2720 = vld [vmem:[#allocation3 + $0xf8] sm:$0xff]
    %v2721 = vpack.c.bf16 %v2698, %v2697
    %v2722 = vpack.c.bf16 %v2700, %v2699
    %v2723 = vpack.c.bf16 %v2702, %v2701
    %v2724 = vpack.c.bf16 %v2704, %v2703
    %v2725 = vpack.c.bf16 %v2706, %v2705
    %v2726 = vpack.c.bf16 %v2708, %v2707
    %v2727 = vpack.c.bf16 %v2710, %v2709
    %v2728 = vpack.c.bf16 %v2712, %v2711
    %v2729 = vpack.c.bf16 %v2714, %v2713
    %v2730 = vpack.c.bf16 %v2716, %v2715
    %v2731 = vpack.c.bf16 %v2718, %v2717
    %v2732 = vpack.c.bf16 %v2720, %v2719
    %2733 = vst.msk [vmem:[#allocation4 + $0x8] sm:$0xff] %vm2107, %v2721
    %2734 = vst.msk [vmem:[#allocation4 + $0x40] sm:$0xff] %vm2107, %v2722
    %2735 = vst.msk [vmem:[#allocation4 + $0x78] sm:$0xff] %vm2107, %v2723
    %2736 = vst.msk [vmem:[#allocation4 + $0xb0] sm:$0xff] %vm2107, %v2724
    %2737 = vst.msk [vmem:[#allocation4 + $0xe8] sm:$0xff] %vm2107, %v2725
    %2738 = vst.msk [vmem:[#allocation4 + $0x120] sm:$0xff] %vm2107, %v2726
    %2739 = vst.msk [vmem:[#allocation4 + $0x158] sm:$0xff] %vm2107, %v2727
    %2740 = vst.msk [vmem:[#allocation4 + $0x190] sm:$0xff] %vm2107, %v2728
    %2741 = vst.msk [vmem:[#allocation4 + $0x1c8] sm:$0xff] %vm2107, %v2729
    %2742 = vst.msk [vmem:[#allocation4 + $0x200] sm:$0xff] %vm2107, %v2730
    %2743 = vst.msk [vmem:[#allocation4 + $0x238] sm:$0xff] %vm2107, %v2731
    %2744 = vst.msk [vmem:[#allocation4 + $0x270] sm:$0xff] %vm2107, %v2732
    %v2745 = vld [vmem:[#allocation3 + $0x2] sm:$0xff]
    %v2746 = vld [vmem:[#allocation3 + $0xa] sm:$0xff]
    %v2747 = vld [vmem:[#allocation3 + $0x12] sm:$0xff]
    %v2748 = vld [vmem:[#allocation3 + $0x1a] sm:$0xff]
    %v2749 = vld [vmem:[#allocation3 + $0x22] sm:$0xff]
    %v2750 = vld [vmem:[#allocation3 + $0x2a] sm:$0xff]
    %v2751 = vld [vmem:[#allocation3 + $0x32] sm:$0xff]
    %v2752 = vld [vmem:[#allocation3 + $0x3a] sm:$0xff]
    %v2753 = vld [vmem:[#allocation3 + $0x42] sm:$0xff]
    %v2754 = vld [vmem:[#allocation3 + $0x4a] sm:$0xff]
    %v2755 = vld [vmem:[#allocation3 + $0x52] sm:$0xff]
    %v2756 = vld [vmem:[#allocation3 + $0x5a] sm:$0xff]
    %v2757 = vld [vmem:[#allocation3 + $0x62] sm:$0xff]
    %v2758 = vld [vmem:[#allocation3 + $0x6a] sm:$0xff]
    %v2759 = vld [vmem:[#allocation3 + $0x72] sm:$0xff]
    %v2760 = vld [vmem:[#allocation3 + $0x7a] sm:$0xff]
    %v2761 = vld [vmem:[#allocation3 + $0x82] sm:$0xff]
    %v2762 = vld [vmem:[#allocation3 + $0x8a] sm:$0xff]
    %v2763 = vld [vmem:[#allocation3 + $0x92] sm:$0xff]
    %v2764 = vld [vmem:[#allocation3 + $0x9a] sm:$0xff]
    %v2765 = vld [vmem:[#allocation3 + $0xa2] sm:$0xff]
    %v2766 = vld [vmem:[#allocation3 + $0xaa] sm:$0xff]
    %v2767 = vld [vmem:[#allocation3 + $0xb2] sm:$0xff]
    %v2768 = vld [vmem:[#allocation3 + $0xba] sm:$0xff]
    %v2769 = vpack.c.bf16 %v2746, %v2745
    %v2770 = vpack.c.bf16 %v2748, %v2747
    %v2771 = vpack.c.bf16 %v2750, %v2749
    %v2772 = vpack.c.bf16 %v2752, %v2751
    %v2773 = vpack.c.bf16 %v2754, %v2753
    %v2774 = vpack.c.bf16 %v2756, %v2755
    %v2775 = vpack.c.bf16 %v2758, %v2757
    %v2776 = vpack.c.bf16 %v2760, %v2759
    %v2777 = vpack.c.bf16 %v2762, %v2761
    %v2778 = vpack.c.bf16 %v2764, %v2763
    %v2779 = vpack.c.bf16 %v2766, %v2765
    %v2780 = vpack.c.bf16 %v2768, %v2767
    %2793 = vrot.lane.b32.xlu0 %v2769, 32
    %v2794 = vpop.permute.xlu0 %2793
    %2795 = vrot.lane.b32.xlu0 %v2770, 32
    %v2796 = vpop.permute.xlu0 %2795
    %2797 = vrot.lane.b32.xlu0 %v2771, 32
    %v2798 = vpop.permute.xlu0 %2797
    %2799 = vrot.lane.b32.xlu0 %v2772, 32
    %v2800 = vpop.permute.xlu0 %2799
    %2801 = vrot.lane.b32.xlu0 %v2773, 32
    %v2802 = vpop.permute.xlu0 %2801
    %2803 = vrot.lane.b32.xlu0 %v2774, 32
    %v2804 = vpop.permute.xlu0 %2803
    %2805 = vrot.lane.b32.xlu0 %v2775, 32
    %v2806 = vpop.permute.xlu0 %2805
    %2807 = vrot.lane.b32.xlu0 %v2776, 32
    %v2808 = vpop.permute.xlu0 %2807
    %2809 = vrot.lane.b32.xlu0 %v2777, 32
    %v2810 = vpop.permute.xlu0 %2809
    %2811 = vrot.lane.b32.xlu0 %v2778, 32
    %v2812 = vpop.permute.xlu0 %2811
    %2813 = vrot.lane.b32.xlu0 %v2779, 32
    %v2814 = vpop.permute.xlu0 %2813
    %2815 = vrot.lane.b32.xlu0 %v2780, 32
    %v2816 = vpop.permute.xlu0 %2815
    %2829 = vst.msk [vmem:[#allocation4 + $0x8] sm:$0xff] %vm2490, %v2794
    %2830 = vst.msk [vmem:[#allocation4 + $0x40] sm:$0xff] %vm2490, %v2796
    %2831 = vst.msk [vmem:[#allocation4 + $0x78] sm:$0xff] %vm2490, %v2798
    %2832 = vst.msk [vmem:[#allocation4 + $0xb0] sm:$0xff] %vm2490, %v2800
    %2833 = vst.msk [vmem:[#allocation4 + $0xe8] sm:$0xff] %vm2490, %v2802
    %2834 = vst.msk [vmem:[#allocation4 + $0x120] sm:$0xff] %vm2490, %v2804
    %2835 = vst.msk [vmem:[#allocation4 + $0x158] sm:$0xff] %vm2490, %v2806
    %2836 = vst.msk [vmem:[#allocation4 + $0x190] sm:$0xff] %vm2490, %v2808
    %2837 = vst.msk [vmem:[#allocation4 + $0x1c8] sm:$0xff] %vm2490, %v2810
    %2838 = vst.msk [vmem:[#allocation4 + $0x200] sm:$0xff] %vm2490, %v2812
    %2839 = vst.msk [vmem:[#allocation4 + $0x238] sm:$0xff] %vm2490, %v2814
    %2840 = vst.msk [vmem:[#allocation4 + $0x270] sm:$0xff] %vm2490, %v2816
    %v2841 = vld [vmem:[#allocation3 + $0x12] sm:$0xff]
    %v2842 = vld [vmem:[#allocation3 + $0x1a] sm:$0xff]
    %v2843 = vld [vmem:[#allocation3 + $0x22] sm:$0xff]
    %v2844 = vld [vmem:[#allocation3 + $0x2a] sm:$0xff]
    %v2845 = vld [vmem:[#allocation3 + $0x32] sm:$0xff]
    %v2846 = vld [vmem:[#allocation3 + $0x3a] sm:$0xff]
    %v2847 = vld [vmem:[#allocation3 + $0x42] sm:$0xff]
    %v2848 = vld [vmem:[#allocation3 + $0x4a] sm:$0xff]
    %v2849 = vld [vmem:[#allocation3 + $0x52] sm:$0xff]
    %v2850 = vld [vmem:[#allocation3 + $0x5a] sm:$0xff]
    %v2851 = vld [vmem:[#allocation3 + $0x62] sm:$0xff]
    %v2852 = vld [vmem:[#allocation3 + $0x6a] sm:$0xff]
    %v2853 = vld [vmem:[#allocation3 + $0x72] sm:$0xff]
    %v2854 = vld [vmem:[#allocation3 + $0x7a] sm:$0xff]
    %v2855 = vld [vmem:[#allocation3 + $0x82] sm:$0xff]
    %v2856 = vld [vmem:[#allocation3 + $0x8a] sm:$0xff]
    %v2857 = vld [vmem:[#allocation3 + $0x92] sm:$0xff]
    %v2858 = vld [vmem:[#allocation3 + $0x9a] sm:$0xff]
    %v2859 = vld [vmem:[#allocation3 + $0xa2] sm:$0xff]
    %v2860 = vld [vmem:[#allocation3 + $0xaa] sm:$0xff]
    %v2861 = vld [vmem:[#allocation3 + $0xb2] sm:$0xff]
    %v2862 = vld [vmem:[#allocation3 + $0xba] sm:$0xff]
    %v2863 = vld [vmem:[#allocation3 + $0xc2] sm:$0xff]
    %v2864 = vld [vmem:[#allocation3 + $0xca] sm:$0xff]
    %v2865 = vpack.c.bf16 %v2842, %v2841
    %v2866 = vpack.c.bf16 %v2844, %v2843
    %v2867 = vpack.c.bf16 %v2846, %v2845
    %v2868 = vpack.c.bf16 %v2848, %v2847
    %v2869 = vpack.c.bf16 %v2850, %v2849
    %v2870 = vpack.c.bf16 %v2852, %v2851
    %v2871 = vpack.c.bf16 %v2854, %v2853
    %v2872 = vpack.c.bf16 %v2856, %v2855
    %v2873 = vpack.c.bf16 %v2858, %v2857
    %v2874 = vpack.c.bf16 %v2860, %v2859
    %v2875 = vpack.c.bf16 %v2862, %v2861
    %v2876 = vpack.c.bf16 %v2864, %v2863
    %2889 = vrot.lane.b32.xlu0 %v2865, 64
    %v2890 = vpop.permute.xlu0 %2889
    %2891 = vrot.lane.b32.xlu0 %v2866, 64
    %v2892 = vpop.permute.xlu0 %2891
    %2893 = vrot.lane.b32.xlu0 %v2867, 64
    %v2894 = vpop.permute.xlu0 %2893
    %2895 = vrot.lane.b32.xlu0 %v2868, 64
    %v2896 = vpop.permute.xlu0 %2895
    %2897 = vrot.lane.b32.xlu0 %v2869, 64
    %v2898 = vpop.permute.xlu0 %2897
    %2899 = vrot.lane.b32.xlu0 %v2870, 64
    %v2900 = vpop.permute.xlu0 %2899
    %2901 = vrot.lane.b32.xlu0 %v2871, 64
    %v2902 = vpop.permute.xlu0 %2901
    %2903 = vrot.lane.b32.xlu0 %v2872, 64
    %v2904 = vpop.permute.xlu0 %2903
    %2905 = vrot.lane.b32.xlu0 %v2873, 64
    %v2906 = vpop.permute.xlu0 %2905
    %2907 = vrot.lane.b32.xlu0 %v2874, 64
    %v2908 = vpop.permute.xlu0 %2907
    %2909 = vrot.lane.b32.xlu0 %v2875, 64
    %v2910 = vpop.permute.xlu0 %2909
    %2911 = vrot.lane.b32.xlu0 %v2876, 64
    %v2912 = vpop.permute.xlu0 %2911
    %2925 = vst.msk [vmem:[#allocation4 + $0x8] sm:$0xff] %vm2587, %v2890
    %2926 = vst.msk [vmem:[#allocation4 + $0x40] sm:$0xff] %vm2587, %v2892
    %2927 = vst.msk [vmem:[#allocation4 + $0x78] sm:$0xff] %vm2587, %v2894
    %2928 = vst.msk [vmem:[#allocation4 + $0xb0] sm:$0xff] %vm2587, %v2896
    %2929 = vst.msk [vmem:[#allocation4 + $0xe8] sm:$0xff] %vm2587, %v2898
    %2930 = vst.msk [vmem:[#allocation4 + $0x120] sm:$0xff] %vm2587, %v2900
    %2931 = vst.msk [vmem:[#allocation4 + $0x158] sm:$0xff] %vm2587, %v2902
    %2932 = vst.msk [vmem:[#allocation4 + $0x190] sm:$0xff] %vm2587, %v2904
    %2933 = vst.msk [vmem:[#allocation4 + $0x1c8] sm:$0xff] %vm2587, %v2906
    %2934 = vst.msk [vmem:[#allocation4 + $0x200] sm:$0xff] %vm2587, %v2908
    %2935 = vst.msk [vmem:[#allocation4 + $0x238] sm:$0xff] %vm2587, %v2910
    %2936 = vst.msk [vmem:[#allocation4 + $0x270] sm:$0xff] %vm2587, %v2912
    %v2937 = vld [vmem:[#allocation3 + $0x22] sm:$0xff]
    %v2938 = vld [vmem:[#allocation3 + $0x2a] sm:$0xff]
    %v2939 = vld [vmem:[#allocation3 + $0x32] sm:$0xff]
    %v2940 = vld [vmem:[#allocation3 + $0x3a] sm:$0xff]
    %v2941 = vld [vmem:[#allocation3 + $0x42] sm:$0xff]
    %v2942 = vld [vmem:[#allocation3 + $0x4a] sm:$0xff]
    %v2943 = vld [vmem:[#allocation3 + $0x52] sm:$0xff]
    %v2944 = vld [vmem:[#allocation3 + $0x5a] sm:$0xff]
    %v2945 = vld [vmem:[#allocation3 + $0x62] sm:$0xff]
    %v2946 = vld [vmem:[#allocation3 + $0x6a] sm:$0xff]
    %v2947 = vld [vmem:[#allocation3 + $0x72] sm:$0xff]
    %v2948 = vld [vmem:[#allocation3 + $0x7a] sm:$0xff]
    %v2949 = vld [vmem:[#allocation3 + $0x82] sm:$0xff]
    %v2950 = vld [vmem:[#allocation3 + $0x8a] sm:$0xff]
    %v2951 = vld [vmem:[#allocation3 + $0x92] sm:$0xff]
    %v2952 = vld [vmem:[#allocation3 + $0x9a] sm:$0xff]
    %v2953 = vld [vmem:[#allocation3 + $0xa2] sm:$0xff]
    %v2954 = vld [vmem:[#allocation3 + $0xaa] sm:$0xff]
    %v2955 = vld [vmem:[#allocation3 + $0xb2] sm:$0xff]
    %v2956 = vld [vmem:[#allocation3 + $0xba] sm:$0xff]
    %v2957 = vld [vmem:[#allocation3 + $0xc2] sm:$0xff]
    %v2958 = vld [vmem:[#allocation3 + $0xca] sm:$0xff]
    %v2959 = vld [vmem:[#allocation3 + $0xd2] sm:$0xff]
    %v2960 = vld [vmem:[#allocation3 + $0xda] sm:$0xff]
    %v2961 = vpack.c.bf16 %v2938, %v2937
    %v2962 = vpack.c.bf16 %v2940, %v2939
    %v2963 = vpack.c.bf16 %v2942, %v2941
    %v2964 = vpack.c.bf16 %v2944, %v2943
    %v2965 = vpack.c.bf16 %v2946, %v2945
    %v2966 = vpack.c.bf16 %v2948, %v2947
    %v2967 = vpack.c.bf16 %v2950, %v2949
    %v2968 = vpack.c.bf16 %v2952, %v2951
    %v2969 = vpack.c.bf16 %v2954, %v2953
    %v2970 = vpack.c.bf16 %v2956, %v2955
    %v2971 = vpack.c.bf16 %v2958, %v2957
    %v2972 = vpack.c.bf16 %v2960, %v2959
    %2985 = vrot.lane.b32.xlu0 %v2961, 96
    %v2986 = vpop.permute.xlu0 %2985
    %2987 = vrot.lane.b32.xlu0 %v2962, 96
    %v2988 = vpop.permute.xlu0 %2987
    %2989 = vrot.lane.b32.xlu0 %v2963, 96
    %v2990 = vpop.permute.xlu0 %2989
    %2991 = vrot.lane.b32.xlu0 %v2964, 96
    %v2992 = vpop.permute.xlu0 %2991
    %2993 = vrot.lane.b32.xlu0 %v2965, 96
    %v2994 = vpop.permute.xlu0 %2993
    %2995 = vrot.lane.b32.xlu0 %v2966, 96
    %v2996 = vpop.permute.xlu0 %2995
    %2997 = vrot.lane.b32.xlu0 %v2967, 96
    %v2998 = vpop.permute.xlu0 %2997
    %2999 = vrot.lane.b32.xlu0 %v2968, 96
    %v3000 = vpop.permute.xlu0 %2999
    %3001 = vrot.lane.b32.xlu0 %v2969, 96
    %v3002 = vpop.permute.xlu0 %3001
    %3003 = vrot.lane.b32.xlu0 %v2970, 96
    %v3004 = vpop.permute.xlu0 %3003
    %3005 = vrot.lane.b32.xlu0 %v2971, 96
    %v3006 = vpop.permute.xlu0 %3005
    %3007 = vrot.lane.b32.xlu0 %v2972, 96
    %v3008 = vpop.permute.xlu0 %3007
    %3021 = vst.msk [vmem:[#allocation4 + $0x8] sm:$0xff] %vm2684, %v2986
    %3022 = vst.msk [vmem:[#allocation4 + $0x40] sm:$0xff] %vm2684, %v2988
    %3023 = vst.msk [vmem:[#allocation4 + $0x78] sm:$0xff] %vm2684, %v2990
    %3024 = vst.msk [vmem:[#allocation4 + $0xb0] sm:$0xff] %vm2684, %v2992
    %3025 = vst.msk [vmem:[#allocation4 + $0xe8] sm:$0xff] %vm2684, %v2994
    %3026 = vst.msk [vmem:[#allocation4 + $0x120] sm:$0xff] %vm2684, %v2996
    %3027 = vst.msk [vmem:[#allocation4 + $0x158] sm:$0xff] %vm2684, %v2998
    %3028 = vst.msk [vmem:[#allocation4 + $0x190] sm:$0xff] %vm2684, %v3000
    %3029 = vst.msk [vmem:[#allocation4 + $0x1c8] sm:$0xff] %vm2684, %v3002
    %3030 = vst.msk [vmem:[#allocation4 + $0x200] sm:$0xff] %vm2684, %v3004
    %3031 = vst.msk [vmem:[#allocation4 + $0x238] sm:$0xff] %vm2684, %v3006
    %3032 = vst.msk [vmem:[#allocation4 + $0x270] sm:$0xff] %vm2684, %v3008
    %v3033 = vld [vmem:[#allocation3 + $0x32] sm:$0xff]
    %v3034 = vld [vmem:[#allocation3 + $0x3a] sm:$0xff]
    %v3035 = vld [vmem:[#allocation3 + $0x42] sm:$0xff]
    %v3036 = vld [vmem:[#allocation3 + $0x4a] sm:$0xff]
    %v3037 = vld [vmem:[#allocation3 + $0x52] sm:$0xff]
    %v3038 = vld [vmem:[#allocation3 + $0x5a] sm:$0xff]
    %v3039 = vld [vmem:[#allocation3 + $0x62] sm:$0xff]
    %v3040 = vld [vmem:[#allocation3 + $0x6a] sm:$0xff]
    %v3041 = vld [vmem:[#allocation3 + $0x72] sm:$0xff]
    %v3042 = vld [vmem:[#allocation3 + $0x7a] sm:$0xff]
    %v3043 = vld [vmem:[#allocation3 + $0x82] sm:$0xff]
    %v3044 = vld [vmem:[#allocation3 + $0x8a] sm:$0xff]
    %v3045 = vld [vmem:[#allocation3 + $0x92] sm:$0xff]
    %v3046 = vld [vmem:[#allocation3 + $0x9a] sm:$0xff]
    %v3047 = vld [vmem:[#allocation3 + $0xa2] sm:$0xff]
    %v3048 = vld [vmem:[#allocation3 + $0xaa] sm:$0xff]
    %v3049 = vld [vmem:[#allocation3 + $0xb2] sm:$0xff]
    %v3050 = vld [vmem:[#allocation3 + $0xba] sm:$0xff]
    %v3051 = vld [vmem:[#allocation3 + $0xc2] sm:$0xff]
    %v3052 = vld [vmem:[#allocation3 + $0xca] sm:$0xff]
    %v3053 = vld [vmem:[#allocation3 + $0xd2] sm:$0xff]
    %v3054 = vld [vmem:[#allocation3 + $0xda] sm:$0xff]
    %v3055 = vld [vmem:[#allocation3 + $0xe2] sm:$0xff]
    %v3056 = vld [vmem:[#allocation3 + $0xea] sm:$0xff]
    %v3057 = vpack.c.bf16 %v3034, %v3033
    %v3058 = vpack.c.bf16 %v3036, %v3035
    %v3059 = vpack.c.bf16 %v3038, %v3037
    %v3060 = vpack.c.bf16 %v3040, %v3039
    %v3061 = vpack.c.bf16 %v3042, %v3041
    %v3062 = vpack.c.bf16 %v3044, %v3043
    %v3063 = vpack.c.bf16 %v3046, %v3045
    %v3064 = vpack.c.bf16 %v3048, %v3047
    %v3065 = vpack.c.bf16 %v3050, %v3049
    %v3066 = vpack.c.bf16 %v3052, %v3051
    %v3067 = vpack.c.bf16 %v3054, %v3053
    %v3068 = vpack.c.bf16 %v3056, %v3055
    %3069 = vst.msk [vmem:[#allocation4 + $0x10] sm:$0xff] %vm2107, %v3057
    %3070 = vst.msk [vmem:[#allocation4 + $0x48] sm:$0xff] %vm2107, %v3058
    %3071 = vst.msk [vmem:[#allocation4 + $0x80] sm:$0xff] %vm2107, %v3059
    %3072 = vst.msk [vmem:[#allocation4 + $0xb8] sm:$0xff] %vm2107, %v3060
    %3073 = vst.msk [vmem:[#allocation4 + $0xf0] sm:$0xff] %vm2107, %v3061
    %3074 = vst.msk [vmem:[#allocation4 + $0x128] sm:$0xff] %vm2107, %v3062
    %3075 = vst.msk [vmem:[#allocation4 + $0x160] sm:$0xff] %vm2107, %v3063
    %3076 = vst.msk [vmem:[#allocation4 + $0x198] sm:$0xff] %vm2107, %v3064
    %3077 = vst.msk [vmem:[#allocation4 + $0x1d0] sm:$0xff] %vm2107, %v3065
    %3078 = vst.msk [vmem:[#allocation4 + $0x208] sm:$0xff] %vm2107, %v3066
    %3079 = vst.msk [vmem:[#allocation4 + $0x240] sm:$0xff] %vm2107, %v3067
    %3080 = vst.msk [vmem:[#allocation4 + $0x278] sm:$0xff] %vm2107, %v3068
    %v3081 = vld [vmem:[#allocation3 + $0x42] sm:$0xff]
    %v3082 = vld [vmem:[#allocation3 + $0x4a] sm:$0xff]
    %v3083 = vld [vmem:[#allocation3 + $0x52] sm:$0xff]
    %v3084 = vld [vmem:[#allocation3 + $0x5a] sm:$0xff]
    %v3085 = vld [vmem:[#allocation3 + $0x62] sm:$0xff]
    %v3086 = vld [vmem:[#allocation3 + $0x6a] sm:$0xff]
    %v3087 = vld [vmem:[#allocation3 + $0x72] sm:$0xff]
    %v3088 = vld [vmem:[#allocation3 + $0x7a] sm:$0xff]
    %v3089 = vld [vmem:[#allocation3 + $0x82] sm:$0xff]
    %v3090 = vld [vmem:[#allocation3 + $0x8a] sm:$0xff]
    %v3091 = vld [vmem:[#allocation3 + $0x92] sm:$0xff]
    %v3092 = vld [vmem:[#allocation3 + $0x9a] sm:$0xff]
    %v3093 = vld [vmem:[#allocation3 + $0xa2] sm:$0xff]
    %v3094 = vld [vmem:[#allocation3 + $0xaa] sm:$0xff]
    %v3095 = vld [vmem:[#allocation3 + $0xb2] sm:$0xff]
    %v3096 = vld [vmem:[#allocation3 + $0xba] sm:$0xff]
    %v3097 = vld [vmem:[#allocation3 + $0xc2] sm:$0xff]
    %v3098 = vld [vmem:[#allocation3 + $0xca] sm:$0xff]
    %v3099 = vld [vmem:[#allocation3 + $0xd2] sm:$0xff]
    %v3100 = vld [vmem:[#allocation3 + $0xda] sm:$0xff]
    %v3101 = vld [vmem:[#allocation3 + $0xe2] sm:$0xff]
    %v3102 = vld [vmem:[#allocation3 + $0xea] sm:$0xff]
    %v3103 = vld [vmem:[#allocation3 + $0xf2] sm:$0xff]
    %v3104 = vld [vmem:[#allocation3 + $0xfa] sm:$0xff]
    %v3105 = vpack.c.bf16 %v3082, %v3081
    %v3106 = vpack.c.bf16 %v3084, %v3083
    %v3107 = vpack.c.bf16 %v3086, %v3085
    %v3108 = vpack.c.bf16 %v3088, %v3087
    %v3109 = vpack.c.bf16 %v3090, %v3089
    %v3110 = vpack.c.bf16 %v3092, %v3091
    %v3111 = vpack.c.bf16 %v3094, %v3093
    %v3112 = vpack.c.bf16 %v3096, %v3095
    %v3113 = vpack.c.bf16 %v3098, %v3097
    %v3114 = vpack.c.bf16 %v3100, %v3099
    %v3115 = vpack.c.bf16 %v3102, %v3101
    %v3116 = vpack.c.bf16 %v3104, %v3103
    %3129 = vrot.lane.b32.xlu0 %v3105, 32
    %v3130 = vpop.permute.xlu0 %3129
    %3131 = vrot.lane.b32.xlu0 %v3106, 32
    %v3132 = vpop.permute.xlu0 %3131
    %3133 = vrot.lane.b32.xlu0 %v3107, 32
    %v3134 = vpop.permute.xlu0 %3133
    %3135 = vrot.lane.b32.xlu0 %v3108, 32
    %v3136 = vpop.permute.xlu0 %3135
    %3137 = vrot.lane.b32.xlu0 %v3109, 32
    %v3138 = vpop.permute.xlu0 %3137
    %3139 = vrot.lane.b32.xlu0 %v3110, 32
    %v3140 = vpop.permute.xlu0 %3139
    %3141 = vrot.lane.b32.xlu0 %v3111, 32
    %v3142 = vpop.permute.xlu0 %3141
    %3143 = vrot.lane.b32.xlu0 %v3112, 32
    %v3144 = vpop.permute.xlu0 %3143
    %3145 = vrot.lane.b32.xlu0 %v3113, 32
    %v3146 = vpop.permute.xlu0 %3145
    %3147 = vrot.lane.b32.xlu0 %v3114, 32
    %v3148 = vpop.permute.xlu0 %3147
    %3149 = vrot.lane.b32.xlu0 %v3115, 32
    %v3150 = vpop.permute.xlu0 %3149
    %3151 = vrot.lane.b32.xlu0 %v3116, 32
    %v3152 = vpop.permute.xlu0 %3151
    %3165 = vst.msk [vmem:[#allocation4 + $0x10] sm:$0xff] %vm2490, %v3130
    %3166 = vst.msk [vmem:[#allocation4 + $0x48] sm:$0xff] %vm2490, %v3132
    %3167 = vst.msk [vmem:[#allocation4 + $0x80] sm:$0xff] %vm2490, %v3134
    %3168 = vst.msk [vmem:[#allocation4 + $0xb8] sm:$0xff] %vm2490, %v3136
    %3169 = vst.msk [vmem:[#allocation4 + $0xf0] sm:$0xff] %vm2490, %v3138
    %3170 = vst.msk [vmem:[#allocation4 + $0x128] sm:$0xff] %vm2490, %v3140
    %3171 = vst.msk [vmem:[#allocation4 + $0x160] sm:$0xff] %vm2490, %v3142
    %3172 = vst.msk [vmem:[#allocation4 + $0x198] sm:$0xff] %vm2490, %v3144
    %3173 = vst.msk [vmem:[#allocation4 + $0x1d0] sm:$0xff] %vm2490, %v3146
    %3174 = vst.msk [vmem:[#allocation4 + $0x208] sm:$0xff] %vm2490, %v3148
    %3175 = vst.msk [vmem:[#allocation4 + $0x240] sm:$0xff] %vm2490, %v3150
    %3176 = vst.msk [vmem:[#allocation4 + $0x278] sm:$0xff] %vm2490, %v3152
    %v3177 = vld [vmem:[#allocation3 + $0x4] sm:$0xff]
    %v3178 = vld [vmem:[#allocation3 + $0xc] sm:$0xff]
    %v3179 = vld [vmem:[#allocation3 + $0x14] sm:$0xff]
    %v3180 = vld [vmem:[#allocation3 + $0x1c] sm:$0xff]
    %v3181 = vld [vmem:[#allocation3 + $0x24] sm:$0xff]
    %v3182 = vld [vmem:[#allocation3 + $0x2c] sm:$0xff]
    %v3183 = vld [vmem:[#allocation3 + $0x34] sm:$0xff]
    %v3184 = vld [vmem:[#allocation3 + $0x3c] sm:$0xff]
    %v3185 = vld [vmem:[#allocation3 + $0x44] sm:$0xff]
    %v3186 = vld [vmem:[#allocation3 + $0x4c] sm:$0xff]
    %v3187 = vld [vmem:[#allocation3 + $0x54] sm:$0xff]
    %v3188 = vld [vmem:[#allocation3 + $0x5c] sm:$0xff]
    %v3189 = vld [vmem:[#allocation3 + $0x64] sm:$0xff]
    %v3190 = vld [vmem:[#allocation3 + $0x6c] sm:$0xff]
    %v3191 = vld [vmem:[#allocation3 + $0x74] sm:$0xff]
    %v3192 = vld [vmem:[#allocation3 + $0x7c] sm:$0xff]
    %v3193 = vld [vmem:[#allocation3 + $0x84] sm:$0xff]
    %v3194 = vld [vmem:[#allocation3 + $0x8c] sm:$0xff]
    %v3195 = vld [vmem:[#allocation3 + $0x94] sm:$0xff]
    %v3196 = vld [vmem:[#allocation3 + $0x9c] sm:$0xff]
    %v3197 = vld [vmem:[#allocation3 + $0xa4] sm:$0xff]
    %v3198 = vld [vmem:[#allocation3 + $0xac] sm:$0xff]
    %v3199 = vld [vmem:[#allocation3 + $0xb4] sm:$0xff]
    %v3200 = vld [vmem:[#allocation3 + $0xbc] sm:$0xff]
    %v3201 = vpack.c.bf16 %v3178, %v3177
    %v3202 = vpack.c.bf16 %v3180, %v3179
    %v3203 = vpack.c.bf16 %v3182, %v3181
    %v3204 = vpack.c.bf16 %v3184, %v3183
    %v3205 = vpack.c.bf16 %v3186, %v3185
    %v3206 = vpack.c.bf16 %v3188, %v3187
    %v3207 = vpack.c.bf16 %v3190, %v3189
    %v3208 = vpack.c.bf16 %v3192, %v3191
    %v3209 = vpack.c.bf16 %v3194, %v3193
    %v3210 = vpack.c.bf16 %v3196, %v3195
    %v3211 = vpack.c.bf16 %v3198, %v3197
    %v3212 = vpack.c.bf16 %v3200, %v3199
    %3225 = vrot.lane.b32.xlu0 %v3201, 64
    %v3226 = vpop.permute.xlu0 %3225
    %3227 = vrot.lane.b32.xlu0 %v3202, 64
    %v3228 = vpop.permute.xlu0 %3227
    %3229 = vrot.lane.b32.xlu0 %v3203, 64
    %v3230 = vpop.permute.xlu0 %3229
    %3231 = vrot.lane.b32.xlu0 %v3204, 64
    %v3232 = vpop.permute.xlu0 %3231
    %3233 = vrot.lane.b32.xlu0 %v3205, 64
    %v3234 = vpop.permute.xlu0 %3233
    %3235 = vrot.lane.b32.xlu0 %v3206, 64
    %v3236 = vpop.permute.xlu0 %3235
    %3237 = vrot.lane.b32.xlu0 %v3207, 64
    %v3238 = vpop.permute.xlu0 %3237
    %3239 = vrot.lane.b32.xlu0 %v3208, 64
    %v3240 = vpop.permute.xlu0 %3239
    %3241 = vrot.lane.b32.xlu0 %v3209, 64
    %v3242 = vpop.permute.xlu0 %3241
    %3243 = vrot.lane.b32.xlu0 %v3210, 64
    %v3244 = vpop.permute.xlu0 %3243
    %3245 = vrot.lane.b32.xlu0 %v3211, 64
    %v3246 = vpop.permute.xlu0 %3245
    %3247 = vrot.lane.b32.xlu0 %v3212, 64
    %v3248 = vpop.permute.xlu0 %3247
    %3261 = vst.msk [vmem:[#allocation4 + $0x10] sm:$0xff] %vm2587, %v3226
    %3262 = vst.msk [vmem:[#allocation4 + $0x48] sm:$0xff] %vm2587, %v3228
    %3263 = vst.msk [vmem:[#allocation4 + $0x80] sm:$0xff] %vm2587, %v3230
    %3264 = vst.msk [vmem:[#allocation4 + $0xb8] sm:$0xff] %vm2587, %v3232
    %3265 = vst.msk [vmem:[#allocation4 + $0xf0] sm:$0xff] %vm2587, %v3234
    %3266 = vst.msk [vmem:[#allocation4 + $0x128] sm:$0xff] %vm2587, %v3236
    %3267 = vst.msk [vmem:[#allocation4 + $0x160] sm:$0xff] %vm2587, %v3238
    %3268 = vst.msk [vmem:[#allocation4 + $0x198] sm:$0xff] %vm2587, %v3240
    %3269 = vst.msk [vmem:[#allocation4 + $0x1d0] sm:$0xff] %vm2587, %v3242
    %3270 = vst.msk [vmem:[#allocation4 + $0x208] sm:$0xff] %vm2587, %v3244
    %3271 = vst.msk [vmem:[#allocation4 + $0x240] sm:$0xff] %vm2587, %v3246
    %3272 = vst.msk [vmem:[#allocation4 + $0x278] sm:$0xff] %vm2587, %v3248
    %v3273 = vld [vmem:[#allocation3 + $0x14] sm:$0xff]
    %v3274 = vld [vmem:[#allocation3 + $0x1c] sm:$0xff]
    %v3275 = vld [vmem:[#allocation3 + $0x24] sm:$0xff]
    %v3276 = vld [vmem:[#allocation3 + $0x2c] sm:$0xff]
    %v3277 = vld [vmem:[#allocation3 + $0x34] sm:$0xff]
    %v3278 = vld [vmem:[#allocation3 + $0x3c] sm:$0xff]
    %v3279 = vld [vmem:[#allocation3 + $0x44] sm:$0xff]
    %v3280 = vld [vmem:[#allocation3 + $0x4c] sm:$0xff]
    %v3281 = vld [vmem:[#allocation3 + $0x54] sm:$0xff]
    %v3282 = vld [vmem:[#allocation3 + $0x5c] sm:$0xff]
    %v3283 = vld [vmem:[#allocation3 + $0x64] sm:$0xff]
    %v3284 = vld [vmem:[#allocation3 + $0x6c] sm:$0xff]
    %v3285 = vld [vmem:[#allocation3 + $0x74] sm:$0xff]
    %v3286 = vld [vmem:[#allocation3 + $0x7c] sm:$0xff]
    %v3287 = vld [vmem:[#allocation3 + $0x84] sm:$0xff]
    %v3288 = vld [vmem:[#allocation3 + $0x8c] sm:$0xff]
    %v3289 = vld [vmem:[#allocation3 + $0x94] sm:$0xff]
    %v3290 = vld [vmem:[#allocation3 + $0x9c] sm:$0xff]
    %v3291 = vld [vmem:[#allocation3 + $0xa4] sm:$0xff]
    %v3292 = vld [vmem:[#allocation3 + $0xac] sm:$0xff]
    %v3293 = vld [vmem:[#allocation3 + $0xb4] sm:$0xff]
    %v3294 = vld [vmem:[#allocation3 + $0xbc] sm:$0xff]
    %v3295 = vld [vmem:[#allocation3 + $0xc4] sm:$0xff]
    %v3296 = vld [vmem:[#allocation3 + $0xcc] sm:$0xff]
    %v3297 = vpack.c.bf16 %v3274, %v3273
    %v3298 = vpack.c.bf16 %v3276, %v3275
    %v3299 = vpack.c.bf16 %v3278, %v3277
    %v3300 = vpack.c.bf16 %v3280, %v3279
    %v3301 = vpack.c.bf16 %v3282, %v3281
    %v3302 = vpack.c.bf16 %v3284, %v3283
    %v3303 = vpack.c.bf16 %v3286, %v3285
    %v3304 = vpack.c.bf16 %v3288, %v3287
    %v3305 = vpack.c.bf16 %v3290, %v3289
    %v3306 = vpack.c.bf16 %v3292, %v3291
    %v3307 = vpack.c.bf16 %v3294, %v3293
    %v3308 = vpack.c.bf16 %v3296, %v3295
    %3321 = vrot.lane.b32.xlu0 %v3297, 96
    %v3322 = vpop.permute.xlu0 %3321
    %3323 = vrot.lane.b32.xlu0 %v3298, 96
    %v3324 = vpop.permute.xlu0 %3323
    %3325 = vrot.lane.b32.xlu0 %v3299, 96
    %v3326 = vpop.permute.xlu0 %3325
    %3327 = vrot.lane.b32.xlu0 %v3300, 96
    %v3328 = vpop.permute.xlu0 %3327
    %3329 = vrot.lane.b32.xlu0 %v3301, 96
    %v3330 = vpop.permute.xlu0 %3329
    %3331 = vrot.lane.b32.xlu0 %v3302, 96
    %v3332 = vpop.permute.xlu0 %3331
    %3333 = vrot.lane.b32.xlu0 %v3303, 96
    %v3334 = vpop.permute.xlu0 %3333
    %3335 = vrot.lane.b32.xlu0 %v3304, 96
    %v3336 = vpop.permute.xlu0 %3335
    %3337 = vrot.lane.b32.xlu0 %v3305, 96
    %v3338 = vpop.permute.xlu0 %3337
    %3339 = vrot.lane.b32.xlu0 %v3306, 96
    %v3340 = vpop.permute.xlu0 %3339
    %3341 = vrot.lane.b32.xlu0 %v3307, 96
    %v3342 = vpop.permute.xlu0 %3341
    %3343 = vrot.lane.b32.xlu0 %v3308, 96
    %v3344 = vpop.permute.xlu0 %3343
    %3357 = vst.msk [vmem:[#allocation4 + $0x10] sm:$0xff] %vm2684, %v3322
    %3358 = vst.msk [vmem:[#allocation4 + $0x48] sm:$0xff] %vm2684, %v3324
    %3359 = vst.msk [vmem:[#allocation4 + $0x80] sm:$0xff] %vm2684, %v3326
    %3360 = vst.msk [vmem:[#allocation4 + $0xb8] sm:$0xff] %vm2684, %v3328
    %3361 = vst.msk [vmem:[#allocation4 + $0xf0] sm:$0xff] %vm2684, %v3330
    %3362 = vst.msk [vmem:[#allocation4 + $0x128] sm:$0xff] %vm2684, %v3332
    %3363 = vst.msk [vmem:[#allocation4 + $0x160] sm:$0xff] %vm2684, %v3334
    %3364 = vst.msk [vmem:[#allocation4 + $0x198] sm:$0xff] %vm2684, %v3336
    %3365 = vst.msk [vmem:[#allocation4 + $0x1d0] sm:$0xff] %vm2684, %v3338
    %3366 = vst.msk [vmem:[#allocation4 + $0x208] sm:$0xff] %vm2684, %v3340
    %3367 = vst.msk [vmem:[#allocation4 + $0x240] sm:$0xff] %vm2684, %v3342
    %3368 = vst.msk [vmem:[#allocation4 + $0x278] sm:$0xff] %vm2684, %v3344
    %v3369 = vld [vmem:[#allocation3 + $0x24] sm:$0xff]
    %v3370 = vld [vmem:[#allocation3 + $0x2c] sm:$0xff]
    %v3371 = vld [vmem:[#allocation3 + $0x34] sm:$0xff]
    %v3372 = vld [vmem:[#allocation3 + $0x3c] sm:$0xff]
    %v3373 = vld [vmem:[#allocation3 + $0x44] sm:$0xff]
    %v3374 = vld [vmem:[#allocation3 + $0x4c] sm:$0xff]
    %v3375 = vld [vmem:[#allocation3 + $0x54] sm:$0xff]
    %v3376 = vld [vmem:[#allocation3 + $0x5c] sm:$0xff]
    %v3377 = vld [vmem:[#allocation3 + $0x64] sm:$0xff]
    %v3378 = vld [vmem:[#allocation3 + $0x6c] sm:$0xff]
    %v3379 = vld [vmem:[#allocation3 + $0x74] sm:$0xff]
    %v3380 = vld [vmem:[#allocation3 + $0x7c] sm:$0xff]
    %v3381 = vld [vmem:[#allocation3 + $0x84] sm:$0xff]
    %v3382 = vld [vmem:[#allocation3 + $0x8c] sm:$0xff]
    %v3383 = vld [vmem:[#allocation3 + $0x94] sm:$0xff]
    %v3384 = vld [vmem:[#allocation3 + $0x9c] sm:$0xff]
    %v3385 = vld [vmem:[#allocation3 + $0xa4] sm:$0xff]
    %v3386 = vld [vmem:[#allocation3 + $0xac] sm:$0xff]
    %v3387 = vld [vmem:[#allocation3 + $0xb4] sm:$0xff]
    %v3388 = vld [vmem:[#allocation3 + $0xbc] sm:$0xff]
    %v3389 = vld [vmem:[#allocation3 + $0xc4] sm:$0xff]
    %v3390 = vld [vmem:[#allocation3 + $0xcc] sm:$0xff]
    %v3391 = vld [vmem:[#allocation3 + $0xd4] sm:$0xff]
    %v3392 = vld [vmem:[#allocation3 + $0xdc] sm:$0xff]
    %v3393 = vpack.c.bf16 %v3370, %v3369
    %v3394 = vpack.c.bf16 %v3372, %v3371
    %v3395 = vpack.c.bf16 %v3374, %v3373
    %v3396 = vpack.c.bf16 %v3376, %v3375
    %v3397 = vpack.c.bf16 %v3378, %v3377
    %v3398 = vpack.c.bf16 %v3380, %v3379
    %v3399 = vpack.c.bf16 %v3382, %v3381
    %v3400 = vpack.c.bf16 %v3384, %v3383
    %v3401 = vpack.c.bf16 %v3386, %v3385
    %v3402 = vpack.c.bf16 %v3388, %v3387
    %v3403 = vpack.c.bf16 %v3390, %v3389
    %v3404 = vpack.c.bf16 %v3392, %v3391
    %3405 = vst.msk [vmem:[#allocation4 + $0x18] sm:$0xff] %vm2107, %v3393
    %3406 = vst.msk [vmem:[#allocation4 + $0x50] sm:$0xff] %vm2107, %v3394
    %3407 = vst.msk [vmem:[#allocation4 + $0x88] sm:$0xff] %vm2107, %v3395
    %3408 = vst.msk [vmem:[#allocation4 + $0xc0] sm:$0xff] %vm2107, %v3396
    %3409 = vst.msk [vmem:[#allocation4 + $0xf8] sm:$0xff] %vm2107, %v3397
    %3410 = vst.msk [vmem:[#allocation4 + $0x130] sm:$0xff] %vm2107, %v3398
    %3411 = vst.msk [vmem:[#allocation4 + $0x168] sm:$0xff] %vm2107, %v3399
    %3412 = vst.msk [vmem:[#allocation4 + $0x1a0] sm:$0xff] %vm2107, %v3400
    %3413 = vst.msk [vmem:[#allocation4 + $0x1d8] sm:$0xff] %vm2107, %v3401
    %3414 = vst.msk [vmem:[#allocation4 + $0x210] sm:$0xff] %vm2107, %v3402
    %3415 = vst.msk [vmem:[#allocation4 + $0x248] sm:$0xff] %vm2107, %v3403
    %3416 = vst.msk [vmem:[#allocation4 + $0x280] sm:$0xff] %vm2107, %v3404
    %v3417 = vld [vmem:[#allocation3 + $0x34] sm:$0xff]
    %v3418 = vld [vmem:[#allocation3 + $0x3c] sm:$0xff]
    %v3419 = vld [vmem:[#allocation3 + $0x44] sm:$0xff]
    %v3420 = vld [vmem:[#allocation3 + $0x4c] sm:$0xff]
    %v3421 = vld [vmem:[#allocation3 + $0x54] sm:$0xff]
    %v3422 = vld [vmem:[#allocation3 + $0x5c] sm:$0xff]
    %v3423 = vld [vmem:[#allocation3 + $0x64] sm:$0xff]
    %v3424 = vld [vmem:[#allocation3 + $0x6c] sm:$0xff]
    %v3425 = vld [vmem:[#allocation3 + $0x74] sm:$0xff]
    %v3426 = vld [vmem:[#allocation3 + $0x7c] sm:$0xff]
    %v3427 = vld [vmem:[#allocation3 + $0x84] sm:$0xff]
    %v3428 = vld [vmem:[#allocation3 + $0x8c] sm:$0xff]
    %v3429 = vld [vmem:[#allocation3 + $0x94] sm:$0xff]
    %v3430 = vld [vmem:[#allocation3 + $0x9c] sm:$0xff]
    %v3431 = vld [vmem:[#allocation3 + $0xa4] sm:$0xff]
    %v3432 = vld [vmem:[#allocation3 + $0xac] sm:$0xff]
    %v3433 = vld [vmem:[#allocation3 + $0xb4] sm:$0xff]
    %v3434 = vld [vmem:[#allocation3 + $0xbc] sm:$0xff]
    %v3435 = vld [vmem:[#allocation3 + $0xc4] sm:$0xff]
    %v3436 = vld [vmem:[#allocation3 + $0xcc] sm:$0xff]
    %v3437 = vld [vmem:[#allocation3 + $0xd4] sm:$0xff]
    %v3438 = vld [vmem:[#allocation3 + $0xdc] sm:$0xff]
    %v3439 = vld [vmem:[#allocation3 + $0xe4] sm:$0xff]
    %v3440 = vld [vmem:[#allocation3 + $0xec] sm:$0xff]
    %v3441 = vpack.c.bf16 %v3418, %v3417
    %v3442 = vpack.c.bf16 %v3420, %v3419
    %v3443 = vpack.c.bf16 %v3422, %v3421
    %v3444 = vpack.c.bf16 %v3424, %v3423
    %v3445 = vpack.c.bf16 %v3426, %v3425
    %v3446 = vpack.c.bf16 %v3428, %v3427
    %v3447 = vpack.c.bf16 %v3430, %v3429
    %v3448 = vpack.c.bf16 %v3432, %v3431
    %v3449 = vpack.c.bf16 %v3434, %v3433
    %v3450 = vpack.c.bf16 %v3436, %v3435
    %v3451 = vpack.c.bf16 %v3438, %v3437
    %v3452 = vpack.c.bf16 %v3440, %v3439
    %3465 = vrot.lane.b32.xlu0 %v3441, 32
    %v3466 = vpop.permute.xlu0 %3465
    %3467 = vrot.lane.b32.xlu0 %v3442, 32
    %v3468 = vpop.permute.xlu0 %3467
    %3469 = vrot.lane.b32.xlu0 %v3443, 32
    %v3470 = vpop.permute.xlu0 %3469
    %3471 = vrot.lane.b32.xlu0 %v3444, 32
    %v3472 = vpop.permute.xlu0 %3471
    %3473 = vrot.lane.b32.xlu0 %v3445, 32
    %v3474 = vpop.permute.xlu0 %3473
    %3475 = vrot.lane.b32.xlu0 %v3446, 32
    %v3476 = vpop.permute.xlu0 %3475
    %3477 = vrot.lane.b32.xlu0 %v3447, 32
    %v3478 = vpop.permute.xlu0 %3477
    %3479 = vrot.lane.b32.xlu0 %v3448, 32
    %v3480 = vpop.permute.xlu0 %3479
    %3481 = vrot.lane.b32.xlu0 %v3449, 32
    %v3482 = vpop.permute.xlu0 %3481
    %3483 = vrot.lane.b32.xlu0 %v3450, 32
    %v3484 = vpop.permute.xlu0 %3483
    %3485 = vrot.lane.b32.xlu0 %v3451, 32
    %v3486 = vpop.permute.xlu0 %3485
    %3487 = vrot.lane.b32.xlu0 %v3452, 32
    %v3488 = vpop.permute.xlu0 %3487
    %3501 = vst.msk [vmem:[#allocation4 + $0x18] sm:$0xff] %vm2490, %v3466
    %3502 = vst.msk [vmem:[#allocation4 + $0x50] sm:$0xff] %vm2490, %v3468
    %3503 = vst.msk [vmem:[#allocation4 + $0x88] sm:$0xff] %vm2490, %v3470
    %3504 = vst.msk [vmem:[#allocation4 + $0xc0] sm:$0xff] %vm2490, %v3472
    %3505 = vst.msk [vmem:[#allocation4 + $0xf8] sm:$0xff] %vm2490, %v3474
    %3506 = vst.msk [vmem:[#allocation4 + $0x130] sm:$0xff] %vm2490, %v3476
    %3507 = vst.msk [vmem:[#allocation4 + $0x168] sm:$0xff] %vm2490, %v3478
    %3508 = vst.msk [vmem:[#allocation4 + $0x1a0] sm:$0xff] %vm2490, %v3480
    %3509 = vst.msk [vmem:[#allocation4 + $0x1d8] sm:$0xff] %vm2490, %v3482
    %3510 = vst.msk [vmem:[#allocation4 + $0x210] sm:$0xff] %vm2490, %v3484
    %3511 = vst.msk [vmem:[#allocation4 + $0x248] sm:$0xff] %vm2490, %v3486
    %3512 = vst.msk [vmem:[#allocation4 + $0x280] sm:$0xff] %vm2490, %v3488
    %v3513 = vld [vmem:[#allocation3 + $0x44] sm:$0xff]
    %v3514 = vld [vmem:[#allocation3 + $0x4c] sm:$0xff]
    %v3515 = vld [vmem:[#allocation3 + $0x54] sm:$0xff]
    %v3516 = vld [vmem:[#allocation3 + $0x5c] sm:$0xff]
    %v3517 = vld [vmem:[#allocation3 + $0x64] sm:$0xff]
    %v3518 = vld [vmem:[#allocation3 + $0x6c] sm:$0xff]
    %v3519 = vld [vmem:[#allocation3 + $0x74] sm:$0xff]
    %v3520 = vld [vmem:[#allocation3 + $0x7c] sm:$0xff]
    %v3521 = vld [vmem:[#allocation3 + $0x84] sm:$0xff]
    %v3522 = vld [vmem:[#allocation3 + $0x8c] sm:$0xff]
    %v3523 = vld [vmem:[#allocation3 + $0x94] sm:$0xff]
    %v3524 = vld [vmem:[#allocation3 + $0x9c] sm:$0xff]
    %v3525 = vld [vmem:[#allocation3 + $0xa4] sm:$0xff]
    %v3526 = vld [vmem:[#allocation3 + $0xac] sm:$0xff]
    %v3527 = vld [vmem:[#allocation3 + $0xb4] sm:$0xff]
    %v3528 = vld [vmem:[#allocation3 + $0xbc] sm:$0xff]
    %v3529 = vld [vmem:[#allocation3 + $0xc4] sm:$0xff]
    %v3530 = vld [vmem:[#allocation3 + $0xcc] sm:$0xff]
    %v3531 = vld [vmem:[#allocation3 + $0xd4] sm:$0xff]
    %v3532 = vld [vmem:[#allocation3 + $0xdc] sm:$0xff]
    %v3533 = vld [vmem:[#allocation3 + $0xe4] sm:$0xff]
    %v3534 = vld [vmem:[#allocation3 + $0xec] sm:$0xff]
    %v3535 = vld [vmem:[#allocation3 + $0xf4] sm:$0xff]
    %v3536 = vld [vmem:[#allocation3 + $0xfc] sm:$0xff]
    %v3537 = vpack.c.bf16 %v3514, %v3513
    %v3538 = vpack.c.bf16 %v3516, %v3515
    %v3539 = vpack.c.bf16 %v3518, %v3517
    %v3540 = vpack.c.bf16 %v3520, %v3519
    %v3541 = vpack.c.bf16 %v3522, %v3521
    %v3542 = vpack.c.bf16 %v3524, %v3523
    %v3543 = vpack.c.bf16 %v3526, %v3525
    %v3544 = vpack.c.bf16 %v3528, %v3527
    %v3545 = vpack.c.bf16 %v3530, %v3529
    %v3546 = vpack.c.bf16 %v3532, %v3531
    %v3547 = vpack.c.bf16 %v3534, %v3533
    %v3548 = vpack.c.bf16 %v3536, %v3535
    %3561 = vrot.lane.b32.xlu0 %v3537, 64
    %v3562 = vpop.permute.xlu0 %3561
    %3563 = vrot.lane.b32.xlu0 %v3538, 64
    %v3564 = vpop.permute.xlu0 %3563
    %3565 = vrot.lane.b32.xlu0 %v3539, 64
    %v3566 = vpop.permute.xlu0 %3565
    %3567 = vrot.lane.b32.xlu0 %v3540, 64
    %v3568 = vpop.permute.xlu0 %3567
    %3569 = vrot.lane.b32.xlu0 %v3541, 64
    %v3570 = vpop.permute.xlu0 %3569
    %3571 = vrot.lane.b32.xlu0 %v3542, 64
    %v3572 = vpop.permute.xlu0 %3571
    %3573 = vrot.lane.b32.xlu0 %v3543, 64
    %v3574 = vpop.permute.xlu0 %3573
    %3575 = vrot.lane.b32.xlu0 %v3544, 64
    %v3576 = vpop.permute.xlu0 %3575
    %3577 = vrot.lane.b32.xlu0 %v3545, 64
    %v3578 = vpop.permute.xlu0 %3577
    %3579 = vrot.lane.b32.xlu0 %v3546, 64
    %v3580 = vpop.permute.xlu0 %3579
    %3581 = vrot.lane.b32.xlu0 %v3547, 64
    %v3582 = vpop.permute.xlu0 %3581
    %3583 = vrot.lane.b32.xlu0 %v3548, 64
    %v3584 = vpop.permute.xlu0 %3583
    %3597 = vst.msk [vmem:[#allocation4 + $0x18] sm:$0xff] %vm2587, %v3562
    %3598 = vst.msk [vmem:[#allocation4 + $0x50] sm:$0xff] %vm2587, %v3564
    %3599 = vst.msk [vmem:[#allocation4 + $0x88] sm:$0xff] %vm2587, %v3566
    %3600 = vst.msk [vmem:[#allocation4 + $0xc0] sm:$0xff] %vm2587, %v3568
    %3601 = vst.msk [vmem:[#allocation4 + $0xf8] sm:$0xff] %vm2587, %v3570
    %3602 = vst.msk [vmem:[#allocation4 + $0x130] sm:$0xff] %vm2587, %v3572
    %3603 = vst.msk [vmem:[#allocation4 + $0x168] sm:$0xff] %vm2587, %v3574
    %3604 = vst.msk [vmem:[#allocation4 + $0x1a0] sm:$0xff] %vm2587, %v3576
    %3605 = vst.msk [vmem:[#allocation4 + $0x1d8] sm:$0xff] %vm2587, %v3578
    %3606 = vst.msk [vmem:[#allocation4 + $0x210] sm:$0xff] %vm2587, %v3580
    %3607 = vst.msk [vmem:[#allocation4 + $0x248] sm:$0xff] %vm2587, %v3582
    %3608 = vst.msk [vmem:[#allocation4 + $0x280] sm:$0xff] %vm2587, %v3584
    %v3609 = vld [vmem:[#allocation3 + $0x6] sm:$0xff]
    %v3610 = vld [vmem:[#allocation3 + $0xe] sm:$0xff]
    %v3611 = vld [vmem:[#allocation3 + $0x16] sm:$0xff]
    %v3612 = vld [vmem:[#allocation3 + $0x1e] sm:$0xff]
    %v3613 = vld [vmem:[#allocation3 + $0x26] sm:$0xff]
    %v3614 = vld [vmem:[#allocation3 + $0x2e] sm:$0xff]
    %v3615 = vld [vmem:[#allocation3 + $0x36] sm:$0xff]
    %v3616 = vld [vmem:[#allocation3 + $0x3e] sm:$0xff]
    %v3617 = vld [vmem:[#allocation3 + $0x46] sm:$0xff]
    %v3618 = vld [vmem:[#allocation3 + $0x4e] sm:$0xff]
    %v3619 = vld [vmem:[#allocation3 + $0x56] sm:$0xff]
    %v3620 = vld [vmem:[#allocation3 + $0x5e] sm:$0xff]
    %v3621 = vld [vmem:[#allocation3 + $0x66] sm:$0xff]
    %v3622 = vld [vmem:[#allocation3 + $0x6e] sm:$0xff]
    %v3623 = vld [vmem:[#allocation3 + $0x76] sm:$0xff]
    %v3624 = vld [vmem:[#allocation3 + $0x7e] sm:$0xff]
    %v3625 = vld [vmem:[#allocation3 + $0x86] sm:$0xff]
    %v3626 = vld [vmem:[#allocation3 + $0x8e] sm:$0xff]
    %v3627 = vld [vmem:[#allocation3 + $0x96] sm:$0xff]
    %v3628 = vld [vmem:[#allocation3 + $0x9e] sm:$0xff]
    %v3629 = vld [vmem:[#allocation3 + $0xa6] sm:$0xff]
    %v3630 = vld [vmem:[#allocation3 + $0xae] sm:$0xff]
    %v3631 = vld [vmem:[#allocation3 + $0xb6] sm:$0xff]
    %v3632 = vld [vmem:[#allocation3 + $0xbe] sm:$0xff]
    %v3633 = vpack.c.bf16 %v3610, %v3609
    %v3634 = vpack.c.bf16 %v3612, %v3611
    %v3635 = vpack.c.bf16 %v3614, %v3613
    %v3636 = vpack.c.bf16 %v3616, %v3615
    %v3637 = vpack.c.bf16 %v3618, %v3617
    %v3638 = vpack.c.bf16 %v3620, %v3619
    %v3639 = vpack.c.bf16 %v3622, %v3621
    %v3640 = vpack.c.bf16 %v3624, %v3623
    %v3641 = vpack.c.bf16 %v3626, %v3625
    %v3642 = vpack.c.bf16 %v3628, %v3627
    %v3643 = vpack.c.bf16 %v3630, %v3629
    %v3644 = vpack.c.bf16 %v3632, %v3631
    %3657 = vrot.lane.b32.xlu0 %v3633, 96
    %v3658 = vpop.permute.xlu0 %3657
    %3659 = vrot.lane.b32.xlu0 %v3634, 96
    %v3660 = vpop.permute.xlu0 %3659
    %3661 = vrot.lane.b32.xlu0 %v3635, 96
    %v3662 = vpop.permute.xlu0 %3661
    %3663 = vrot.lane.b32.xlu0 %v3636, 96
    %v3664 = vpop.permute.xlu0 %3663
    %3665 = vrot.lane.b32.xlu0 %v3637, 96
    %v3666 = vpop.permute.xlu0 %3665
    %3667 = vrot.lane.b32.xlu0 %v3638, 96
    %v3668 = vpop.permute.xlu0 %3667
    %3669 = vrot.lane.b32.xlu0 %v3639, 96
    %v3670 = vpop.permute.xlu0 %3669
    %3671 = vrot.lane.b32.xlu0 %v3640, 96
    %v3672 = vpop.permute.xlu0 %3671
    %3673 = vrot.lane.b32.xlu0 %v3641, 96
    %v3674 = vpop.permute.xlu0 %3673
    %3675 = vrot.lane.b32.xlu0 %v3642, 96
    %v3676 = vpop.permute.xlu0 %3675
    %3677 = vrot.lane.b32.xlu0 %v3643, 96
    %v3678 = vpop.permute.xlu0 %3677
    %3679 = vrot.lane.b32.xlu0 %v3644, 96
    %v3680 = vpop.permute.xlu0 %3679
    %3693 = vst.msk [vmem:[#allocation4 + $0x18] sm:$0xff] %vm2684, %v3658
    %3694 = vst.msk [vmem:[#allocation4 + $0x50] sm:$0xff] %vm2684, %v3660
    %3695 = vst.msk [vmem:[#allocation4 + $0x88] sm:$0xff] %vm2684, %v3662
    %3696 = vst.msk [vmem:[#allocation4 + $0xc0] sm:$0xff] %vm2684, %v3664
    %3697 = vst.msk [vmem:[#allocation4 + $0xf8] sm:$0xff] %vm2684, %v3666
    %3698 = vst.msk [vmem:[#allocation4 + $0x130] sm:$0xff] %vm2684, %v3668
    %3699 = vst.msk [vmem:[#allocation4 + $0x168] sm:$0xff] %vm2684, %v3670
    %3700 = vst.msk [vmem:[#allocation4 + $0x1a0] sm:$0xff] %vm2684, %v3672
    %3701 = vst.msk [vmem:[#allocation4 + $0x1d8] sm:$0xff] %vm2684, %v3674
    %3702 = vst.msk [vmem:[#allocation4 + $0x210] sm:$0xff] %vm2684, %v3676
    %3703 = vst.msk [vmem:[#allocation4 + $0x248] sm:$0xff] %vm2684, %v3678
    %3704 = vst.msk [vmem:[#allocation4 + $0x280] sm:$0xff] %vm2684, %v3680
    %v3705 = vld [vmem:[#allocation3 + $0x16] sm:$0xff]
    %v3706 = vld [vmem:[#allocation3 + $0x1e] sm:$0xff]
    %v3707 = vld [vmem:[#allocation3 + $0x26] sm:$0xff]
    %v3708 = vld [vmem:[#allocation3 + $0x2e] sm:$0xff]
    %v3709 = vld [vmem:[#allocation3 + $0x36] sm:$0xff]
    %v3710 = vld [vmem:[#allocation3 + $0x3e] sm:$0xff]
    %v3711 = vld [vmem:[#allocation3 + $0x46] sm:$0xff]
    %v3712 = vld [vmem:[#allocation3 + $0x4e] sm:$0xff]
    %v3713 = vld [vmem:[#allocation3 + $0x56] sm:$0xff]
    %v3714 = vld [vmem:[#allocation3 + $0x5e] sm:$0xff]
    %v3715 = vld [vmem:[#allocation3 + $0x66] sm:$0xff]
    %v3716 = vld [vmem:[#allocation3 + $0x6e] sm:$0xff]
    %v3717 = vld [vmem:[#allocation3 + $0x76] sm:$0xff]
    %v3718 = vld [vmem:[#allocation3 + $0x7e] sm:$0xff]
    %v3719 = vld [vmem:[#allocation3 + $0x86] sm:$0xff]
    %v3720 = vld [vmem:[#allocation3 + $0x8e] sm:$0xff]
    %v3721 = vld [vmem:[#allocation3 + $0x96] sm:$0xff]
    %v3722 = vld [vmem:[#allocation3 + $0x9e] sm:$0xff]
    %v3723 = vld [vmem:[#allocation3 + $0xa6] sm:$0xff]
    %v3724 = vld [vmem:[#allocation3 + $0xae] sm:$0xff]
    %v3725 = vld [vmem:[#allocation3 + $0xb6] sm:$0xff]
    %v3726 = vld [vmem:[#allocation3 + $0xbe] sm:$0xff]
    %v3727 = vld [vmem:[#allocation3 + $0xc6] sm:$0xff]
    %v3728 = vld [vmem:[#allocation3 + $0xce] sm:$0xff]
    %v3729 = vpack.c.bf16 %v3706, %v3705
    %v3730 = vpack.c.bf16 %v3708, %v3707
    %v3731 = vpack.c.bf16 %v3710, %v3709
    %v3732 = vpack.c.bf16 %v3712, %v3711
    %v3733 = vpack.c.bf16 %v3714, %v3713
    %v3734 = vpack.c.bf16 %v3716, %v3715
    %v3735 = vpack.c.bf16 %v3718, %v3717
    %v3736 = vpack.c.bf16 %v3720, %v3719
    %v3737 = vpack.c.bf16 %v3722, %v3721
    %v3738 = vpack.c.bf16 %v3724, %v3723
    %v3739 = vpack.c.bf16 %v3726, %v3725
    %v3740 = vpack.c.bf16 %v3728, %v3727
    %3741 = vst.msk [vmem:[#allocation4 + $0x20] sm:$0xff] %vm2107, %v3729
    %3742 = vst.msk [vmem:[#allocation4 + $0x58] sm:$0xff] %vm2107, %v3730
    %3743 = vst.msk [vmem:[#allocation4 + $0x90] sm:$0xff] %vm2107, %v3731
    %3744 = vst.msk [vmem:[#allocation4 + $0xc8] sm:$0xff] %vm2107, %v3732
    %3745 = vst.msk [vmem:[#allocation4 + $0x100] sm:$0xff] %vm2107, %v3733
    %3746 = vst.msk [vmem:[#allocation4 + $0x138] sm:$0xff] %vm2107, %v3734
    %3747 = vst.msk [vmem:[#allocation4 + $0x170] sm:$0xff] %vm2107, %v3735
    %3748 = vst.msk [vmem:[#allocation4 + $0x1a8] sm:$0xff] %vm2107, %v3736
    %3749 = vst.msk [vmem:[#allocation4 + $0x1e0] sm:$0xff] %vm2107, %v3737
    %3750 = vst.msk [vmem:[#allocation4 + $0x218] sm:$0xff] %vm2107, %v3738
    %3751 = vst.msk [vmem:[#allocation4 + $0x250] sm:$0xff] %vm2107, %v3739
    %3752 = vst.msk [vmem:[#allocation4 + $0x288] sm:$0xff] %vm2107, %v3740
    %v3753 = vld [vmem:[#allocation3 + $0x26] sm:$0xff]
    %v3754 = vld [vmem:[#allocation3 + $0x2e] sm:$0xff]
    %v3755 = vld [vmem:[#allocation3 + $0x36] sm:$0xff]
    %v3756 = vld [vmem:[#allocation3 + $0x3e] sm:$0xff]
    %v3757 = vld [vmem:[#allocation3 + $0x46] sm:$0xff]
    %v3758 = vld [vmem:[#allocation3 + $0x4e] sm:$0xff]
    %v3759 = vld [vmem:[#allocation3 + $0x56] sm:$0xff]
    %v3760 = vld [vmem:[#allocation3 + $0x5e] sm:$0xff]
    %v3761 = vld [vmem:[#allocation3 + $0x66] sm:$0xff]
    %v3762 = vld [vmem:[#allocation3 + $0x6e] sm:$0xff]
    %v3763 = vld [vmem:[#allocation3 + $0x76] sm:$0xff]
    %v3764 = vld [vmem:[#allocation3 + $0x7e] sm:$0xff]
    %v3765 = vld [vmem:[#allocation3 + $0x86] sm:$0xff]
    %v3766 = vld [vmem:[#allocation3 + $0x8e] sm:$0xff]
    %v3767 = vld [vmem:[#allocation3 + $0x96] sm:$0xff]
    %v3768 = vld [vmem:[#allocation3 + $0x9e] sm:$0xff]
    %v3769 = vld [vmem:[#allocation3 + $0xa6] sm:$0xff]
    %v3770 = vld [vmem:[#allocation3 + $0xae] sm:$0xff]
    %v3771 = vld [vmem:[#allocation3 + $0xb6] sm:$0xff]
    %v3772 = vld [vmem:[#allocation3 + $0xbe] sm:$0xff]
    %v3773 = vld [vmem:[#allocation3 + $0xc6] sm:$0xff]
    %v3774 = vld [vmem:[#allocation3 + $0xce] sm:$0xff]
    %v3775 = vld [vmem:[#allocation3 + $0xd6] sm:$0xff]
    %v3776 = vld [vmem:[#allocation3 + $0xde] sm:$0xff]
    %v3777 = vpack.c.bf16 %v3754, %v3753
    %v3778 = vpack.c.bf16 %v3756, %v3755
    %v3779 = vpack.c.bf16 %v3758, %v3757
    %v3780 = vpack.c.bf16 %v3760, %v3759
    %v3781 = vpack.c.bf16 %v3762, %v3761
    %v3782 = vpack.c.bf16 %v3764, %v3763
    %v3783 = vpack.c.bf16 %v3766, %v3765
    %v3784 = vpack.c.bf16 %v3768, %v3767
    %v3785 = vpack.c.bf16 %v3770, %v3769
    %v3786 = vpack.c.bf16 %v3772, %v3771
    %v3787 = vpack.c.bf16 %v3774, %v3773
    %v3788 = vpack.c.bf16 %v3776, %v3775
    %3801 = vrot.lane.b32.xlu0 %v3777, 32
    %v3802 = vpop.permute.xlu0 %3801
    %3803 = vrot.lane.b32.xlu0 %v3778, 32
    %v3804 = vpop.permute.xlu0 %3803
    %3805 = vrot.lane.b32.xlu0 %v3779, 32
    %v3806 = vpop.permute.xlu0 %3805
    %3807 = vrot.lane.b32.xlu0 %v3780, 32
    %v3808 = vpop.permute.xlu0 %3807
    %3809 = vrot.lane.b32.xlu0 %v3781, 32
    %v3810 = vpop.permute.xlu0 %3809
    %3811 = vrot.lane.b32.xlu0 %v3782, 32
    %v3812 = vpop.permute.xlu0 %3811
    %3813 = vrot.lane.b32.xlu0 %v3783, 32
    %v3814 = vpop.permute.xlu0 %3813
    %3815 = vrot.lane.b32.xlu0 %v3784, 32
    %v3816 = vpop.permute.xlu0 %3815
    %3817 = vrot.lane.b32.xlu0 %v3785, 32
    %v3818 = vpop.permute.xlu0 %3817
    %3819 = vrot.lane.b32.xlu0 %v3786, 32
    %v3820 = vpop.permute.xlu0 %3819
    %3821 = vrot.lane.b32.xlu0 %v3787, 32
    %v3822 = vpop.permute.xlu0 %3821
    %3823 = vrot.lane.b32.xlu0 %v3788, 32
    %v3824 = vpop.permute.xlu0 %3823
    %3837 = vst.msk [vmem:[#allocation4 + $0x20] sm:$0xff] %vm2490, %v3802
    %3838 = vst.msk [vmem:[#allocation4 + $0x58] sm:$0xff] %vm2490, %v3804
    %3839 = vst.msk [vmem:[#allocation4 + $0x90] sm:$0xff] %vm2490, %v3806
    %3840 = vst.msk [vmem:[#allocation4 + $0xc8] sm:$0xff] %vm2490, %v3808
    %3841 = vst.msk [vmem:[#allocation4 + $0x100] sm:$0xff] %vm2490, %v3810
    %3842 = vst.msk [vmem:[#allocation4 + $0x138] sm:$0xff] %vm2490, %v3812
    %3843 = vst.msk [vmem:[#allocation4 + $0x170] sm:$0xff] %vm2490, %v3814
    %3844 = vst.msk [vmem:[#allocation4 + $0x1a8] sm:$0xff] %vm2490, %v3816
    %3845 = vst.msk [vmem:[#allocation4 + $0x1e0] sm:$0xff] %vm2490, %v3818
    %3846 = vst.msk [vmem:[#allocation4 + $0x218] sm:$0xff] %vm2490, %v3820
    %3847 = vst.msk [vmem:[#allocation4 + $0x250] sm:$0xff] %vm2490, %v3822
    %3848 = vst.msk [vmem:[#allocation4 + $0x288] sm:$0xff] %vm2490, %v3824
    %v3849 = vld [vmem:[#allocation3 + $0x36] sm:$0xff]
    %v3850 = vld [vmem:[#allocation3 + $0x3e] sm:$0xff]
    %v3851 = vld [vmem:[#allocation3 + $0x46] sm:$0xff]
    %v3852 = vld [vmem:[#allocation3 + $0x4e] sm:$0xff]
    %v3853 = vld [vmem:[#allocation3 + $0x56] sm:$0xff]
    %v3854 = vld [vmem:[#allocation3 + $0x5e] sm:$0xff]
    %v3855 = vld [vmem:[#allocation3 + $0x66] sm:$0xff]
    %v3856 = vld [vmem:[#allocation3 + $0x6e] sm:$0xff]
    %v3857 = vld [vmem:[#allocation3 + $0x76] sm:$0xff]
    %v3858 = vld [vmem:[#allocation3 + $0x7e] sm:$0xff]
    %v3859 = vld [vmem:[#allocation3 + $0x86] sm:$0xff]
    %v3860 = vld [vmem:[#allocation3 + $0x8e] sm:$0xff]
    %v3861 = vld [vmem:[#allocation3 + $0x96] sm:$0xff]
    %v3862 = vld [vmem:[#allocation3 + $0x9e] sm:$0xff]
    %v3863 = vld [vmem:[#allocation3 + $0xa6] sm:$0xff]
    %v3864 = vld [vmem:[#allocation3 + $0xae] sm:$0xff]
    %v3865 = vld [vmem:[#allocation3 + $0xb6] sm:$0xff]
    %v3866 = vld [vmem:[#allocation3 + $0xbe] sm:$0xff]
    %v3867 = vld [vmem:[#allocation3 + $0xc6] sm:$0xff]
    %v3868 = vld [vmem:[#allocation3 + $0xce] sm:$0xff]
    %v3869 = vld [vmem:[#allocation3 + $0xd6] sm:$0xff]
    %v3870 = vld [vmem:[#allocation3 + $0xde] sm:$0xff]
    %v3871 = vld [vmem:[#allocation3 + $0xe6] sm:$0xff]
    %v3872 = vld [vmem:[#allocation3 + $0xee] sm:$0xff]
    %v3873 = vpack.c.bf16 %v3850, %v3849
    %v3874 = vpack.c.bf16 %v3852, %v3851
    %v3875 = vpack.c.bf16 %v3854, %v3853
    %v3876 = vpack.c.bf16 %v3856, %v3855
    %v3877 = vpack.c.bf16 %v3858, %v3857
    %v3878 = vpack.c.bf16 %v3860, %v3859
    %v3879 = vpack.c.bf16 %v3862, %v3861
    %v3880 = vpack.c.bf16 %v3864, %v3863
    %v3881 = vpack.c.bf16 %v3866, %v3865
    %v3882 = vpack.c.bf16 %v3868, %v3867
    %v3883 = vpack.c.bf16 %v3870, %v3869
    %v3884 = vpack.c.bf16 %v3872, %v3871
    %3897 = vrot.lane.b32.xlu0 %v3873, 64
    %v3898 = vpop.permute.xlu0 %3897
    %3899 = vrot.lane.b32.xlu0 %v3874, 64
    %v3900 = vpop.permute.xlu0 %3899
    %3901 = vrot.lane.b32.xlu0 %v3875, 64
    %v3902 = vpop.permute.xlu0 %3901
    %3903 = vrot.lane.b32.xlu0 %v3876, 64
    %v3904 = vpop.permute.xlu0 %3903
    %3905 = vrot.lane.b32.xlu0 %v3877, 64
    %v3906 = vpop.permute.xlu0 %3905
    %3907 = vrot.lane.b32.xlu0 %v3878, 64
    %v3908 = vpop.permute.xlu0 %3907
    %3909 = vrot.lane.b32.xlu0 %v3879, 64
    %v3910 = vpop.permute.xlu0 %3909
    %3911 = vrot.lane.b32.xlu0 %v3880, 64
    %v3912 = vpop.permute.xlu0 %3911
    %3913 = vrot.lane.b32.xlu0 %v3881, 64
    %v3914 = vpop.permute.xlu0 %3913
    %3915 = vrot.lane.b32.xlu0 %v3882, 64
    %v3916 = vpop.permute.xlu0 %3915
    %3917 = vrot.lane.b32.xlu0 %v3883, 64
    %v3918 = vpop.permute.xlu0 %3917
    %3919 = vrot.lane.b32.xlu0 %v3884, 64
    %v3920 = vpop.permute.xlu0 %3919
    %3933 = vst.msk [vmem:[#allocation4 + $0x20] sm:$0xff] %vm2587, %v3898
    %3934 = vst.msk [vmem:[#allocation4 + $0x58] sm:$0xff] %vm2587, %v3900
    %3935 = vst.msk [vmem:[#allocation4 + $0x90] sm:$0xff] %vm2587, %v3902
    %3936 = vst.msk [vmem:[#allocation4 + $0xc8] sm:$0xff] %vm2587, %v3904
    %3937 = vst.msk [vmem:[#allocation4 + $0x100] sm:$0xff] %vm2587, %v3906
    %3938 = vst.msk [vmem:[#allocation4 + $0x138] sm:$0xff] %vm2587, %v3908
    %3939 = vst.msk [vmem:[#allocation4 + $0x170] sm:$0xff] %vm2587, %v3910
    %3940 = vst.msk [vmem:[#allocation4 + $0x1a8] sm:$0xff] %vm2587, %v3912
    %3941 = vst.msk [vmem:[#allocation4 + $0x1e0] sm:$0xff] %vm2587, %v3914
    %3942 = vst.msk [vmem:[#allocation4 + $0x218] sm:$0xff] %vm2587, %v3916
    %3943 = vst.msk [vmem:[#allocation4 + $0x250] sm:$0xff] %vm2587, %v3918
    %3944 = vst.msk [vmem:[#allocation4 + $0x288] sm:$0xff] %vm2587, %v3920
    %v3945 = vld [vmem:[#allocation3 + $0x46] sm:$0xff]
    %v3946 = vld [vmem:[#allocation3 + $0x4e] sm:$0xff]
    %v3947 = vld [vmem:[#allocation3 + $0x56] sm:$0xff]
    %v3948 = vld [vmem:[#allocation3 + $0x5e] sm:$0xff]
    %v3949 = vld [vmem:[#allocation3 + $0x66] sm:$0xff]
    %v3950 = vld [vmem:[#allocation3 + $0x6e] sm:$0xff]
    %v3951 = vld [vmem:[#allocation3 + $0x76] sm:$0xff]
    %v3952 = vld [vmem:[#allocation3 + $0x7e] sm:$0xff]
    %v3953 = vld [vmem:[#allocation3 + $0x86] sm:$0xff]
    %v3954 = vld [vmem:[#allocation3 + $0x8e] sm:$0xff]
    %v3955 = vld [vmem:[#allocation3 + $0x96] sm:$0xff]
    %v3956 = vld [vmem:[#allocation3 + $0x9e] sm:$0xff]
    %v3957 = vld [vmem:[#allocation3 + $0xa6] sm:$0xff]
    %v3958 = vld [vmem:[#allocation3 + $0xae] sm:$0xff]
    %v3959 = vld [vmem:[#allocation3 + $0xb6] sm:$0xff]
    %v3960 = vld [vmem:[#allocation3 + $0xbe] sm:$0xff]
    %v3961 = vld [vmem:[#allocation3 + $0xc6] sm:$0xff]
    %v3962 = vld [vmem:[#allocation3 + $0xce] sm:$0xff]
    %v3963 = vld [vmem:[#allocation3 + $0xd6] sm:$0xff]
    %v3964 = vld [vmem:[#allocation3 + $0xde] sm:$0xff]
    %v3965 = vld [vmem:[#allocation3 + $0xe6] sm:$0xff]
    %v3966 = vld [vmem:[#allocation3 + $0xee] sm:$0xff]
    %v3967 = vld [vmem:[#allocation3 + $0xf6] sm:$0xff]
    %v3968 = vld [vmem:[#allocation3 + $0xfe] sm:$0xff]
    %v3969 = vpack.c.bf16 %v3946, %v3945
    %v3970 = vpack.c.bf16 %v3948, %v3947
    %v3971 = vpack.c.bf16 %v3950, %v3949
    %v3972 = vpack.c.bf16 %v3952, %v3951
    %v3973 = vpack.c.bf16 %v3954, %v3953
    %v3974 = vpack.c.bf16 %v3956, %v3955
    %v3975 = vpack.c.bf16 %v3958, %v3957
    %v3976 = vpack.c.bf16 %v3960, %v3959
    %v3977 = vpack.c.bf16 %v3962, %v3961
    %v3978 = vpack.c.bf16 %v3964, %v3963
    %v3979 = vpack.c.bf16 %v3966, %v3965
    %v3980 = vpack.c.bf16 %v3968, %v3967
    %3993 = vrot.lane.b32.xlu0 %v3969, 96
    %v3994 = vpop.permute.xlu0 %3993
    %3995 = vrot.lane.b32.xlu0 %v3970, 96
    %v3996 = vpop.permute.xlu0 %3995
    %3997 = vrot.lane.b32.xlu0 %v3971, 96
    %v3998 = vpop.permute.xlu0 %3997
    %3999 = vrot.lane.b32.xlu0 %v3972, 96
    %v4000 = vpop.permute.xlu0 %3999
    %4001 = vrot.lane.b32.xlu0 %v3973, 96
    %v4002 = vpop.permute.xlu0 %4001
    %4003 = vrot.lane.b32.xlu0 %v3974, 96
    %v4004 = vpop.permute.xlu0 %4003
    %4005 = vrot.lane.b32.xlu0 %v3975, 96
    %v4006 = vpop.permute.xlu0 %4005
    %4007 = vrot.lane.b32.xlu0 %v3976, 96
    %v4008 = vpop.permute.xlu0 %4007
    %4009 = vrot.lane.b32.xlu0 %v3977, 96
    %v4010 = vpop.permute.xlu0 %4009
    %4011 = vrot.lane.b32.xlu0 %v3978, 96
    %v4012 = vpop.permute.xlu0 %4011
    %4013 = vrot.lane.b32.xlu0 %v3979, 96
    %v4014 = vpop.permute.xlu0 %4013
    %4015 = vrot.lane.b32.xlu0 %v3980, 96
    %v4016 = vpop.permute.xlu0 %4015
    %4029 = vst.msk [vmem:[#allocation4 + $0x20] sm:$0xff] %vm2684, %v3994
    %4030 = vst.msk [vmem:[#allocation4 + $0x58] sm:$0xff] %vm2684, %v3996
    %4031 = vst.msk [vmem:[#allocation4 + $0x90] sm:$0xff] %vm2684, %v3998
    %4032 = vst.msk [vmem:[#allocation4 + $0xc8] sm:$0xff] %vm2684, %v4000
    %4033 = vst.msk [vmem:[#allocation4 + $0x100] sm:$0xff] %vm2684, %v4002
    %4034 = vst.msk [vmem:[#allocation4 + $0x138] sm:$0xff] %vm2684, %v4004
    %4035 = vst.msk [vmem:[#allocation4 + $0x170] sm:$0xff] %vm2684, %v4006
    %4036 = vst.msk [vmem:[#allocation4 + $0x1a8] sm:$0xff] %vm2684, %v4008
    %4037 = vst.msk [vmem:[#allocation4 + $0x1e0] sm:$0xff] %vm2684, %v4010
    %4038 = vst.msk [vmem:[#allocation4 + $0x218] sm:$0xff] %vm2684, %v4012
    %4039 = vst.msk [vmem:[#allocation4 + $0x250] sm:$0xff] %vm2684, %v4014
    %4040 = vst.msk [vmem:[#allocation4 + $0x288] sm:$0xff] %vm2684, %v4016
    %v4041 = vld [vmem:[#allocation3 + $0x8] sm:$0xff]
    %v4042 = vld [vmem:[#allocation3 + $0x10] sm:$0xff]
    %v4043 = vld [vmem:[#allocation3 + $0x18] sm:$0xff]
    %v4044 = vld [vmem:[#allocation3 + $0x20] sm:$0xff]
    %v4045 = vld [vmem:[#allocation3 + $0x28] sm:$0xff]
    %v4046 = vld [vmem:[#allocation3 + $0x30] sm:$0xff]
    %v4047 = vld [vmem:[#allocation3 + $0x38] sm:$0xff]
    %v4048 = vld [vmem:[#allocation3 + $0x40] sm:$0xff]
    %v4049 = vld [vmem:[#allocation3 + $0x48] sm:$0xff]
    %v4050 = vld [vmem:[#allocation3 + $0x50] sm:$0xff]
    %v4051 = vld [vmem:[#allocation3 + $0x58] sm:$0xff]
    %v4052 = vld [vmem:[#allocation3 + $0x60] sm:$0xff]
    %v4053 = vld [vmem:[#allocation3 + $0x68] sm:$0xff]
    %v4054 = vld [vmem:[#allocation3 + $0x70] sm:$0xff]
    %v4055 = vld [vmem:[#allocation3 + $0x78] sm:$0xff]
    %v4056 = vld [vmem:[#allocation3 + $0x80] sm:$0xff]
    %v4057 = vld [vmem:[#allocation3 + $0x88] sm:$0xff]
    %v4058 = vld [vmem:[#allocation3 + $0x90] sm:$0xff]
    %v4059 = vld [vmem:[#allocation3 + $0x98] sm:$0xff]
    %v4060 = vld [vmem:[#allocation3 + $0xa0] sm:$0xff]
    %v4061 = vld [vmem:[#allocation3 + $0xa8] sm:$0xff]
    %v4062 = vld [vmem:[#allocation3 + $0xb0] sm:$0xff]
    %v4063 = vld [vmem:[#allocation3 + $0xb8] sm:$0xff]
    %v4064 = vld [vmem:[#allocation3 + $0xc0] sm:$0xff]
    %v4065 = vpack.c.bf16 %v4042, %v4041
    %v4066 = vpack.c.bf16 %v4044, %v4043
    %v4067 = vpack.c.bf16 %v4046, %v4045
    %v4068 = vpack.c.bf16 %v4048, %v4047
    %v4069 = vpack.c.bf16 %v4050, %v4049
    %v4070 = vpack.c.bf16 %v4052, %v4051
    %v4071 = vpack.c.bf16 %v4054, %v4053
    %v4072 = vpack.c.bf16 %v4056, %v4055
    %v4073 = vpack.c.bf16 %v4058, %v4057
    %v4074 = vpack.c.bf16 %v4060, %v4059
    %v4075 = vpack.c.bf16 %v4062, %v4061
    %v4076 = vpack.c.bf16 %v4064, %v4063
    %4077 = vst.msk [vmem:[#allocation4 + $0x28] sm:$0xff] %vm2107, %v4065
    %4078 = vst.msk [vmem:[#allocation4 + $0x60] sm:$0xff] %vm2107, %v4066
    %4079 = vst.msk [vmem:[#allocation4 + $0x98] sm:$0xff] %vm2107, %v4067
    %4080 = vst.msk [vmem:[#allocation4 + $0xd0] sm:$0xff] %vm2107, %v4068
    %4081 = vst.msk [vmem:[#allocation4 + $0x108] sm:$0xff] %vm2107, %v4069
    %4082 = vst.msk [vmem:[#allocation4 + $0x140] sm:$0xff] %vm2107, %v4070
    %4083 = vst.msk [vmem:[#allocation4 + $0x178] sm:$0xff] %vm2107, %v4071
    %4084 = vst.msk [vmem:[#allocation4 + $0x1b0] sm:$0xff] %vm2107, %v4072
    %4085 = vst.msk [vmem:[#allocation4 + $0x1e8] sm:$0xff] %vm2107, %v4073
    %4086 = vst.msk [vmem:[#allocation4 + $0x220] sm:$0xff] %vm2107, %v4074
    %4087 = vst.msk [vmem:[#allocation4 + $0x258] sm:$0xff] %vm2107, %v4075
    %4088 = vst.msk [vmem:[#allocation4 + $0x290] sm:$0xff] %vm2107, %v4076
    %v4089 = vld [vmem:[#allocation3 + $0x18] sm:$0xff]
    %v4090 = vld [vmem:[#allocation3 + $0x20] sm:$0xff]
    %v4091 = vld [vmem:[#allocation3 + $0x28] sm:$0xff]
    %v4092 = vld [vmem:[#allocation3 + $0x30] sm:$0xff]
    %v4093 = vld [vmem:[#allocation3 + $0x38] sm:$0xff]
    %v4094 = vld [vmem:[#allocation3 + $0x40] sm:$0xff]
    %v4095 = vld [vmem:[#allocation3 + $0x48] sm:$0xff]
    %v4096 = vld [vmem:[#allocation3 + $0x50] sm:$0xff]
    %v4097 = vld [vmem:[#allocation3 + $0x58] sm:$0xff]
    %v4098 = vld [vmem:[#allocation3 + $0x60] sm:$0xff]
    %v4099 = vld [vmem:[#allocation3 + $0x68] sm:$0xff]
    %v4100 = vld [vmem:[#allocation3 + $0x70] sm:$0xff]
    %v4101 = vld [vmem:[#allocation3 + $0x78] sm:$0xff]
    %v4102 = vld [vmem:[#allocation3 + $0x80] sm:$0xff]
    %v4103 = vld [vmem:[#allocation3 + $0x88] sm:$0xff]
    %v4104 = vld [vmem:[#allocation3 + $0x90] sm:$0xff]
    %v4105 = vld [vmem:[#allocation3 + $0x98] sm:$0xff]
    %v4106 = vld [vmem:[#allocation3 + $0xa0] sm:$0xff]
    %v4107 = vld [vmem:[#allocation3 + $0xa8] sm:$0xff]
    %v4108 = vld [vmem:[#allocation3 + $0xb0] sm:$0xff]
    %v4109 = vld [vmem:[#allocation3 + $0xb8] sm:$0xff]
    %v4110 = vld [vmem:[#allocation3 + $0xc0] sm:$0xff]
    %v4111 = vld [vmem:[#allocation3 + $0xc8] sm:$0xff]
    %v4112 = vld [vmem:[#allocation3 + $0xd0] sm:$0xff]
    %v4113 = vpack.c.bf16 %v4090, %v4089
    %v4114 = vpack.c.bf16 %v4092, %v4091
    %v4115 = vpack.c.bf16 %v4094, %v4093
    %v4116 = vpack.c.bf16 %v4096, %v4095
    %v4117 = vpack.c.bf16 %v4098, %v4097
    %v4118 = vpack.c.bf16 %v4100, %v4099
    %v4119 = vpack.c.bf16 %v4102, %v4101
    %v4120 = vpack.c.bf16 %v4104, %v4103
    %v4121 = vpack.c.bf16 %v4106, %v4105
    %v4122 = vpack.c.bf16 %v4108, %v4107
    %v4123 = vpack.c.bf16 %v4110, %v4109
    %v4124 = vpack.c.bf16 %v4112, %v4111
    %4137 = vrot.lane.b32.xlu0 %v4113, 32
    %v4138 = vpop.permute.xlu0 %4137
    %4139 = vrot.lane.b32.xlu0 %v4114, 32
    %v4140 = vpop.permute.xlu0 %4139
    %4141 = vrot.lane.b32.xlu0 %v4115, 32
    %v4142 = vpop.permute.xlu0 %4141
    %4143 = vrot.lane.b32.xlu0 %v4116, 32
    %v4144 = vpop.permute.xlu0 %4143
    %4145 = vrot.lane.b32.xlu0 %v4117, 32
    %v4146 = vpop.permute.xlu0 %4145
    %4147 = vrot.lane.b32.xlu0 %v4118, 32
    %v4148 = vpop.permute.xlu0 %4147
    %4149 = vrot.lane.b32.xlu0 %v4119, 32
    %v4150 = vpop.permute.xlu0 %4149
    %4151 = vrot.lane.b32.xlu0 %v4120, 32
    %v4152 = vpop.permute.xlu0 %4151
    %4153 = vrot.lane.b32.xlu0 %v4121, 32
    %v4154 = vpop.permute.xlu0 %4153
    %4155 = vrot.lane.b32.xlu0 %v4122, 32
    %v4156 = vpop.permute.xlu0 %4155
    %4157 = vrot.lane.b32.xlu0 %v4123, 32
    %v4158 = vpop.permute.xlu0 %4157
    %4159 = vrot.lane.b32.xlu0 %v4124, 32
    %v4160 = vpop.permute.xlu0 %4159
    %4173 = vst.msk [vmem:[#allocation4 + $0x28] sm:$0xff] %vm2490, %v4138
    %4174 = vst.msk [vmem:[#allocation4 + $0x60] sm:$0xff] %vm2490, %v4140
    %4175 = vst.msk [vmem:[#allocation4 + $0x98] sm:$0xff] %vm2490, %v4142
    %4176 = vst.msk [vmem:[#allocation4 + $0xd0] sm:$0xff] %vm2490, %v4144
    %4177 = vst.msk [vmem:[#allocation4 + $0x108] sm:$0xff] %vm2490, %v4146
    %4178 = vst.msk [vmem:[#allocation4 + $0x140] sm:$0xff] %vm2490, %v4148
    %4179 = vst.msk [vmem:[#allocation4 + $0x178] sm:$0xff] %vm2490, %v4150
    %4180 = vst.msk [vmem:[#allocation4 + $0x1b0] sm:$0xff] %vm2490, %v4152
    %4181 = vst.msk [vmem:[#allocation4 + $0x1e8] sm:$0xff] %vm2490, %v4154
    %4182 = vst.msk [vmem:[#allocation4 + $0x220] sm:$0xff] %vm2490, %v4156
    %4183 = vst.msk [vmem:[#allocation4 + $0x258] sm:$0xff] %vm2490, %v4158
    %4184 = vst.msk [vmem:[#allocation4 + $0x290] sm:$0xff] %vm2490, %v4160
    %v4185 = vld [vmem:[#allocation3 + $0x28] sm:$0xff]
    %v4186 = vld [vmem:[#allocation3 + $0x30] sm:$0xff]
    %v4187 = vld [vmem:[#allocation3 + $0x38] sm:$0xff]
    %v4188 = vld [vmem:[#allocation3 + $0x40] sm:$0xff]
    %v4189 = vld [vmem:[#allocation3 + $0x48] sm:$0xff]
    %v4190 = vld [vmem:[#allocation3 + $0x50] sm:$0xff]
    %v4191 = vld [vmem:[#allocation3 + $0x58] sm:$0xff]
    %v4192 = vld [vmem:[#allocation3 + $0x60] sm:$0xff]
    %v4193 = vld [vmem:[#allocation3 + $0x68] sm:$0xff]
    %v4194 = vld [vmem:[#allocation3 + $0x70] sm:$0xff]
    %v4195 = vld [vmem:[#allocation3 + $0x78] sm:$0xff]
    %v4196 = vld [vmem:[#allocation3 + $0x80] sm:$0xff]
    %v4197 = vld [vmem:[#allocation3 + $0x88] sm:$0xff]
    %v4198 = vld [vmem:[#allocation3 + $0x90] sm:$0xff]
    %v4199 = vld [vmem:[#allocation3 + $0x98] sm:$0xff]
    %v4200 = vld [vmem:[#allocation3 + $0xa0] sm:$0xff]
    %v4201 = vld [vmem:[#allocation3 + $0xa8] sm:$0xff]
    %v4202 = vld [vmem:[#allocation3 + $0xb0] sm:$0xff]
    %v4203 = vld [vmem:[#allocation3 + $0xb8] sm:$0xff]
    %v4204 = vld [vmem:[#allocation3 + $0xc0] sm:$0xff]
    %v4205 = vld [vmem:[#allocation3 + $0xc8] sm:$0xff]
    %v4206 = vld [vmem:[#allocation3 + $0xd0] sm:$0xff]
    %v4207 = vld [vmem:[#allocation3 + $0xd8] sm:$0xff]
    %v4208 = vld [vmem:[#allocation3 + $0xe0] sm:$0xff]
    %v4209 = vpack.c.bf16 %v4186, %v4185
    %v4210 = vpack.c.bf16 %v4188, %v4187
    %v4211 = vpack.c.bf16 %v4190, %v4189
    %v4212 = vpack.c.bf16 %v4192, %v4191
    %v4213 = vpack.c.bf16 %v4194, %v4193
    %v4214 = vpack.c.bf16 %v4196, %v4195
    %v4215 = vpack.c.bf16 %v4198, %v4197
    %v4216 = vpack.c.bf16 %v4200, %v4199
    %v4217 = vpack.c.bf16 %v4202, %v4201
    %v4218 = vpack.c.bf16 %v4204, %v4203
    %v4219 = vpack.c.bf16 %v4206, %v4205
    %v4220 = vpack.c.bf16 %v4208, %v4207
    %4233 = vrot.lane.b32.xlu0 %v4209, 64
    %v4234 = vpop.permute.xlu0 %4233
    %4235 = vrot.lane.b32.xlu0 %v4210, 64
    %v4236 = vpop.permute.xlu0 %4235
    %4237 = vrot.lane.b32.xlu0 %v4211, 64
    %v4238 = vpop.permute.xlu0 %4237
    %4239 = vrot.lane.b32.xlu0 %v4212, 64
    %v4240 = vpop.permute.xlu0 %4239
    %4241 = vrot.lane.b32.xlu0 %v4213, 64
    %v4242 = vpop.permute.xlu0 %4241
    %4243 = vrot.lane.b32.xlu0 %v4214, 64
    %v4244 = vpop.permute.xlu0 %4243
    %4245 = vrot.lane.b32.xlu0 %v4215, 64
    %v4246 = vpop.permute.xlu0 %4245
    %4247 = vrot.lane.b32.xlu0 %v4216, 64
    %v4248 = vpop.permute.xlu0 %4247
    %4249 = vrot.lane.b32.xlu0 %v4217, 64
    %v4250 = vpop.permute.xlu0 %4249
    %4251 = vrot.lane.b32.xlu0 %v4218, 64
    %v4252 = vpop.permute.xlu0 %4251
    %4253 = vrot.lane.b32.xlu0 %v4219, 64
    %v4254 = vpop.permute.xlu0 %4253
    %4255 = vrot.lane.b32.xlu0 %v4220, 64
    %v4256 = vpop.permute.xlu0 %4255
    %4269 = vst.msk [vmem:[#allocation4 + $0x28] sm:$0xff] %vm2587, %v4234
    %4270 = vst.msk [vmem:[#allocation4 + $0x60] sm:$0xff] %vm2587, %v4236
    %4271 = vst.msk [vmem:[#allocation4 + $0x98] sm:$0xff] %vm2587, %v4238
    %4272 = vst.msk [vmem:[#allocation4 + $0xd0] sm:$0xff] %vm2587, %v4240
    %4273 = vst.msk [vmem:[#allocation4 + $0x108] sm:$0xff] %vm2587, %v4242
    %4274 = vst.msk [vmem:[#allocation4 + $0x140] sm:$0xff] %vm2587, %v4244
    %4275 = vst.msk [vmem:[#allocation4 + $0x178] sm:$0xff] %vm2587, %v4246
    %4276 = vst.msk [vmem:[#allocation4 + $0x1b0] sm:$0xff] %vm2587, %v4248
    %4277 = vst.msk [vmem:[#allocation4 + $0x1e8] sm:$0xff] %vm2587, %v4250
    %4278 = vst.msk [vmem:[#allocation4 + $0x220] sm:$0xff] %vm2587, %v4252
    %4279 = vst.msk [vmem:[#allocation4 + $0x258] sm:$0xff] %vm2587, %v4254
    %4280 = vst.msk [vmem:[#allocation4 + $0x290] sm:$0xff] %vm2587, %v4256
    %v4281 = vld [vmem:[#allocation3 + $0x38] sm:$0xff]
    %v4282 = vld [vmem:[#allocation3 + $0x40] sm:$0xff]
    %v4283 = vld [vmem:[#allocation3 + $0x48] sm:$0xff]
    %v4284 = vld [vmem:[#allocation3 + $0x50] sm:$0xff]
    %v4285 = vld [vmem:[#allocation3 + $0x58] sm:$0xff]
    %v4286 = vld [vmem:[#allocation3 + $0x60] sm:$0xff]
    %v4287 = vld [vmem:[#allocation3 + $0x68] sm:$0xff]
    %v4288 = vld [vmem:[#allocation3 + $0x70] sm:$0xff]
    %v4289 = vld [vmem:[#allocation3 + $0x78] sm:$0xff]
    %v4290 = vld [vmem:[#allocation3 + $0x80] sm:$0xff]
    %v4291 = vld [vmem:[#allocation3 + $0x88] sm:$0xff]
    %v4292 = vld [vmem:[#allocation3 + $0x90] sm:$0xff]
    %v4293 = vld [vmem:[#allocation3 + $0x98] sm:$0xff]
    %v4294 = vld [vmem:[#allocation3 + $0xa0] sm:$0xff]
    %v4295 = vld [vmem:[#allocation3 + $0xa8] sm:$0xff]
    %v4296 = vld [vmem:[#allocation3 + $0xb0] sm:$0xff]
    %v4297 = vld [vmem:[#allocation3 + $0xb8] sm:$0xff]
    %v4298 = vld [vmem:[#allocation3 + $0xc0] sm:$0xff]
    %v4299 = vld [vmem:[#allocation3 + $0xc8] sm:$0xff]
    %v4300 = vld [vmem:[#allocation3 + $0xd0] sm:$0xff]
    %v4301 = vld [vmem:[#allocation3 + $0xd8] sm:$0xff]
    %v4302 = vld [vmem:[#allocation3 + $0xe0] sm:$0xff]
    %v4303 = vld [vmem:[#allocation3 + $0xe8] sm:$0xff]
    %v4304 = vld [vmem:[#allocation3 + $0xf0] sm:$0xff]
    %v4305 = vpack.c.bf16 %v4282, %v4281
    %v4306 = vpack.c.bf16 %v4284, %v4283
    %v4307 = vpack.c.bf16 %v4286, %v4285
    %v4308 = vpack.c.bf16 %v4288, %v4287
    %v4309 = vpack.c.bf16 %v4290, %v4289
    %v4310 = vpack.c.bf16 %v4292, %v4291
    %v4311 = vpack.c.bf16 %v4294, %v4293
    %v4312 = vpack.c.bf16 %v4296, %v4295
    %v4313 = vpack.c.bf16 %v4298, %v4297
    %v4314 = vpack.c.bf16 %v4300, %v4299
    %v4315 = vpack.c.bf16 %v4302, %v4301
    %v4316 = vpack.c.bf16 %v4304, %v4303
    %4329 = vrot.lane.b32.xlu0 %v4305, 96
    %v4330 = vpop.permute.xlu0 %4329
    %4331 = vrot.lane.b32.xlu0 %v4306, 96
    %v4332 = vpop.permute.xlu0 %4331
    %4333 = vrot.lane.b32.xlu0 %v4307, 96
    %v4334 = vpop.permute.xlu0 %4333
    %4335 = vrot.lane.b32.xlu0 %v4308, 96
    %v4336 = vpop.permute.xlu0 %4335
    %4337 = vrot.lane.b32.xlu0 %v4309, 96
    %v4338 = vpop.permute.xlu0 %4337
    %4339 = vrot.lane.b32.xlu0 %v4310, 96
    %v4340 = vpop.permute.xlu0 %4339
    %4341 = vrot.lane.b32.xlu0 %v4311, 96
    %v4342 = vpop.permute.xlu0 %4341
    %4343 = vrot.lane.b32.xlu0 %v4312, 96
    %v4344 = vpop.permute.xlu0 %4343
    %4345 = vrot.lane.b32.xlu0 %v4313, 96
    %v4346 = vpop.permute.xlu0 %4345
    %4347 = vrot.lane.b32.xlu0 %v4314, 96
    %v4348 = vpop.permute.xlu0 %4347
    %4349 = vrot.lane.b32.xlu0 %v4315, 96
    %v4350 = vpop.permute.xlu0 %4349
    %4351 = vrot.lane.b32.xlu0 %v4316, 96
    %v4352 = vpop.permute.xlu0 %4351
    %4365 = vst.msk [vmem:[#allocation4 + $0x28] sm:$0xff] %vm2684, %v4330
    %4366 = vst.msk [vmem:[#allocation4 + $0x60] sm:$0xff] %vm2684, %v4332
    %4367 = vst.msk [vmem:[#allocation4 + $0x98] sm:$0xff] %vm2684, %v4334
    %4368 = vst.msk [vmem:[#allocation4 + $0xd0] sm:$0xff] %vm2684, %v4336
    %4369 = vst.msk [vmem:[#allocation4 + $0x108] sm:$0xff] %vm2684, %v4338
    %4370 = vst.msk [vmem:[#allocation4 + $0x140] sm:$0xff] %vm2684, %v4340
    %4371 = vst.msk [vmem:[#allocation4 + $0x178] sm:$0xff] %vm2684, %v4342
    %4372 = vst.msk [vmem:[#allocation4 + $0x1b0] sm:$0xff] %vm2684, %v4344
    %4373 = vst.msk [vmem:[#allocation4 + $0x1e8] sm:$0xff] %vm2684, %v4346
    %4374 = vst.msk [vmem:[#allocation4 + $0x220] sm:$0xff] %vm2684, %v4348
    %4375 = vst.msk [vmem:[#allocation4 + $0x258] sm:$0xff] %vm2684, %v4350
    %4376 = vst.msk [vmem:[#allocation4 + $0x290] sm:$0xff] %vm2684, %v4352
    %v4377 = vld [vmem:[#allocation3 + $0x48] sm:$0xff]
    %v4378 = vld [vmem:[#allocation3 + $0x50] sm:$0xff]
    %v4379 = vld [vmem:[#allocation3 + $0x58] sm:$0xff]
    %v4380 = vld [vmem:[#allocation3 + $0x60] sm:$0xff]
    %v4381 = vld [vmem:[#allocation3 + $0x68] sm:$0xff]
    %v4382 = vld [vmem:[#allocation3 + $0x70] sm:$0xff]
    %v4383 = vld [vmem:[#allocation3 + $0x78] sm:$0xff]
    %v4384 = vld [vmem:[#allocation3 + $0x80] sm:$0xff]
    %v4385 = vld [vmem:[#allocation3 + $0x88] sm:$0xff]
    %v4386 = vld [vmem:[#allocation3 + $0x90] sm:$0xff]
    %v4387 = vld [vmem:[#allocation3 + $0x98] sm:$0xff]
    %v4388 = vld [vmem:[#allocation3 + $0xa0] sm:$0xff]
    %v4389 = vld [vmem:[#allocation3 + $0xa8] sm:$0xff]
    %v4390 = vld [vmem:[#allocation3 + $0xb0] sm:$0xff]
    %v4391 = vld [vmem:[#allocation3 + $0xb8] sm:$0xff]
    %v4392 = vld [vmem:[#allocation3 + $0xc0] sm:$0xff]
    %v4393 = vld [vmem:[#allocation3 + $0xc8] sm:$0xff]
    %v4394 = vld [vmem:[#allocation3 + $0xd0] sm:$0xff]
    %v4395 = vld [vmem:[#allocation3 + $0xd8] sm:$0xff]
    %v4396 = vld [vmem:[#allocation3 + $0xe0] sm:$0xff]
    %v4397 = vld [vmem:[#allocation3 + $0xe8] sm:$0xff]
    %v4398 = vld [vmem:[#allocation3 + $0xf0] sm:$0xff]
    %v4399 = vld [vmem:[#allocation3 + $0xf8] sm:$0xff]
    %v4400 = vld [vmem:[#allocation3 + $0x100] sm:$0xff]
    %v4401 = vpack.c.bf16 %v4378, %v4377
    %v4402 = vpack.c.bf16 %v4380, %v4379
    %v4403 = vpack.c.bf16 %v4382, %v4381
    %v4404 = vpack.c.bf16 %v4384, %v4383
    %v4405 = vpack.c.bf16 %v4386, %v4385
    %v4406 = vpack.c.bf16 %v4388, %v4387
    %v4407 = vpack.c.bf16 %v4390, %v4389
    %v4408 = vpack.c.bf16 %v4392, %v4391
    %v4409 = vpack.c.bf16 %v4394, %v4393
    %v4410 = vpack.c.bf16 %v4396, %v4395
    %v4411 = vpack.c.bf16 %v4398, %v4397
    %v4412 = vpack.c.bf16 %v4400, %v4399
    %4413 = vst.msk [vmem:[#allocation4 + $0x30] sm:$0xff] %vm2107, %v4401
    %4414 = vst.msk [vmem:[#allocation4 + $0x68] sm:$0xff] %vm2107, %v4402
    %4415 = vst.msk [vmem:[#allocation4 + $0xa0] sm:$0xff] %vm2107, %v4403
    %4416 = vst.msk [vmem:[#allocation4 + $0xd8] sm:$0xff] %vm2107, %v4404
    %4417 = vst.msk [vmem:[#allocation4 + $0x110] sm:$0xff] %vm2107, %v4405
    %4418 = vst.msk [vmem:[#allocation4 + $0x148] sm:$0xff] %vm2107, %v4406
    %4419 = vst.msk [vmem:[#allocation4 + $0x180] sm:$0xff] %vm2107, %v4407
    %4420 = vst.msk [vmem:[#allocation4 + $0x1b8] sm:$0xff] %vm2107, %v4408
    %4421 = vst.msk [vmem:[#allocation4 + $0x1f0] sm:$0xff] %vm2107, %v4409
    %4422 = vst.msk [vmem:[#allocation4 + $0x228] sm:$0xff] %vm2107, %v4410
    %4423 = vst.msk [vmem:[#allocation4 + $0x260] sm:$0xff] %vm2107, %v4411
    %4424 = vst.msk [vmem:[#allocation4 + $0x298] sm:$0xff] %vm2107, %v4412
    %v4425 = vld [vmem:[%s5 + $0x50] ss:$0 sm:$0xff]
    %v4426 = vld [vmem:[#allocation4] sm:$0xff]
    %v4427 = vld [vmem:[#allocation4 + $0x8] sm:$0xff]
    %v4428 = vld [vmem:[#allocation4 + $0x10] sm:$0xff]
    %v4429 = vld [vmem:[#allocation4 + $0x18] sm:$0xff]
    %v4430 = vld [vmem:[#allocation4 + $0x20] sm:$0xff]
    %v4431 = vld [vmem:[#allocation4 + $0x28] sm:$0xff]
    %v4432 = vld [vmem:[#allocation4 + $0x30] sm:$0xff]
    %v4433 = vld [vmem:[#allocation4 + $0x38] sm:$0xff]
    %v4434 = vld [vmem:[#allocation4 + $0x40] sm:$0xff]
    %v4435 = vld [vmem:[#allocation4 + $0x48] sm:$0xff]
    %v4436 = vld [vmem:[#allocation4 + $0x50] sm:$0xff]
    %v4437 = vld [vmem:[#allocation4 + $0x58] sm:$0xff]
    %v4438 = vld [vmem:[#allocation4 + $0x60] sm:$0xff]
    %v4439 = vld [vmem:[#allocation4 + $0x68] sm:$0xff]
    %v4440 = vld [vmem:[#allocation4 + $0x70] sm:$0xff]
    %v4441 = vld [vmem:[#allocation4 + $0x78] sm:$0xff]
    %v4442 = vld [vmem:[#allocation4 + $0x80] sm:$0xff]
    %v4443 = vld [vmem:[#allocation4 + $0x88] sm:$0xff]
    %v4444 = vld [vmem:[#allocation4 + $0x90] sm:$0xff]
    %v4445 = vld [vmem:[#allocation4 + $0x98] sm:$0xff]
    %v4446 = vld [vmem:[#allocation4 + $0xa0] sm:$0xff]
    %v4447 = vld [vmem:[#allocation4 + $0xa8] sm:$0xff]
    %v4448 = vld [vmem:[#allocation4 + $0xb0] sm:$0xff]
    %v4449 = vld [vmem:[#allocation4 + $0xb8] sm:$0xff]
    %v4450 = vld [vmem:[#allocation4 + $0xc0] sm:$0xff]
    %v4451 = vld [vmem:[#allocation4 + $0xc8] sm:$0xff]
    %v4452 = vld [vmem:[#allocation4 + $0xd0] sm:$0xff]
    %v4453 = vld [vmem:[#allocation4 + $0xd8] sm:$0xff]
    %v4454 = vld [vmem:[#allocation4 + $0xe0] sm:$0xff]
    %v4455 = vld [vmem:[#allocation4 + $0xe8] sm:$0xff]
    %v4456 = vld [vmem:[#allocation4 + $0xf0] sm:$0xff]
    %v4457 = vld [vmem:[#allocation4 + $0xf8] sm:$0xff]
    %v4458 = vld [vmem:[#allocation4 + $0x100] sm:$0xff]
    %v4459 = vld [vmem:[#allocation4 + $0x108] sm:$0xff]
    %v4460 = vld [vmem:[#allocation4 + $0x110] sm:$0xff]
    %v4461 = vld [vmem:[#allocation4 + $0x118] sm:$0xff]
    %v4462 = vld [vmem:[#allocation4 + $0x120] sm:$0xff]
    %v4463 = vld [vmem:[#allocation4 + $0x128] sm:$0xff]
    %v4464 = vld [vmem:[#allocation4 + $0x130] sm:$0xff]
    %v4465 = vld [vmem:[#allocation4 + $0x138] sm:$0xff]
    %v4466 = vld [vmem:[#allocation4 + $0x140] sm:$0xff]
    %v4467 = vld [vmem:[#allocation4 + $0x148] sm:$0xff]
    %v4468 = vld [vmem:[#allocation4 + $0x150] sm:$0xff]
    %v4469 = vld [vmem:[#allocation4 + $0x158] sm:$0xff]
    %v4470 = vld [vmem:[#allocation4 + $0x160] sm:$0xff]
    %v4471 = vld [vmem:[#allocation4 + $0x168] sm:$0xff]
    %v4472 = vld [vmem:[#allocation4 + $0x170] sm:$0xff]
    %v4473 = vld [vmem:[#allocation4 + $0x178] sm:$0xff]
    %v4474 = vld [vmem:[#allocation4 + $0x180] sm:$0xff]
    %v4475 = vld [vmem:[#allocation4 + $0x188] sm:$0xff]
    %v4476 = vld [vmem:[#allocation4 + $0x190] sm:$0xff]
    %v4477 = vld [vmem:[#allocation4 + $0x198] sm:$0xff]
    %v4478 = vld [vmem:[#allocation4 + $0x1a0] sm:$0xff]
    %v4479 = vld [vmem:[#allocation4 + $0x1a8] sm:$0xff]
    %v4480 = vld [vmem:[#allocation4 + $0x1b0] sm:$0xff]
    %v4481 = vld [vmem:[#allocation4 + $0x1b8] sm:$0xff]
    %v4482 = vld [vmem:[#allocation4 + $0x1c0] sm:$0xff]
    %v4483 = vld [vmem:[#allocation4 + $0x1c8] sm:$0xff]
    %v4484 = vld [vmem:[#allocation4 + $0x1d0] sm:$0xff]
    %v4485 = vld [vmem:[#allocation4 + $0x1d8] sm:$0xff]
    %v4486 = vld [vmem:[#allocation4 + $0x1e0] sm:$0xff]
    %v4487 = vld [vmem:[#allocation4 + $0x1e8] sm:$0xff]
    %v4488 = vld [vmem:[#allocation4 + $0x1f0] sm:$0xff]
    %v4489 = vld [vmem:[#allocation4 + $0x1f8] sm:$0xff]
    %v4490 = vld [vmem:[#allocation4 + $0x200] sm:$0xff]
    %v4491 = vld [vmem:[#allocation4 + $0x208] sm:$0xff]
    %v4492 = vld [vmem:[#allocation4 + $0x210] sm:$0xff]
    %v4493 = vld [vmem:[#allocation4 + $0x218] sm:$0xff]
    %v4494 = vld [vmem:[#allocation4 + $0x220] sm:$0xff]
    %v4495 = vld [vmem:[#allocation4 + $0x228] sm:$0xff]
    %v4496 = vld [vmem:[#allocation4 + $0x230] sm:$0xff]
    %v4497 = vld [vmem:[#allocation4 + $0x238] sm:$0xff]
    %v4498 = vld [vmem:[#allocation4 + $0x240] sm:$0xff]
    %v4499 = vld [vmem:[#allocation4 + $0x248] sm:$0xff]
    %v4500 = vld [vmem:[#allocation4 + $0x250] sm:$0xff]
    %v4501 = vld [vmem:[#allocation4 + $0x258] sm:$0xff]
    %v4502 = vld [vmem:[#allocation4 + $0x260] sm:$0xff]
    %v4503 = vld [vmem:[#allocation4 + $0x268] sm:$0xff]
    %v4504 = vld [vmem:[#allocation4 + $0x270] sm:$0xff]
    %v4505 = vld [vmem:[#allocation4 + $0x278] sm:$0xff]
    %v4506 = vld [vmem:[#allocation4 + $0x280] sm:$0xff]
    %v4507 = vld [vmem:[#allocation4 + $0x288] sm:$0xff]
    %v4508 = vld [vmem:[#allocation4 + $0x290] sm:$0xff]
    %v4509 = vld [vmem:[#allocation4 + $0x298] sm:$0xff]
    %v4510 = vld [vmem:[%s2] sm:$0xf]
    %v4511 = vld [vmem:[%s2 + $0x4] sm:$0xf]
    %v4512 = vld [vmem:[%s2 + $0x8] sm:$0xf]
    %v4513 = vld [vmem:[%s2 + $0xc] sm:$0xf]
    %v4514 = vld [vmem:[%s2 + $0x10] sm:$0xf]
    %v4515 = vld [vmem:[%s2 + $0x14] sm:$0xf]
    %v4516 = vld [vmem:[%s2 + $0x18] sm:$0xf]
    %v4517 = vld [vmem:[%s2 + $0x1c] sm:$0xf]
    %v4518 = vld [vmem:[%s2 + $0x20] sm:$0xf]
    %v4519 = vld [vmem:[%s2 + $0x24] sm:$0xf]
    %v4520 = vld [vmem:[%s2 + $0x28] sm:$0xf]
    %v4521 = vld [vmem:[%s2 + $0x2c] sm:$0xf]
    %v4522 = vld [vmem:[%s2 + $0x30] sm:$0xf]
    %v4523 = vld [vmem:[%s2 + $0x34] sm:$0xf]
    %v4524 = vld [vmem:[%s2 + $0x38] sm:$0xf]
    %v4525 = vld [vmem:[%s2 + $0x3c] sm:$0xf]
    %v4526 = vld [vmem:[%s2 + $0x40] sm:$0xf]
    %v4527 = vld [vmem:[%s2 + $0x44] sm:$0xf]
    %v4528 = vld [vmem:[%s2 + $0x48] sm:$0xf]
    %v4529 = vld [vmem:[%s2 + $0x4c] sm:$0xf]
    %v4530 = vld [vmem:[%s2 + $0x50] sm:$0xf]
    %v4531 = vld [vmem:[%s2 + $0x54] sm:$0xf]
    %v4532 = vld [vmem:[%s2 + $0x58] sm:$0xf]
    %v4533 = vld [vmem:[%s2 + $0x5c] sm:$0xf]
    %v4534 = vld [vmem:[%s2 + $0x60] sm:$0xf]
    %v4535 = vld [vmem:[%s2 + $0x64] sm:$0xf]
    %v4536 = vld [vmem:[%s2 + $0x68] sm:$0xf]
    %v4537 = vld [vmem:[%s2 + $0x6c] sm:$0xf]
    %v4538 = vld [vmem:[%s2 + $0x70] sm:$0xf]
    %v4539 = vld [vmem:[%s2 + $0x74] sm:$0xf]
    %v4540 = vld [vmem:[%s2 + $0x78] sm:$0xf]
    %v4541 = vld [vmem:[%s2 + $0x7c] sm:$0xf]
    %v4542 = vld [vmem:[%s2 + $0x80] sm:$0xf]
    %v4543 = vld [vmem:[%s2 + $0x84] sm:$0xf]
    %v4544 = vld [vmem:[%s2 + $0x88] sm:$0xf]
    %v4545 = vld [vmem:[%s2 + $0x8c] sm:$0xf]
    %v4546 = vld [vmem:[%s2 + $0x90] sm:$0xf]
    %v4547 = vld [vmem:[%s2 + $0x94] sm:$0xf]
    %v4548 = vld [vmem:[%s2 + $0x98] sm:$0xf]
    %v4549 = vld [vmem:[%s2 + $0x9c] sm:$0xf]
    %v4550 = vld [vmem:[%s2 + $0xa0] sm:$0xf]
    %v4551 = vld [vmem:[%s2 + $0xa4] sm:$0xf]
    %v4552 = vld [vmem:[%s2 + $0xa8] sm:$0xf]
    %v4553 = vld [vmem:[%s2 + $0xac] sm:$0xf]
    %v4554 = vld [vmem:[%s2 + $0xb0] sm:$0xf]
    %v4555 = vld [vmem:[%s2 + $0xb4] sm:$0xf]
    %v4556 = vld [vmem:[%s2 + $0xb8] sm:$0xf]
    %v4557 = vld [vmem:[%s2 + $0xbc] sm:$0xf]
    %v4558 = vld [vmem:[%s2 + $0xc0] sm:$0xf]
    %v4559 = vld [vmem:[%s2 + $0xc4] sm:$0xf]
    %v4560 = vld [vmem:[%s2 + $0xc8] sm:$0xf]
    %v4561 = vld [vmem:[%s2 + $0xcc] sm:$0xf]
    %v4562 = vld [vmem:[%s2 + $0xd0] sm:$0xf]
    %v4563 = vld [vmem:[%s2 + $0xd4] sm:$0xf]
    %v4564 = vld [vmem:[%s2 + $0xd8] sm:$0xf]
    %v4565 = vld [vmem:[%s2 + $0xdc] sm:$0xf]
    %v4566 = vld [vmem:[%s2 + $0xe0] sm:$0xf]
    %v4567 = vld [vmem:[%s2 + $0xe4] sm:$0xf]
    %v4568 = vld [vmem:[%s2 + $0xe8] sm:$0xf]
    %v4569 = vld [vmem:[%s2 + $0xec] sm:$0xf]
    %v4570 = vld [vmem:[%s2 + $0xf0] sm:$0xf]
    %v4571 = vld [vmem:[%s2 + $0xf4] sm:$0xf]
    %v4572 = vld [vmem:[%s2 + $0xf8] sm:$0xf]
    %v4573 = vld [vmem:[%s2 + $0xfc] sm:$0xf]
    %v4574 = vld [vmem:[%s2 + $0x100] sm:$0xf]
    %v4575 = vld [vmem:[%s2 + $0x104] sm:$0xf]
    %v4576 = vld [vmem:[%s2 + $0x108] sm:$0xf]
    %v4577 = vld [vmem:[%s2 + $0x10c] sm:$0xf]
    %v4578 = vld [vmem:[%s2 + $0x110] sm:$0xf]
    %v4579 = vld [vmem:[%s2 + $0x114] sm:$0xf]
    %v4580 = vld [vmem:[%s2 + $0x118] sm:$0xf]
    %v4581 = vld [vmem:[%s2 + $0x11c] sm:$0xf]
    %v4582 = vld [vmem:[%s2 + $0x120] sm:$0xf]
    %v4583 = vld [vmem:[%s2 + $0x124] sm:$0xf]
    %v4584 = vld [vmem:[%s2 + $0x128] sm:$0xf]
    %v4585 = vld [vmem:[%s2 + $0x12c] sm:$0xf]
    %v4586 = vld [vmem:[%s2 + $0x130] sm:$0xf]
    %v4587 = vld [vmem:[%s2 + $0x134] sm:$0xf]
    %v4588 = vld [vmem:[%s2 + $0x138] sm:$0xf]
    %v4589 = vld [vmem:[%s2 + $0x13c] sm:$0xf]
    %v4590 = vld [vmem:[%s2 + $0x140] sm:$0xf]
    %v4591 = vld [vmem:[%s2 + $0x144] sm:$0xf]
    %v4592 = vld [vmem:[%s2 + $0x148] sm:$0xf]
    %v4593 = vld [vmem:[%s2 + $0x14c] sm:$0xf]
    %v4594 = vld [vmem:[%s2 + $0x150] sm:$0xf]
    %v4595 = vld [vmem:[%s2 + $0x154] sm:$0xf]
    %v4596 = vld [vmem:[%s2 + $0x158] sm:$0xf]
    %v4597 = vld [vmem:[%s2 + $0x15c] sm:$0xf]
    %v4598 = vld [vmem:[%s2 + $0x160] sm:$0xf]
    %v4599 = vld [vmem:[%s2 + $0x164] sm:$0xf]
    %v4600 = vld [vmem:[%s2 + $0x168] sm:$0xf]
    %v4601 = vld [vmem:[%s2 + $0x16c] sm:$0xf]
    %v4602 = vld [vmem:[%s2 + $0x170] sm:$0xf]
    %v4603 = vld [vmem:[%s2 + $0x174] sm:$0xf]
    %v4604 = vld [vmem:[%s2 + $0x178] sm:$0xf]
    %v4605 = vld [vmem:[%s2 + $0x17c] sm:$0xf]
    %v4606 = vld [vmem:[%s2 + $0x180] sm:$0xf]
    %v4607 = vld [vmem:[%s2 + $0x184] sm:$0xf]
    %v4608 = vld [vmem:[%s2 + $0x188] sm:$0xf]
    %v4609 = vld [vmem:[%s2 + $0x18c] sm:$0xf]
    %v4710 = vunpack.c.l.b16 %v4510
    %v4711 = vunpack.c.l.b16 %v4511
    %v4712 = vunpack.c.l.b16 %v4512
    %v4713 = vunpack.c.l.b16 %v4513
    %v4714 = vunpack.c.l.b16 %v4514
    %v4715 = vunpack.c.l.b16 %v4515
    %v4716 = vunpack.c.l.b16 %v4516
    %v4717 = vunpack.c.l.b16 %v4517
    %v4718 = vunpack.c.l.b16 %v4518
    %v4719 = vunpack.c.l.b16 %v4519
    %v4720 = vunpack.c.l.b16 %v4520
    %v4721 = vunpack.c.l.b16 %v4521
    %v4722 = vunpack.c.l.b16 %v4522
    %v4723 = vunpack.c.l.b16 %v4523
    %v4724 = vunpack.c.l.b16 %v4524
    %v4725 = vunpack.c.l.b16 %v4525
    %v4726 = vunpack.c.l.b16 %v4526
    %v4727 = vunpack.c.l.b16 %v4527
    %v4728 = vunpack.c.l.b16 %v4528
    %v4729 = vunpack.c.l.b16 %v4529
    %v4730 = vunpack.c.l.b16 %v4530
    %v4731 = vunpack.c.l.b16 %v4531
    %v4732 = vunpack.c.l.b16 %v4532
    %v4733 = vunpack.c.l.b16 %v4533
    %v4734 = vunpack.c.l.b16 %v4534
    %v4735 = vunpack.c.l.b16 %v4535
    %v4736 = vunpack.c.l.b16 %v4536
    %v4737 = vunpack.c.l.b16 %v4537
    %v4738 = vunpack.c.l.b16 %v4538
    %v4739 = vunpack.c.l.b16 %v4539
    %v4740 = vunpack.c.l.b16 %v4540
    %v4741 = vunpack.c.l.b16 %v4541
    %v4742 = vunpack.c.l.b16 %v4542
    %v4743 = vunpack.c.l.b16 %v4543
    %v4744 = vunpack.c.l.b16 %v4544
    %v4745 = vunpack.c.l.b16 %v4545
    %v4746 = vunpack.c.l.b16 %v4546
    %v4747 = vunpack.c.l.b16 %v4547
    %v4748 = vunpack.c.l.b16 %v4548
    %v4749 = vunpack.c.l.b16 %v4549
    %v4750 = vunpack.c.l.b16 %v4550
    %v4751 = vunpack.c.l.b16 %v4551
    %v4752 = vunpack.c.l.b16 %v4552
    %v4753 = vunpack.c.l.b16 %v4553
    %v4754 = vunpack.c.l.b16 %v4554
    %v4755 = vunpack.c.l.b16 %v4555
    %v4756 = vunpack.c.l.b16 %v4556
    %v4757 = vunpack.c.l.b16 %v4557
    %v4758 = vunpack.c.l.b16 %v4558
    %v4759 = vunpack.c.l.b16 %v4559
    %v4760 = vunpack.c.l.b16 %v4560
    %v4761 = vunpack.c.l.b16 %v4561
    %v4762 = vunpack.c.l.b16 %v4562
    %v4763 = vunpack.c.l.b16 %v4563
    %v4764 = vunpack.c.l.b16 %v4564
    %v4765 = vunpack.c.l.b16 %v4565
    %v4766 = vunpack.c.l.b16 %v4566
    %v4767 = vunpack.c.l.b16 %v4567
    %v4768 = vunpack.c.l.b16 %v4568
    %v4769 = vunpack.c.l.b16 %v4569
    %v4770 = vunpack.c.l.b16 %v4570
    %v4771 = vunpack.c.l.b16 %v4571
    %v4772 = vunpack.c.l.b16 %v4572
    %v4773 = vunpack.c.l.b16 %v4573
    %v4774 = vunpack.c.l.b16 %v4574
    %v4775 = vunpack.c.l.b16 %v4575
    %v4776 = vunpack.c.l.b16 %v4576
    %v4777 = vunpack.c.l.b16 %v4577
    %v4778 = vunpack.c.l.b16 %v4578
    %v4779 = vunpack.c.l.b16 %v4579
    %v4780 = vunpack.c.l.b16 %v4580
    %v4781 = vunpack.c.l.b16 %v4581
    %v4782 = vunpack.c.l.b16 %v4582
    %v4783 = vunpack.c.l.b16 %v4583
    %v4784 = vunpack.c.l.b16 %v4584
    %v4785 = vunpack.c.l.b16 %v4585
    %v4786 = vunpack.c.l.b16 %v4586
    %v4787 = vunpack.c.l.b16 %v4587
    %v4788 = vunpack.c.l.b16 %v4588
    %v4789 = vunpack.c.l.b16 %v4589
    %v4790 = vunpack.c.l.b16 %v4590
    %v4791 = vunpack.c.l.b16 %v4591
    %v4792 = vunpack.c.l.b16 %v4592
    %v4793 = vunpack.c.l.b16 %v4593
    %v4794 = vunpack.c.l.b16 %v4594
    %v4795 = vunpack.c.l.b16 %v4595
    %v4796 = vunpack.c.l.b16 %v4596
    %v4797 = vunpack.c.l.b16 %v4597
    %v4798 = vunpack.c.l.b16 %v4598
    %v4799 = vunpack.c.l.b16 %v4599
    %v4800 = vunpack.c.l.b16 %v4600
    %v4801 = vunpack.c.l.b16 %v4601
    %v4802 = vunpack.c.l.b16 %v4602
    %v4803 = vunpack.c.l.b16 %v4603
    %v4804 = vunpack.c.l.b16 %v4604
    %v4805 = vunpack.c.l.b16 %v4605
    %v4806 = vunpack.c.l.b16 %v4606
    %v4807 = vunpack.c.l.b16 %v4607
    %v4808 = vunpack.c.l.b16 %v4608
    %v4809 = vunpack.c.l.b16 %v4609
    %v4810 = vpack.c.b16 %v4711, %v4710
    %v4811 = vpack.c.b16 %v4713, %v4712
    %v4812 = vpack.c.b16 %v4715, %v4714
    %v4813 = vpack.c.b16 %v4717, %v4716
    %v4814 = vpack.c.b16 %v4719, %v4718
    %v4815 = vpack.c.b16 %v4721, %v4720
    %v4816 = vpack.c.b16 %v4723, %v4722
    %v4817 = vpack.c.b16 %v4725, %v4724
    %v4818 = vpack.c.b16 %v4727, %v4726
    %v4819 = vpack.c.b16 %v4729, %v4728
    %v4820 = vpack.c.b16 %v4731, %v4730
    %v4821 = vpack.c.b16 %v4733, %v4732
    %v4822 = vpack.c.b16 %v4735, %v4734
    %v4823 = vpack.c.b16 %v4737, %v4736
    %v4824 = vpack.c.b16 %v4739, %v4738
    %v4825 = vpack.c.b16 %v4741, %v4740
    %v4826 = vpack.c.b16 %v4743, %v4742
    %v4827 = vpack.c.b16 %v4745, %v4744
    %v4828 = vpack.c.b16 %v4747, %v4746
    %v4829 = vpack.c.b16 %v4749, %v4748
    %v4830 = vpack.c.b16 %v4751, %v4750
    %v4831 = vpack.c.b16 %v4753, %v4752
    %v4832 = vpack.c.b16 %v4755, %v4754
    %v4833 = vpack.c.b16 %v4757, %v4756
    %v4834 = vpack.c.b16 %v4759, %v4758
    %v4835 = vpack.c.b16 %v4761, %v4760
    %v4836 = vpack.c.b16 %v4763, %v4762
    %v4837 = vpack.c.b16 %v4765, %v4764
    %v4838 = vpack.c.b16 %v4767, %v4766
    %v4839 = vpack.c.b16 %v4769, %v4768
    %v4840 = vpack.c.b16 %v4771, %v4770
    %v4841 = vpack.c.b16 %v4773, %v4772
    %v4842 = vpack.c.b16 %v4775, %v4774
    %v4843 = vpack.c.b16 %v4777, %v4776
    %v4844 = vpack.c.b16 %v4779, %v4778
    %v4845 = vpack.c.b16 %v4781, %v4780
    %v4846 = vpack.c.b16 %v4783, %v4782
    %v4847 = vpack.c.b16 %v4785, %v4784
    %v4848 = vpack.c.b16 %v4787, %v4786
    %v4849 = vpack.c.b16 %v4789, %v4788
    %v4850 = vpack.c.b16 %v4791, %v4790
    %v4851 = vpack.c.b16 %v4793, %v4792
    %v4852 = vpack.c.b16 %v4795, %v4794
    %v4853 = vpack.c.b16 %v4797, %v4796
    %v4854 = vpack.c.b16 %v4799, %v4798
    %v4855 = vpack.c.b16 %v4801, %v4800
    %v4856 = vpack.c.b16 %v4803, %v4802
    %v4857 = vpack.c.b16 %v4805, %v4804
    %v4858 = vpack.c.b16 %v4807, %v4806
    %v4859 = vpack.c.b16 %v4809, %v4808
    %v4911 = vsel %vm2107, %v4432, 0
    %v4914 = vsel %vm2107, %v4439, 0
    %v4917 = vsel %vm2107, %v4446, 0
    %v4920 = vsel %vm2107, %v4453, 0
    %v4923 = vsel %vm2107, %v4460, 0
    %v4926 = vsel %vm2107, %v4467, 0
    %v4929 = vsel %vm2107, %v4474, 0
    %v4932 = vsel %vm2107, %v4481, 0
    %v4935 = vsel %vm2107, %v4488, 0
    %v4938 = vsel %vm2107, %v4495, 0
    %v4941 = vsel %vm2107, %v4502, 0
    %v4944 = vsel %vm2107, %v4509, 0
    %4946 = vmatprep.subr.bf16.mxu0 0
    %4947 = vmatpush1.bf16.msra.mxu0 %v4810
    %4948 = vmatprep.subr.bf16.mxu0 0
    %4949 = vmatpush1.bf16.msra.mxu0 %v4811
    %4950 = vmatprep.subr.bf16.mxu0 0
    %4951 = vmatpush1.bf16.msra.mxu0 %v4812
    %4952 = vmatprep.subr.bf16.mxu0 0
    %4953 = vmatpush1.bf16.msra.mxu0 %v4813
    %4954 = vmatprep.subr.bf16.mxu0 0
    %4955 = vmatpush1.bf16.msra.mxu0 %v4814
    %4956 = vmatprep.subr.bf16.mxu0 0
    %4957 = vmatpush1.bf16.msra.mxu0 %v4815
    %4958 = vmatprep.subr.bf16.mxu0 0
    %4959 = vmatpush1.bf16.msra.mxu0 %v4816
    %4960 = vmatprep.subr.bf16.mxu0 0
    %4961 = vmatpush1.bf16.msra.mxu0 %v4817
    %4962 = vmatprep.subr.bf16.mxu0 0
    %4963 = vmatpush1.bf16.msra.mxu0 %v4818
    %4964 = vmatprep.subr.bf16.mxu0 0
    %4965 = vmatpush1.bf16.msra.mxu0 %v4819
    %4966 = vmatprep.subr.bf16.mxu0 0
    %4967 = vmatpush1.bf16.msra.mxu0 %v4820
    %4968 = vmatprep.subr.bf16.mxu0 0
    %4969 = vmatpush1.bf16.msra.mxu0 %v4821
    %4970 = vmatprep.subr.bf16.mxu0 0
    %4971 = vmatpush1.bf16.msra.mxu0 %v4822
    %4972 = vmatprep.subr.bf16.mxu0 0
    %4973 = vmatpush1.bf16.msra.mxu0 %v4823
    %4974 = vmatprep.subr.bf16.mxu0 0
    %4975 = vmatpush1.bf16.msra.mxu0 %v4824
    %4976 = vmatprep.subr.bf16.mxu0 0
    %4977 = vmatpush1.bf16.msra.mxu0 %v4825
    %4978 = vmatprep.mubr.bf16.mxu0 %v4427
    %4979 = vmatmul.mubr.bf16.gmra.mrb[0].mxu0 %v4426
    %v4980 = vpop.f32.mrb[0].mxu0
    %v4981 = vadd.f32 %v4425, %v4980
    %v4982 = vpop.f32.mrb[0].mxu0
    %v4983 = vpop.f32.mrb[0].mxu0
    %v4984 = vadd.f32 %v4425, %v4983
    %v4985 = vpop.f32.mrb[0].mxu0
    %4986 = vmatprep.mubr.bf16.mxu0 %v4434
    %4987 = vmatmul.mubr.bf16.gmra.mrb[0].mxu0 %v4433
    %v4988 = vpop.f32.mrb[0].mxu0
    %v4989 = vadd.f32 %v4425, %v4988
    %v4990 = vpop.f32.mrb[0].mxu0
    %v4991 = vpop.f32.mrb[0].mxu0
    %v4992 = vadd.f32 %v4425, %v4991
    %v4993 = vpop.f32.mrb[0].mxu0
    %4994 = vmatprep.mubr.bf16.mxu0 %v4441
    %4995 = vmatmul.mubr.bf16.gmra.mrb[0].mxu0 %v4440
    %v4996 = vpop.f32.mrb[0].mxu0
    %v4997 = vadd.f32 %v4425, %v4996
    %v4998 = vpop.f32.mrb[0].mxu0
    %v4999 = vpop.f32.mrb[0].mxu0
    %v5000 = vadd.f32 %v4425, %v4999
    %v5001 = vpop.f32.mrb[0].mxu0
    %5002 = vmatprep.mubr.bf16.mxu0 %v4448
    %5003 = vmatmul.mubr.bf16.gmra.mrb[0].mxu0 %v4447
    %v5004 = vpop.f32.mrb[0].mxu0
    %v5005 = vadd.f32 %v4425, %v5004
    %v5006 = vpop.f32.mrb[0].mxu0
    %v5007 = vpop.f32.mrb[0].mxu0
    %v5008 = vadd.f32 %v4425, %v5007
    %v5009 = vpop.f32.mrb[0].mxu0
    %5010 = vmatprep.mubr.bf16.mxu0 %v4455
    %5011 = vmatmul.mubr.bf16.gmra.mrb[0].mxu0 %v4454
    %v5012 = vpop.f32.mrb[0].mxu0
    %v5013 = vadd.f32 %v4425, %v5012
    %v5014 = vpop.f32.mrb[0].mxu0
    %v5015 = vpop.f32.mrb[0].mxu0
    %v5016 = vadd.f32 %v4425, %v5015
    %v5017 = vpop.f32.mrb[0].mxu0
    %5018 = vmatprep.mubr.bf16.mxu0 %v4462
    %5019 = vmatmul.mubr.bf16.gmra.mrb[0].mxu0 %v4461
    %v5020 = vpop.f32.mrb[0].mxu0
    %v5021 = vadd.f32 %v4425, %v5020
    %v5022 = vpop.f32.mrb[0].mxu0
    %v5023 = vpop.f32.mrb[0].mxu0
    %v5024 = vadd.f32 %v4425, %v5023
    %v5025 = vpop.f32.mrb[0].mxu0
    %5026 = vmatprep.mubr.bf16.mxu0 %v4469
    %5027 = vmatmul.mubr.bf16.gmra.mrb[0].mxu0 %v4468
    %v5028 = vpop.f32.mrb[0].mxu0
    %v5029 = vadd.f32 %v4425, %v5028
    %v5030 = vpop.f32.mrb[0].mxu0
    %v5031 = vpop.f32.mrb[0].mxu0
    %v5032 = vadd.f32 %v4425, %v5031
    %v5033 = vpop.f32.mrb[0].mxu0
    %5034 = vmatprep.mubr.bf16.mxu0 %v4476
    %5035 = vmatmul.mubr.bf16.gmra.mrb[0].mxu0 %v4475
    %v5036 = vpop.f32.mrb[0].mxu0
    %v5037 = vadd.f32 %v4425, %v5036
    %v5038 = vpop.f32.mrb[0].mxu0
    %v5039 = vpop.f32.mrb[0].mxu0
    %v5040 = vadd.f32 %v4425, %v5039
    %v5041 = vpop.f32.mrb[0].mxu0
    %5042 = vmatprep.mubr.bf16.mxu0 %v4483
    %5043 = vmatmul.mubr.bf16.gmra.mrb[0].mxu0 %v4482
    %v5044 = vpop.f32.mrb[0].mxu0
    %v5045 = vadd.f32 %v4425, %v5044
    %v5046 = vpop.f32.mrb[0].mxu0
    %v5047 = vpop.f32.mrb[0].mxu0
    %v5048 = vadd.f32 %v4425, %v5047
    %v5049 = vpop.f32.mrb[0].mxu0
    %5050 = vmatprep.mubr.bf16.mxu0 %v4490
    %5051 = vmatmul.mubr.bf16.gmra.mrb[0].mxu0 %v4489
    %v5052 = vpop.f32.mrb[0].mxu0
    %v5053 = vadd.f32 %v4425, %v5052
    %v5054 = vpop.f32.mrb[0].mxu0
    %v5055 = vpop.f32.mrb[0].mxu0
    %v5056 = vadd.f32 %v4425, %v5055
    %v5057 = vpop.f32.mrb[0].mxu0
    %5058 = vmatprep.mubr.bf16.mxu0 %v4497
    %5059 = vmatmul.mubr.bf16.gmra.mrb[0].mxu0 %v4496
    %v5060 = vpop.f32.mrb[0].mxu0
    %v5061 = vadd.f32 %v4425, %v5060
    %v5062 = vpop.f32.mrb[0].mxu0
    %v5063 = vpop.f32.mrb[0].mxu0
    %v5064 = vadd.f32 %v4425, %v5063
    %v5065 = vpop.f32.mrb[0].mxu0
    %5066 = vmatprep.mubr.bf16.mxu0 %v4504
    %5067 = vmatmul.mubr.bf16.gmra.mrb[0].mxu0 %v4503
    %v5068 = vpop.f32.mrb[0].mxu0
    %v5069 = vadd.f32 %v4425, %v5068
    %v5070 = vpop.f32.mrb[0].mxu0
    %v5071 = vpop.f32.mrb[0].mxu0
    %v5072 = vadd.f32 %v4425, %v5071
    %v5073 = vpop.f32.mrb[0].mxu0
    %5074 = vdwg.mxu0
    %5075 = vmatprep.subr.bf16.mxu0 0
    %5076 = vmatpush1.bf16.msra.mxu0 %v4826
    %5077 = vmatprep.subr.bf16.mxu0 0
    %5078 = vmatpush1.bf16.msra.mxu0 %v4827
    %5079 = vmatprep.subr.bf16.mxu0 0
    %5080 = vmatpush1.bf16.msra.mxu0 %v4828
    %5081 = vmatprep.subr.bf16.mxu0 0
    %5082 = vmatpush1.bf16.msra.mxu0 %v4829
    %5083 = vmatprep.subr.bf16.mxu0 0
    %5084 = vmatpush1.bf16.msra.mxu0 %v4830
    %5085 = vmatprep.subr.bf16.mxu0 0
    %5086 = vmatpush1.bf16.msra.mxu0 %v4831
    %5087 = vmatprep.subr.bf16.mxu0 0
    %5088 = vmatpush1.bf16.msra.mxu0 %v4832
    %5089 = vmatprep.subr.bf16.mxu0 0
    %5090 = vmatpush1.bf16.msra.mxu0 %v4833
    %5091 = vmatprep.subr.bf16.mxu0 0
    %5092 = vmatpush1.bf16.msra.mxu0 %v4834
    %5093 = vmatprep.subr.bf16.mxu0 0
    %5094 = vmatpush1.bf16.msra.mxu0 %v4835
    %5095 = vmatprep.subr.bf16.mxu0 0
    %5096 = vmatpush1.bf16.msra.mxu0 %v4836
    %5097 = vmatprep.subr.bf16.mxu0 0
    %5098 = vmatpush1.bf16.msra.mxu0 %v4837
    %5099 = vmatprep.subr.bf16.mxu0 0
    %5100 = vmatpush1.bf16.msra.mxu0 %v4838
    %5101 = vmatprep.subr.bf16.mxu0 0
    %5102 = vmatpush1.bf16.msra.mxu0 %v4839
    %5103 = vmatprep.subr.bf16.mxu0 0
    %5104 = vmatpush1.bf16.msra.mxu0 %v4840
    %5105 = vmatprep.subr.bf16.mxu0 0
    %5106 = vmatpush1.bf16.msra.mxu0 %v4841
    %5107 = vmatprep.mubr.bf16.mxu0 %v4429
    %5108 = vmatmul.mubr.bf16.gmra.mrb[0].mxu0 %v4428
    %v5109 = vpop.f32.mrb[0].mxu0
    %v5110 = vadd.f32 %v4981, %v5109
    %v5111 = vpop.f32.mrb[0].mxu0
    %v5112 = vpop.f32.mrb[0].mxu0
    %v5113 = vadd.f32 %v4984, %v5112
    %v5114 = vpop.f32.mrb[0].mxu0
    %5115 = vmatprep.mubr.bf16.mxu0 %v4436
    %5116 = vmatmul.mubr.bf16.gmra.mrb[0].mxu0 %v4435
    %v5117 = vpop.f32.mrb[0].mxu0
    %v5118 = vadd.f32 %v4989, %v5117
    %v5119 = vpop.f32.mrb[0].mxu0
    %v5120 = vpop.f32.mrb[0].mxu0
    %v5121 = vadd.f32 %v4992, %v5120
    %v5122 = vpop.f32.mrb[0].mxu0
    %5123 = vmatprep.mubr.bf16.mxu0 %v4443
    %5124 = vmatmul.mubr.bf16.gmra.mrb[0].mxu0 %v4442
    %v5125 = vpop.f32.mrb[0].mxu0
    %v5126 = vadd.f32 %v4997, %v5125
    %v5127 = vpop.f32.mrb[0].mxu0
    %v5128 = vpop.f32.mrb[0].mxu0
    %v5129 = vadd.f32 %v5000, %v5128
    %v5130 = vpop.f32.mrb[0].mxu0
    %5131 = vmatprep.mubr.bf16.mxu0 %v4450
    %5132 = vmatmul.mubr.bf16.gmra.mrb[0].mxu0 %v4449
    %v5133 = vpop.f32.mrb[0].mxu0
    %v5134 = vadd.f32 %v5005, %v5133
    %v5135 = vpop.f32.mrb[0].mxu0
    %v5136 = vpop.f32.mrb[0].mxu0
    %v5137 = vadd.f32 %v5008, %v5136
    %v5138 = vpop.f32.mrb[0].mxu0
    %5139 = vmatprep.mubr.bf16.mxu0 %v4457
    %5140 = vmatmul.mubr.bf16.gmra.mrb[0].mxu0 %v4456
    %v5141 = vpop.f32.mrb[0].mxu0
    %v5142 = vadd.f32 %v5013, %v5141
    %v5143 = vpop.f32.mrb[0].mxu0
    %v5144 = vpop.f32.mrb[0].mxu0
    %v5145 = vadd.f32 %v5016, %v5144
    %v5146 = vpop.f32.mrb[0].mxu0
    %5147 = vmatprep.mubr.bf16.mxu0 %v4464
    %5148 = vmatmul.mubr.bf16.gmra.mrb[0].mxu0 %v4463
    %v5149 = vpop.f32.mrb[0].mxu0
    %v5150 = vadd.f32 %v5021, %v5149
    %v5151 = vpop.f32.mrb[0].mxu0
    %v5152 = vpop.f32.mrb[0].mxu0
    %v5153 = vadd.f32 %v5024, %v5152
    %v5154 = vpop.f32.mrb[0].mxu0
    %5155 = vmatprep.mubr.bf16.mxu0 %v4471
    %5156 = vmatmul.mubr.bf16.gmra.mrb[0].mxu0 %v4470
    %v5157 = vpop.f32.mrb[0].mxu0
    %v5158 = vadd.f32 %v5029, %v5157
    %v5159 = vpop.f32.mrb[0].mxu0
    %v5160 = vpop.f32.mrb[0].mxu0
    %v5161 = vadd.f32 %v5032, %v5160
    %v5162 = vpop.f32.mrb[0].mxu0
    %5163 = vmatprep.mubr.bf16.mxu0 %v4478
    %5164 = vmatmul.mubr.bf16.gmra.mrb[0].mxu0 %v4477
    %v5165 = vpop.f32.mrb[0].mxu0
    %v5166 = vadd.f32 %v5037, %v5165
    %v5167 = vpop.f32.mrb[0].mxu0
    %v5168 = vpop.f32.mrb[0].mxu0
    %v5169 = vadd.f32 %v5040, %v5168
    %v5170 = vpop.f32.mrb[0].mxu0
    %5171 = vmatprep.mubr.bf16.mxu0 %v4485
    %5172 = vmatmul.mubr.bf16.gmra.mrb[0].mxu0 %v4484
    %v5173 = vpop.f32.mrb[0].mxu0
    %v5174 = vadd.f32 %v5045, %v5173
    %v5175 = vpop.f32.mrb[0].mxu0
    %v5176 = vpop.f32.mrb[0].mxu0
    %v5177 = vadd.f32 %v5048, %v5176
    %v5178 = vpop.f32.mrb[0].mxu0
    %5179 = vmatprep.mubr.bf16.mxu0 %v4492
    %5180 = vmatmul.mubr.bf16.gmra.mrb[0].mxu0 %v4491
    %v5181 = vpop.f32.mrb[0].mxu0
    %v5182 = vadd.f32 %v5053, %v5181
    %v5183 = vpop.f32.mrb[0].mxu0
    %v5184 = vpop.f32.mrb[0].mxu0
    %v5185 = vadd.f32 %v5056, %v5184
    %v5186 = vpop.f32.mrb[0].mxu0
    %5187 = vmatprep.mubr.bf16.mxu0 %v4499
    %5188 = vmatmul.mubr.bf16.gmra.mrb[0].mxu0 %v4498
    %v5189 = vpop.f32.mrb[0].mxu0
    %v5190 = vadd.f32 %v5061, %v5189
    %v5191 = vpop.f32.mrb[0].mxu0
    %v5192 = vpop.f32.mrb[0].mxu0
    %v5193 = vadd.f32 %v5064, %v5192
    %v5194 = vpop.f32.mrb[0].mxu0
    %5195 = vmatprep.mubr.bf16.mxu0 %v4506
    %5196 = vmatmul.mubr.bf16.gmra.mrb[0].mxu0 %v4505
    %v5197 = vpop.f32.mrb[0].mxu0
    %v5198 = vadd.f32 %v5069, %v5197
    %v5199 = vpop.f32.mrb[0].mxu0
    %v5200 = vpop.f32.mrb[0].mxu0
    %v5201 = vadd.f32 %v5072, %v5200
    %v5202 = vpop.f32.mrb[0].mxu0
    %5203 = vdwg.mxu0
    %5204 = vmatprep.subr.bf16.mxu0 0
    %5205 = vmatpush1.bf16.msra.mxu0 %v4842
    %5206 = vmatprep.subr.bf16.mxu0 0
    %5207 = vmatpush1.bf16.msra.mxu0 %v4843
    %5208 = vmatprep.subr.bf16.mxu0 0
    %5209 = vmatpush1.bf16.msra.mxu0 %v4844
    %5210 = vmatprep.subr.bf16.mxu0 0
    %5211 = vmatpush1.bf16.msra.mxu0 %v4845
    %5212 = vmatprep.subr.bf16.mxu0 0
    %5213 = vmatpush1.bf16.msra.mxu0 %v4846
    %5214 = vmatprep.subr.bf16.mxu0 0
    %5215 = vmatpush1.bf16.msra.mxu0 %v4847
    %5216 = vmatprep.subr.bf16.mxu0 0
    %5217 = vmatpush1.bf16.msra.mxu0 %v4848
    %5218 = vmatprep.subr.bf16.mxu0 0
    %5219 = vmatpush1.bf16.msra.mxu0 %v4849
    %5220 = vmatprep.subr.bf16.mxu0 0
    %5221 = vmatpush1.bf16.msra.mxu0 %v4850
    %5222 = vmatprep.subr.bf16.mxu0 0
    %5223 = vmatpush1.bf16.msra.mxu0 %v4851
    %5224 = vmatprep.subr.bf16.mxu0 0
    %5225 = vmatpush1.bf16.msra.mxu0 %v4852
    %5226 = vmatprep.subr.bf16.mxu0 0
    %5227 = vmatpush1.bf16.msra.mxu0 %v4853
    %5228 = vmatprep.subr.bf16.mxu0 0
    %5229 = vmatpush1.bf16.msra.mxu0 %v4854
    %5230 = vmatprep.subr.bf16.mxu0 0
    %5231 = vmatpush1.bf16.msra.mxu0 %v4855
    %5232 = vmatprep.subr.bf16.mxu0 0
    %5233 = vmatpush1.bf16.msra.mxu0 %v4856
    %5234 = vmatprep.subr.bf16.mxu0 0
    %5235 = vmatpush1.bf16.msra.mxu0 %v4857
    %5236 = vmatprep.mubr.bf16.mxu0 %v4431
    %5237 = vmatmul.mubr.bf16.gmra.mrb[0].mxu0 %v4430
    %v5238 = vpop.f32.mrb[0].mxu0
    %v5239 = vadd.f32 %v5110, %v5238
    %v5240 = vpop.f32.mrb[0].mxu0
    %v5241 = vpop.f32.mrb[0].mxu0
    %v5242 = vadd.f32 %v5113, %v5241
    %v5243 = vpop.f32.mrb[0].mxu0
    %5244 = vmatprep.mubr.bf16.mxu0 %v4438
    %5245 = vmatmul.mubr.bf16.gmra.mrb[0].mxu0 %v4437
    %v5246 = vpop.f32.mrb[0].mxu0
    %v5247 = vadd.f32 %v5118, %v5246
    %v5248 = vpop.f32.mrb[0].mxu0
    %v5249 = vpop.f32.mrb[0].mxu0
    %v5250 = vadd.f32 %v5121, %v5249
    %v5251 = vpop.f32.mrb[0].mxu0
    %5252 = vmatprep.mubr.bf16.mxu0 %v4445
    %5253 = vmatmul.mubr.bf16.gmra.mrb[0].mxu0 %v4444
    %v5254 = vpop.f32.mrb[0].mxu0
    %v5255 = vadd.f32 %v5126, %v5254
    %v5256 = vpop.f32.mrb[0].mxu0
    %v5257 = vpop.f32.mrb[0].mxu0
    %v5258 = vadd.f32 %v5129, %v5257
    %v5259 = vpop.f32.mrb[0].mxu0
    %5260 = vmatprep.mubr.bf16.mxu0 %v4452
    %5261 = vmatmul.mubr.bf16.gmra.mrb[0].mxu0 %v4451
    %v5262 = vpop.f32.mrb[0].mxu0
    %v5263 = vadd.f32 %v5134, %v5262
    %v5264 = vpop.f32.mrb[0].mxu0
    %v5265 = vpop.f32.mrb[0].mxu0
    %v5266 = vadd.f32 %v5137, %v5265
    %v5267 = vpop.f32.mrb[0].mxu0
    %5268 = vmatprep.mubr.bf16.mxu0 %v4459
    %5269 = vmatmul.mubr.bf16.gmra.mrb[0].mxu0 %v4458
    %v5270 = vpop.f32.mrb[0].mxu0
    %v5271 = vadd.f32 %v5142, %v5270
    %v5272 = vpop.f32.mrb[0].mxu0
    %v5273 = vpop.f32.mrb[0].mxu0
    %v5274 = vadd.f32 %v5145, %v5273
    %v5275 = vpop.f32.mrb[0].mxu0
    %5276 = vmatprep.mubr.bf16.mxu0 %v4466
    %5277 = vmatmul.mubr.bf16.gmra.mrb[0].mxu0 %v4465
    %v5278 = vpop.f32.mrb[0].mxu0
    %v5279 = vadd.f32 %v5150, %v5278
    %v5280 = vpop.f32.mrb[0].mxu0
    %v5281 = vpop.f32.mrb[0].mxu0
    %v5282 = vadd.f32 %v5153, %v5281
    %v5283 = vpop.f32.mrb[0].mxu0
    %5284 = vmatprep.mubr.bf16.mxu0 %v4473
    %5285 = vmatmul.mubr.bf16.gmra.mrb[0].mxu0 %v4472
    %v5286 = vpop.f32.mrb[0].mxu0
    %v5287 = vadd.f32 %v5158, %v5286
    %v5288 = vpop.f32.mrb[0].mxu0
    %v5289 = vpop.f32.mrb[0].mxu0
    %v5290 = vadd.f32 %v5161, %v5289
    %v5291 = vpop.f32.mrb[0].mxu0
    %5292 = vmatprep.mubr.bf16.mxu0 %v4480
    %5293 = vmatmul.mubr.bf16.gmra.mrb[0].mxu0 %v4479
    %v5294 = vpop.f32.mrb[0].mxu0
    %v5295 = vadd.f32 %v5166, %v5294
    %v5296 = vpop.f32.mrb[0].mxu0
    %v5297 = vpop.f32.mrb[0].mxu0
    %v5298 = vadd.f32 %v5169, %v5297
    %v5299 = vpop.f32.mrb[0].mxu0
    %5300 = vmatprep.mubr.bf16.mxu0 %v4487
    %5301 = vmatmul.mubr.bf16.gmra.mrb[0].mxu0 %v4486
    %v5302 = vpop.f32.mrb[0].mxu0
    %v5303 = vadd.f32 %v5174, %v5302
    %v5304 = vpop.f32.mrb[0].mxu0
    %v5305 = vpop.f32.mrb[0].mxu0
    %v5306 = vadd.f32 %v5177, %v5305
    %v5307 = vpop.f32.mrb[0].mxu0
    %5308 = vmatprep.mubr.bf16.mxu0 %v4494
    %5309 = vmatmul.mubr.bf16.gmra.mrb[0].mxu0 %v4493
    %v5310 = vpop.f32.mrb[0].mxu0
    %v5311 = vadd.f32 %v5182, %v5310
    %v5312 = vpop.f32.mrb[0].mxu0
    %v5313 = vpop.f32.mrb[0].mxu0
    %v5314 = vadd.f32 %v5185, %v5313
    %v5315 = vpop.f32.mrb[0].mxu0
    %5316 = vmatprep.mubr.bf16.mxu0 %v4501
    %5317 = vmatmul.mubr.bf16.gmra.mrb[0].mxu0 %v4500
    %v5318 = vpop.f32.mrb[0].mxu0
    %v5319 = vadd.f32 %v5190, %v5318
    %v5320 = vpop.f32.mrb[0].mxu0
    %v5321 = vpop.f32.mrb[0].mxu0
    %v5322 = vadd.f32 %v5193, %v5321
    %v5323 = vpop.f32.mrb[0].mxu0
    %5324 = vmatprep.mubr.bf16.mxu0 %v4508
    %5325 = vmatmul.mubr.bf16.gmra.mrb[0].mxu0 %v4507
    %v5326 = vpop.f32.mrb[0].mxu0
    %v5327 = vadd.f32 %v5198, %v5326
    %v5328 = vpop.f32.mrb[0].mxu0
    %v5329 = vpop.f32.mrb[0].mxu0
    %v5330 = vadd.f32 %v5201, %v5329
    %v5331 = vpop.f32.mrb[0].mxu0
    %5332 = vdwg.mxu0
    %5333 = vmatprep.subr.bf16.mxu0 0
    %5334 = vmatpush1.bf16.msra.mxu0 %v4858
    %5335 = vmatprep.subr.bf16.mxu0 0
    %5336 = vmatpush1.bf16.msra.mxu0 %v4859
    %5337 = vmatprep.subr.bf16.mxu0 0
    %5338 = vmatpush1.bf16.msra.mxu0 0
    %5339 = vmatprep.subr.bf16.mxu0 0
    %5340 = vmatpush1.bf16.msra.mxu0 0
    %5341 = vmatprep.subr.bf16.mxu0 0
    %5342 = vmatpush1.bf16.msra.mxu0 0
    %5343 = vmatprep.subr.bf16.mxu0 0
    %5344 = vmatpush1.bf16.msra.mxu0 0
    %5345 = vmatprep.subr.bf16.mxu0 0
    %5346 = vmatpush1.bf16.msra.mxu0 0
    %5347 = vmatprep.subr.bf16.mxu0 0
    %5348 = vmatpush1.bf16.msra.mxu0 0
    %5349 = vmatprep.subr.bf16.mxu0 0
    %5350 = vmatpush1.bf16.msra.mxu0 0
    %5351 = vmatprep.subr.bf16.mxu0 0
    %5352 = vmatpush1.bf16.msra.mxu0 0
    %5353 = vmatprep.subr.bf16.mxu0 0
    %5354 = vmatpush1.bf16.msra.mxu0 0
    %5355 = vmatprep.subr.bf16.mxu0 0
    %5356 = vmatpush1.bf16.msra.mxu0 0
    %5357 = vmatprep.subr.bf16.mxu0 0
    %5358 = vmatpush1.bf16.msra.mxu0 0
    %5359 = vmatprep.subr.bf16.mxu0 0
    %5360 = vmatpush1.bf16.msra.mxu0 0
    %5361 = vmatprep.subr.bf16.mxu0 0
    %5362 = vmatpush1.bf16.msra.mxu0 0
    %5363 = vmatprep.subr.bf16.mxu0 0
    %5364 = vmatpush1.bf16.msra.mxu0 0
    %5365 = vmatprep.mubr.bf16.mxu0 0
    %5366 = vmatmul.mubr.bf16.gmra.mrb[0].mxu0 %v4911
    %v5367 = vpop.f32.mrb[0].mxu0
    %v5368 = vadd.f32 %v5239, %v5367
    %v5369 = vpop.f32.mrb[0].mxu0
    %v5370 = vpop.f32.mrb[0].mxu0
    %v5371 = vadd.f32 %v5242, %v5370
    %v5372 = vpop.f32.mrb[0].mxu0
    %5373 = vmatprep.mubr.bf16.mxu0 0
    %5374 = vmatmul.mubr.bf16.gmra.mrb[0].mxu0 %v4914
    %v5375 = vpop.f32.mrb[0].mxu0
    %v5376 = vadd.f32 %v5247, %v5375
    %v5377 = vpop.f32.mrb[0].mxu0
    %v5378 = vpop.f32.mrb[0].mxu0
    %v5379 = vadd.f32 %v5250, %v5378
    %v5380 = vpop.f32.mrb[0].mxu0
    %5381 = vmatprep.mubr.bf16.mxu0 0
    %5382 = vmatmul.mubr.bf16.gmra.mrb[0].mxu0 %v4917
    %v5383 = vpop.f32.mrb[0].mxu0
    %v5384 = vadd.f32 %v5255, %v5383
    %v5385 = vpop.f32.mrb[0].mxu0
    %v5386 = vpop.f32.mrb[0].mxu0
    %v5387 = vadd.f32 %v5258, %v5386
    %v5388 = vpop.f32.mrb[0].mxu0
    %5389 = vmatprep.mubr.bf16.mxu0 0
    %5390 = vmatmul.mubr.bf16.gmra.mrb[0].mxu0 %v4920
    %v5391 = vpop.f32.mrb[0].mxu0
    %v5392 = vadd.f32 %v5263, %v5391
    %v5393 = vpop.f32.mrb[0].mxu0
    %v5394 = vpop.f32.mrb[0].mxu0
    %v5395 = vadd.f32 %v5266, %v5394
    %v5396 = vpop.f32.mrb[0].mxu0
    %5397 = vmatprep.mubr.bf16.mxu0 0
    %5398 = vmatmul.mubr.bf16.gmra.mrb[0].mxu0 %v4923
    %v5399 = vpop.f32.mrb[0].mxu0
    %v5400 = vadd.f32 %v5271, %v5399
    %v5401 = vpop.f32.mrb[0].mxu0
    %v5402 = vpop.f32.mrb[0].mxu0
    %v5403 = vadd.f32 %v5274, %v5402
    %v5404 = vpop.f32.mrb[0].mxu0
    %5405 = vmatprep.mubr.bf16.mxu0 0
    %5406 = vmatmul.mubr.bf16.gmra.mrb[0].mxu0 %v4926
    %v5407 = vpop.f32.mrb[0].mxu0
    %v5408 = vadd.f32 %v5279, %v5407
    %v5409 = vpop.f32.mrb[0].mxu0
    %v5410 = vpop.f32.mrb[0].mxu0
    %v5411 = vadd.f32 %v5282, %v5410
    %v5412 = vpop.f32.mrb[0].mxu0
    %5413 = vmatprep.mubr.bf16.mxu0 0
    %5414 = vmatmul.mubr.bf16.gmra.mrb[0].mxu0 %v4929
    %v5415 = vpop.f32.mrb[0].mxu0
    %v5416 = vadd.f32 %v5287, %v5415
    %v5417 = vpop.f32.mrb[0].mxu0
    %v5418 = vpop.f32.mrb[0].mxu0
    %v5419 = vadd.f32 %v5290, %v5418
    %v5420 = vpop.f32.mrb[0].mxu0
    %5421 = vmatprep.mubr.bf16.mxu0 0
    %5422 = vmatmul.mubr.bf16.gmra.mrb[0].mxu0 %v4932
    %v5423 = vpop.f32.mrb[0].mxu0
    %v5424 = vadd.f32 %v5295, %v5423
    %v5425 = vpop.f32.mrb[0].mxu0
    %v5426 = vpop.f32.mrb[0].mxu0
    %v5427 = vadd.f32 %v5298, %v5426
    %v5428 = vpop.f32.mrb[0].mxu0
    %5429 = vmatprep.mubr.bf16.mxu0 0
    %5430 = vmatmul.mubr.bf16.gmra.mrb[0].mxu0 %v4935
    %v5431 = vpop.f32.mrb[0].mxu0
    %v5432 = vadd.f32 %v5303, %v5431
    %v5433 = vpop.f32.mrb[0].mxu0
    %v5434 = vpop.f32.mrb[0].mxu0
    %v5435 = vadd.f32 %v5306, %v5434
    %v5436 = vpop.f32.mrb[0].mxu0
    %5437 = vmatprep.mubr.bf16.mxu0 0
    %5438 = vmatmul.mubr.bf16.gmra.mrb[0].mxu0 %v4938
    %v5439 = vpop.f32.mrb[0].mxu0
    %v5440 = vadd.f32 %v5311, %v5439
    %v5441 = vpop.f32.mrb[0].mxu0
    %v5442 = vpop.f32.mrb[0].mxu0
    %v5443 = vadd.f32 %v5314, %v5442
    %v5444 = vpop.f32.mrb[0].mxu0
    %5445 = vmatprep.mubr.bf16.mxu0 0
    %5446 = vmatmul.mubr.bf16.gmra.mrb[0].mxu0 %v4941
    %v5447 = vpop.f32.mrb[0].mxu0
    %v5448 = vadd.f32 %v5319, %v5447
    %v5449 = vpop.f32.mrb[0].mxu0
    %v5450 = vpop.f32.mrb[0].mxu0
    %v5451 = vadd.f32 %v5322, %v5450
    %v5452 = vpop.f32.mrb[0].mxu0
    %5453 = vmatprep.mubr.bf16.mxu0 0
    %5454 = vmatmul.mubr.bf16.gmra.mrb[0].mxu0 %v4944
    %v5455 = vpop.f32.mrb[0].mxu0
    %v5456 = vadd.f32 %v5327, %v5455
    %v5457 = vpop.f32.mrb[0].mxu0
    %v5458 = vpop.f32.mrb[0].mxu0
    %v5459 = vadd.f32 %v5330, %v5458
    %v5460 = vpop.f32.mrb[0].mxu0
    %5461 = vdwg.mxu0
    %v5462 = vmax.f32 %v5368, 0.0
    %v5463 = vmax.f32 %v5371, 0.0
    %v5464 = vmax.f32 %v5376, 0.0
    %v5465 = vmax.f32 %v5379, 0.0
    %v5466 = vmax.f32 %v5384, 0.0
    %v5467 = vmax.f32 %v5387, 0.0
    %v5468 = vmax.f32 %v5392, 0.0
    %v5469 = vmax.f32 %v5395, 0.0
    %v5470 = vmax.f32 %v5400, 0.0
    %v5471 = vmax.f32 %v5403, 0.0
    %v5472 = vmax.f32 %v5408, 0.0
    %v5473 = vmax.f32 %v5411, 0.0
    %v5474 = vmax.f32 %v5416, 0.0
    %v5475 = vmax.f32 %v5419, 0.0
    %v5476 = vmax.f32 %v5424, 0.0
    %v5477 = vmax.f32 %v5427, 0.0
    %v5478 = vmax.f32 %v5432, 0.0
    %v5479 = vmax.f32 %v5435, 0.0
    %v5480 = vmax.f32 %v5440, 0.0
    %v5481 = vmax.f32 %v5443, 0.0
    %v5482 = vmax.f32 %v5448, 0.0
    %v5483 = vmax.f32 %v5451, 0.0
    %v5484 = vmax.f32 %v5456, 0.0
    %v5485 = vmax.f32 %v5459, 0.0
    %v5486 = vld [vmem:[%s5] sm:$0xff]
    %v5487 = vld [vmem:[%s5 + $0x8] sm:$0xff]
    %v5488 = vld [vmem:[%s5 + $0x10] sm:$0xff]
    %v5489 = vld [vmem:[%s5 + $0x18] sm:$0xff]
    %v5490 = vld [vmem:[%s5 + $0x20] sm:$0xff]
    %v5491 = vld [vmem:[%s5 + $0x28] sm:$0xff]
    %v5492 = vld [vmem:[%s5 + $0x30] sm:$0xff]
    %v5493 = vld [vmem:[%s5 + $0x38] sm:$0xff]
    %vm5494 = vcmask 523264
    %v5496 = vsel %vm5494, %v5487, 0
    %v5499 = vsel %vm5494, %v5489, 0
    %v5502 = vsel %vm5494, %v5491, 0
    %v5505 = vsel %vm5494, %v5493, 0
    %5507 = vmatprep.subr.mxu0 0.0
    %5508 = vmatpush1.msra.mxu0 %v5462
    %5509 = vmatprep.subr.mxu0 0.0
    %5510 = vmatpush1.msra.mxu0 %v5463
    %5511 = vmatprep.subr.mxu0 0.0
    %5512 = vmatpush1.msra.mxu0 %v5464
    %5513 = vmatprep.subr.mxu0 0.0
    %5514 = vmatpush1.msra.mxu0 %v5465
    %5515 = vmatprep.subr.mxu0 0.0
    %5516 = vmatpush1.msra.mxu0 %v5466
    %5517 = vmatprep.subr.mxu0 0.0
    %5518 = vmatpush1.msra.mxu0 %v5467
    %5519 = vmatprep.subr.mxu0 0.0
    %5520 = vmatpush1.msra.mxu0 %v5468
    %5521 = vmatprep.subr.mxu0 0.0
    %5522 = vmatpush1.msra.mxu0 %v5469
    %5523 = vmatprep.subr.mxu0 0.0
    %5524 = vmatpush1.msra.mxu0 %v5470
    %5525 = vmatprep.subr.mxu0 0.0
    %5526 = vmatpush1.msra.mxu0 %v5471
    %5527 = vmatprep.subr.mxu0 0.0
    %5528 = vmatpush1.msra.mxu0 %v5472
    %5529 = vmatprep.subr.mxu0 0.0
    %5530 = vmatpush1.msra.mxu0 %v5473
    %5531 = vmatprep.subr.mxu0 0.0
    %5532 = vmatpush1.msra.mxu0 %v5474
    %5533 = vmatprep.subr.mxu0 0.0
    %5534 = vmatpush1.msra.mxu0 %v5475
    %5535 = vmatprep.subr.mxu0 0.0
    %5536 = vmatpush1.msra.mxu0 %v5476
    %5537 = vmatprep.subr.mxu0 0.0
    %5538 = vmatpush1.msra.mxu0 %v5477
    %5539 = vmatprep.subr.mxu0 0.0
    %5540 = vmatpush1.msra.mxu0 %v5478
    %5541 = vmatprep.subr.mxu0 0.0
    %5542 = vmatpush1.msra.mxu0 %v5479
    %5543 = vmatprep.subr.mxu0 0.0
    %5544 = vmatpush1.msra.mxu0 %v5480
    %5545 = vmatprep.subr.mxu0 0.0
    %5546 = vmatpush1.msra.mxu0 %v5481
    %5547 = vmatprep.subr.mxu0 0.0
    %5548 = vmatpush1.msra.mxu0 %v5482
    %5549 = vmatprep.subr.mxu0 0.0
    %5550 = vmatpush1.msra.mxu0 %v5483
    %5551 = vmatprep.subr.mxu0 0.0
    %5552 = vmatpush1.msra.mxu0 %v5484
    %5553 = vmatprep.subr.mxu0 0.0
    %5554 = vmatpush1.msra.mxu0 %v5485
    %5555 = vmatprep.subr.mxu0 0.0
    %5556 = vmatpush1.msra.mxu0 0.0
    %5557 = vmatprep.subr.mxu0 0.0
    %5558 = vmatpush1.msra.mxu0 0.0
    %5559 = vmatprep.subr.mxu0 0.0
    %5560 = vmatpush1.msra.mxu0 0.0
    %5561 = vmatprep.subr.mxu0 0.0
    %5562 = vmatpush1.msra.mxu0 0.0
    %5563 = vmatprep.subr.mxu0 0.0
    %5564 = vmatpush1.msra.mxu0 0.0
    %5565 = vmatprep.subr.mxu0 0.0
    %5566 = vmatpush1.msra.mxu0 0.0
    %5567 = vmatprep.subr.mxu0 0.0
    %5568 = vmatpush1.msra.mxu0 0.0
    %5569 = vmatprep.subr.mxu0 0.0
    %5570 = vmatpush1.msra.mxu0 0.0
    %5571 = vmatprep.mubr.f32.mxu0 %v5496
    %5572 = vmatmul.mubr.f32.gmra.mrb[0].mxu0 %v5486
    %v5573 = vpop.f32.mrb[0].mxu0
    %v5574 = vadd.f32 0.0, %v5573
    %v5575 = vpop.f32.mrb[0].mxu0
    %5576 = vmatprep.mubr.f32.mxu0 %v5499
    %5577 = vmatmul.mubr.f32.gmra.mrb[0].mxu0 %v5488
    %v5578 = vpop.f32.mrb[0].mxu0
    %v5579 = vadd.f32 0.0, %v5578
    %v5580 = vpop.f32.mrb[0].mxu0
    %5581 = vmatprep.mubr.f32.mxu0 %v5502
    %5582 = vmatmul.mubr.f32.gmra.mrb[0].mxu0 %v5490
    %v5583 = vpop.f32.mrb[0].mxu0
    %v5584 = vadd.f32 0.0, %v5583
    %v5585 = vpop.f32.mrb[0].mxu0
    %5586 = vmatprep.mubr.f32.mxu0 %v5505
    %5587 = vmatmul.mubr.f32.gmra.mrb[0].mxu0 %v5492
    %v5588 = vpop.f32.mrb[0].mxu0
    %v5589 = vadd.f32 0.0, %v5588
    %v5590 = vpop.f32.mrb[0].mxu0
    %5591 = vdwg.mxu0
    %v5592 = vmax.f32 %v5574, %v5579
    %v5593 = vmax.f32 %v5584, %v5589
    %v5594 = vmax.f32 %v5592, %v5593
    %v5595 = vld [vmem:[%s5 + $0x40] sm:$0xff]
    %vm5596 = vcmask 64512
    %v5598 = vsel %vm5596, %v5595, 0
    %5600 = vmatprep.subr.mxu0 0.0
    %5601 = vmatpush1.msra.mxu0 %v5594
    %5602 = vmatprep.subr.mxu0 0.0
    %5603 = vmatpush1.msra.mxu0 0.0
    %5604 = vmatprep.subr.mxu0 0.0
    %5605 = vmatpush1.msra.mxu0 0.0
    %5606 = vmatprep.subr.mxu0 0.0
    %5607 = vmatpush1.msra.mxu0 0.0
    %5608 = vmatprep.subr.mxu0 0.0
    %5609 = vmatpush1.msra.mxu0 0.0
    %5610 = vmatprep.subr.mxu0 0.0
    %5611 = vmatpush1.msra.mxu0 0.0
    %5612 = vmatprep.subr.mxu0 0.0
    %5613 = vmatpush1.msra.mxu0 0.0
    %5614 = vmatprep.subr.mxu0 0.0
    %5615 = vmatpush1.msra.mxu0 0.0
    %5616 = vmatprep.subr.mxu0 0.0
    %5617 = vmatpush1.msra.mxu0 0.0
    %5618 = vmatprep.subr.mxu0 0.0
    %5619 = vmatpush1.msra.mxu0 0.0
    %5620 = vmatprep.subr.mxu0 0.0
    %5621 = vmatpush1.msra.mxu0 0.0
    %5622 = vmatprep.subr.mxu0 0.0
    %5623 = vmatpush1.msra.mxu0 0.0
    %5624 = vmatprep.subr.mxu0 0.0
    %5625 = vmatpush1.msra.mxu0 0.0
    %5626 = vmatprep.subr.mxu0 0.0
    %5627 = vmatpush1.msra.mxu0 0.0
    %5628 = vmatprep.subr.mxu0 0.0
    %5629 = vmatpush1.msra.mxu0 0.0
    %5630 = vmatprep.subr.mxu0 0.0
    %5631 = vmatpush1.msra.mxu0 0.0
    %5632 = vmatprep.subr.mxu0 0.0
    %5633 = vmatpush1.msra.mxu0 0.0
    %5634 = vmatprep.subr.mxu0 0.0
    %5635 = vmatpush1.msra.mxu0 0.0
    %5636 = vmatprep.subr.mxu0 0.0
    %5637 = vmatpush1.msra.mxu0 0.0
    %5638 = vmatprep.subr.mxu0 0.0
    %5639 = vmatpush1.msra.mxu0 0.0
    %5640 = vmatprep.subr.mxu0 0.0
    %5641 = vmatpush1.msra.mxu0 0.0
    %5642 = vmatprep.subr.mxu0 0.0
    %5643 = vmatpush1.msra.mxu0 0.0
    %5644 = vmatprep.subr.mxu0 0.0
    %5645 = vmatpush1.msra.mxu0 0.0
    %5646 = vmatprep.subr.mxu0 0.0
    %5647 = vmatpush1.msra.mxu0 0.0
    %5648 = vmatprep.subr.mxu0 0.0
    %5649 = vmatpush1.msra.mxu0 0.0
    %5650 = vmatprep.subr.mxu0 0.0
    %5651 = vmatpush1.msra.mxu0 0.0
    %5652 = vmatprep.subr.mxu0 0.0
    %5653 = vmatpush1.msra.mxu0 0.0
    %5654 = vmatprep.subr.mxu0 0.0
    %5655 = vmatpush1.msra.mxu0 0.0
    %5656 = vmatprep.subr.mxu0 0.0
    %5657 = vmatpush1.msra.mxu0 0.0
    %5658 = vmatprep.subr.mxu0 0.0
    %5659 = vmatpush1.msra.mxu0 0.0
    %5660 = vmatprep.subr.mxu0 0.0
    %5661 = vmatpush1.msra.mxu0 0.0
    %5662 = vmatprep.subr.mxu0 0.0
    %5663 = vmatpush1.msra.mxu0 0.0
    %5664 = vmatprep.mubr.f32.mxu0 0.0
    %5665 = vmatmul.mubr.f32.gmra.mrb[0].mxu0 %v5598
    %v5666 = vpop.f32.mrb[0].mxu0
    %v5667 = vadd.f32 0.0, %v5666
    %v5668 = vpop.f32.mrb[0].mxu0
    %5669 = vdwg.mxu0
    %s5670 = scalar_lea.vmem %s5, 81
    %v5671 = vld [vmem:[%s5670] ss:$8 sm:$0x3]
    %v5672 = vld [vmem:[%s5 + $0x52] ss:$0 sm:$0xff]
    %v5673 = vpack.c.bf16 %v5667, %v5667
    %v5674 = vld [vmem:[%s3] sm:$0xff]
    %v5675 = vld [vmem:[%s3 + $0x8] sm:$0xff]
    %v5676 = vld [vmem:[%s3 + $0x10] sm:$0xff]
    %v5677 = vld [vmem:[%s3 + $0x18] sm:$0xff]
    %v5679 = vlaneseq
    %v5680 = vshrl.u32 %v5679, 7
    %v5681 = vsub.s32 0, %v5680
    %v5682 = vrot.slane %v5671, %v5681
    %v5683 = vlaneseq
    %v5684 = vshrl.u32 %v5683, 7
    %v5685 = vsub.s32 1, %v5684
    %v5686 = vrot.slane %v5671, %v5685
    %v5693 = vunpack.c.l.b16 %v5674
    %v5694 = vunpack.c.h.b16 %v5674
    %v5695 = vunpack.c.l.b16 %v5675
    %v5696 = vunpack.c.h.b16 %v5675
    %v5697 = vunpack.c.l.b16 %v5676
    %v5698 = vunpack.c.h.b16 %v5676
    %v5699 = vunpack.c.l.b16 %v5677
    %v5700 = vunpack.c.h.b16 %v5677
    %v5701 = vpack.c.b16 %v5695, %v5693
    %v5702 = vpack.c.b16 %v5696, %v5694
    %v5703 = vpack.c.b16 %v5699, %v5697
    %v5704 = vpack.c.b16 %v5700, %v5698
    %v5710 = vsel %vm2107, %v5673, 0
    %5712 = vmatprep.subr.bf16.mxu0 %v5702
    %5713 = vmatpush1.bf16.msra.mxu0 %v5701
    %5714 = vmatprep.subr.bf16.mxu0 %v5704
    %5715 = vmatpush1.bf16.msra.mxu0 %v5703
    %5716 = vmatprep.subr.bf16.mxu0 0
    %5717 = vmatpush1.bf16.msra.mxu0 0
    %5718 = vmatprep.subr.bf16.mxu0 0
    %5719 = vmatpush1.bf16.msra.mxu0 0
    %5720 = vmatprep.subr.bf16.mxu0 0
    %5721 = vmatpush1.bf16.msra.mxu0 0
    %5722 = vmatprep.subr.bf16.mxu0 0
    %5723 = vmatpush1.bf16.msra.mxu0 0
    %5724 = vmatprep.subr.bf16.mxu0 0
    %5725 = vmatpush1.bf16.msra.mxu0 0
    %5726 = vmatprep.subr.bf16.mxu0 0
    %5727 = vmatpush1.bf16.msra.mxu0 0
    %5728 = vmatprep.subr.bf16.mxu0 0
    %5729 = vmatpush1.bf16.msra.mxu0 0
    %5730 = vmatprep.subr.bf16.mxu0 0
    %5731 = vmatpush1.bf16.msra.mxu0 0
    %5732 = vmatprep.subr.bf16.mxu0 0
    %5733 = vmatpush1.bf16.msra.mxu0 0
    %5734 = vmatprep.subr.bf16.mxu0 0
    %5735 = vmatpush1.bf16.msra.mxu0 0
    %5736 = vmatprep.subr.bf16.mxu0 0
    %5737 = vmatpush1.bf16.msra.mxu0 0
    %5738 = vmatprep.subr.bf16.mxu0 0
    %5739 = vmatpush1.bf16.msra.mxu0 0
    %5740 = vmatprep.subr.bf16.mxu0 0
    %5741 = vmatpush1.bf16.msra.mxu0 0
    %5742 = vmatprep.subr.bf16.mxu0 0
    %5743 = vmatpush1.bf16.msra.mxu0 0
    %5744 = vmatprep.mubr.bf16.mxu0 0
    %5745 = vmatmul.mubr.bf16.gmra.mrb[0].mxu0 %v5710
    %v5746 = vpop.f32.mrb[0].mxu0
    %v5747 = vadd.f32 %v5682, %v5746
    %v5748 = vpop.f32.mrb[0].mxu0
    %v5749 = vadd.f32 %v5686, %v5748
    %v5750 = vpop.f32.mrb[0].mxu0
    %v5751 = vpop.f32.mrb[0].mxu0
    %5752 = vdwg.mxu0
    %v5753 = vmax.f32 %v5747, 0.0
    %v5754 = vmax.f32 %v5749, 0.0
    %v5755 = vpack.c.bf16 %v5753, %v5753
    %v5756 = vpack.c.bf16 %v5754, %v5754
    %v5757 = vld [vmem:[%s4] sm:$0xf]
    %v5758 = vld [vmem:[%s4 + $0x4] sm:$0xf]
    %v5759 = vld [vmem:[%s4 + $0x8] sm:$0xf]
    %v5760 = vld [vmem:[%s4 + $0xc] sm:$0xf]
    %v5761 = vld [vmem:[%s4 + $0x10] sm:$0xf]
    %v5762 = vld [vmem:[%s4 + $0x14] sm:$0xf]
    %v5763 = vld [vmem:[%s4 + $0x18] sm:$0xf]
    %v5764 = vld [vmem:[%s4 + $0x1c] sm:$0xf]
    %v5765 = vld [vmem:[%s4 + $0x20] sm:$0xf]
    %v5766 = vld [vmem:[%s4 + $0x24] sm:$0xf]
    %v5767 = vld [vmem:[%s4 + $0x28] sm:$0xf]
    %v5768 = vld [vmem:[%s4 + $0x2c] sm:$0xf]
    %v5769 = vld [vmem:[%s4 + $0x30] sm:$0xf]
    %v5770 = vld [vmem:[%s4 + $0x34] sm:$0xf]
    %v5771 = vld [vmem:[%s4 + $0x38] sm:$0xf]
    %v5772 = vld [vmem:[%s4 + $0x3c] sm:$0xf]
    %v5773 = vld [vmem:[%s4 + $0x40] sm:$0xf]
    %v5774 = vld [vmem:[%s4 + $0x44] sm:$0xf]
    %v5775 = vld [vmem:[%s4 + $0x48] sm:$0xf]
    %v5776 = vld [vmem:[%s4 + $0x4c] sm:$0xf]
    %v5777 = vld [vmem:[%s4 + $0x50] sm:$0xf]
    %v5778 = vld [vmem:[%s4 + $0x54] sm:$0xf]
    %v5779 = vld [vmem:[%s4 + $0x58] sm:$0xf]
    %v5780 = vld [vmem:[%s4 + $0x5c] sm:$0xf]
    %v5781 = vld [vmem:[%s4 + $0x60] sm:$0xf]
    %v5782 = vld [vmem:[%s4 + $0x64] sm:$0xf]
    %v5783 = vld [vmem:[%s4 + $0x68] sm:$0xf]
    %v5784 = vld [vmem:[%s4 + $0x6c] sm:$0xf]
    %v5785 = vld [vmem:[%s4 + $0x70] sm:$0xf]
    %v5786 = vld [vmem:[%s4 + $0x74] sm:$0xf]
    %v5787 = vld [vmem:[%s4 + $0x78] sm:$0xf]
    %v5788 = vld [vmem:[%s4 + $0x7c] sm:$0xf]
    %v5821 = vunpack.c.l.b16 %v5757
    %v5822 = vunpack.c.l.b16 %v5758
    %v5823 = vunpack.c.l.b16 %v5759
    %v5824 = vunpack.c.l.b16 %v5760
    %v5825 = vunpack.c.l.b16 %v5761
    %v5826 = vunpack.c.l.b16 %v5762
    %v5827 = vunpack.c.l.b16 %v5763
    %v5828 = vunpack.c.l.b16 %v5764
    %v5829 = vunpack.c.l.b16 %v5765
    %v5830 = vunpack.c.l.b16 %v5766
    %v5831 = vunpack.c.l.b16 %v5767
    %v5832 = vunpack.c.l.b16 %v5768
    %v5833 = vunpack.c.l.b16 %v5769
    %v5834 = vunpack.c.l.b16 %v5770
    %v5835 = vunpack.c.l.b16 %v5771
    %v5836 = vunpack.c.l.b16 %v5772
    %v5837 = vunpack.c.l.b16 %v5773
    %v5838 = vunpack.c.l.b16 %v5774
    %v5839 = vunpack.c.l.b16 %v5775
    %v5840 = vunpack.c.l.b16 %v5776
    %v5841 = vunpack.c.l.b16 %v5777
    %v5842 = vunpack.c.l.b16 %v5778
    %v5843 = vunpack.c.l.b16 %v5779
    %v5844 = vunpack.c.l.b16 %v5780
    %v5845 = vunpack.c.l.b16 %v5781
    %v5846 = vunpack.c.l.b16 %v5782
    %v5847 = vunpack.c.l.b16 %v5783
    %v5848 = vunpack.c.l.b16 %v5784
    %v5849 = vunpack.c.l.b16 %v5785
    %v5850 = vunpack.c.l.b16 %v5786
    %v5851 = vunpack.c.l.b16 %v5787
    %v5852 = vunpack.c.l.b16 %v5788
    %v5853 = vpack.c.b16 %v5822, %v5821
    %v5854 = vpack.c.b16 %v5824, %v5823
    %v5855 = vpack.c.b16 %v5826, %v5825
    %v5856 = vpack.c.b16 %v5828, %v5827
    %v5857 = vpack.c.b16 %v5830, %v5829
    %v5858 = vpack.c.b16 %v5832, %v5831
    %v5859 = vpack.c.b16 %v5834, %v5833
    %v5860 = vpack.c.b16 %v5836, %v5835
    %v5861 = vpack.c.b16 %v5838, %v5837
    %v5862 = vpack.c.b16 %v5840, %v5839
    %v5863 = vpack.c.b16 %v5842, %v5841
    %v5864 = vpack.c.b16 %v5844, %v5843
    %v5865 = vpack.c.b16 %v5846, %v5845
    %v5866 = vpack.c.b16 %v5848, %v5847
    %v5867 = vpack.c.b16 %v5850, %v5849
    %v5868 = vpack.c.b16 %v5852, %v5851
    %5885 = vmatprep.subr.bf16.mxu0 0
    %5886 = vmatpush1.bf16.msra.mxu0 %v5853
    %5887 = vmatprep.subr.bf16.mxu0 0
    %5888 = vmatpush1.bf16.msra.mxu0 %v5854
    %5889 = vmatprep.subr.bf16.mxu0 0
    %5890 = vmatpush1.bf16.msra.mxu0 %v5855
    %5891 = vmatprep.subr.bf16.mxu0 0
    %5892 = vmatpush1.bf16.msra.mxu0 %v5856
    %5893 = vmatprep.subr.bf16.mxu0 0
    %5894 = vmatpush1.bf16.msra.mxu0 %v5857
    %5895 = vmatprep.subr.bf16.mxu0 0
    %5896 = vmatpush1.bf16.msra.mxu0 %v5858
    %5897 = vmatprep.subr.bf16.mxu0 0
    %5898 = vmatpush1.bf16.msra.mxu0 %v5859
    %5899 = vmatprep.subr.bf16.mxu0 0
    %5900 = vmatpush1.bf16.msra.mxu0 %v5860
    %5901 = vmatprep.subr.bf16.mxu0 0
    %5902 = vmatpush1.bf16.msra.mxu0 %v5861
    %5903 = vmatprep.subr.bf16.mxu0 0
    %5904 = vmatpush1.bf16.msra.mxu0 %v5862
    %5905 = vmatprep.subr.bf16.mxu0 0
    %5906 = vmatpush1.bf16.msra.mxu0 %v5863
    %5907 = vmatprep.subr.bf16.mxu0 0
    %5908 = vmatpush1.bf16.msra.mxu0 %v5864
    %5909 = vmatprep.subr.bf16.mxu0 0
    %5910 = vmatpush1.bf16.msra.mxu0 %v5865
    %5911 = vmatprep.subr.bf16.mxu0 0
    %5912 = vmatpush1.bf16.msra.mxu0 %v5866
    %5913 = vmatprep.subr.bf16.mxu0 0
    %5914 = vmatpush1.bf16.msra.mxu0 %v5867
    %5915 = vmatprep.subr.bf16.mxu0 0
    %5916 = vmatpush1.bf16.msra.mxu0 %v5868
    %5917 = vmatprep.mubr.bf16.mxu0 %v5756
    %5918 = vmatmul.mubr.bf16.gmra.mrb[0].mxu0 %v5755
    %v5919 = vpop.f32.mrb[0].mxu0
    %v5920 = vadd.f32 %v5672, %v5919
    %v5921 = vpop.f32.mrb[0].mxu0
    %v5922 = vpop.f32.mrb[0].mxu0
    %v5923 = vpop.f32.mrb[0].mxu0
    %5924 = vdwg.mxu0
    %5925 = vst [vmem:[#allocation5] sm:$0xff] %v5920
    // Predicated region
    $region26: #{_lambda_.1} parent=1 // pred_check
      _
    $region27: #{_lambda_.1} parent=1 // pred_check_branch
      %5927 = sbr.rel (0) target = $region29
    $region28: #{_lambda_.1} parent=1 // pred_region
      %s5929 = ssub.s32 128, 128
      %5930 = vsyncadd [#allocation6], %s5929
      %s5932 = sshll.u32 [#allocation5], 4
      %s5933 = int_to_ptr.vmem [resolvable:$true] %s5932
      %5935 = dma.vmem_to_hbm [thread:$0]  %s5933, 128, %s6, [#allocation6]
    $region29: #{_lambda_.1} parent=1 // pred_fallthru
      _
    // Predicated region
    $region30: #{_lambda_.1} parent=1 // pred_check
      _
    $region31: #{_lambda_.1} parent=1 // pred_check_branch
      %5937 = sbr.rel (0) target = $region33
    $region32: #{_lambda_.1} parent=1 // pred_region
      %5938 = dma.done [#allocation6], 128
    $region33: #{_lambda_.1} parent=1 // pred_fallthru
      _
    %5939 = vsyncpa [#allocation6], 1

</llo_original>
